<compile_context>
chip_gen: v5e
topology: v5e:2x2
jax: 0.10.0
libtpu: 0.0.40
codegen_flags: <defaults>
</compile_context>

<pallas_src>
import math

import jax
import jax.numpy as jnp
from jax.experimental import pallas as pl
from jax.experimental.pallas import tpu as pltpu


def _dl_classifier_kernel(
    # ---- inputs ----
    x_ref,                                   # (T, B, F)  time-major input
    e1_wih, e1_whh, e1_b,                    # encoder LSTM1: gate-major (4, F,  H1) / (4, H1, H1) / (4, 1, H1)
    e2_wih, e2_whh, e2_b,                    # encoder LSTM2: (4, H1, E) / (4, E, E) / (4, 1, E)
    d1_wih, d1_whh, d1_b,                    # decoder LSTM1: (4, E,  H1) / (4, H1, H1) / (4, 1, H1)
    d2_wih, d2_whh, d2_b,                    # decoder LSTM2: (4, H1, F) / (4, F, F) / (4, 1, F)
    dense_w, dense_b,                        # decoder dense: (F, F), (1, F)
    cls_w1, cls_b1, cls_w2bd, cls_b2,        # fused heads: (E, C*H1), (1, C*H1), (C*H1, C) blockdiag, (1, C)
    # ---- outputs ----
    x2_ref,                                  # (T, B, F) reconstruction
    y_ref,                                   # (B, C)    softmax class scores
    # ---- scratch ----
    enc1_seq,                                # (T*B, H1)
    dec1_seq,                                # (T*B, H1)
    dec2_seq,                                # (T*B, F)
):
    T, B, F = x_ref.shape
    H1 = e1_whh.shape[1]
    E = e2_whh.shape[1]
    TB = T * B
    f32 = jnp.float32

    def sigmoid(z):
        # divide moved to the EUP reciprocal slot (recurrence is latency-bound)
        return pl.reciprocal(1.0 + jnp.exp(-z), approx=True)

    def input_proj(x_flat, wih_ref, b_ref):
        # Batched-over-time input projection + bias, one clean tile per gate
        # (PyTorch gate order i, f, g, o).  Computed once, outside the loop.
        return [jnp.dot(x_flat, wih_ref[g], preferred_element_type=f32) + b_ref[g]
                for g in range(4)]

    def run_lstm(pre_at, whh_ref, H, seq_out=None):
        # pre_at(t) -> list of 4 (B, H) gate pre-activations (input part + bias).
        # Only the recurrent h @ whh matmuls remain inside the unrolled loop.
        wg = [whh_ref[g] for g in range(4)]
        h = jnp.zeros((B, H), f32)
        c = jnp.zeros((B, H), f32)
        for t in range(T):                       # T is small & static -> unrolled
            p = pre_at(t)
            gi = p[0] + jnp.dot(h, wg[0], preferred_element_type=f32)
            gf = p[1] + jnp.dot(h, wg[1], preferred_element_type=f32)
            gg = p[2] + jnp.dot(h, wg[2], preferred_element_type=f32)
            go = p[3] + jnp.dot(h, wg[3], preferred_element_type=f32)
            c = sigmoid(gf) * c + sigmoid(gi) * jnp.tanh(gg)
            h = sigmoid(go) * jnp.tanh(c)
            if seq_out is not None:
                seq_out[t * B:(t + 1) * B, :] = h
        return h

    # ---- Encoder LSTM 1: F -> H1 (input projection batched over all T) ----
    x_flat = x_ref[...].reshape(TB, F)
    pre1 = input_proj(x_flat, e1_wih, e1_b)
    run_lstm(lambda t: [p[t * B:(t + 1) * B, :] for p in pre1],
             e1_whh, H1, seq_out=enc1_seq)

    # ---- Encoder LSTM 2: H1 -> E, final hidden is the embedding x1 ----
    pre2 = input_proj(enc1_seq[...], e2_wih, e2_b)
    x1 = run_lstm(lambda t: [p[t * B:(t + 1) * B, :] for p in pre2],
                  e2_whh, E)

    # ---- Decoder LSTM 1: constant embedding input; projection hoisted ----
    pre_d1 = [jnp.dot(x1, d1_wih[g], preferred_element_type=f32) + d1_b[g]
              for g in range(4)]
    run_lstm(lambda t: pre_d1, d1_whh, H1, seq_out=dec1_seq)

    # ---- Decoder LSTM 2: H1 -> F ----
    pre_d2 = input_proj(dec1_seq[...], d2_wih, d2_b)
    run_lstm(lambda t: [p[t * B:(t + 1) * B, :] for p in pre_d2],
             d2_whh, F, seq_out=dec2_seq)

    # ---- Dense layer batched over time + single contiguous output store ----
    x2 = (jnp.dot(dec2_seq[...], dense_w[...], preferred_element_type=f32)
          + dense_b[...])
    x2_ref[...] = x2.reshape(T, B, F)

    # ---- Fused classifier heads on x1 + softmax over classes (dim=1) ----
    h1 = jnp.dot(x1, cls_w1[...], preferred_element_type=f32) + cls_b1[...]      # (B, C*H1)
    logits = (jnp.dot(h1, cls_w2bd[...], preferred_element_type=f32)
              + cls_b2[...])                                                     # (B, C)
    m = jnp.max(logits, axis=1, keepdims=True)
    ex = jnp.exp(logits - m)
    y_ref[...] = ex / jnp.sum(ex, axis=1, keepdims=True)


def init_params(key, n_features, embedding_dim, n_classes):
    """Deterministic synthetic parameters matching the module's shapes.
    LSTM weights stored as (in_dim, 4*H) with PyTorch gate order i,f,g,o;
    b stands in for b_ih + b_hh."""
    F, E, C = n_features, embedding_dim, n_classes
    H1 = 2 * E

    def lstm_params(k, din, h):
        k1, k2, k3 = jax.random.split(k, 3)
        s = 1.0 / math.sqrt(h)
        wih = jax.random.uniform(k1, (din, 4 * h), jnp.float32, -s, s)
        whh = jax.random.uniform(k2, (h, 4 * h), jnp.float32, -s, s)
        b = jax.random.uniform(k3, (1, 4 * h), jnp.float32, -s, s) * 2.0
        return wih, whh, b

    keys = jax.random.split(key, 7)
    enc1 = lstm_params(keys[0], F, H1)
    enc2 = lstm_params(keys[1], H1, E)
    dec1 = lstm_params(keys[2], E, H1)
    dec2 = lstm_params(keys[3], H1, F)

    sd = 1.0 / math.sqrt(F)
    dense_w = jax.random.uniform(keys[4], (F, F), jnp.float32, -sd, sd)
    dense_b = jax.random.uniform(keys[5], (1, F), jnp.float32, -sd, sd)

    s1 = 1.0 / math.sqrt(E)
    s2 = 1.0 / math.sqrt(H1)
    kc = jax.random.split(keys[6], 4)
    cls_w1 = jax.random.uniform(kc[0], (C, E, H1), jnp.float32, -s1, s1)
    cls_b1 = jax.random.uniform(kc[1], (C, H1), jnp.float32, -s1, s1)
    cls_w2 = jax.random.uniform(kc[2], (C, H1), jnp.float32, -s2, s2)
    cls_b2 = jax.random.uniform(kc[3], (C, 1), jnp.float32, -s2, s2)

    return enc1 + enc2 + dec1 + dec2 + (dense_w, dense_b,
                                        cls_w1, cls_b1, cls_w2, cls_b2)


def _gate_major(wih, whh, b, h):
    """(din,4H)/(H,4H)/(1,4H) PyTorch-style -> gate-major (4,din,H)/(4,H,H)/(4,1,H)."""
    din = wih.shape[0]
    return (wih.reshape(din, 4, h).transpose(1, 0, 2),
            whh.reshape(h, 4, h).transpose(1, 0, 2),
            b.reshape(1, 4, h).transpose(1, 0, 2))


def dl_classifier_forward(x, params):
    """x: (B, T, F) float32, batch-first like the PyTorch module. Returns (x2, y)."""
    (e1_wih, e1_whh, e1_b,
     e2_wih, e2_whh, e2_b,
     d1_wih, d1_whh, d1_b,
     d2_wih, d2_whh, d2_b,
     dense_w, dense_b,
     cls_w1, cls_b1, cls_w2, cls_b2) = params

    B, T, F = x.shape
    # The reference Decoder's repeat/reshape is only shape-consistent for B==1.
    assert B == 1, "DLClassifier decoder semantics require batch == 1"
    H1 = e1_whh.shape[0]
    E = e2_whh.shape[0]
    C = cls_w1.shape[0]

    # ---- wrapper-side layout plumbing (done once per call, outside the kernel) ----
    e1 = _gate_major(e1_wih, e1_whh, e1_b, H1)
    e2 = _gate_major(e2_wih, e2_whh, e2_b, E)
    d1 = _gate_major(d1_wih, d1_whh, d1_b, H1)
    d2 = _gate_major(d2_wih, d2_whh, d2_b, F)

    # Fused classifier heads: layer1 weights flattened to (E, C*H1); layer2 as a
    # block-diagonal (C*H1, C) matrix so all C heads are two matmuls total.
    cls_w1_flat = jnp.transpose(cls_w1, (1, 0, 2)).reshape(E, C * H1)
    cls_b1_flat = cls_b1.reshape(1, C * H1)
    w2bd = jnp.zeros((C * H1, C), jnp.float32)
    for c in range(C):
        w2bd = w2bd.at[c * H1:(c + 1) * H1, c].set(cls_w2[c])
    cls_b2_flat = cls_b2.reshape(1, C)

    x_tm = jnp.transpose(x, (1, 0, 2)).astype(jnp.float32)   # time-major for kernel

    kernel_args = (x_tm, *e1, *e2, *d1, *d2, dense_w, dense_b,
                   cls_w1_flat, cls_b1_flat, w2bd, cls_b2_flat)

    x2_tm, y = pl.pallas_call(
        _dl_classifier_kernel,
        out_shape=(jax.ShapeDtypeStruct((T, B, F), jnp.float32),
                   jax.ShapeDtypeStruct((B, C), jnp.float32)),
        in_specs=[pl.BlockSpec(memory_space=pltpu.MemorySpace.VMEM)
                  for _ in range(len(kernel_args))],
        out_specs=(pl.BlockSpec(memory_space=pltpu.MemorySpace.VMEM),
                   pl.BlockSpec(memory_space=pltpu.MemorySpace.VMEM)),
        scratch_shapes=[pltpu.VMEM((T * B, H1), jnp.float32),
                        pltpu.VMEM((T * B, H1), jnp.float32),
                        pltpu.VMEM((T * B, F), jnp.float32)],
    )(*kernel_args)

    x2 = jnp.transpose(x2_tm, (1, 0, 2))                     # back to (B, T, F)
    return x2, y


if __name__ == "__main__":
    n_features = 4
    embedding_dim = 16
    classes = ["benign", "trojan", "worm"]

    # batch=1: the reference Decoder's repeat/reshape only works for batch==1.
    B, T = 1, 8

    key = jax.random.PRNGKey(0)
    kx, kp = jax.random.split(key)
    x = jax.random.normal(kx, (B, T, n_features), jnp.float32)
    params = init_params(kp, n_features, embedding_dim, len(classes))

    x2, y = jax.jit(dl_classifier_forward)(x, params)
    jax.block_until_ready((x2, y))

    assert x2.shape == (B, T, n_features)
    assert y.shape == (B, len(classes))
    assert bool(jnp.all(jnp.isfinite(x2))) and bool(jnp.all(jnp.isfinite(y)))
    print("KERNEL_OK")
</pallas_src>

<mosaic_0001>
module attributes {stable_mosaic.version = 11 : i64} {
  func.func @_dl_classifier_kernel(%arg0: memref<8x1x4xf32, #tpu.memory_space<vmem>>, %arg1: memref<4x4x32xf32, #tpu.memory_space<vmem>>, %arg2: memref<4x32x32xf32, #tpu.memory_space<vmem>>, %arg3: memref<4x1x32xf32, #tpu.memory_space<vmem>>, %arg4: memref<4x32x16xf32, #tpu.memory_space<vmem>>, %arg5: memref<4x16x16xf32, #tpu.memory_space<vmem>>, %arg6: memref<4x1x16xf32, #tpu.memory_space<vmem>>, %arg7: memref<4x16x32xf32, #tpu.memory_space<vmem>>, %arg8: memref<4x32x32xf32, #tpu.memory_space<vmem>>, %arg9: memref<4x1x32xf32, #tpu.memory_space<vmem>>, %arg10: memref<4x32x4xf32, #tpu.memory_space<vmem>>, %arg11: memref<4x4x4xf32, #tpu.memory_space<vmem>>, %arg12: memref<4x1x4xf32, #tpu.memory_space<vmem>>, %arg13: memref<4x4xf32, #tpu.memory_space<vmem>>, %arg14: memref<1x4xf32, #tpu.memory_space<vmem>>, %arg15: memref<16x96xf32, #tpu.memory_space<vmem>>, %arg16: memref<1x96xf32, #tpu.memory_space<vmem>>, %arg17: memref<96x3xf32, #tpu.memory_space<vmem>>, %arg18: memref<1x3xf32, #tpu.memory_space<vmem>>, %arg19: memref<8x1x4xf32, #tpu.memory_space<vmem>>, %arg20: memref<1x3xf32, #tpu.memory_space<vmem>>, %arg21: memref<8x32xf32, #tpu.memory_space<vmem>>, %arg22: memref<8x32xf32, #tpu.memory_space<vmem>>, %arg23: memref<8x4xf32, #tpu.memory_space<vmem>>) attributes {dimension_semantics = [], scalar_prefetch = 0 : i64, scratch_operands = 3 : i64, tpu.core_type = #tpu.core_type<tc>} {
    %c0 = arith.constant 0 : index
    %c0_0 = arith.constant 0 : index
    %c0_1 = arith.constant 0 : index
    %0 = vector.load %arg0[%c0, %c0_0, %c0_1] : memref<8x1x4xf32, #tpu.memory_space<vmem>>, vector<8x1x4xf32>
    %1 = vector.shape_cast %0 : vector<8x1x4xf32> to vector<8x4xf32>
    %c0_2 = arith.constant 0 : index
    %c0_3 = arith.constant 0 : index
    %c0_4 = arith.constant 0 : index
    %2 = vector.load %arg1[%c0_2, %c0_3, %c0_4] : memref<4x4x32xf32, #tpu.memory_space<vmem>>, vector<1x4x32xf32>
    %3 = vector.shape_cast %2 : vector<1x4x32xf32> to vector<4x32xf32>
    %cst = arith.constant dense<0.000000e+00> : vector<8x32xf32>
    %4 = tpu.matmul %1, %3, %cst {dimension_numbers = #tpu.dot_dimension_numbers<[1], [0], [0], [1], [0, 0, 1, 1], [], []>} : vector<8x4xf32>, vector<4x32xf32>, vector<8x32xf32> -> vector<8x32xf32>
    %c0_5 = arith.constant 0 : index
    %c0_6 = arith.constant 0 : index
    %c0_7 = arith.constant 0 : index
    %5 = vector.load %arg3[%c0_5, %c0_6, %c0_7] : memref<4x1x32xf32, #tpu.memory_space<vmem>>, vector<1x1x32xf32>
    %6 = vector.shape_cast %5 : vector<1x1x32xf32> to vector<1x32xf32>
    %7 = vector.broadcast %6 : vector<1x32xf32> to vector<8x32xf32>
    %8 = arith.addf %4, %7 : vector<8x32xf32>
    %c1 = arith.constant 1 : index
    %c0_8 = arith.constant 0 : index
    %c0_9 = arith.constant 0 : index
    %9 = vector.load %arg1[%c1, %c0_8, %c0_9] : memref<4x4x32xf32, #tpu.memory_space<vmem>>, vector<1x4x32xf32>
    %10 = vector.shape_cast %9 : vector<1x4x32xf32> to vector<4x32xf32>
    %cst_10 = arith.constant dense<0.000000e+00> : vector<8x32xf32>
    %11 = tpu.matmul %1, %10, %cst_10 {dimension_numbers = #tpu.dot_dimension_numbers<[1], [0], [0], [1], [0, 0, 1, 1], [], []>} : vector<8x4xf32>, vector<4x32xf32>, vector<8x32xf32> -> vector<8x32xf32>
    %c1_11 = arith.constant 1 : index
    %c0_12 = arith.constant 0 : index
    %c0_13 = arith.constant 0 : index
    %12 = vector.load %arg3[%c1_11, %c0_12, %c0_13] : memref<4x1x32xf32, #tpu.memory_space<vmem>>, vector<1x1x32xf32>
    %13 = vector.shape_cast %12 : vector<1x1x32xf32> to vector<1x32xf32>
    %14 = vector.broadcast %13 : vector<1x32xf32> to vector<8x32xf32>
    %15 = arith.addf %11, %14 : vector<8x32xf32>
    %c2 = arith.constant 2 : index
    %c0_14 = arith.constant 0 : index
    %c0_15 = arith.constant 0 : index
    %16 = vector.load %arg1[%c2, %c0_14, %c0_15] : memref<4x4x32xf32, #tpu.memory_space<vmem>>, vector<1x4x32xf32>
    %17 = vector.shape_cast %16 : vector<1x4x32xf32> to vector<4x32xf32>
    %cst_16 = arith.constant dense<0.000000e+00> : vector<8x32xf32>
    %18 = tpu.matmul %1, %17, %cst_16 {dimension_numbers = #tpu.dot_dimension_numbers<[1], [0], [0], [1], [0, 0, 1, 1], [], []>} : vector<8x4xf32>, vector<4x32xf32>, vector<8x32xf32> -> vector<8x32xf32>
    %c2_17 = arith.constant 2 : index
    %c0_18 = arith.constant 0 : index
    %c0_19 = arith.constant 0 : index
    %19 = vector.load %arg3[%c2_17, %c0_18, %c0_19] : memref<4x1x32xf32, #tpu.memory_space<vmem>>, vector<1x1x32xf32>
    %20 = vector.shape_cast %19 : vector<1x1x32xf32> to vector<1x32xf32>
    %21 = vector.broadcast %20 : vector<1x32xf32> to vector<8x32xf32>
    %22 = arith.addf %18, %21 : vector<8x32xf32>
    %c3 = arith.constant 3 : index
    %c0_20 = arith.constant 0 : index
    %c0_21 = arith.constant 0 : index
    %23 = vector.load %arg1[%c3, %c0_20, %c0_21] : memref<4x4x32xf32, #tpu.memory_space<vmem>>, vector<1x4x32xf32>
    %24 = vector.shape_cast %23 : vector<1x4x32xf32> to vector<4x32xf32>
    %cst_22 = arith.constant dense<0.000000e+00> : vector<8x32xf32>
    %25 = tpu.matmul %1, %24, %cst_22 {dimension_numbers = #tpu.dot_dimension_numbers<[1], [0], [0], [1], [0, 0, 1, 1], [], []>} : vector<8x4xf32>, vector<4x32xf32>, vector<8x32xf32> -> vector<8x32xf32>
    %c3_23 = arith.constant 3 : index
    %c0_24 = arith.constant 0 : index
    %c0_25 = arith.constant 0 : index
    %26 = vector.load %arg3[%c3_23, %c0_24, %c0_25] : memref<4x1x32xf32, #tpu.memory_space<vmem>>, vector<1x1x32xf32>
    %27 = vector.shape_cast %26 : vector<1x1x32xf32> to vector<1x32xf32>
    %28 = vector.broadcast %27 : vector<1x32xf32> to vector<8x32xf32>
    %29 = arith.addf %25, %28 : vector<8x32xf32>
    %c0_26 = arith.constant 0 : index
    %c0_27 = arith.constant 0 : index
    %c0_28 = arith.constant 0 : index
    %30 = vector.load %arg2[%c0_26, %c0_27, %c0_28] : memref<4x32x32xf32, #tpu.memory_space<vmem>>, vector<1x32x32xf32>
    %31 = vector.shape_cast %30 : vector<1x32x32xf32> to vector<32x32xf32>
    %c1_29 = arith.constant 1 : index
    %c0_30 = arith.constant 0 : index
    %c0_31 = arith.constant 0 : index
    %32 = vector.load %arg2[%c1_29, %c0_30, %c0_31] : memref<4x32x32xf32, #tpu.memory_space<vmem>>, vector<1x32x32xf32>
    %33 = vector.shape_cast %32 : vector<1x32x32xf32> to vector<32x32xf32>
    %c2_32 = arith.constant 2 : index
    %c0_33 = arith.constant 0 : index
    %c0_34 = arith.constant 0 : index
    %34 = vector.load %arg2[%c2_32, %c0_33, %c0_34] : memref<4x32x32xf32, #tpu.memory_space<vmem>>, vector<1x32x32xf32>
    %35 = vector.shape_cast %34 : vector<1x32x32xf32> to vector<32x32xf32>
    %c3_35 = arith.constant 3 : index
    %c0_36 = arith.constant 0 : index
    %c0_37 = arith.constant 0 : index
    %36 = vector.load %arg2[%c3_35, %c0_36, %c0_37] : memref<4x32x32xf32, #tpu.memory_space<vmem>>, vector<1x32x32xf32>
    %37 = vector.shape_cast %36 : vector<1x32x32xf32> to vector<32x32xf32>
    %cst_38 = arith.constant 0.000000e+00 : f32
    %38 = vector.broadcast %cst_38 : f32 to vector<1x32xf32>
    %cst_39 = arith.constant 0.000000e+00 : f32
    %39 = vector.broadcast %cst_39 : f32 to vector<1x32xf32>
    %40 = vector.extract_strided_slice %8 {offsets = [0, 0], sizes = [1, 32], strides = [1, 1]} : vector<8x32xf32> to vector<1x32xf32>
    %41 = vector.extract_strided_slice %15 {offsets = [0, 0], sizes = [1, 32], strides = [1, 1]} : vector<8x32xf32> to vector<1x32xf32>
    %42 = vector.extract_strided_slice %22 {offsets = [0, 0], sizes = [1, 32], strides = [1, 1]} : vector<8x32xf32> to vector<1x32xf32>
    %43 = vector.extract_strided_slice %29 {offsets = [0, 0], sizes = [1, 32], strides = [1, 1]} : vector<8x32xf32> to vector<1x32xf32>
    %cst_40 = arith.constant dense<0.000000e+00> : vector<1x32xf32>
    %44 = tpu.matmul %38, %31, %cst_40 {dimension_numbers = #tpu.dot_dimension_numbers<[1], [0], [0], [1], [0, 0, 1, 1], [], []>} : vector<1x32xf32>, vector<32x32xf32>, vector<1x32xf32> -> vector<1x32xf32>
    %45 = arith.addf %40, %44 : vector<1x32xf32>
    %cst_41 = arith.constant dense<0.000000e+00> : vector<1x32xf32>
    %46 = tpu.matmul %38, %33, %cst_41 {dimension_numbers = #tpu.dot_dimension_numbers<[1], [0], [0], [1], [0, 0, 1, 1], [], []>} : vector<1x32xf32>, vector<32x32xf32>, vector<1x32xf32> -> vector<1x32xf32>
    %47 = arith.addf %41, %46 : vector<1x32xf32>
    %cst_42 = arith.constant dense<0.000000e+00> : vector<1x32xf32>
    %48 = tpu.matmul %38, %35, %cst_42 {dimension_numbers = #tpu.dot_dimension_numbers<[1], [0], [0], [1], [0, 0, 1, 1], [], []>} : vector<1x32xf32>, vector<32x32xf32>, vector<1x32xf32> -> vector<1x32xf32>
    %49 = arith.addf %42, %48 : vector<1x32xf32>
    %cst_43 = arith.constant dense<0.000000e+00> : vector<1x32xf32>
    %50 = tpu.matmul %38, %37, %cst_43 {dimension_numbers = #tpu.dot_dimension_numbers<[1], [0], [0], [1], [0, 0, 1, 1], [], []>} : vector<1x32xf32>, vector<32x32xf32>, vector<1x32xf32> -> vector<1x32xf32>
    %51 = arith.addf %43, %50 : vector<1x32xf32>
    %cst_44 = arith.constant 0.000000e+00 : f32
    %52 = vector.broadcast %cst_44 : f32 to vector<1x32xf32>
    %53 = arith.subf %52, %47 : vector<1x32xf32>
    %54 = math.exp %53 : vector<1x32xf32>
    %cst_45 = arith.constant 1.000000e+00 : f32
    %55 = vector.broadcast %cst_45 : f32 to vector<1x32xf32>
    %56 = arith.addf %55, %54 : vector<1x32xf32>
    %57 = tpu.reciprocal %56 {approx = true} : vector<1x32xf32> -> vector<1x32xf32>
    %58 = arith.mulf %57, %39 : vector<1x32xf32>
    %cst_46 = arith.constant 0.000000e+00 : f32
    %59 = vector.broadcast %cst_46 : f32 to vector<1x32xf32>
    %60 = arith.subf %59, %45 : vector<1x32xf32>
    %61 = math.exp %60 : vector<1x32xf32>
    %cst_47 = arith.constant 1.000000e+00 : f32
    %62 = vector.broadcast %cst_47 : f32 to vector<1x32xf32>
    %63 = arith.addf %62, %61 : vector<1x32xf32>
    %64 = tpu.reciprocal %63 {approx = true} : vector<1x32xf32> -> vector<1x32xf32>
    %65 = math.tanh %49 : vector<1x32xf32>
    %66 = arith.mulf %64, %65 : vector<1x32xf32>
    %67 = arith.addf %58, %66 : vector<1x32xf32>
    %cst_48 = arith.constant 0.000000e+00 : f32
    %68 = vector.broadcast %cst_48 : f32 to vector<1x32xf32>
    %69 = arith.subf %68, %51 : vector<1x32xf32>
    %70 = math.exp %69 : vector<1x32xf32>
    %cst_49 = arith.constant 1.000000e+00 : f32
    %71 = vector.broadcast %cst_49 : f32 to vector<1x32xf32>
    %72 = arith.addf %71, %70 : vector<1x32xf32>
    %73 = tpu.reciprocal %72 {approx = true} : vector<1x32xf32> -> vector<1x32xf32>
    %74 = math.tanh %67 : vector<1x32xf32>
    %75 = arith.mulf %73, %74 : vector<1x32xf32>
    %c0_50 = arith.constant 0 : index
    %c0_51 = arith.constant 0 : index
    %76 = vector.load %arg21[%c0_50, %c0_51] : memref<8x32xf32, #tpu.memory_space<vmem>>, vector<1x32xf32>
    tpu.vector_store %arg21[%c0_50, %c0_51], %75 {strides = array<i32>} : memref<8x32xf32, #tpu.memory_space<vmem>>, vector<1x32xf32>,
    %77 = vector.extract_strided_slice %8 {offsets = [1, 0], sizes = [1, 32], strides = [1, 1]} : vector<8x32xf32> to vector<1x32xf32>
    %78 = vector.extract_strided_slice %15 {offsets = [1, 0], sizes = [1, 32], strides = [1, 1]} : vector<8x32xf32> to vector<1x32xf32>
    %79 = vector.extract_strided_slice %22 {offsets = [1, 0], sizes = [1, 32], strides = [1, 1]} : vector<8x32xf32> to vector<1x32xf32>
    %80 = vector.extract_strided_slice %29 {offsets = [1, 0], sizes = [1, 32], strides = [1, 1]} : vector<8x32xf32> to vector<1x32xf32>
    %cst_52 = arith.constant dense<0.000000e+00> : vector<1x32xf32>
    %81 = tpu.matmul %75, %31, %cst_52 {dimension_numbers = #tpu.dot_dimension_numbers<[1], [0], [0], [1], [0, 0, 1, 1], [], []>} : vector<1x32xf32>, vector<32x32xf32>, vector<1x32xf32> -> vector<1x32xf32>
    %82 = arith.addf %77, %81 : vector<1x32xf32>
    %cst_53 = arith.constant dense<0.000000e+00> : vector<1x32xf32>
    %83 = tpu.matmul %75, %33, %cst_53 {dimension_numbers = #tpu.dot_dimension_numbers<[1], [0], [0], [1], [0, 0, 1, 1], [], []>} : vector<1x32xf32>, vector<32x32xf32>, vector<1x32xf32> -> vector<1x32xf32>
    %84 = arith.addf %78, %83 : vector<1x32xf32>
    %cst_54 = arith.constant dense<0.000000e+00> : vector<1x32xf32>
    %85 = tpu.matmul %75, %35, %cst_54 {dimension_numbers = #tpu.dot_dimension_numbers<[1], [0], [0], [1], [0, 0, 1, 1], [], []>} : vector<1x32xf32>, vector<32x32xf32>, vector<1x32xf32> -> vector<1x32xf32>
    %86 = arith.addf %79, %85 : vector<1x32xf32>
    %cst_55 = arith.constant dense<0.000000e+00> : vector<1x32xf32>
    %87 = tpu.matmul %75, %37, %cst_55 {dimension_numbers = #tpu.dot_dimension_numbers<[1], [0], [0], [1], [0, 0, 1, 1], [], []>} : vector<1x32xf32>, vector<32x32xf32>, vector<1x32xf32> -> vector<1x32xf32>
    %88 = arith.addf %80, %87 : vector<1x32xf32>
    %cst_56 = arith.constant 0.000000e+00 : f32
    %89 = vector.broadcast %cst_56 : f32 to vector<1x32xf32>
    %90 = arith.subf %89, %84 : vector<1x32xf32>
    %91 = math.exp %90 : vector<1x32xf32>
    %cst_57 = arith.constant 1.000000e+00 : f32
    %92 = vector.broadcast %cst_57 : f32 to vector<1x32xf32>
    %93 = arith.addf %92, %91 : vector<1x32xf32>
    %94 = tpu.reciprocal %93 {approx = true} : vector<1x32xf32> -> vector<1x32xf32>
    %95 = arith.mulf %94, %67 : vector<1x32xf32>
    %cst_58 = arith.constant 0.000000e+00 : f32
    %96 = vector.broadcast %cst_58 : f32 to vector<1x32xf32>
    %97 = arith.subf %96, %82 : vector<1x32xf32>
    %98 = math.exp %97 : vector<1x32xf32>
    %cst_59 = arith.constant 1.000000e+00 : f32
    %99 = vector.broadcast %cst_59 : f32 to vector<1x32xf32>
    %100 = arith.addf %99, %98 : vector<1x32xf32>
    %101 = tpu.reciprocal %100 {approx = true} : vector<1x32xf32> -> vector<1x32xf32>
    %102 = math.tanh %86 : vector<1x32xf32>
    %103 = arith.mulf %101, %102 : vector<1x32xf32>
    %104 = arith.addf %95, %103 : vector<1x32xf32>
    %cst_60 = arith.constant 0.000000e+00 : f32
    %105 = vector.broadcast %cst_60 : f32 to vector<1x32xf32>
    %106 = arith.subf %105, %88 : vector<1x32xf32>
    %107 = math.exp %106 : vector<1x32xf32>
    %cst_61 = arith.constant 1.000000e+00 : f32
    %108 = vector.broadcast %cst_61 : f32 to vector<1x32xf32>
    %109 = arith.addf %108, %107 : vector<1x32xf32>
    %110 = tpu.reciprocal %109 {approx = true} : vector<1x32xf32> -> vector<1x32xf32>
    %111 = math.tanh %104 : vector<1x32xf32>
    %112 = arith.mulf %110, %111 : vector<1x32xf32>
    %c1_62 = arith.constant 1 : index
    %c0_63 = arith.constant 0 : index
    %113 = vector.load %arg21[%c1_62, %c0_63] : memref<8x32xf32, #tpu.memory_space<vmem>>, vector<1x32xf32>
    tpu.vector_store %arg21[%c1_62, %c0_63], %112 {strides = array<i32>} : memref<8x32xf32, #tpu.memory_space<vmem>>, vector<1x32xf32>,
    %114 = vector.extract_strided_slice %8 {offsets = [2, 0], sizes = [1, 32], strides = [1, 1]} : vector<8x32xf32> to vector<1x32xf32>
    %115 = vector.extract_strided_slice %15 {offsets = [2, 0], sizes = [1, 32], strides = [1, 1]} : vector<8x32xf32> to vector<1x32xf32>
    %116 = vector.extract_strided_slice %22 {offsets = [2, 0], sizes = [1, 32], strides = [1, 1]} : vector<8x32xf32> to vector<1x32xf32>
    %117 = vector.extract_strided_slice %29 {offsets = [2, 0], sizes = [1, 32], strides = [1, 1]} : vector<8x32xf32> to vector<1x32xf32>
    %cst_64 = arith.constant dense<0.000000e+00> : vector<1x32xf32>
    %118 = tpu.matmul %112, %31, %cst_64 {dimension_numbers = #tpu.dot_dimension_numbers<[1], [0], [0], [1], [0, 0, 1, 1], [], []>} : vector<1x32xf32>, vector<32x32xf32>, vector<1x32xf32> -> vector<1x32xf32>
    %119 = arith.addf %114, %118 : vector<1x32xf32>
    %cst_65 = arith.constant dense<0.000000e+00> : vector<1x32xf32>
    %120 = tpu.matmul %112, %33, %cst_65 {dimension_numbers = #tpu.dot_dimension_numbers<[1], [0], [0], [1], [0, 0, 1, 1], [], []>} : vector<1x32xf32>, vector<32x32xf32>, vector<1x32xf32> -> vector<1x32xf32>
    %121 = arith.addf %115, %120 : vector<1x32xf32>
    %cst_66 = arith.constant dense<0.000000e+00> : vector<1x32xf32>
    %122 = tpu.matmul %112, %35, %cst_66 {dimension_numbers = #tpu.dot_dimension_numbers<[1], [0], [0], [1], [0, 0, 1, 1], [], []>} : vector<1x32xf32>, vector<32x32xf32>, vector<1x32xf32> -> vector<1x32xf32>
    %123 = arith.addf %116, %122 : vector<1x32xf32>
    %cst_67 = arith.constant dense<0.000000e+00> : vector<1x32xf32>
    %124 = tpu.matmul %112, %37, %cst_67 {dimension_numbers = #tpu.dot_dimension_numbers<[1], [0], [0], [1], [0, 0, 1, 1], [], []>} : vector<1x32xf32>, vector<32x32xf32>, vector<1x32xf32> -> vector<1x32xf32>
    %125 = arith.addf %117, %124 : vector<1x32xf32>
    %cst_68 = arith.constant 0.000000e+00 : f32
    %126 = vector.broadcast %cst_68 : f32 to vector<1x32xf32>
    %127 = arith.subf %126, %121 : vector<1x32xf32>
    %128 = math.exp %127 : vector<1x32xf32>
    %cst_69 = arith.constant 1.000000e+00 : f32
    %129 = vector.broadcast %cst_69 : f32 to vector<1x32xf32>
    %130 = arith.addf %129, %128 : vector<1x32xf32>
    %131 = tpu.reciprocal %130 {approx = true} : vector<1x32xf32> -> vector<1x32xf32>
    %132 = arith.mulf %131, %104 : vector<1x32xf32>
    %cst_70 = arith.constant 0.000000e+00 : f32
    %133 = vector.broadcast %cst_70 : f32 to vector<1x32xf32>
    %134 = arith.subf %133, %119 : vector<1x32xf32>
    %135 = math.exp %134 : vector<1x32xf32>
    %cst_71 = arith.constant 1.000000e+00 : f32
    %136 = vector.broadcast %cst_71 : f32 to vector<1x32xf32>
    %137 = arith.addf %136, %135 : vector<1x32xf32>
    %138 = tpu.reciprocal %137 {approx = true} : vector<1x32xf32> -> vector<1x32xf32>
    %139 = math.tanh %123 : vector<1x32xf32>
    %140 = arith.mulf %138, %139 : vector<1x32xf32>
    %141 = arith.addf %132, %140 : vector<1x32xf32>
    %cst_72 = arith.constant 0.000000e+00 : f32
    %142 = vector.broadcast %cst_72 : f32 to vector<1x32xf32>
    %143 = arith.subf %142, %125 : vector<1x32xf32>
    %144 = math.exp %143 : vector<1x32xf32>
    %cst_73 = arith.constant 1.000000e+00 : f32
    %145 = vector.broadcast %cst_73 : f32 to vector<1x32xf32>
    %146 = arith.addf %145, %144 : vector<1x32xf32>
    %147 = tpu.reciprocal %146 {approx = true} : vector<1x32xf32> -> vector<1x32xf32>
    %148 = math.tanh %141 : vector<1x32xf32>
    %149 = arith.mulf %147, %148 : vector<1x32xf32>
    %c2_74 = arith.constant 2 : index
    %c0_75 = arith.constant 0 : index
    %150 = vector.load %arg21[%c2_74, %c0_75] : memref<8x32xf32, #tpu.memory_space<vmem>>, vector<1x32xf32>
    tpu.vector_store %arg21[%c2_74, %c0_75], %149 {strides = array<i32>} : memref<8x32xf32, #tpu.memory_space<vmem>>, vector<1x32xf32>,
    %151 = vector.extract_strided_slice %8 {offsets = [3, 0], sizes = [1, 32], strides = [1, 1]} : vector<8x32xf32> to vector<1x32xf32>
    %152 = vector.extract_strided_slice %15 {offsets = [3, 0], sizes = [1, 32], strides = [1, 1]} : vector<8x32xf32> to vector<1x32xf32>
    %153 = vector.extract_strided_slice %22 {offsets = [3, 0], sizes = [1, 32], strides = [1, 1]} : vector<8x32xf32> to vector<1x32xf32>
    %154 = vector.extract_strided_slice %29 {offsets = [3, 0], sizes = [1, 32], strides = [1, 1]} : vector<8x32xf32> to vector<1x32xf32>
    %cst_76 = arith.constant dense<0.000000e+00> : vector<1x32xf32>
    %155 = tpu.matmul %149, %31, %cst_76 {dimension_numbers = #tpu.dot_dimension_numbers<[1], [0], [0], [1], [0, 0, 1, 1], [], []>} : vector<1x32xf32>, vector<32x32xf32>, vector<1x32xf32> -> vector<1x32xf32>
    %156 = arith.addf %151, %155 : vector<1x32xf32>
    %cst_77 = arith.constant dense<0.000000e+00> : vector<1x32xf32>
    %157 = tpu.matmul %149, %33, %cst_77 {dimension_numbers = #tpu.dot_dimension_numbers<[1], [0], [0], [1], [0, 0, 1, 1], [], []>} : vector<1x32xf32>, vector<32x32xf32>, vector<1x32xf32> -> vector<1x32xf32>
    %158 = arith.addf %152, %157 : vector<1x32xf32>
    %cst_78 = arith.constant dense<0.000000e+00> : vector<1x32xf32>
    %159 = tpu.matmul %149, %35, %cst_78 {dimension_numbers = #tpu.dot_dimension_numbers<[1], [0], [0], [1], [0, 0, 1, 1], [], []>} : vector<1x32xf32>, vector<32x32xf32>, vector<1x32xf32> -> vector<1x32xf32>
    %160 = arith.addf %153, %159 : vector<1x32xf32>
    %cst_79 = arith.constant dense<0.000000e+00> : vector<1x32xf32>
    %161 = tpu.matmul %149, %37, %cst_79 {dimension_numbers = #tpu.dot_dimension_numbers<[1], [0], [0], [1], [0, 0, 1, 1], [], []>} : vector<1x32xf32>, vector<32x32xf32>, vector<1x32xf32> -> vector<1x32xf32>
    %162 = arith.addf %154, %161 : vector<1x32xf32>
    %cst_80 = arith.constant 0.000000e+00 : f32
    %163 = vector.broadcast %cst_80 : f32 to vector<1x32xf32>
    %164 = arith.subf %163, %158 : vector<1x32xf32>
    %165 = math.exp %164 : vector<1x32xf32>
    %cst_81 = arith.constant 1.000000e+00 : f32
    %166 = vector.broadcast %cst_81 : f32 to vector<1x32xf32>
    %167 = arith.addf %166, %165 : vector<1x32xf32>
    %168 = tpu.reciprocal %167 {approx = true} : vector<1x32xf32> -> vector<1x32xf32>
    %169 = arith.mulf %168, %141 : vector<1x32xf32>
    %cst_82 = arith.constant 0.000000e+00 : f32
    %170 = vector.broadcast %cst_82 : f32 to vector<1x32xf32>
    %171 = arith.subf %170, %156 : vector<1x32xf32>
    %172 = math.exp %171 : vector<1x32xf32>
    %cst_83 = arith.constant 1.000000e+00 : f32
    %173 = vector.broadcast %cst_83 : f32 to vector<1x32xf32>
    %174 = arith.addf %173, %172 : vector<1x32xf32>
    %175 = tpu.reciprocal %174 {approx = true} : vector<1x32xf32> -> vector<1x32xf32>
    %176 = math.tanh %160 : vector<1x32xf32>
    %177 = arith.mulf %175, %176 : vector<1x32xf32>
    %178 = arith.addf %169, %177 : vector<1x32xf32>
    %cst_84 = arith.constant 0.000000e+00 : f32
    %179 = vector.broadcast %cst_84 : f32 to vector<1x32xf32>
    %180 = arith.subf %179, %162 : vector<1x32xf32>
    %181 = math.exp %180 : vector<1x32xf32>
    %cst_85 = arith.constant 1.000000e+00 : f32
    %182 = vector.broadcast %cst_85 : f32 to vector<1x32xf32>
    %183 = arith.addf %182, %181 : vector<1x32xf32>
    %184 = tpu.reciprocal %183 {approx = true} : vector<1x32xf32> -> vector<1x32xf32>
    %185 = math.tanh %178 : vector<1x32xf32>
    %186 = arith.mulf %184, %185 : vector<1x32xf32>
    %c3_86 = arith.constant 3 : index
    %c0_87 = arith.constant 0 : index
    %187 = vector.load %arg21[%c3_86, %c0_87] : memref<8x32xf32, #tpu.memory_space<vmem>>, vector<1x32xf32>
    tpu.vector_store %arg21[%c3_86, %c0_87], %186 {strides = array<i32>} : memref<8x32xf32, #tpu.memory_space<vmem>>, vector<1x32xf32>,
    %188 = vector.extract_strided_slice %8 {offsets = [4, 0], sizes = [1, 32], strides = [1, 1]} : vector<8x32xf32> to vector<1x32xf32>
    %189 = vector.extract_strided_slice %15 {offsets = [4, 0], sizes = [1, 32], strides = [1, 1]} : vector<8x32xf32> to vector<1x32xf32>
    %190 = vector.extract_strided_slice %22 {offsets = [4, 0], sizes = [1, 32], strides = [1, 1]} : vector<8x32xf32> to vector<1x32xf32>
    %191 = vector.extract_strided_slice %29 {offsets = [4, 0], sizes = [1, 32], strides = [1, 1]} : vector<8x32xf32> to vector<1x32xf32>
    %cst_88 = arith.constant dense<0.000000e+00> : vector<1x32xf32>
    %192 = tpu.matmul %186, %31, %cst_88 {dimension_numbers = #tpu.dot_dimension_numbers<[1], [0], [0], [1], [0, 0, 1, 1], [], []>} : vector<1x32xf32>, vector<32x32xf32>, vector<1x32xf32> -> vector<1x32xf32>
    %193 = arith.addf %188, %192 : vector<1x32xf32>
    %cst_89 = arith.constant dense<0.000000e+00> : vector<1x32xf32>
    %194 = tpu.matmul %186, %33, %cst_89 {dimension_numbers = #tpu.dot_dimension_numbers<[1], [0], [0], [1], [0, 0, 1, 1], [], []>} : vector<1x32xf32>, vector<32x32xf32>, vector<1x32xf32> -> vector<1x32xf32>
    %195 = arith.addf %189, %194 : vector<1x32xf32>
    %cst_90 = arith.constant dense<0.000000e+00> : vector<1x32xf32>
    %196 = tpu.matmul %186, %35, %cst_90 {dimension_numbers = #tpu.dot_dimension_numbers<[1], [0], [0], [1], [0, 0, 1, 1], [], []>} : vector<1x32xf32>, vector<32x32xf32>, vector<1x32xf32> -> vector<1x32xf32>
    %197 = arith.addf %190, %196 : vector<1x32xf32>
    %cst_91 = arith.constant dense<0.000000e+00> : vector<1x32xf32>
    %198 = tpu.matmul %186, %37, %cst_91 {dimension_numbers = #tpu.dot_dimension_numbers<[1], [0], [0], [1], [0, 0, 1, 1], [], []>} : vector<1x32xf32>, vector<32x32xf32>, vector<1x32xf32> -> vector<1x32xf32>
    %199 = arith.addf %191, %198 : vector<1x32xf32>
    %cst_92 = arith.constant 0.000000e+00 : f32
    %200 = vector.broadcast %cst_92 : f32 to vector<1x32xf32>
    %201 = arith.subf %200, %195 : vector<1x32xf32>
    %202 = math.exp %201 : vector<1x32xf32>
    %cst_93 = arith.constant 1.000000e+00 : f32
    %203 = vector.broadcast %cst_93 : f32 to vector<1x32xf32>
    %204 = arith.addf %203, %202 : vector<1x32xf32>
    %205 = tpu.reciprocal %204 {approx = true} : vector<1x32xf32> -> vector<1x32xf32>
    %206 = arith.mulf %205, %178 : vector<1x32xf32>
    %cst_94 = arith.constant 0.000000e+00 : f32
    %207 = vector.broadcast %cst_94 : f32 to vector<1x32xf32>
    %208 = arith.subf %207, %193 : vector<1x32xf32>
    %209 = math.exp %208 : vector<1x32xf32>
    %cst_95 = arith.constant 1.000000e+00 : f32
    %210 = vector.broadcast %cst_95 : f32 to vector<1x32xf32>
    %211 = arith.addf %210, %209 : vector<1x32xf32>
    %212 = tpu.reciprocal %211 {approx = true} : vector<1x32xf32> -> vector<1x32xf32>
    %213 = math.tanh %197 : vector<1x32xf32>
    %214 = arith.mulf %212, %213 : vector<1x32xf32>
    %215 = arith.addf %206, %214 : vector<1x32xf32>
    %cst_96 = arith.constant 0.000000e+00 : f32
    %216 = vector.broadcast %cst_96 : f32 to vector<1x32xf32>
    %217 = arith.subf %216, %199 : vector<1x32xf32>
    %218 = math.exp %217 : vector<1x32xf32>
    %cst_97 = arith.constant 1.000000e+00 : f32
    %219 = vector.broadcast %cst_97 : f32 to vector<1x32xf32>
    %220 = arith.addf %219, %218 : vector<1x32xf32>
    %221 = tpu.reciprocal %220 {approx = true} : vector<1x32xf32> -> vector<1x32xf32>
    %222 = math.tanh %215 : vector<1x32xf32>
    %223 = arith.mulf %221, %222 : vector<1x32xf32>
    %c4 = arith.constant 4 : index
    %c0_98 = arith.constant 0 : index
    %224 = vector.load %arg21[%c4, %c0_98] : memref<8x32xf32, #tpu.memory_space<vmem>>, vector<1x32xf32>
    tpu.vector_store %arg21[%c4, %c0_98], %223 {strides = array<i32>} : memref<8x32xf32, #tpu.memory_space<vmem>>, vector<1x32xf32>,
    %225 = vector.extract_strided_slice %8 {offsets = [5, 0], sizes = [1, 32], strides = [1, 1]} : vector<8x32xf32> to vector<1x32xf32>
    %226 = vector.extract_strided_slice %15 {offsets = [5, 0], sizes = [1, 32], strides = [1, 1]} : vector<8x32xf32> to vector<1x32xf32>
    %227 = vector.extract_strided_slice %22 {offsets = [5, 0], sizes = [1, 32], strides = [1, 1]} : vector<8x32xf32> to vector<1x32xf32>
    %228 = vector.extract_strided_slice %29 {offsets = [5, 0], sizes = [1, 32], strides = [1, 1]} : vector<8x32xf32> to vector<1x32xf32>
    %cst_99 = arith.constant dense<0.000000e+00> : vector<1x32xf32>
    %229 = tpu.matmul %223, %31, %cst_99 {dimension_numbers = #tpu.dot_dimension_numbers<[1], [0], [0], [1], [0, 0, 1, 1], [], []>} : vector<1x32xf32>, vector<32x32xf32>, vector<1x32xf32> -> vector<1x32xf32>
    %230 = arith.addf %225, %229 : vector<1x32xf32>
    %cst_100 = arith.constant dense<0.000000e+00> : vector<1x32xf32>
    %231 = tpu.matmul %223, %33, %cst_100 {dimension_numbers = #tpu.dot_dimension_numbers<[1], [0], [0], [1], [0, 0, 1, 1], [], []>} : vector<1x32xf32>, vector<32x32xf32>, vector<1x32xf32> -> vector<1x32xf32>
    %232 = arith.addf %226, %231 : vector<1x32xf32>
    %cst_101 = arith.constant dense<0.000000e+00> : vector<1x32xf32>
    %233 = tpu.matmul %223, %35, %cst_101 {dimension_numbers = #tpu.dot_dimension_numbers<[1], [0], [0], [1], [0, 0, 1, 1], [], []>} : vector<1x32xf32>, vector<32x32xf32>, vector<1x32xf32> -> vector<1x32xf32>
    %234 = arith.addf %227, %233 : vector<1x32xf32>
    %cst_102 = arith.constant dense<0.000000e+00> : vector<1x32xf32>
    %235 = tpu.matmul %223, %37, %cst_102 {dimension_numbers = #tpu.dot_dimension_numbers<[1], [0], [0], [1], [0, 0, 1, 1], [], []>} : vector<1x32xf32>, vector<32x32xf32>, vector<1x32xf32> -> vector<1x32xf32>
    %236 = arith.addf %228, %235 : vector<1x32xf32>
    %cst_103 = arith.constant 0.000000e+00 : f32
    %237 = vector.broadcast %cst_103 : f32 to vector<1x32xf32>
    %238 = arith.subf %237, %232 : vector<1x32xf32>
    %239 = math.exp %238 : vector<1x32xf32>
    %cst_104 = arith.constant 1.000000e+00 : f32
    %240 = vector.broadcast %cst_104 : f32 to vector<1x32xf32>
    %241 = arith.addf %240, %239 : vector<1x32xf32>
    %242 = tpu.reciprocal %241 {approx = true} : vector<1x32xf32> -> vector<1x32xf32>
    %243 = arith.mulf %242, %215 : vector<1x32xf32>
    %cst_105 = arith.constant 0.000000e+00 : f32
    %244 = vector.broadcast %cst_105 : f32 to vector<1x32xf32>
    %245 = arith.subf %244, %230 : vector<1x32xf32>
    %246 = math.exp %245 : vector<1x32xf32>
    %cst_106 = arith.constant 1.000000e+00 : f32
    %247 = vector.broadcast %cst_106 : f32 to vector<1x32xf32>
    %248 = arith.addf %247, %246 : vector<1x32xf32>
    %249 = tpu.reciprocal %248 {approx = true} : vector<1x32xf32> -> vector<1x32xf32>
    %250 = math.tanh %234 : vector<1x32xf32>
    %251 = arith.mulf %249, %250 : vector<1x32xf32>
    %252 = arith.addf %243, %251 : vector<1x32xf32>
    %cst_107 = arith.constant 0.000000e+00 : f32
    %253 = vector.broadcast %cst_107 : f32 to vector<1x32xf32>
    %254 = arith.subf %253, %236 : vector<1x32xf32>
    %255 = math.exp %254 : vector<1x32xf32>
    %cst_108 = arith.constant 1.000000e+00 : f32
    %256 = vector.broadcast %cst_108 : f32 to vector<1x32xf32>
    %257 = arith.addf %256, %255 : vector<1x32xf32>
    %258 = tpu.reciprocal %257 {approx = true} : vector<1x32xf32> -> vector<1x32xf32>
    %259 = math.tanh %252 : vector<1x32xf32>
    %260 = arith.mulf %258, %259 : vector<1x32xf32>
    %c5 = arith.constant 5 : index
    %c0_109 = arith.constant 0 : index
    %261 = vector.load %arg21[%c5, %c0_109] : memref<8x32xf32, #tpu.memory_space<vmem>>, vector<1x32xf32>
    tpu.vector_store %arg21[%c5, %c0_109], %260 {strides = array<i32>} : memref<8x32xf32, #tpu.memory_space<vmem>>, vector<1x32xf32>,
    %262 = vector.extract_strided_slice %8 {offsets = [6, 0], sizes = [1, 32], strides = [1, 1]} : vector<8x32xf32> to vector<1x32xf32>
    %263 = vector.extract_strided_slice %15 {offsets = [6, 0], sizes = [1, 32], strides = [1, 1]} : vector<8x32xf32> to vector<1x32xf32>
    %264 = vector.extract_strided_slice %22 {offsets = [6, 0], sizes = [1, 32], strides = [1, 1]} : vector<8x32xf32> to vector<1x32xf32>
    %265 = vector.extract_strided_slice %29 {offsets = [6, 0], sizes = [1, 32], strides = [1, 1]} : vector<8x32xf32> to vector<1x32xf32>
    %cst_110 = arith.constant dense<0.000000e+00> : vector<1x32xf32>
    %266 = tpu.matmul %260, %31, %cst_110 {dimension_numbers = #tpu.dot_dimension_numbers<[1], [0], [0], [1], [0, 0, 1, 1], [], []>} : vector<1x32xf32>, vector<32x32xf32>, vector<1x32xf32> -> vector<1x32xf32>
    %267 = arith.addf %262, %266 : vector<1x32xf32>
    %cst_111 = arith.constant dense<0.000000e+00> : vector<1x32xf32>
    %268 = tpu.matmul %260, %33, %cst_111 {dimension_numbers = #tpu.dot_dimension_numbers<[1], [0], [0], [1], [0, 0, 1, 1], [], []>} : vector<1x32xf32>, vector<32x32xf32>, vector<1x32xf32> -> vector<1x32xf32>
    %269 = arith.addf %263, %268 : vector<1x32xf32>
    %cst_112 = arith.constant dense<0.000000e+00> : vector<1x32xf32>
    %270 = tpu.matmul %260, %35, %cst_112 {dimension_numbers = #tpu.dot_dimension_numbers<[1], [0], [0], [1], [0, 0, 1, 1], [], []>} : vector<1x32xf32>, vector<32x32xf32>, vector<1x32xf32> -> vector<1x32xf32>
    %271 = arith.addf %264, %270 : vector<1x32xf32>
    %cst_113 = arith.constant dense<0.000000e+00> : vector<1x32xf32>
    %272 = tpu.matmul %260, %37, %cst_113 {dimension_numbers = #tpu.dot_dimension_numbers<[1], [0], [0], [1], [0, 0, 1, 1], [], []>} : vector<1x32xf32>, vector<32x32xf32>, vector<1x32xf32> -> vector<1x32xf32>
    %273 = arith.addf %265, %272 : vector<1x32xf32>
    %cst_114 = arith.constant 0.000000e+00 : f32
    %274 = vector.broadcast %cst_114 : f32 to vector<1x32xf32>
    %275 = arith.subf %274, %269 : vector<1x32xf32>
    %276 = math.exp %275 : vector<1x32xf32>
    %cst_115 = arith.constant 1.000000e+00 : f32
    %277 = vector.broadcast %cst_115 : f32 to vector<1x32xf32>
    %278 = arith.addf %277, %276 : vector<1x32xf32>
    %279 = tpu.reciprocal %278 {approx = true} : vector<1x32xf32> -> vector<1x32xf32>
    %280 = arith.mulf %279, %252 : vector<1x32xf32>
    %cst_116 = arith.constant 0.000000e+00 : f32
    %281 = vector.broadcast %cst_116 : f32 to vector<1x32xf32>
    %282 = arith.subf %281, %267 : vector<1x32xf32>
    %283 = math.exp %282 : vector<1x32xf32>
    %cst_117 = arith.constant 1.000000e+00 : f32
    %284 = vector.broadcast %cst_117 : f32 to vector<1x32xf32>
    %285 = arith.addf %284, %283 : vector<1x32xf32>
    %286 = tpu.reciprocal %285 {approx = true} : vector<1x32xf32> -> vector<1x32xf32>
    %287 = math.tanh %271 : vector<1x32xf32>
    %288 = arith.mulf %286, %287 : vector<1x32xf32>
    %289 = arith.addf %280, %288 : vector<1x32xf32>
    %cst_118 = arith.constant 0.000000e+00 : f32
    %290 = vector.broadcast %cst_118 : f32 to vector<1x32xf32>
    %291 = arith.subf %290, %273 : vector<1x32xf32>
    %292 = math.exp %291 : vector<1x32xf32>
    %cst_119 = arith.constant 1.000000e+00 : f32
    %293 = vector.broadcast %cst_119 : f32 to vector<1x32xf32>
    %294 = arith.addf %293, %292 : vector<1x32xf32>
    %295 = tpu.reciprocal %294 {approx = true} : vector<1x32xf32> -> vector<1x32xf32>
    %296 = math.tanh %289 : vector<1x32xf32>
    %297 = arith.mulf %295, %296 : vector<1x32xf32>
    %c6 = arith.constant 6 : index
    %c0_120 = arith.constant 0 : index
    %298 = vector.load %arg21[%c6, %c0_120] : memref<8x32xf32, #tpu.memory_space<vmem>>, vector<1x32xf32>
    tpu.vector_store %arg21[%c6, %c0_120], %297 {strides = array<i32>} : memref<8x32xf32, #tpu.memory_space<vmem>>, vector<1x32xf32>,
    %299 = vector.extract_strided_slice %8 {offsets = [7, 0], sizes = [1, 32], strides = [1, 1]} : vector<8x32xf32> to vector<1x32xf32>
    %300 = vector.extract_strided_slice %15 {offsets = [7, 0], sizes = [1, 32], strides = [1, 1]} : vector<8x32xf32> to vector<1x32xf32>
    %301 = vector.extract_strided_slice %22 {offsets = [7, 0], sizes = [1, 32], strides = [1, 1]} : vector<8x32xf32> to vector<1x32xf32>
    %302 = vector.extract_strided_slice %29 {offsets = [7, 0], sizes = [1, 32], strides = [1, 1]} : vector<8x32xf32> to vector<1x32xf32>
    %cst_121 = arith.constant dense<0.000000e+00> : vector<1x32xf32>
    %303 = tpu.matmul %297, %31, %cst_121 {dimension_numbers = #tpu.dot_dimension_numbers<[1], [0], [0], [1], [0, 0, 1, 1], [], []>} : vector<1x32xf32>, vector<32x32xf32>, vector<1x32xf32> -> vector<1x32xf32>
    %304 = arith.addf %299, %303 : vector<1x32xf32>
    %cst_122 = arith.constant dense<0.000000e+00> : vector<1x32xf32>
    %305 = tpu.matmul %297, %33, %cst_122 {dimension_numbers = #tpu.dot_dimension_numbers<[1], [0], [0], [1], [0, 0, 1, 1], [], []>} : vector<1x32xf32>, vector<32x32xf32>, vector<1x32xf32> -> vector<1x32xf32>
    %306 = arith.addf %300, %305 : vector<1x32xf32>
    %cst_123 = arith.constant dense<0.000000e+00> : vector<1x32xf32>
    %307 = tpu.matmul %297, %35, %cst_123 {dimension_numbers = #tpu.dot_dimension_numbers<[1], [0], [0], [1], [0, 0, 1, 1], [], []>} : vector<1x32xf32>, vector<32x32xf32>, vector<1x32xf32> -> vector<1x32xf32>
    %308 = arith.addf %301, %307 : vector<1x32xf32>
    %cst_124 = arith.constant dense<0.000000e+00> : vector<1x32xf32>
    %309 = tpu.matmul %297, %37, %cst_124 {dimension_numbers = #tpu.dot_dimension_numbers<[1], [0], [0], [1], [0, 0, 1, 1], [], []>} : vector<1x32xf32>, vector<32x32xf32>, vector<1x32xf32> -> vector<1x32xf32>
    %310 = arith.addf %302, %309 : vector<1x32xf32>
    %cst_125 = arith.constant 0.000000e+00 : f32
    %311 = vector.broadcast %cst_125 : f32 to vector<1x32xf32>
    %312 = arith.subf %311, %306 : vector<1x32xf32>
    %313 = math.exp %312 : vector<1x32xf32>
    %cst_126 = arith.constant 1.000000e+00 : f32
    %314 = vector.broadcast %cst_126 : f32 to vector<1x32xf32>
    %315 = arith.addf %314, %313 : vector<1x32xf32>
    %316 = tpu.reciprocal %315 {approx = true} : vector<1x32xf32> -> vector<1x32xf32>
    %317 = arith.mulf %316, %289 : vector<1x32xf32>
    %cst_127 = arith.constant 0.000000e+00 : f32
    %318 = vector.broadcast %cst_127 : f32 to vector<1x32xf32>
    %319 = arith.subf %318, %304 : vector<1x32xf32>
    %320 = math.exp %319 : vector<1x32xf32>
    %cst_128 = arith.constant 1.000000e+00 : f32
    %321 = vector.broadcast %cst_128 : f32 to vector<1x32xf32>
    %322 = arith.addf %321, %320 : vector<1x32xf32>
    %323 = tpu.reciprocal %322 {approx = true} : vector<1x32xf32> -> vector<1x32xf32>
    %324 = math.tanh %308 : vector<1x32xf32>
    %325 = arith.mulf %323, %324 : vector<1x32xf32>
    %326 = arith.addf %317, %325 : vector<1x32xf32>
    %cst_129 = arith.constant 0.000000e+00 : f32
    %327 = vector.broadcast %cst_129 : f32 to vector<1x32xf32>
    %328 = arith.subf %327, %310 : vector<1x32xf32>
    %329 = math.exp %328 : vector<1x32xf32>
    %cst_130 = arith.constant 1.000000e+00 : f32
    %330 = vector.broadcast %cst_130 : f32 to vector<1x32xf32>
    %331 = arith.addf %330, %329 : vector<1x32xf32>
    %332 = tpu.reciprocal %331 {approx = true} : vector<1x32xf32> -> vector<1x32xf32>
    %333 = math.tanh %326 : vector<1x32xf32>
    %334 = arith.mulf %332, %333 : vector<1x32xf32>
    %c7 = arith.constant 7 : index
    %c0_131 = arith.constant 0 : index
    %335 = vector.load %arg21[%c7, %c0_131] : memref<8x32xf32, #tpu.memory_space<vmem>>, vector<1x32xf32>
    tpu.vector_store %arg21[%c7, %c0_131], %334 {strides = array<i32>} : memref<8x32xf32, #tpu.memory_space<vmem>>, vector<1x32xf32>,
    %c0_132 = arith.constant 0 : index
    %c0_133 = arith.constant 0 : index
    %336 = vector.load %arg21[%c0_132, %c0_133] : memref<8x32xf32, #tpu.memory_space<vmem>>, vector<8x32xf32>
    %c0_134 = arith.constant 0 : index
    %c0_135 = arith.constant 0 : index
    %c0_136 = arith.constant 0 : index
    %337 = vector.load %arg4[%c0_134, %c0_135, %c0_136] : memref<4x32x16xf32, #tpu.memory_space<vmem>>, vector<1x32x16xf32>
    %338 = vector.shape_cast %337 : vector<1x32x16xf32> to vector<32x16xf32>
    %cst_137 = arith.constant dense<0.000000e+00> : vector<8x16xf32>
    %339 = tpu.matmul %336, %338, %cst_137 {dimension_numbers = #tpu.dot_dimension_numbers<[1], [0], [0], [1], [0, 0, 1, 1], [], []>} : vector<8x32xf32>, vector<32x16xf32>, vector<8x16xf32> -> vector<8x16xf32>
    %c0_138 = arith.constant 0 : index
    %c0_139 = arith.constant 0 : index
    %c0_140 = arith.constant 0 : index
    %340 = vector.load %arg6[%c0_138, %c0_139, %c0_140] : memref<4x1x16xf32, #tpu.memory_space<vmem>>, vector<1x1x16xf32>
    %341 = vector.shape_cast %340 : vector<1x1x16xf32> to vector<1x16xf32>
    %342 = vector.broadcast %341 : vector<1x16xf32> to vector<8x16xf32>
    %343 = arith.addf %339, %342 : vector<8x16xf32>
    %c1_141 = arith.constant 1 : index
    %c0_142 = arith.constant 0 : index
    %c0_143 = arith.constant 0 : index
    %344 = vector.load %arg4[%c1_141, %c0_142, %c0_143] : memref<4x32x16xf32, #tpu.memory_space<vmem>>, vector<1x32x16xf32>
    %345 = vector.shape_cast %344 : vector<1x32x16xf32> to vector<32x16xf32>
    %cst_144 = arith.constant dense<0.000000e+00> : vector<8x16xf32>
    %346 = tpu.matmul %336, %345, %cst_144 {dimension_numbers = #tpu.dot_dimension_numbers<[1], [0], [0], [1], [0, 0, 1, 1], [], []>} : vector<8x32xf32>, vector<32x16xf32>, vector<8x16xf32> -> vector<8x16xf32>
    %c1_145 = arith.constant 1 : index
    %c0_146 = arith.constant 0 : index
    %c0_147 = arith.constant 0 : index
    %347 = vector.load %arg6[%c1_145, %c0_146, %c0_147] : memref<4x1x16xf32, #tpu.memory_space<vmem>>, vector<1x1x16xf32>
    %348 = vector.shape_cast %347 : vector<1x1x16xf32> to vector<1x16xf32>
    %349 = vector.broadcast %348 : vector<1x16xf32> to vector<8x16xf32>
    %350 = arith.addf %346, %349 : vector<8x16xf32>
    %c2_148 = arith.constant 2 : index
    %c0_149 = arith.constant 0 : index
    %c0_150 = arith.constant 0 : index
    %351 = vector.load %arg4[%c2_148, %c0_149, %c0_150] : memref<4x32x16xf32, #tpu.memory_space<vmem>>, vector<1x32x16xf32>
    %352 = vector.shape_cast %351 : vector<1x32x16xf32> to vector<32x16xf32>
    %cst_151 = arith.constant dense<0.000000e+00> : vector<8x16xf32>
    %353 = tpu.matmul %336, %352, %cst_151 {dimension_numbers = #tpu.dot_dimension_numbers<[1], [0], [0], [1], [0, 0, 1, 1], [], []>} : vector<8x32xf32>, vector<32x16xf32>, vector<8x16xf32> -> vector<8x16xf32>
    %c2_152 = arith.constant 2 : index
    %c0_153 = arith.constant 0 : index
    %c0_154 = arith.constant 0 : index
    %354 = vector.load %arg6[%c2_152, %c0_153, %c0_154] : memref<4x1x16xf32, #tpu.memory_space<vmem>>, vector<1x1x16xf32>
    %355 = vector.shape_cast %354 : vector<1x1x16xf32> to vector<1x16xf32>
    %356 = vector.broadcast %355 : vector<1x16xf32> to vector<8x16xf32>
    %357 = arith.addf %353, %356 : vector<8x16xf32>
    %c3_155 = arith.constant 3 : index
    %c0_156 = arith.constant 0 : index
    %c0_157 = arith.constant 0 : index
    %358 = vector.load %arg4[%c3_155, %c0_156, %c0_157] : memref<4x32x16xf32, #tpu.memory_space<vmem>>, vector<1x32x16xf32>
    %359 = vector.shape_cast %358 : vector<1x32x16xf32> to vector<32x16xf32>
    %cst_158 = arith.constant dense<0.000000e+00> : vector<8x16xf32>
    %360 = tpu.matmul %336, %359, %cst_158 {dimension_numbers = #tpu.dot_dimension_numbers<[1], [0], [0], [1], [0, 0, 1, 1], [], []>} : vector<8x32xf32>, vector<32x16xf32>, vector<8x16xf32> -> vector<8x16xf32>
    %c3_159 = arith.constant 3 : index
    %c0_160 = arith.constant 0 : index
    %c0_161 = arith.constant 0 : index
    %361 = vector.load %arg6[%c3_159, %c0_160, %c0_161] : memref<4x1x16xf32, #tpu.memory_space<vmem>>, vector<1x1x16xf32>
    %362 = vector.shape_cast %361 : vector<1x1x16xf32> to vector<1x16xf32>
    %363 = vector.broadcast %362 : vector<1x16xf32> to vector<8x16xf32>
    %364 = arith.addf %360, %363 : vector<8x16xf32>
    %c0_162 = arith.constant 0 : index
    %c0_163 = arith.constant 0 : index
    %c0_164 = arith.constant 0 : index
    %365 = vector.load %arg5[%c0_162, %c0_163, %c0_164] : memref<4x16x16xf32, #tpu.memory_space<vmem>>, vector<1x16x16xf32>
    %366 = vector.shape_cast %365 : vector<1x16x16xf32> to vector<16x16xf32>
    %c1_165 = arith.constant 1 : index
    %c0_166 = arith.constant 0 : index
    %c0_167 = arith.constant 0 : index
    %367 = vector.load %arg5[%c1_165, %c0_166, %c0_167] : memref<4x16x16xf32, #tpu.memory_space<vmem>>, vector<1x16x16xf32>
    %368 = vector.shape_cast %367 : vector<1x16x16xf32> to vector<16x16xf32>
    %c2_168 = arith.constant 2 : index
    %c0_169 = arith.constant 0 : index
    %c0_170 = arith.constant 0 : index
    %369 = vector.load %arg5[%c2_168, %c0_169, %c0_170] : memref<4x16x16xf32, #tpu.memory_space<vmem>>, vector<1x16x16xf32>
    %370 = vector.shape_cast %369 : vector<1x16x16xf32> to vector<16x16xf32>
    %c3_171 = arith.constant 3 : index
    %c0_172 = arith.constant 0 : index
    %c0_173 = arith.constant 0 : index
    %371 = vector.load %arg5[%c3_171, %c0_172, %c0_173] : memref<4x16x16xf32, #tpu.memory_space<vmem>>, vector<1x16x16xf32>
    %372 = vector.shape_cast %371 : vector<1x16x16xf32> to vector<16x16xf32>
    %cst_174 = arith.constant 0.000000e+00 : f32
    %373 = vector.broadcast %cst_174 : f32 to vector<1x16xf32>
    %cst_175 = arith.constant 0.000000e+00 : f32
    %374 = vector.broadcast %cst_175 : f32 to vector<1x16xf32>
    %375 = vector.extract_strided_slice %343 {offsets = [0, 0], sizes = [1, 16], strides = [1, 1]} : vector<8x16xf32> to vector<1x16xf32>
    %376 = vector.extract_strided_slice %350 {offsets = [0, 0], sizes = [1, 16], strides = [1, 1]} : vector<8x16xf32> to vector<1x16xf32>
    %377 = vector.extract_strided_slice %357 {offsets = [0, 0], sizes = [1, 16], strides = [1, 1]} : vector<8x16xf32> to vector<1x16xf32>
    %378 = vector.extract_strided_slice %364 {offsets = [0, 0], sizes = [1, 16], strides = [1, 1]} : vector<8x16xf32> to vector<1x16xf32>
    %cst_176 = arith.constant dense<0.000000e+00> : vector<1x16xf32>
    %379 = tpu.matmul %373, %366, %cst_176 {dimension_numbers = #tpu.dot_dimension_numbers<[1], [0], [0], [1], [0, 0, 1, 1], [], []>} : vector<1x16xf32>, vector<16x16xf32>, vector<1x16xf32> -> vector<1x16xf32>
    %380 = arith.addf %375, %379 : vector<1x16xf32>
    %cst_177 = arith.constant dense<0.000000e+00> : vector<1x16xf32>
    %381 = tpu.matmul %373, %368, %cst_177 {dimension_numbers = #tpu.dot_dimension_numbers<[1], [0], [0], [1], [0, 0, 1, 1], [], []>} : vector<1x16xf32>, vector<16x16xf32>, vector<1x16xf32> -> vector<1x16xf32>
    %382 = arith.addf %376, %381 : vector<1x16xf32>
    %cst_178 = arith.constant dense<0.000000e+00> : vector<1x16xf32>
    %383 = tpu.matmul %373, %370, %cst_178 {dimension_numbers = #tpu.dot_dimension_numbers<[1], [0], [0], [1], [0, 0, 1, 1], [], []>} : vector<1x16xf32>, vector<16x16xf32>, vector<1x16xf32> -> vector<1x16xf32>
    %384 = arith.addf %377, %383 : vector<1x16xf32>
    %cst_179 = arith.constant dense<0.000000e+00> : vector<1x16xf32>
    %385 = tpu.matmul %373, %372, %cst_179 {dimension_numbers = #tpu.dot_dimension_numbers<[1], [0], [0], [1], [0, 0, 1, 1], [], []>} : vector<1x16xf32>, vector<16x16xf32>, vector<1x16xf32> -> vector<1x16xf32>
    %386 = arith.addf %378, %385 : vector<1x16xf32>
    %cst_180 = arith.constant 0.000000e+00 : f32
    %387 = vector.broadcast %cst_180 : f32 to vector<1x16xf32>
    %388 = arith.subf %387, %382 : vector<1x16xf32>
    %389 = math.exp %388 : vector<1x16xf32>
    %cst_181 = arith.constant 1.000000e+00 : f32
    %390 = vector.broadcast %cst_181 : f32 to vector<1x16xf32>
    %391 = arith.addf %390, %389 : vector<1x16xf32>
    %392 = tpu.reciprocal %391 {approx = true} : vector<1x16xf32> -> vector<1x16xf32>
    %393 = arith.mulf %392, %374 : vector<1x16xf32>
    %cst_182 = arith.constant 0.000000e+00 : f32
    %394 = vector.broadcast %cst_182 : f32 to vector<1x16xf32>
    %395 = arith.subf %394, %380 : vector<1x16xf32>
    %396 = math.exp %395 : vector<1x16xf32>
    %cst_183 = arith.constant 1.000000e+00 : f32
    %397 = vector.broadcast %cst_183 : f32 to vector<1x16xf32>
    %398 = arith.addf %397, %396 : vector<1x16xf32>
    %399 = tpu.reciprocal %398 {approx = true} : vector<1x16xf32> -> vector<1x16xf32>
    %400 = math.tanh %384 : vector<1x16xf32>
    %401 = arith.mulf %399, %400 : vector<1x16xf32>
    %402 = arith.addf %393, %401 : vector<1x16xf32>
    %cst_184 = arith.constant 0.000000e+00 : f32
    %403 = vector.broadcast %cst_184 : f32 to vector<1x16xf32>
    %404 = arith.subf %403, %386 : vector<1x16xf32>
    %405 = math.exp %404 : vector<1x16xf32>
    %cst_185 = arith.constant 1.000000e+00 : f32
    %406 = vector.broadcast %cst_185 : f32 to vector<1x16xf32>
    %407 = arith.addf %406, %405 : vector<1x16xf32>
    %408 = tpu.reciprocal %407 {approx = true} : vector<1x16xf32> -> vector<1x16xf32>
    %409 = math.tanh %402 : vector<1x16xf32>
    %410 = arith.mulf %408, %409 : vector<1x16xf32>
    %411 = vector.extract_strided_slice %343 {offsets = [1, 0], sizes = [1, 16], strides = [1, 1]} : vector<8x16xf32> to vector<1x16xf32>
    %412 = vector.extract_strided_slice %350 {offsets = [1, 0], sizes = [1, 16], strides = [1, 1]} : vector<8x16xf32> to vector<1x16xf32>
    %413 = vector.extract_strided_slice %357 {offsets = [1, 0], sizes = [1, 16], strides = [1, 1]} : vector<8x16xf32> to vector<1x16xf32>
    %414 = vector.extract_strided_slice %364 {offsets = [1, 0], sizes = [1, 16], strides = [1, 1]} : vector<8x16xf32> to vector<1x16xf32>
    %cst_186 = arith.constant dense<0.000000e+00> : vector<1x16xf32>
    %415 = tpu.matmul %410, %366, %cst_186 {dimension_numbers = #tpu.dot_dimension_numbers<[1], [0], [0], [1], [0, 0, 1, 1], [], []>} : vector<1x16xf32>, vector<16x16xf32>, vector<1x16xf32> -> vector<1x16xf32>
    %416 = arith.addf %411, %415 : vector<1x16xf32>
    %cst_187 = arith.constant dense<0.000000e+00> : vector<1x16xf32>
    %417 = tpu.matmul %410, %368, %cst_187 {dimension_numbers = #tpu.dot_dimension_numbers<[1], [0], [0], [1], [0, 0, 1, 1], [], []>} : vector<1x16xf32>, vector<16x16xf32>, vector<1x16xf32> -> vector<1x16xf32>
    %418 = arith.addf %412, %417 : vector<1x16xf32>
    %cst_188 = arith.constant dense<0.000000e+00> : vector<1x16xf32>
    %419 = tpu.matmul %410, %370, %cst_188 {dimension_numbers = #tpu.dot_dimension_numbers<[1], [0], [0], [1], [0, 0, 1, 1], [], []>} : vector<1x16xf32>, vector<16x16xf32>, vector<1x16xf32> -> vector<1x16xf32>
    %420 = arith.addf %413, %419 : vector<1x16xf32>
    %cst_189 = arith.constant dense<0.000000e+00> : vector<1x16xf32>
    %421 = tpu.matmul %410, %372, %cst_189 {dimension_numbers = #tpu.dot_dimension_numbers<[1], [0], [0], [1], [0, 0, 1, 1], [], []>} : vector<1x16xf32>, vector<16x16xf32>, vector<1x16xf32> -> vector<1x16xf32>
    %422 = arith.addf %414, %421 : vector<1x16xf32>
    %cst_190 = arith.constant 0.000000e+00 : f32
    %423 = vector.broadcast %cst_190 : f32 to vector<1x16xf32>
    %424 = arith.subf %423, %418 : vector<1x16xf32>
    %425 = math.exp %424 : vector<1x16xf32>
    %cst_191 = arith.constant 1.000000e+00 : f32
    %426 = vector.broadcast %cst_191 : f32 to vector<1x16xf32>
    %427 = arith.addf %426, %425 : vector<1x16xf32>
    %428 = tpu.reciprocal %427 {approx = true} : vector<1x16xf32> -> vector<1x16xf32>
    %429 = arith.mulf %428, %402 : vector<1x16xf32>
    %cst_192 = arith.constant 0.000000e+00 : f32
    %430 = vector.broadcast %cst_192 : f32 to vector<1x16xf32>
    %431 = arith.subf %430, %416 : vector<1x16xf32>
    %432 = math.exp %431 : vector<1x16xf32>
    %cst_193 = arith.constant 1.000000e+00 : f32
    %433 = vector.broadcast %cst_193 : f32 to vector<1x16xf32>
    %434 = arith.addf %433, %432 : vector<1x16xf32>
    %435 = tpu.reciprocal %434 {approx = true} : vector<1x16xf32> -> vector<1x16xf32>
    %436 = math.tanh %420 : vector<1x16xf32>
    %437 = arith.mulf %435, %436 : vector<1x16xf32>
    %438 = arith.addf %429, %437 : vector<1x16xf32>
    %cst_194 = arith.constant 0.000000e+00 : f32
    %439 = vector.broadcast %cst_194 : f32 to vector<1x16xf32>
    %440 = arith.subf %439, %422 : vector<1x16xf32>
    %441 = math.exp %440 : vector<1x16xf32>
    %cst_195 = arith.constant 1.000000e+00 : f32
    %442 = vector.broadcast %cst_195 : f32 to vector<1x16xf32>
    %443 = arith.addf %442, %441 : vector<1x16xf32>
    %444 = tpu.reciprocal %443 {approx = true} : vector<1x16xf32> -> vector<1x16xf32>
    %445 = math.tanh %438 : vector<1x16xf32>
    %446 = arith.mulf %444, %445 : vector<1x16xf32>
    %447 = vector.extract_strided_slice %343 {offsets = [2, 0], sizes = [1, 16], strides = [1, 1]} : vector<8x16xf32> to vector<1x16xf32>
    %448 = vector.extract_strided_slice %350 {offsets = [2, 0], sizes = [1, 16], strides = [1, 1]} : vector<8x16xf32> to vector<1x16xf32>
    %449 = vector.extract_strided_slice %357 {offsets = [2, 0], sizes = [1, 16], strides = [1, 1]} : vector<8x16xf32> to vector<1x16xf32>
    %450 = vector.extract_strided_slice %364 {offsets = [2, 0], sizes = [1, 16], strides = [1, 1]} : vector<8x16xf32> to vector<1x16xf32>
    %cst_196 = arith.constant dense<0.000000e+00> : vector<1x16xf32>
    %451 = tpu.matmul %446, %366, %cst_196 {dimension_numbers = #tpu.dot_dimension_numbers<[1], [0], [0], [1], [0, 0, 1, 1], [], []>} : vector<1x16xf32>, vector<16x16xf32>, vector<1x16xf32> -> vector<1x16xf32>
    %452 = arith.addf %447, %451 : vector<1x16xf32>
    %cst_197 = arith.constant dense<0.000000e+00> : vector<1x16xf32>
    %453 = tpu.matmul %446, %368, %cst_197 {dimension_numbers = #tpu.dot_dimension_numbers<[1], [0], [0], [1], [0, 0, 1, 1], [], []>} : vector<1x16xf32>, vector<16x16xf32>, vector<1x16xf32> -> vector<1x16xf32>
    %454 = arith.addf %448, %453 : vector<1x16xf32>
    %cst_198 = arith.constant dense<0.000000e+00> : vector<1x16xf32>
    %455 = tpu.matmul %446, %370, %cst_198 {dimension_numbers = #tpu.dot_dimension_numbers<[1], [0], [0], [1], [0, 0, 1, 1], [], []>} : vector<1x16xf32>, vector<16x16xf32>, vector<1x16xf32> -> vector<1x16xf32>
    %456 = arith.addf %449, %455 : vector<1x16xf32>
    %cst_199 = arith.constant dense<0.000000e+00> : vector<1x16xf32>
    %457 = tpu.matmul %446, %372, %cst_199 {dimension_numbers = #tpu.dot_dimension_numbers<[1], [0], [0], [1], [0, 0, 1, 1], [], []>} : vector<1x16xf32>, vector<16x16xf32>, vector<1x16xf32> -> vector<1x16xf32>
    %458 = arith.addf %450, %457 : vector<1x16xf32>
    %cst_200 = arith.constant 0.000000e+00 : f32
    %459 = vector.broadcast %cst_200 : f32 to vector<1x16xf32>
    %460 = arith.subf %459, %454 : vector<1x16xf32>
    %461 = math.exp %460 : vector<1x16xf32>
    %cst_201 = arith.constant 1.000000e+00 : f32
    %462 = vector.broadcast %cst_201 : f32 to vector<1x16xf32>
    %463 = arith.addf %462, %461 : vector<1x16xf32>
    %464 = tpu.reciprocal %463 {approx = true} : vector<1x16xf32> -> vector<1x16xf32>
    %465 = arith.mulf %464, %438 : vector<1x16xf32>
    %cst_202 = arith.constant 0.000000e+00 : f32
    %466 = vector.broadcast %cst_202 : f32 to vector<1x16xf32>
    %467 = arith.subf %466, %452 : vector<1x16xf32>
    %468 = math.exp %467 : vector<1x16xf32>
    %cst_203 = arith.constant 1.000000e+00 : f32
    %469 = vector.broadcast %cst_203 : f32 to vector<1x16xf32>
    %470 = arith.addf %469, %468 : vector<1x16xf32>
    %471 = tpu.reciprocal %470 {approx = true} : vector<1x16xf32> -> vector<1x16xf32>
    %472 = math.tanh %456 : vector<1x16xf32>
    %473 = arith.mulf %471, %472 : vector<1x16xf32>
    %474 = arith.addf %465, %473 : vector<1x16xf32>
    %cst_204 = arith.constant 0.000000e+00 : f32
    %475 = vector.broadcast %cst_204 : f32 to vector<1x16xf32>
    %476 = arith.subf %475, %458 : vector<1x16xf32>
    %477 = math.exp %476 : vector<1x16xf32>
    %cst_205 = arith.constant 1.000000e+00 : f32
    %478 = vector.broadcast %cst_205 : f32 to vector<1x16xf32>
    %479 = arith.addf %478, %477 : vector<1x16xf32>
    %480 = tpu.reciprocal %479 {approx = true} : vector<1x16xf32> -> vector<1x16xf32>
    %481 = math.tanh %474 : vector<1x16xf32>
    %482 = arith.mulf %480, %481 : vector<1x16xf32>
    %483 = vector.extract_strided_slice %343 {offsets = [3, 0], sizes = [1, 16], strides = [1, 1]} : vector<8x16xf32> to vector<1x16xf32>
    %484 = vector.extract_strided_slice %350 {offsets = [3, 0], sizes = [1, 16], strides = [1, 1]} : vector<8x16xf32> to vector<1x16xf32>
    %485 = vector.extract_strided_slice %357 {offsets = [3, 0], sizes = [1, 16], strides = [1, 1]} : vector<8x16xf32> to vector<1x16xf32>
    %486 = vector.extract_strided_slice %364 {offsets = [3, 0], sizes = [1, 16], strides = [1, 1]} : vector<8x16xf32> to vector<1x16xf32>
    %cst_206 = arith.constant dense<0.000000e+00> : vector<1x16xf32>
    %487 = tpu.matmul %482, %366, %cst_206 {dimension_numbers = #tpu.dot_dimension_numbers<[1], [0], [0], [1], [0, 0, 1, 1], [], []>} : vector<1x16xf32>, vector<16x16xf32>, vector<1x16xf32> -> vector<1x16xf32>
    %488 = arith.addf %483, %487 : vector<1x16xf32>
    %cst_207 = arith.constant dense<0.000000e+00> : vector<1x16xf32>
    %489 = tpu.matmul %482, %368, %cst_207 {dimension_numbers = #tpu.dot_dimension_numbers<[1], [0], [0], [1], [0, 0, 1, 1], [], []>} : vector<1x16xf32>, vector<16x16xf32>, vector<1x16xf32> -> vector<1x16xf32>
    %490 = arith.addf %484, %489 : vector<1x16xf32>
    %cst_208 = arith.constant dense<0.000000e+00> : vector<1x16xf32>
    %491 = tpu.matmul %482, %370, %cst_208 {dimension_numbers = #tpu.dot_dimension_numbers<[1], [0], [0], [1], [0, 0, 1, 1], [], []>} : vector<1x16xf32>, vector<16x16xf32>, vector<1x16xf32> -> vector<1x16xf32>
    %492 = arith.addf %485, %491 : vector<1x16xf32>
    %cst_209 = arith.constant dense<0.000000e+00> : vector<1x16xf32>
    %493 = tpu.matmul %482, %372, %cst_209 {dimension_numbers = #tpu.dot_dimension_numbers<[1], [0], [0], [1], [0, 0, 1, 1], [], []>} : vector<1x16xf32>, vector<16x16xf32>, vector<1x16xf32> -> vector<1x16xf32>
    %494 = arith.addf %486, %493 : vector<1x16xf32>
    %cst_210 = arith.constant 0.000000e+00 : f32
    %495 = vector.broadcast %cst_210 : f32 to vector<1x16xf32>
    %496 = arith.subf %495, %490 : vector<1x16xf32>
    %497 = math.exp %496 : vector<1x16xf32>
    %cst_211 = arith.constant 1.000000e+00 : f32
    %498 = vector.broadcast %cst_211 : f32 to vector<1x16xf32>
    %499 = arith.addf %498, %497 : vector<1x16xf32>
    %500 = tpu.reciprocal %499 {approx = true} : vector<1x16xf32> -> vector<1x16xf32>
    %501 = arith.mulf %500, %474 : vector<1x16xf32>
    %cst_212 = arith.constant 0.000000e+00 : f32
    %502 = vector.broadcast %cst_212 : f32 to vector<1x16xf32>
    %503 = arith.subf %502, %488 : vector<1x16xf32>
    %504 = math.exp %503 : vector<1x16xf32>
    %cst_213 = arith.constant 1.000000e+00 : f32
    %505 = vector.broadcast %cst_213 : f32 to vector<1x16xf32>
    %506 = arith.addf %505, %504 : vector<1x16xf32>
    %507 = tpu.reciprocal %506 {approx = true} : vector<1x16xf32> -> vector<1x16xf32>
    %508 = math.tanh %492 : vector<1x16xf32>
    %509 = arith.mulf %507, %508 : vector<1x16xf32>
    %510 = arith.addf %501, %509 : vector<1x16xf32>
    %cst_214 = arith.constant 0.000000e+00 : f32
    %511 = vector.broadcast %cst_214 : f32 to vector<1x16xf32>
    %512 = arith.subf %511, %494 : vector<1x16xf32>
    %513 = math.exp %512 : vector<1x16xf32>
    %cst_215 = arith.constant 1.000000e+00 : f32
    %514 = vector.broadcast %cst_215 : f32 to vector<1x16xf32>
    %515 = arith.addf %514, %513 : vector<1x16xf32>
    %516 = tpu.reciprocal %515 {approx = true} : vector<1x16xf32> -> vector<1x16xf32>
    %517 = math.tanh %510 : vector<1x16xf32>
    %518 = arith.mulf %516, %517 : vector<1x16xf32>
    %519 = vector.extract_strided_slice %343 {offsets = [4, 0], sizes = [1, 16], strides = [1, 1]} : vector<8x16xf32> to vector<1x16xf32>
    %520 = vector.extract_strided_slice %350 {offsets = [4, 0], sizes = [1, 16], strides = [1, 1]} : vector<8x16xf32> to vector<1x16xf32>
    %521 = vector.extract_strided_slice %357 {offsets = [4, 0], sizes = [1, 16], strides = [1, 1]} : vector<8x16xf32> to vector<1x16xf32>
    %522 = vector.extract_strided_slice %364 {offsets = [4, 0], sizes = [1, 16], strides = [1, 1]} : vector<8x16xf32> to vector<1x16xf32>
    %cst_216 = arith.constant dense<0.000000e+00> : vector<1x16xf32>
    %523 = tpu.matmul %518, %366, %cst_216 {dimension_numbers = #tpu.dot_dimension_numbers<[1], [0], [0], [1], [0, 0, 1, 1], [], []>} : vector<1x16xf32>, vector<16x16xf32>, vector<1x16xf32> -> vector<1x16xf32>
    %524 = arith.addf %519, %523 : vector<1x16xf32>
    %cst_217 = arith.constant dense<0.000000e+00> : vector<1x16xf32>
    %525 = tpu.matmul %518, %368, %cst_217 {dimension_numbers = #tpu.dot_dimension_numbers<[1], [0], [0], [1], [0, 0, 1, 1], [], []>} : vector<1x16xf32>, vector<16x16xf32>, vector<1x16xf32> -> vector<1x16xf32>
    %526 = arith.addf %520, %525 : vector<1x16xf32>
    %cst_218 = arith.constant dense<0.000000e+00> : vector<1x16xf32>
    %527 = tpu.matmul %518, %370, %cst_218 {dimension_numbers = #tpu.dot_dimension_numbers<[1], [0], [0], [1], [0, 0, 1, 1], [], []>} : vector<1x16xf32>, vector<16x16xf32>, vector<1x16xf32> -> vector<1x16xf32>
    %528 = arith.addf %521, %527 : vector<1x16xf32>
    %cst_219 = arith.constant dense<0.000000e+00> : vector<1x16xf32>
    %529 = tpu.matmul %518, %372, %cst_219 {dimension_numbers = #tpu.dot_dimension_numbers<[1], [0], [0], [1], [0, 0, 1, 1], [], []>} : vector<1x16xf32>, vector<16x16xf32>, vector<1x16xf32> -> vector<1x16xf32>
    %530 = arith.addf %522, %529 : vector<1x16xf32>
    %cst_220 = arith.constant 0.000000e+00 : f32
    %531 = vector.broadcast %cst_220 : f32 to vector<1x16xf32>
    %532 = arith.subf %531, %526 : vector<1x16xf32>
    %533 = math.exp %532 : vector<1x16xf32>
    %cst_221 = arith.constant 1.000000e+00 : f32
    %534 = vector.broadcast %cst_221 : f32 to vector<1x16xf32>
    %535 = arith.addf %534, %533 : vector<1x16xf32>
    %536 = tpu.reciprocal %535 {approx = true} : vector<1x16xf32> -> vector<1x16xf32>
    %537 = arith.mulf %536, %510 : vector<1x16xf32>
    %cst_222 = arith.constant 0.000000e+00 : f32
    %538 = vector.broadcast %cst_222 : f32 to vector<1x16xf32>
    %539 = arith.subf %538, %524 : vector<1x16xf32>
    %540 = math.exp %539 : vector<1x16xf32>
    %cst_223 = arith.constant 1.000000e+00 : f32
    %541 = vector.broadcast %cst_223 : f32 to vector<1x16xf32>
    %542 = arith.addf %541, %540 : vector<1x16xf32>
    %543 = tpu.reciprocal %542 {approx = true} : vector<1x16xf32> -> vector<1x16xf32>
    %544 = math.tanh %528 : vector<1x16xf32>
    %545 = arith.mulf %543, %544 : vector<1x16xf32>
    %546 = arith.addf %537, %545 : vector<1x16xf32>
    %cst_224 = arith.constant 0.000000e+00 : f32
    %547 = vector.broadcast %cst_224 : f32 to vector<1x16xf32>
    %548 = arith.subf %547, %530 : vector<1x16xf32>
    %549 = math.exp %548 : vector<1x16xf32>
    %cst_225 = arith.constant 1.000000e+00 : f32
    %550 = vector.broadcast %cst_225 : f32 to vector<1x16xf32>
    %551 = arith.addf %550, %549 : vector<1x16xf32>
    %552 = tpu.reciprocal %551 {approx = true} : vector<1x16xf32> -> vector<1x16xf32>
    %553 = math.tanh %546 : vector<1x16xf32>
    %554 = arith.mulf %552, %553 : vector<1x16xf32>
    %555 = vector.extract_strided_slice %343 {offsets = [5, 0], sizes = [1, 16], strides = [1, 1]} : vector<8x16xf32> to vector<1x16xf32>
    %556 = vector.extract_strided_slice %350 {offsets = [5, 0], sizes = [1, 16], strides = [1, 1]} : vector<8x16xf32> to vector<1x16xf32>
    %557 = vector.extract_strided_slice %357 {offsets = [5, 0], sizes = [1, 16], strides = [1, 1]} : vector<8x16xf32> to vector<1x16xf32>
    %558 = vector.extract_strided_slice %364 {offsets = [5, 0], sizes = [1, 16], strides = [1, 1]} : vector<8x16xf32> to vector<1x16xf32>
    %cst_226 = arith.constant dense<0.000000e+00> : vector<1x16xf32>
    %559 = tpu.matmul %554, %366, %cst_226 {dimension_numbers = #tpu.dot_dimension_numbers<[1], [0], [0], [1], [0, 0, 1, 1], [], []>} : vector<1x16xf32>, vector<16x16xf32>, vector<1x16xf32> -> vector<1x16xf32>
    %560 = arith.addf %555, %559 : vector<1x16xf32>
    %cst_227 = arith.constant dense<0.000000e+00> : vector<1x16xf32>
    %561 = tpu.matmul %554, %368, %cst_227 {dimension_numbers = #tpu.dot_dimension_numbers<[1], [0], [0], [1], [0, 0, 1, 1], [], []>} : vector<1x16xf32>, vector<16x16xf32>, vector<1x16xf32> -> vector<1x16xf32>
    %562 = arith.addf %556, %561 : vector<1x16xf32>
    %cst_228 = arith.constant dense<0.000000e+00> : vector<1x16xf32>
    %563 = tpu.matmul %554, %370, %cst_228 {dimension_numbers = #tpu.dot_dimension_numbers<[1], [0], [0], [1], [0, 0, 1, 1], [], []>} : vector<1x16xf32>, vector<16x16xf32>, vector<1x16xf32> -> vector<1x16xf32>
    %564 = arith.addf %557, %563 : vector<1x16xf32>
    %cst_229 = arith.constant dense<0.000000e+00> : vector<1x16xf32>
    %565 = tpu.matmul %554, %372, %cst_229 {dimension_numbers = #tpu.dot_dimension_numbers<[1], [0], [0], [1], [0, 0, 1, 1], [], []>} : vector<1x16xf32>, vector<16x16xf32>, vector<1x16xf32> -> vector<1x16xf32>
    %566 = arith.addf %558, %565 : vector<1x16xf32>
    %cst_230 = arith.constant 0.000000e+00 : f32
    %567 = vector.broadcast %cst_230 : f32 to vector<1x16xf32>
    %568 = arith.subf %567, %562 : vector<1x16xf32>
    %569 = math.exp %568 : vector<1x16xf32>
    %cst_231 = arith.constant 1.000000e+00 : f32
    %570 = vector.broadcast %cst_231 : f32 to vector<1x16xf32>
    %571 = arith.addf %570, %569 : vector<1x16xf32>
    %572 = tpu.reciprocal %571 {approx = true} : vector<1x16xf32> -> vector<1x16xf32>
    %573 = arith.mulf %572, %546 : vector<1x16xf32>
    %cst_232 = arith.constant 0.000000e+00 : f32
    %574 = vector.broadcast %cst_232 : f32 to vector<1x16xf32>
    %575 = arith.subf %574, %560 : vector<1x16xf32>
    %576 = math.exp %575 : vector<1x16xf32>
    %cst_233 = arith.constant 1.000000e+00 : f32
    %577 = vector.broadcast %cst_233 : f32 to vector<1x16xf32>
    %578 = arith.addf %577, %576 : vector<1x16xf32>
    %579 = tpu.reciprocal %578 {approx = true} : vector<1x16xf32> -> vector<1x16xf32>
    %580 = math.tanh %564 : vector<1x16xf32>
    %581 = arith.mulf %579, %580 : vector<1x16xf32>
    %582 = arith.addf %573, %581 : vector<1x16xf32>
    %cst_234 = arith.constant 0.000000e+00 : f32
    %583 = vector.broadcast %cst_234 : f32 to vector<1x16xf32>
    %584 = arith.subf %583, %566 : vector<1x16xf32>
    %585 = math.exp %584 : vector<1x16xf32>
    %cst_235 = arith.constant 1.000000e+00 : f32
    %586 = vector.broadcast %cst_235 : f32 to vector<1x16xf32>
    %587 = arith.addf %586, %585 : vector<1x16xf32>
    %588 = tpu.reciprocal %587 {approx = true} : vector<1x16xf32> -> vector<1x16xf32>
    %589 = math.tanh %582 : vector<1x16xf32>
    %590 = arith.mulf %588, %589 : vector<1x16xf32>
    %591 = vector.extract_strided_slice %343 {offsets = [6, 0], sizes = [1, 16], strides = [1, 1]} : vector<8x16xf32> to vector<1x16xf32>
    %592 = vector.extract_strided_slice %350 {offsets = [6, 0], sizes = [1, 16], strides = [1, 1]} : vector<8x16xf32> to vector<1x16xf32>
    %593 = vector.extract_strided_slice %357 {offsets = [6, 0], sizes = [1, 16], strides = [1, 1]} : vector<8x16xf32> to vector<1x16xf32>
    %594 = vector.extract_strided_slice %364 {offsets = [6, 0], sizes = [1, 16], strides = [1, 1]} : vector<8x16xf32> to vector<1x16xf32>
    %cst_236 = arith.constant dense<0.000000e+00> : vector<1x16xf32>
    %595 = tpu.matmul %590, %366, %cst_236 {dimension_numbers = #tpu.dot_dimension_numbers<[1], [0], [0], [1], [0, 0, 1, 1], [], []>} : vector<1x16xf32>, vector<16x16xf32>, vector<1x16xf32> -> vector<1x16xf32>
    %596 = arith.addf %591, %595 : vector<1x16xf32>
    %cst_237 = arith.constant dense<0.000000e+00> : vector<1x16xf32>
    %597 = tpu.matmul %590, %368, %cst_237 {dimension_numbers = #tpu.dot_dimension_numbers<[1], [0], [0], [1], [0, 0, 1, 1], [], []>} : vector<1x16xf32>, vector<16x16xf32>, vector<1x16xf32> -> vector<1x16xf32>
    %598 = arith.addf %592, %597 : vector<1x16xf32>
    %cst_238 = arith.constant dense<0.000000e+00> : vector<1x16xf32>
    %599 = tpu.matmul %590, %370, %cst_238 {dimension_numbers = #tpu.dot_dimension_numbers<[1], [0], [0], [1], [0, 0, 1, 1], [], []>} : vector<1x16xf32>, vector<16x16xf32>, vector<1x16xf32> -> vector<1x16xf32>
    %600 = arith.addf %593, %599 : vector<1x16xf32>
    %cst_239 = arith.constant dense<0.000000e+00> : vector<1x16xf32>
    %601 = tpu.matmul %590, %372, %cst_239 {dimension_numbers = #tpu.dot_dimension_numbers<[1], [0], [0], [1], [0, 0, 1, 1], [], []>} : vector<1x16xf32>, vector<16x16xf32>, vector<1x16xf32> -> vector<1x16xf32>
    %602 = arith.addf %594, %601 : vector<1x16xf32>
    %cst_240 = arith.constant 0.000000e+00 : f32
    %603 = vector.broadcast %cst_240 : f32 to vector<1x16xf32>
    %604 = arith.subf %603, %598 : vector<1x16xf32>
    %605 = math.exp %604 : vector<1x16xf32>
    %cst_241 = arith.constant 1.000000e+00 : f32
    %606 = vector.broadcast %cst_241 : f32 to vector<1x16xf32>
    %607 = arith.addf %606, %605 : vector<1x16xf32>
    %608 = tpu.reciprocal %607 {approx = true} : vector<1x16xf32> -> vector<1x16xf32>
    %609 = arith.mulf %608, %582 : vector<1x16xf32>
    %cst_242 = arith.constant 0.000000e+00 : f32
    %610 = vector.broadcast %cst_242 : f32 to vector<1x16xf32>
    %611 = arith.subf %610, %596 : vector<1x16xf32>
    %612 = math.exp %611 : vector<1x16xf32>
    %cst_243 = arith.constant 1.000000e+00 : f32
    %613 = vector.broadcast %cst_243 : f32 to vector<1x16xf32>
    %614 = arith.addf %613, %612 : vector<1x16xf32>
    %615 = tpu.reciprocal %614 {approx = true} : vector<1x16xf32> -> vector<1x16xf32>
    %616 = math.tanh %600 : vector<1x16xf32>
    %617 = arith.mulf %615, %616 : vector<1x16xf32>
    %618 = arith.addf %609, %617 : vector<1x16xf32>
    %cst_244 = arith.constant 0.000000e+00 : f32
    %619 = vector.broadcast %cst_244 : f32 to vector<1x16xf32>
    %620 = arith.subf %619, %602 : vector<1x16xf32>
    %621 = math.exp %620 : vector<1x16xf32>
    %cst_245 = arith.constant 1.000000e+00 : f32
    %622 = vector.broadcast %cst_245 : f32 to vector<1x16xf32>
    %623 = arith.addf %622, %621 : vector<1x16xf32>
    %624 = tpu.reciprocal %623 {approx = true} : vector<1x16xf32> -> vector<1x16xf32>
    %625 = math.tanh %618 : vector<1x16xf32>
    %626 = arith.mulf %624, %625 : vector<1x16xf32>
    %627 = vector.extract_strided_slice %343 {offsets = [7, 0], sizes = [1, 16], strides = [1, 1]} : vector<8x16xf32> to vector<1x16xf32>
    %628 = vector.extract_strided_slice %350 {offsets = [7, 0], sizes = [1, 16], strides = [1, 1]} : vector<8x16xf32> to vector<1x16xf32>
    %629 = vector.extract_strided_slice %357 {offsets = [7, 0], sizes = [1, 16], strides = [1, 1]} : vector<8x16xf32> to vector<1x16xf32>
    %630 = vector.extract_strided_slice %364 {offsets = [7, 0], sizes = [1, 16], strides = [1, 1]} : vector<8x16xf32> to vector<1x16xf32>
    %cst_246 = arith.constant dense<0.000000e+00> : vector<1x16xf32>
    %631 = tpu.matmul %626, %366, %cst_246 {dimension_numbers = #tpu.dot_dimension_numbers<[1], [0], [0], [1], [0, 0, 1, 1], [], []>} : vector<1x16xf32>, vector<16x16xf32>, vector<1x16xf32> -> vector<1x16xf32>
    %632 = arith.addf %627, %631 : vector<1x16xf32>
    %cst_247 = arith.constant dense<0.000000e+00> : vector<1x16xf32>
    %633 = tpu.matmul %626, %368, %cst_247 {dimension_numbers = #tpu.dot_dimension_numbers<[1], [0], [0], [1], [0, 0, 1, 1], [], []>} : vector<1x16xf32>, vector<16x16xf32>, vector<1x16xf32> -> vector<1x16xf32>
    %634 = arith.addf %628, %633 : vector<1x16xf32>
    %cst_248 = arith.constant dense<0.000000e+00> : vector<1x16xf32>
    %635 = tpu.matmul %626, %370, %cst_248 {dimension_numbers = #tpu.dot_dimension_numbers<[1], [0], [0], [1], [0, 0, 1, 1], [], []>} : vector<1x16xf32>, vector<16x16xf32>, vector<1x16xf32> -> vector<1x16xf32>
    %636 = arith.addf %629, %635 : vector<1x16xf32>
    %cst_249 = arith.constant dense<0.000000e+00> : vector<1x16xf32>
    %637 = tpu.matmul %626, %372, %cst_249 {dimension_numbers = #tpu.dot_dimension_numbers<[1], [0], [0], [1], [0, 0, 1, 1], [], []>} : vector<1x16xf32>, vector<16x16xf32>, vector<1x16xf32> -> vector<1x16xf32>
    %638 = arith.addf %630, %637 : vector<1x16xf32>
    %cst_250 = arith.constant 0.000000e+00 : f32
    %639 = vector.broadcast %cst_250 : f32 to vector<1x16xf32>
    %640 = arith.subf %639, %634 : vector<1x16xf32>
    %641 = math.exp %640 : vector<1x16xf32>
    %cst_251 = arith.constant 1.000000e+00 : f32
    %642 = vector.broadcast %cst_251 : f32 to vector<1x16xf32>
    %643 = arith.addf %642, %641 : vector<1x16xf32>
    %644 = tpu.reciprocal %643 {approx = true} : vector<1x16xf32> -> vector<1x16xf32>
    %645 = arith.mulf %644, %618 : vector<1x16xf32>
    %cst_252 = arith.constant 0.000000e+00 : f32
    %646 = vector.broadcast %cst_252 : f32 to vector<1x16xf32>
    %647 = arith.subf %646, %632 : vector<1x16xf32>
    %648 = math.exp %647 : vector<1x16xf32>
    %cst_253 = arith.constant 1.000000e+00 : f32
    %649 = vector.broadcast %cst_253 : f32 to vector<1x16xf32>
    %650 = arith.addf %649, %648 : vector<1x16xf32>
    %651 = tpu.reciprocal %650 {approx = true} : vector<1x16xf32> -> vector<1x16xf32>
    %652 = math.tanh %636 : vector<1x16xf32>
    %653 = arith.mulf %651, %652 : vector<1x16xf32>
    %654 = arith.addf %645, %653 : vector<1x16xf32>
    %cst_254 = arith.constant 0.000000e+00 : f32
    %655 = vector.broadcast %cst_254 : f32 to vector<1x16xf32>
    %656 = arith.subf %655, %638 : vector<1x16xf32>
    %657 = math.exp %656 : vector<1x16xf32>
    %cst_255 = arith.constant 1.000000e+00 : f32
    %658 = vector.broadcast %cst_255 : f32 to vector<1x16xf32>
    %659 = arith.addf %658, %657 : vector<1x16xf32>
    %660 = tpu.reciprocal %659 {approx = true} : vector<1x16xf32> -> vector<1x16xf32>
    %661 = math.tanh %654 : vector<1x16xf32>
    %662 = arith.mulf %660, %661 : vector<1x16xf32>
    %c0_256 = arith.constant 0 : index
    %c0_257 = arith.constant 0 : index
    %c0_258 = arith.constant 0 : index
    %663 = vector.load %arg7[%c0_256, %c0_257, %c0_258] : memref<4x16x32xf32, #tpu.memory_space<vmem>>, vector<1x16x32xf32>
    %664 = vector.shape_cast %663 : vector<1x16x32xf32> to vector<16x32xf32>
    %cst_259 = arith.constant dense<0.000000e+00> : vector<1x32xf32>
    %665 = tpu.matmul %662, %664, %cst_259 {dimension_numbers = #tpu.dot_dimension_numbers<[1], [0], [0], [1], [0, 0, 1, 1], [], []>} : vector<1x16xf32>, vector<16x32xf32>, vector<1x32xf32> -> vector<1x32xf32>
    %c0_260 = arith.constant 0 : index
    %c0_261 = arith.constant 0 : index
    %c0_262 = arith.constant 0 : index
    %666 = vector.load %arg9[%c0_260, %c0_261, %c0_262] : memref<4x1x32xf32, #tpu.memory_space<vmem>>, vector<1x1x32xf32>
    %667 = vector.shape_cast %666 : vector<1x1x32xf32> to vector<1x32xf32>
    %668 = arith.addf %665, %667 : vector<1x32xf32>
    %c1_263 = arith.constant 1 : index
    %c0_264 = arith.constant 0 : index
    %c0_265 = arith.constant 0 : index
    %669 = vector.load %arg7[%c1_263, %c0_264, %c0_265] : memref<4x16x32xf32, #tpu.memory_space<vmem>>, vector<1x16x32xf32>
    %670 = vector.shape_cast %669 : vector<1x16x32xf32> to vector<16x32xf32>
    %cst_266 = arith.constant dense<0.000000e+00> : vector<1x32xf32>
    %671 = tpu.matmul %662, %670, %cst_266 {dimension_numbers = #tpu.dot_dimension_numbers<[1], [0], [0], [1], [0, 0, 1, 1], [], []>} : vector<1x16xf32>, vector<16x32xf32>, vector<1x32xf32> -> vector<1x32xf32>
    %c1_267 = arith.constant 1 : index
    %c0_268 = arith.constant 0 : index
    %c0_269 = arith.constant 0 : index
    %672 = vector.load %arg9[%c1_267, %c0_268, %c0_269] : memref<4x1x32xf32, #tpu.memory_space<vmem>>, vector<1x1x32xf32>
    %673 = vector.shape_cast %672 : vector<1x1x32xf32> to vector<1x32xf32>
    %674 = arith.addf %671, %673 : vector<1x32xf32>
    %c2_270 = arith.constant 2 : index
    %c0_271 = arith.constant 0 : index
    %c0_272 = arith.constant 0 : index
    %675 = vector.load %arg7[%c2_270, %c0_271, %c0_272] : memref<4x16x32xf32, #tpu.memory_space<vmem>>, vector<1x16x32xf32>
    %676 = vector.shape_cast %675 : vector<1x16x32xf32> to vector<16x32xf32>
    %cst_273 = arith.constant dense<0.000000e+00> : vector<1x32xf32>
    %677 = tpu.matmul %662, %676, %cst_273 {dimension_numbers = #tpu.dot_dimension_numbers<[1], [0], [0], [1], [0, 0, 1, 1], [], []>} : vector<1x16xf32>, vector<16x32xf32>, vector<1x32xf32> -> vector<1x32xf32>
    %c2_274 = arith.constant 2 : index
    %c0_275 = arith.constant 0 : index
    %c0_276 = arith.constant 0 : index
    %678 = vector.load %arg9[%c2_274, %c0_275, %c0_276] : memref<4x1x32xf32, #tpu.memory_space<vmem>>, vector<1x1x32xf32>
    %679 = vector.shape_cast %678 : vector<1x1x32xf32> to vector<1x32xf32>
    %680 = arith.addf %677, %679 : vector<1x32xf32>
    %c3_277 = arith.constant 3 : index
    %c0_278 = arith.constant 0 : index
    %c0_279 = arith.constant 0 : index
    %681 = vector.load %arg7[%c3_277, %c0_278, %c0_279] : memref<4x16x32xf32, #tpu.memory_space<vmem>>, vector<1x16x32xf32>
    %682 = vector.shape_cast %681 : vector<1x16x32xf32> to vector<16x32xf32>
    %cst_280 = arith.constant dense<0.000000e+00> : vector<1x32xf32>
    %683 = tpu.matmul %662, %682, %cst_280 {dimension_numbers = #tpu.dot_dimension_numbers<[1], [0], [0], [1], [0, 0, 1, 1], [], []>} : vector<1x16xf32>, vector<16x32xf32>, vector<1x32xf32> -> vector<1x32xf32>
    %c3_281 = arith.constant 3 : index
    %c0_282 = arith.constant 0 : index
    %c0_283 = arith.constant 0 : index
    %684 = vector.load %arg9[%c3_281, %c0_282, %c0_283] : memref<4x1x32xf32, #tpu.memory_space<vmem>>, vector<1x1x32xf32>
    %685 = vector.shape_cast %684 : vector<1x1x32xf32> to vector<1x32xf32>
    %686 = arith.addf %683, %685 : vector<1x32xf32>
    %c0_284 = arith.constant 0 : index
    %c0_285 = arith.constant 0 : index
    %c0_286 = arith.constant 0 : index
    %687 = vector.load %arg8[%c0_284, %c0_285, %c0_286] : memref<4x32x32xf32, #tpu.memory_space<vmem>>, vector<1x32x32xf32>
    %688 = vector.shape_cast %687 : vector<1x32x32xf32> to vector<32x32xf32>
    %c1_287 = arith.constant 1 : index
    %c0_288 = arith.constant 0 : index
    %c0_289 = arith.constant 0 : index
    %689 = vector.load %arg8[%c1_287, %c0_288, %c0_289] : memref<4x32x32xf32, #tpu.memory_space<vmem>>, vector<1x32x32xf32>
    %690 = vector.shape_cast %689 : vector<1x32x32xf32> to vector<32x32xf32>
    %c2_290 = arith.constant 2 : index
    %c0_291 = arith.constant 0 : index
    %c0_292 = arith.constant 0 : index
    %691 = vector.load %arg8[%c2_290, %c0_291, %c0_292] : memref<4x32x32xf32, #tpu.memory_space<vmem>>, vector<1x32x32xf32>
    %692 = vector.shape_cast %691 : vector<1x32x32xf32> to vector<32x32xf32>
    %c3_293 = arith.constant 3 : index
    %c0_294 = arith.constant 0 : index
    %c0_295 = arith.constant 0 : index
    %693 = vector.load %arg8[%c3_293, %c0_294, %c0_295] : memref<4x32x32xf32, #tpu.memory_space<vmem>>, vector<1x32x32xf32>
    %694 = vector.shape_cast %693 : vector<1x32x32xf32> to vector<32x32xf32>
    %cst_296 = arith.constant 0.000000e+00 : f32
    %695 = vector.broadcast %cst_296 : f32 to vector<1x32xf32>
    %cst_297 = arith.constant 0.000000e+00 : f32
    %696 = vector.broadcast %cst_297 : f32 to vector<1x32xf32>
    %cst_298 = arith.constant dense<0.000000e+00> : vector<1x32xf32>
    %697 = tpu.matmul %695, %688, %cst_298 {dimension_numbers = #tpu.dot_dimension_numbers<[1], [0], [0], [1], [0, 0, 1, 1], [], []>} : vector<1x32xf32>, vector<32x32xf32>, vector<1x32xf32> -> vector<1x32xf32>
    %698 = arith.addf %668, %697 : vector<1x32xf32>
    %cst_299 = arith.constant dense<0.000000e+00> : vector<1x32xf32>
    %699 = tpu.matmul %695, %690, %cst_299 {dimension_numbers = #tpu.dot_dimension_numbers<[1], [0], [0], [1], [0, 0, 1, 1], [], []>} : vector<1x32xf32>, vector<32x32xf32>, vector<1x32xf32> -> vector<1x32xf32>
    %700 = arith.addf %674, %699 : vector<1x32xf32>
    %cst_300 = arith.constant dense<0.000000e+00> : vector<1x32xf32>
    %701 = tpu.matmul %695, %692, %cst_300 {dimension_numbers = #tpu.dot_dimension_numbers<[1], [0], [0], [1], [0, 0, 1, 1], [], []>} : vector<1x32xf32>, vector<32x32xf32>, vector<1x32xf32> -> vector<1x32xf32>
    %702 = arith.addf %680, %701 : vector<1x32xf32>
    %cst_301 = arith.constant dense<0.000000e+00> : vector<1x32xf32>
    %703 = tpu.matmul %695, %694, %cst_301 {dimension_numbers = #tpu.dot_dimension_numbers<[1], [0], [0], [1], [0, 0, 1, 1], [], []>} : vector<1x32xf32>, vector<32x32xf32>, vector<1x32xf32> -> vector<1x32xf32>
    %704 = arith.addf %686, %703 : vector<1x32xf32>
    %cst_302 = arith.constant 0.000000e+00 : f32
    %705 = vector.broadcast %cst_302 : f32 to vector<1x32xf32>
    %706 = arith.subf %705, %700 : vector<1x32xf32>
    %707 = math.exp %706 : vector<1x32xf32>
    %cst_303 = arith.constant 1.000000e+00 : f32
    %708 = vector.broadcast %cst_303 : f32 to vector<1x32xf32>
    %709 = arith.addf %708, %707 : vector<1x32xf32>
    %710 = tpu.reciprocal %709 {approx = true} : vector<1x32xf32> -> vector<1x32xf32>
    %711 = arith.mulf %710, %696 : vector<1x32xf32>
    %cst_304 = arith.constant 0.000000e+00 : f32
    %712 = vector.broadcast %cst_304 : f32 to vector<1x32xf32>
    %713 = arith.subf %712, %698 : vector<1x32xf32>
    %714 = math.exp %713 : vector<1x32xf32>
    %cst_305 = arith.constant 1.000000e+00 : f32
    %715 = vector.broadcast %cst_305 : f32 to vector<1x32xf32>
    %716 = arith.addf %715, %714 : vector<1x32xf32>
    %717 = tpu.reciprocal %716 {approx = true} : vector<1x32xf32> -> vector<1x32xf32>
    %718 = math.tanh %702 : vector<1x32xf32>
    %719 = arith.mulf %717, %718 : vector<1x32xf32>
    %720 = arith.addf %711, %719 : vector<1x32xf32>
    %cst_306 = arith.constant 0.000000e+00 : f32
    %721 = vector.broadcast %cst_306 : f32 to vector<1x32xf32>
    %722 = arith.subf %721, %704 : vector<1x32xf32>
    %723 = math.exp %722 : vector<1x32xf32>
    %cst_307 = arith.constant 1.000000e+00 : f32
    %724 = vector.broadcast %cst_307 : f32 to vector<1x32xf32>
    %725 = arith.addf %724, %723 : vector<1x32xf32>
    %726 = tpu.reciprocal %725 {approx = true} : vector<1x32xf32> -> vector<1x32xf32>
    %727 = math.tanh %720 : vector<1x32xf32>
    %728 = arith.mulf %726, %727 : vector<1x32xf32>
    %c0_308 = arith.constant 0 : index
    %c0_309 = arith.constant 0 : index
    %729 = vector.load %arg22[%c0_308, %c0_309] : memref<8x32xf32, #tpu.memory_space<vmem>>, vector<1x32xf32>
    tpu.vector_store %arg22[%c0_308, %c0_309], %728 {strides = array<i32>} : memref<8x32xf32, #tpu.memory_space<vmem>>, vector<1x32xf32>,
    %cst_310 = arith.constant dense<0.000000e+00> : vector<1x32xf32>
    %730 = tpu.matmul %728, %688, %cst_310 {dimension_numbers = #tpu.dot_dimension_numbers<[1], [0], [0], [1], [0, 0, 1, 1], [], []>} : vector<1x32xf32>, vector<32x32xf32>, vector<1x32xf32> -> vector<1x32xf32>
    %731 = arith.addf %668, %730 : vector<1x32xf32>
    %cst_311 = arith.constant dense<0.000000e+00> : vector<1x32xf32>
    %732 = tpu.matmul %728, %690, %cst_311 {dimension_numbers = #tpu.dot_dimension_numbers<[1], [0], [0], [1], [0, 0, 1, 1], [], []>} : vector<1x32xf32>, vector<32x32xf32>, vector<1x32xf32> -> vector<1x32xf32>
    %733 = arith.addf %674, %732 : vector<1x32xf32>
    %cst_312 = arith.constant dense<0.000000e+00> : vector<1x32xf32>
    %734 = tpu.matmul %728, %692, %cst_312 {dimension_numbers = #tpu.dot_dimension_numbers<[1], [0], [0], [1], [0, 0, 1, 1], [], []>} : vector<1x32xf32>, vector<32x32xf32>, vector<1x32xf32> -> vector<1x32xf32>
    %735 = arith.addf %680, %734 : vector<1x32xf32>
    %cst_313 = arith.constant dense<0.000000e+00> : vector<1x32xf32>
    %736 = tpu.matmul %728, %694, %cst_313 {dimension_numbers = #tpu.dot_dimension_numbers<[1], [0], [0], [1], [0, 0, 1, 1], [], []>} : vector<1x32xf32>, vector<32x32xf32>, vector<1x32xf32> -> vector<1x32xf32>
    %737 = arith.addf %686, %736 : vector<1x32xf32>
    %cst_314 = arith.constant 0.000000e+00 : f32
    %738 = vector.broadcast %cst_314 : f32 to vector<1x32xf32>
    %739 = arith.subf %738, %733 : vector<1x32xf32>
    %740 = math.exp %739 : vector<1x32xf32>
    %cst_315 = arith.constant 1.000000e+00 : f32
    %741 = vector.broadcast %cst_315 : f32 to vector<1x32xf32>
    %742 = arith.addf %741, %740 : vector<1x32xf32>
    %743 = tpu.reciprocal %742 {approx = true} : vector<1x32xf32> -> vector<1x32xf32>
    %744 = arith.mulf %743, %720 : vector<1x32xf32>
    %cst_316 = arith.constant 0.000000e+00 : f32
    %745 = vector.broadcast %cst_316 : f32 to vector<1x32xf32>
    %746 = arith.subf %745, %731 : vector<1x32xf32>
    %747 = math.exp %746 : vector<1x32xf32>
    %cst_317 = arith.constant 1.000000e+00 : f32
    %748 = vector.broadcast %cst_317 : f32 to vector<1x32xf32>
    %749 = arith.addf %748, %747 : vector<1x32xf32>
    %750 = tpu.reciprocal %749 {approx = true} : vector<1x32xf32> -> vector<1x32xf32>
    %751 = math.tanh %735 : vector<1x32xf32>
    %752 = arith.mulf %750, %751 : vector<1x32xf32>
    %753 = arith.addf %744, %752 : vector<1x32xf32>
    %cst_318 = arith.constant 0.000000e+00 : f32
    %754 = vector.broadcast %cst_318 : f32 to vector<1x32xf32>
    %755 = arith.subf %754, %737 : vector<1x32xf32>
    %756 = math.exp %755 : vector<1x32xf32>
    %cst_319 = arith.constant 1.000000e+00 : f32
    %757 = vector.broadcast %cst_319 : f32 to vector<1x32xf32>
    %758 = arith.addf %757, %756 : vector<1x32xf32>
    %759 = tpu.reciprocal %758 {approx = true} : vector<1x32xf32> -> vector<1x32xf32>
    %760 = math.tanh %753 : vector<1x32xf32>
    %761 = arith.mulf %759, %760 : vector<1x32xf32>
    %c1_320 = arith.constant 1 : index
    %c0_321 = arith.constant 0 : index
    %762 = vector.load %arg22[%c1_320, %c0_321] : memref<8x32xf32, #tpu.memory_space<vmem>>, vector<1x32xf32>
    tpu.vector_store %arg22[%c1_320, %c0_321], %761 {strides = array<i32>} : memref<8x32xf32, #tpu.memory_space<vmem>>, vector<1x32xf32>,
    %cst_322 = arith.constant dense<0.000000e+00> : vector<1x32xf32>
    %763 = tpu.matmul %761, %688, %cst_322 {dimension_numbers = #tpu.dot_dimension_numbers<[1], [0], [0], [1], [0, 0, 1, 1], [], []>} : vector<1x32xf32>, vector<32x32xf32>, vector<1x32xf32> -> vector<1x32xf32>
    %764 = arith.addf %668, %763 : vector<1x32xf32>
    %cst_323 = arith.constant dense<0.000000e+00> : vector<1x32xf32>
    %765 = tpu.matmul %761, %690, %cst_323 {dimension_numbers = #tpu.dot_dimension_numbers<[1], [0], [0], [1], [0, 0, 1, 1], [], []>} : vector<1x32xf32>, vector<32x32xf32>, vector<1x32xf32> -> vector<1x32xf32>
    %766 = arith.addf %674, %765 : vector<1x32xf32>
    %cst_324 = arith.constant dense<0.000000e+00> : vector<1x32xf32>
    %767 = tpu.matmul %761, %692, %cst_324 {dimension_numbers = #tpu.dot_dimension_numbers<[1], [0], [0], [1], [0, 0, 1, 1], [], []>} : vector<1x32xf32>, vector<32x32xf32>, vector<1x32xf32> -> vector<1x32xf32>
    %768 = arith.addf %680, %767 : vector<1x32xf32>
    %cst_325 = arith.constant dense<0.000000e+00> : vector<1x32xf32>
    %769 = tpu.matmul %761, %694, %cst_325 {dimension_numbers = #tpu.dot_dimension_numbers<[1], [0], [0], [1], [0, 0, 1, 1], [], []>} : vector<1x32xf32>, vector<32x32xf32>, vector<1x32xf32> -> vector<1x32xf32>
    %770 = arith.addf %686, %769 : vector<1x32xf32>
    %cst_326 = arith.constant 0.000000e+00 : f32
    %771 = vector.broadcast %cst_326 : f32 to vector<1x32xf32>
    %772 = arith.subf %771, %766 : vector<1x32xf32>
    %773 = math.exp %772 : vector<1x32xf32>
    %cst_327 = arith.constant 1.000000e+00 : f32
    %774 = vector.broadcast %cst_327 : f32 to vector<1x32xf32>
    %775 = arith.addf %774, %773 : vector<1x32xf32>
    %776 = tpu.reciprocal %775 {approx = true} : vector<1x32xf32> -> vector<1x32xf32>
    %777 = arith.mulf %776, %753 : vector<1x32xf32>
    %cst_328 = arith.constant 0.000000e+00 : f32
    %778 = vector.broadcast %cst_328 : f32 to vector<1x32xf32>
    %779 = arith.subf %778, %764 : vector<1x32xf32>
    %780 = math.exp %779 : vector<1x32xf32>
    %cst_329 = arith.constant 1.000000e+00 : f32
    %781 = vector.broadcast %cst_329 : f32 to vector<1x32xf32>
    %782 = arith.addf %781, %780 : vector<1x32xf32>
    %783 = tpu.reciprocal %782 {approx = true} : vector<1x32xf32> -> vector<1x32xf32>
    %784 = math.tanh %768 : vector<1x32xf32>
    %785 = arith.mulf %783, %784 : vector<1x32xf32>
    %786 = arith.addf %777, %785 : vector<1x32xf32>
    %cst_330 = arith.constant 0.000000e+00 : f32
    %787 = vector.broadcast %cst_330 : f32 to vector<1x32xf32>
    %788 = arith.subf %787, %770 : vector<1x32xf32>
    %789 = math.exp %788 : vector<1x32xf32>
    %cst_331 = arith.constant 1.000000e+00 : f32
    %790 = vector.broadcast %cst_331 : f32 to vector<1x32xf32>
    %791 = arith.addf %790, %789 : vector<1x32xf32>
    %792 = tpu.reciprocal %791 {approx = true} : vector<1x32xf32> -> vector<1x32xf32>
    %793 = math.tanh %786 : vector<1x32xf32>
    %794 = arith.mulf %792, %793 : vector<1x32xf32>
    %c2_332 = arith.constant 2 : index
    %c0_333 = arith.constant 0 : index
    %795 = vector.load %arg22[%c2_332, %c0_333] : memref<8x32xf32, #tpu.memory_space<vmem>>, vector<1x32xf32>
    tpu.vector_store %arg22[%c2_332, %c0_333], %794 {strides = array<i32>} : memref<8x32xf32, #tpu.memory_space<vmem>>, vector<1x32xf32>,
    %cst_334 = arith.constant dense<0.000000e+00> : vector<1x32xf32>
    %796 = tpu.matmul %794, %688, %cst_334 {dimension_numbers = #tpu.dot_dimension_numbers<[1], [0], [0], [1], [0, 0, 1, 1], [], []>} : vector<1x32xf32>, vector<32x32xf32>, vector<1x32xf32> -> vector<1x32xf32>
    %797 = arith.addf %668, %796 : vector<1x32xf32>
    %cst_335 = arith.constant dense<0.000000e+00> : vector<1x32xf32>
    %798 = tpu.matmul %794, %690, %cst_335 {dimension_numbers = #tpu.dot_dimension_numbers<[1], [0], [0], [1], [0, 0, 1, 1], [], []>} : vector<1x32xf32>, vector<32x32xf32>, vector<1x32xf32> -> vector<1x32xf32>
    %799 = arith.addf %674, %798 : vector<1x32xf32>
    %cst_336 = arith.constant dense<0.000000e+00> : vector<1x32xf32>
    %800 = tpu.matmul %794, %692, %cst_336 {dimension_numbers = #tpu.dot_dimension_numbers<[1], [0], [0], [1], [0, 0, 1, 1], [], []>} : vector<1x32xf32>, vector<32x32xf32>, vector<1x32xf32> -> vector<1x32xf32>
    %801 = arith.addf %680, %800 : vector<1x32xf32>
    %cst_337 = arith.constant dense<0.000000e+00> : vector<1x32xf32>
    %802 = tpu.matmul %794, %694, %cst_337 {dimension_numbers = #tpu.dot_dimension_numbers<[1], [0], [0], [1], [0, 0, 1, 1], [], []>} : vector<1x32xf32>, vector<32x32xf32>, vector<1x32xf32> -> vector<1x32xf32>
    %803 = arith.addf %686, %802 : vector<1x32xf32>
    %cst_338 = arith.constant 0.000000e+00 : f32
    %804 = vector.broadcast %cst_338 : f32 to vector<1x32xf32>
    %805 = arith.subf %804, %799 : vector<1x32xf32>
    %806 = math.exp %805 : vector<1x32xf32>
    %cst_339 = arith.constant 1.000000e+00 : f32
    %807 = vector.broadcast %cst_339 : f32 to vector<1x32xf32>
    %808 = arith.addf %807, %806 : vector<1x32xf32>
    %809 = tpu.reciprocal %808 {approx = true} : vector<1x32xf32> -> vector<1x32xf32>
    %810 = arith.mulf %809, %786 : vector<1x32xf32>
    %cst_340 = arith.constant 0.000000e+00 : f32
    %811 = vector.broadcast %cst_340 : f32 to vector<1x32xf32>
    %812 = arith.subf %811, %797 : vector<1x32xf32>
    %813 = math.exp %812 : vector<1x32xf32>
    %cst_341 = arith.constant 1.000000e+00 : f32
    %814 = vector.broadcast %cst_341 : f32 to vector<1x32xf32>
    %815 = arith.addf %814, %813 : vector<1x32xf32>
    %816 = tpu.reciprocal %815 {approx = true} : vector<1x32xf32> -> vector<1x32xf32>
    %817 = math.tanh %801 : vector<1x32xf32>
    %818 = arith.mulf %816, %817 : vector<1x32xf32>
    %819 = arith.addf %810, %818 : vector<1x32xf32>
    %cst_342 = arith.constant 0.000000e+00 : f32
    %820 = vector.broadcast %cst_342 : f32 to vector<1x32xf32>
    %821 = arith.subf %820, %803 : vector<1x32xf32>
    %822 = math.exp %821 : vector<1x32xf32>
    %cst_343 = arith.constant 1.000000e+00 : f32
    %823 = vector.broadcast %cst_343 : f32 to vector<1x32xf32>
    %824 = arith.addf %823, %822 : vector<1x32xf32>
    %825 = tpu.reciprocal %824 {approx = true} : vector<1x32xf32> -> vector<1x32xf32>
    %826 = math.tanh %819 : vector<1x32xf32>
    %827 = arith.mulf %825, %826 : vector<1x32xf32>
    %c3_344 = arith.constant 3 : index
    %c0_345 = arith.constant 0 : index
    %828 = vector.load %arg22[%c3_344, %c0_345] : memref<8x32xf32, #tpu.memory_space<vmem>>, vector<1x32xf32>
    tpu.vector_store %arg22[%c3_344, %c0_345], %827 {strides = array<i32>} : memref<8x32xf32, #tpu.memory_space<vmem>>, vector<1x32xf32>,
    %cst_346 = arith.constant dense<0.000000e+00> : vector<1x32xf32>
    %829 = tpu.matmul %827, %688, %cst_346 {dimension_numbers = #tpu.dot_dimension_numbers<[1], [0], [0], [1], [0, 0, 1, 1], [], []>} : vector<1x32xf32>, vector<32x32xf32>, vector<1x32xf32> -> vector<1x32xf32>
    %830 = arith.addf %668, %829 : vector<1x32xf32>
    %cst_347 = arith.constant dense<0.000000e+00> : vector<1x32xf32>
    %831 = tpu.matmul %827, %690, %cst_347 {dimension_numbers = #tpu.dot_dimension_numbers<[1], [0], [0], [1], [0, 0, 1, 1], [], []>} : vector<1x32xf32>, vector<32x32xf32>, vector<1x32xf32> -> vector<1x32xf32>
    %832 = arith.addf %674, %831 : vector<1x32xf32>
    %cst_348 = arith.constant dense<0.000000e+00> : vector<1x32xf32>
    %833 = tpu.matmul %827, %692, %cst_348 {dimension_numbers = #tpu.dot_dimension_numbers<[1], [0], [0], [1], [0, 0, 1, 1], [], []>} : vector<1x32xf32>, vector<32x32xf32>, vector<1x32xf32> -> vector<1x32xf32>
    %834 = arith.addf %680, %833 : vector<1x32xf32>
    %cst_349 = arith.constant dense<0.000000e+00> : vector<1x32xf32>
    %835 = tpu.matmul %827, %694, %cst_349 {dimension_numbers = #tpu.dot_dimension_numbers<[1], [0], [0], [1], [0, 0, 1, 1], [], []>} : vector<1x32xf32>, vector<32x32xf32>, vector<1x32xf32> -> vector<1x32xf32>
    %836 = arith.addf %686, %835 : vector<1x32xf32>
    %cst_350 = arith.constant 0.000000e+00 : f32
    %837 = vector.broadcast %cst_350 : f32 to vector<1x32xf32>
    %838 = arith.subf %837, %832 : vector<1x32xf32>
    %839 = math.exp %838 : vector<1x32xf32>
    %cst_351 = arith.constant 1.000000e+00 : f32
    %840 = vector.broadcast %cst_351 : f32 to vector<1x32xf32>
    %841 = arith.addf %840, %839 : vector<1x32xf32>
    %842 = tpu.reciprocal %841 {approx = true} : vector<1x32xf32> -> vector<1x32xf32>
    %843 = arith.mulf %842, %819 : vector<1x32xf32>
    %cst_352 = arith.constant 0.000000e+00 : f32
    %844 = vector.broadcast %cst_352 : f32 to vector<1x32xf32>
    %845 = arith.subf %844, %830 : vector<1x32xf32>
    %846 = math.exp %845 : vector<1x32xf32>
    %cst_353 = arith.constant 1.000000e+00 : f32
    %847 = vector.broadcast %cst_353 : f32 to vector<1x32xf32>
    %848 = arith.addf %847, %846 : vector<1x32xf32>
    %849 = tpu.reciprocal %848 {approx = true} : vector<1x32xf32> -> vector<1x32xf32>
    %850 = math.tanh %834 : vector<1x32xf32>
    %851 = arith.mulf %849, %850 : vector<1x32xf32>
    %852 = arith.addf %843, %851 : vector<1x32xf32>
    %cst_354 = arith.constant 0.000000e+00 : f32
    %853 = vector.broadcast %cst_354 : f32 to vector<1x32xf32>
    %854 = arith.subf %853, %836 : vector<1x32xf32>
    %855 = math.exp %854 : vector<1x32xf32>
    %cst_355 = arith.constant 1.000000e+00 : f32
    %856 = vector.broadcast %cst_355 : f32 to vector<1x32xf32>
    %857 = arith.addf %856, %855 : vector<1x32xf32>
    %858 = tpu.reciprocal %857 {approx = true} : vector<1x32xf32> -> vector<1x32xf32>
    %859 = math.tanh %852 : vector<1x32xf32>
    %860 = arith.mulf %858, %859 : vector<1x32xf32>
    %c4_356 = arith.constant 4 : index
    %c0_357 = arith.constant 0 : index
    %861 = vector.load %arg22[%c4_356, %c0_357] : memref<8x32xf32, #tpu.memory_space<vmem>>, vector<1x32xf32>
    tpu.vector_store %arg22[%c4_356, %c0_357], %860 {strides = array<i32>} : memref<8x32xf32, #tpu.memory_space<vmem>>, vector<1x32xf32>,
    %cst_358 = arith.constant dense<0.000000e+00> : vector<1x32xf32>
    %862 = tpu.matmul %860, %688, %cst_358 {dimension_numbers = #tpu.dot_dimension_numbers<[1], [0], [0], [1], [0, 0, 1, 1], [], []>} : vector<1x32xf32>, vector<32x32xf32>, vector<1x32xf32> -> vector<1x32xf32>
    %863 = arith.addf %668, %862 : vector<1x32xf32>
    %cst_359 = arith.constant dense<0.000000e+00> : vector<1x32xf32>
    %864 = tpu.matmul %860, %690, %cst_359 {dimension_numbers = #tpu.dot_dimension_numbers<[1], [0], [0], [1], [0, 0, 1, 1], [], []>} : vector<1x32xf32>, vector<32x32xf32>, vector<1x32xf32> -> vector<1x32xf32>
    %865 = arith.addf %674, %864 : vector<1x32xf32>
    %cst_360 = arith.constant dense<0.000000e+00> : vector<1x32xf32>
    %866 = tpu.matmul %860, %692, %cst_360 {dimension_numbers = #tpu.dot_dimension_numbers<[1], [0], [0], [1], [0, 0, 1, 1], [], []>} : vector<1x32xf32>, vector<32x32xf32>, vector<1x32xf32> -> vector<1x32xf32>
    %867 = arith.addf %680, %866 : vector<1x32xf32>
    %cst_361 = arith.constant dense<0.000000e+00> : vector<1x32xf32>
    %868 = tpu.matmul %860, %694, %cst_361 {dimension_numbers = #tpu.dot_dimension_numbers<[1], [0], [0], [1], [0, 0, 1, 1], [], []>} : vector<1x32xf32>, vector<32x32xf32>, vector<1x32xf32> -> vector<1x32xf32>
    %869 = arith.addf %686, %868 : vector<1x32xf32>
    %cst_362 = arith.constant 0.000000e+00 : f32
    %870 = vector.broadcast %cst_362 : f32 to vector<1x32xf32>
    %871 = arith.subf %870, %865 : vector<1x32xf32>
    %872 = math.exp %871 : vector<1x32xf32>
    %cst_363 = arith.constant 1.000000e+00 : f32
    %873 = vector.broadcast %cst_363 : f32 to vector<1x32xf32>
    %874 = arith.addf %873, %872 : vector<1x32xf32>
    %875 = tpu.reciprocal %874 {approx = true} : vector<1x32xf32> -> vector<1x32xf32>
    %876 = arith.mulf %875, %852 : vector<1x32xf32>
    %cst_364 = arith.constant 0.000000e+00 : f32
    %877 = vector.broadcast %cst_364 : f32 to vector<1x32xf32>
    %878 = arith.subf %877, %863 : vector<1x32xf32>
    %879 = math.exp %878 : vector<1x32xf32>
    %cst_365 = arith.constant 1.000000e+00 : f32
    %880 = vector.broadcast %cst_365 : f32 to vector<1x32xf32>
    %881 = arith.addf %880, %879 : vector<1x32xf32>
    %882 = tpu.reciprocal %881 {approx = true} : vector<1x32xf32> -> vector<1x32xf32>
    %883 = math.tanh %867 : vector<1x32xf32>
    %884 = arith.mulf %882, %883 : vector<1x32xf32>
    %885 = arith.addf %876, %884 : vector<1x32xf32>
    %cst_366 = arith.constant 0.000000e+00 : f32
    %886 = vector.broadcast %cst_366 : f32 to vector<1x32xf32>
    %887 = arith.subf %886, %869 : vector<1x32xf32>
    %888 = math.exp %887 : vector<1x32xf32>
    %cst_367 = arith.constant 1.000000e+00 : f32
    %889 = vector.broadcast %cst_367 : f32 to vector<1x32xf32>
    %890 = arith.addf %889, %888 : vector<1x32xf32>
    %891 = tpu.reciprocal %890 {approx = true} : vector<1x32xf32> -> vector<1x32xf32>
    %892 = math.tanh %885 : vector<1x32xf32>
    %893 = arith.mulf %891, %892 : vector<1x32xf32>
    %c5_368 = arith.constant 5 : index
    %c0_369 = arith.constant 0 : index
    %894 = vector.load %arg22[%c5_368, %c0_369] : memref<8x32xf32, #tpu.memory_space<vmem>>, vector<1x32xf32>
    tpu.vector_store %arg22[%c5_368, %c0_369], %893 {strides = array<i32>} : memref<8x32xf32, #tpu.memory_space<vmem>>, vector<1x32xf32>,
    %cst_370 = arith.constant dense<0.000000e+00> : vector<1x32xf32>
    %895 = tpu.matmul %893, %688, %cst_370 {dimension_numbers = #tpu.dot_dimension_numbers<[1], [0], [0], [1], [0, 0, 1, 1], [], []>} : vector<1x32xf32>, vector<32x32xf32>, vector<1x32xf32> -> vector<1x32xf32>
    %896 = arith.addf %668, %895 : vector<1x32xf32>
    %cst_371 = arith.constant dense<0.000000e+00> : vector<1x32xf32>
    %897 = tpu.matmul %893, %690, %cst_371 {dimension_numbers = #tpu.dot_dimension_numbers<[1], [0], [0], [1], [0, 0, 1, 1], [], []>} : vector<1x32xf32>, vector<32x32xf32>, vector<1x32xf32> -> vector<1x32xf32>
    %898 = arith.addf %674, %897 : vector<1x32xf32>
    %cst_372 = arith.constant dense<0.000000e+00> : vector<1x32xf32>
    %899 = tpu.matmul %893, %692, %cst_372 {dimension_numbers = #tpu.dot_dimension_numbers<[1], [0], [0], [1], [0, 0, 1, 1], [], []>} : vector<1x32xf32>, vector<32x32xf32>, vector<1x32xf32> -> vector<1x32xf32>
    %900 = arith.addf %680, %899 : vector<1x32xf32>
    %cst_373 = arith.constant dense<0.000000e+00> : vector<1x32xf32>
    %901 = tpu.matmul %893, %694, %cst_373 {dimension_numbers = #tpu.dot_dimension_numbers<[1], [0], [0], [1], [0, 0, 1, 1], [], []>} : vector<1x32xf32>, vector<32x32xf32>, vector<1x32xf32> -> vector<1x32xf32>
    %902 = arith.addf %686, %901 : vector<1x32xf32>
    %cst_374 = arith.constant 0.000000e+00 : f32
    %903 = vector.broadcast %cst_374 : f32 to vector<1x32xf32>
    %904 = arith.subf %903, %898 : vector<1x32xf32>
    %905 = math.exp %904 : vector<1x32xf32>
    %cst_375 = arith.constant 1.000000e+00 : f32
    %906 = vector.broadcast %cst_375 : f32 to vector<1x32xf32>
    %907 = arith.addf %906, %905 : vector<1x32xf32>
    %908 = tpu.reciprocal %907 {approx = true} : vector<1x32xf32> -> vector<1x32xf32>
    %909 = arith.mulf %908, %885 : vector<1x32xf32>
    %cst_376 = arith.constant 0.000000e+00 : f32
    %910 = vector.broadcast %cst_376 : f32 to vector<1x32xf32>
    %911 = arith.subf %910, %896 : vector<1x32xf32>
    %912 = math.exp %911 : vector<1x32xf32>
    %cst_377 = arith.constant 1.000000e+00 : f32
    %913 = vector.broadcast %cst_377 : f32 to vector<1x32xf32>
    %914 = arith.addf %913, %912 : vector<1x32xf32>
    %915 = tpu.reciprocal %914 {approx = true} : vector<1x32xf32> -> vector<1x32xf32>
    %916 = math.tanh %900 : vector<1x32xf32>
    %917 = arith.mulf %915, %916 : vector<1x32xf32>
    %918 = arith.addf %909, %917 : vector<1x32xf32>
    %cst_378 = arith.constant 0.000000e+00 : f32
    %919 = vector.broadcast %cst_378 : f32 to vector<1x32xf32>
    %920 = arith.subf %919, %902 : vector<1x32xf32>
    %921 = math.exp %920 : vector<1x32xf32>
    %cst_379 = arith.constant 1.000000e+00 : f32
    %922 = vector.broadcast %cst_379 : f32 to vector<1x32xf32>
    %923 = arith.addf %922, %921 : vector<1x32xf32>
    %924 = tpu.reciprocal %923 {approx = true} : vector<1x32xf32> -> vector<1x32xf32>
    %925 = math.tanh %918 : vector<1x32xf32>
    %926 = arith.mulf %924, %925 : vector<1x32xf32>
    %c6_380 = arith.constant 6 : index
    %c0_381 = arith.constant 0 : index
    %927 = vector.load %arg22[%c6_380, %c0_381] : memref<8x32xf32, #tpu.memory_space<vmem>>, vector<1x32xf32>
    tpu.vector_store %arg22[%c6_380, %c0_381], %926 {strides = array<i32>} : memref<8x32xf32, #tpu.memory_space<vmem>>, vector<1x32xf32>,
    %cst_382 = arith.constant dense<0.000000e+00> : vector<1x32xf32>
    %928 = tpu.matmul %926, %688, %cst_382 {dimension_numbers = #tpu.dot_dimension_numbers<[1], [0], [0], [1], [0, 0, 1, 1], [], []>} : vector<1x32xf32>, vector<32x32xf32>, vector<1x32xf32> -> vector<1x32xf32>
    %929 = arith.addf %668, %928 : vector<1x32xf32>
    %cst_383 = arith.constant dense<0.000000e+00> : vector<1x32xf32>
    %930 = tpu.matmul %926, %690, %cst_383 {dimension_numbers = #tpu.dot_dimension_numbers<[1], [0], [0], [1], [0, 0, 1, 1], [], []>} : vector<1x32xf32>, vector<32x32xf32>, vector<1x32xf32> -> vector<1x32xf32>
    %931 = arith.addf %674, %930 : vector<1x32xf32>
    %cst_384 = arith.constant dense<0.000000e+00> : vector<1x32xf32>
    %932 = tpu.matmul %926, %692, %cst_384 {dimension_numbers = #tpu.dot_dimension_numbers<[1], [0], [0], [1], [0, 0, 1, 1], [], []>} : vector<1x32xf32>, vector<32x32xf32>, vector<1x32xf32> -> vector<1x32xf32>
    %933 = arith.addf %680, %932 : vector<1x32xf32>
    %cst_385 = arith.constant dense<0.000000e+00> : vector<1x32xf32>
    %934 = tpu.matmul %926, %694, %cst_385 {dimension_numbers = #tpu.dot_dimension_numbers<[1], [0], [0], [1], [0, 0, 1, 1], [], []>} : vector<1x32xf32>, vector<32x32xf32>, vector<1x32xf32> -> vector<1x32xf32>
    %935 = arith.addf %686, %934 : vector<1x32xf32>
    %cst_386 = arith.constant 0.000000e+00 : f32
    %936 = vector.broadcast %cst_386 : f32 to vector<1x32xf32>
    %937 = arith.subf %936, %931 : vector<1x32xf32>
    %938 = math.exp %937 : vector<1x32xf32>
    %cst_387 = arith.constant 1.000000e+00 : f32
    %939 = vector.broadcast %cst_387 : f32 to vector<1x32xf32>
    %940 = arith.addf %939, %938 : vector<1x32xf32>
    %941 = tpu.reciprocal %940 {approx = true} : vector<1x32xf32> -> vector<1x32xf32>
    %942 = arith.mulf %941, %918 : vector<1x32xf32>
    %cst_388 = arith.constant 0.000000e+00 : f32
    %943 = vector.broadcast %cst_388 : f32 to vector<1x32xf32>
    %944 = arith.subf %943, %929 : vector<1x32xf32>
    %945 = math.exp %944 : vector<1x32xf32>
    %cst_389 = arith.constant 1.000000e+00 : f32
    %946 = vector.broadcast %cst_389 : f32 to vector<1x32xf32>
    %947 = arith.addf %946, %945 : vector<1x32xf32>
    %948 = tpu.reciprocal %947 {approx = true} : vector<1x32xf32> -> vector<1x32xf32>
    %949 = math.tanh %933 : vector<1x32xf32>
    %950 = arith.mulf %948, %949 : vector<1x32xf32>
    %951 = arith.addf %942, %950 : vector<1x32xf32>
    %cst_390 = arith.constant 0.000000e+00 : f32
    %952 = vector.broadcast %cst_390 : f32 to vector<1x32xf32>
    %953 = arith.subf %952, %935 : vector<1x32xf32>
    %954 = math.exp %953 : vector<1x32xf32>
    %cst_391 = arith.constant 1.000000e+00 : f32
    %955 = vector.broadcast %cst_391 : f32 to vector<1x32xf32>
    %956 = arith.addf %955, %954 : vector<1x32xf32>
    %957 = tpu.reciprocal %956 {approx = true} : vector<1x32xf32> -> vector<1x32xf32>
    %958 = math.tanh %951 : vector<1x32xf32>
    %959 = arith.mulf %957, %958 : vector<1x32xf32>
    %c7_392 = arith.constant 7 : index
    %c0_393 = arith.constant 0 : index
    %960 = vector.load %arg22[%c7_392, %c0_393] : memref<8x32xf32, #tpu.memory_space<vmem>>, vector<1x32xf32>
    tpu.vector_store %arg22[%c7_392, %c0_393], %959 {strides = array<i32>} : memref<8x32xf32, #tpu.memory_space<vmem>>, vector<1x32xf32>,
    %c0_394 = arith.constant 0 : index
    %c0_395 = arith.constant 0 : index
    %961 = vector.load %arg22[%c0_394, %c0_395] : memref<8x32xf32, #tpu.memory_space<vmem>>, vector<8x32xf32>
    %c0_396 = arith.constant 0 : index
    %c0_397 = arith.constant 0 : index
    %c0_398 = arith.constant 0 : index
    %962 = vector.load %arg10[%c0_396, %c0_397, %c0_398] : memref<4x32x4xf32, #tpu.memory_space<vmem>>, vector<1x32x4xf32>
    %963 = vector.shape_cast %962 : vector<1x32x4xf32> to vector<32x4xf32>
    %cst_399 = arith.constant dense<0.000000e+00> : vector<8x4xf32>
    %964 = tpu.matmul %961, %963, %cst_399 {dimension_numbers = #tpu.dot_dimension_numbers<[1], [0], [0], [1], [0, 0, 1, 1], [], []>} : vector<8x32xf32>, vector<32x4xf32>, vector<8x4xf32> -> vector<8x4xf32>
    %c0_400 = arith.constant 0 : index
    %c0_401 = arith.constant 0 : index
    %c0_402 = arith.constant 0 : index
    %965 = vector.load %arg12[%c0_400, %c0_401, %c0_402] : memref<4x1x4xf32, #tpu.memory_space<vmem>>, vector<1x1x4xf32>
    %966 = vector.shape_cast %965 : vector<1x1x4xf32> to vector<1x4xf32>
    %967 = vector.broadcast %966 : vector<1x4xf32> to vector<8x4xf32>
    %968 = arith.addf %964, %967 : vector<8x4xf32>
    %c1_403 = arith.constant 1 : index
    %c0_404 = arith.constant 0 : index
    %c0_405 = arith.constant 0 : index
    %969 = vector.load %arg10[%c1_403, %c0_404, %c0_405] : memref<4x32x4xf32, #tpu.memory_space<vmem>>, vector<1x32x4xf32>
    %970 = vector.shape_cast %969 : vector<1x32x4xf32> to vector<32x4xf32>
    %cst_406 = arith.constant dense<0.000000e+00> : vector<8x4xf32>
    %971 = tpu.matmul %961, %970, %cst_406 {dimension_numbers = #tpu.dot_dimension_numbers<[1], [0], [0], [1], [0, 0, 1, 1], [], []>} : vector<8x32xf32>, vector<32x4xf32>, vector<8x4xf32> -> vector<8x4xf32>
    %c1_407 = arith.constant 1 : index
    %c0_408 = arith.constant 0 : index
    %c0_409 = arith.constant 0 : index
    %972 = vector.load %arg12[%c1_407, %c0_408, %c0_409] : memref<4x1x4xf32, #tpu.memory_space<vmem>>, vector<1x1x4xf32>
    %973 = vector.shape_cast %972 : vector<1x1x4xf32> to vector<1x4xf32>
    %974 = vector.broadcast %973 : vector<1x4xf32> to vector<8x4xf32>
    %975 = arith.addf %971, %974 : vector<8x4xf32>
    %c2_410 = arith.constant 2 : index
    %c0_411 = arith.constant 0 : index
    %c0_412 = arith.constant 0 : index
    %976 = vector.load %arg10[%c2_410, %c0_411, %c0_412] : memref<4x32x4xf32, #tpu.memory_space<vmem>>, vector<1x32x4xf32>
    %977 = vector.shape_cast %976 : vector<1x32x4xf32> to vector<32x4xf32>
    %cst_413 = arith.constant dense<0.000000e+00> : vector<8x4xf32>
    %978 = tpu.matmul %961, %977, %cst_413 {dimension_numbers = #tpu.dot_dimension_numbers<[1], [0], [0], [1], [0, 0, 1, 1], [], []>} : vector<8x32xf32>, vector<32x4xf32>, vector<8x4xf32> -> vector<8x4xf32>
    %c2_414 = arith.constant 2 : index
    %c0_415 = arith.constant 0 : index
    %c0_416 = arith.constant 0 : index
    %979 = vector.load %arg12[%c2_414, %c0_415, %c0_416] : memref<4x1x4xf32, #tpu.memory_space<vmem>>, vector<1x1x4xf32>
    %980 = vector.shape_cast %979 : vector<1x1x4xf32> to vector<1x4xf32>
    %981 = vector.broadcast %980 : vector<1x4xf32> to vector<8x4xf32>
    %982 = arith.addf %978, %981 : vector<8x4xf32>
    %c3_417 = arith.constant 3 : index
    %c0_418 = arith.constant 0 : index
    %c0_419 = arith.constant 0 : index
    %983 = vector.load %arg10[%c3_417, %c0_418, %c0_419] : memref<4x32x4xf32, #tpu.memory_space<vmem>>, vector<1x32x4xf32>
    %984 = vector.shape_cast %983 : vector<1x32x4xf32> to vector<32x4xf32>
    %cst_420 = arith.constant dense<0.000000e+00> : vector<8x4xf32>
    %985 = tpu.matmul %961, %984, %cst_420 {dimension_numbers = #tpu.dot_dimension_numbers<[1], [0], [0], [1], [0, 0, 1, 1], [], []>} : vector<8x32xf32>, vector<32x4xf32>, vector<8x4xf32> -> vector<8x4xf32>
    %c3_421 = arith.constant 3 : index
    %c0_422 = arith.constant 0 : index
    %c0_423 = arith.constant 0 : index
    %986 = vector.load %arg12[%c3_421, %c0_422, %c0_423] : memref<4x1x4xf32, #tpu.memory_space<vmem>>, vector<1x1x4xf32>
    %987 = vector.shape_cast %986 : vector<1x1x4xf32> to vector<1x4xf32>
    %988 = vector.broadcast %987 : vector<1x4xf32> to vector<8x4xf32>
    %989 = arith.addf %985, %988 : vector<8x4xf32>
    %c0_424 = arith.constant 0 : index
    %c0_425 = arith.constant 0 : index
    %c0_426 = arith.constant 0 : index
    %990 = vector.load %arg11[%c0_424, %c0_425, %c0_426] : memref<4x4x4xf32, #tpu.memory_space<vmem>>, vector<1x4x4xf32>
    %991 = vector.shape_cast %990 : vector<1x4x4xf32> to vector<4x4xf32>
    %c1_427 = arith.constant 1 : index
    %c0_428 = arith.constant 0 : index
    %c0_429 = arith.constant 0 : index
    %992 = vector.load %arg11[%c1_427, %c0_428, %c0_429] : memref<4x4x4xf32, #tpu.memory_space<vmem>>, vector<1x4x4xf32>
    %993 = vector.shape_cast %992 : vector<1x4x4xf32> to vector<4x4xf32>
    %c2_430 = arith.constant 2 : index
    %c0_431 = arith.constant 0 : index
    %c0_432 = arith.constant 0 : index
    %994 = vector.load %arg11[%c2_430, %c0_431, %c0_432] : memref<4x4x4xf32, #tpu.memory_space<vmem>>, vector<1x4x4xf32>
    %995 = vector.shape_cast %994 : vector<1x4x4xf32> to vector<4x4xf32>
    %c3_433 = arith.constant 3 : index
    %c0_434 = arith.constant 0 : index
    %c0_435 = arith.constant 0 : index
    %996 = vector.load %arg11[%c3_433, %c0_434, %c0_435] : memref<4x4x4xf32, #tpu.memory_space<vmem>>, vector<1x4x4xf32>
    %997 = vector.shape_cast %996 : vector<1x4x4xf32> to vector<4x4xf32>
    %cst_436 = arith.constant 0.000000e+00 : f32
    %998 = vector.broadcast %cst_436 : f32 to vector<1x4xf32>
    %cst_437 = arith.constant 0.000000e+00 : f32
    %999 = vector.broadcast %cst_437 : f32 to vector<1x4xf32>
    %1000 = vector.extract_strided_slice %968 {offsets = [0, 0], sizes = [1, 4], strides = [1, 1]} : vector<8x4xf32> to vector<1x4xf32>
    %1001 = vector.extract_strided_slice %975 {offsets = [0, 0], sizes = [1, 4], strides = [1, 1]} : vector<8x4xf32> to vector<1x4xf32>
    %1002 = vector.extract_strided_slice %982 {offsets = [0, 0], sizes = [1, 4], strides = [1, 1]} : vector<8x4xf32> to vector<1x4xf32>
    %1003 = vector.extract_strided_slice %989 {offsets = [0, 0], sizes = [1, 4], strides = [1, 1]} : vector<8x4xf32> to vector<1x4xf32>
    %cst_438 = arith.constant dense<0.000000e+00> : vector<1x4xf32>
    %1004 = tpu.matmul %998, %991, %cst_438 {dimension_numbers = #tpu.dot_dimension_numbers<[1], [0], [0], [1], [0, 0, 1, 1], [], []>} : vector<1x4xf32>, vector<4x4xf32>, vector<1x4xf32> -> vector<1x4xf32>
    %1005 = arith.addf %1000, %1004 : vector<1x4xf32>
    %cst_439 = arith.constant dense<0.000000e+00> : vector<1x4xf32>
    %1006 = tpu.matmul %998, %993, %cst_439 {dimension_numbers = #tpu.dot_dimension_numbers<[1], [0], [0], [1], [0, 0, 1, 1], [], []>} : vector<1x4xf32>, vector<4x4xf32>, vector<1x4xf32> -> vector<1x4xf32>
    %1007 = arith.addf %1001, %1006 : vector<1x4xf32>
    %cst_440 = arith.constant dense<0.000000e+00> : vector<1x4xf32>
    %1008 = tpu.matmul %998, %995, %cst_440 {dimension_numbers = #tpu.dot_dimension_numbers<[1], [0], [0], [1], [0, 0, 1, 1], [], []>} : vector<1x4xf32>, vector<4x4xf32>, vector<1x4xf32> -> vector<1x4xf32>
    %1009 = arith.addf %1002, %1008 : vector<1x4xf32>
    %cst_441 = arith.constant dense<0.000000e+00> : vector<1x4xf32>
    %1010 = tpu.matmul %998, %997, %cst_441 {dimension_numbers = #tpu.dot_dimension_numbers<[1], [0], [0], [1], [0, 0, 1, 1], [], []>} : vector<1x4xf32>, vector<4x4xf32>, vector<1x4xf32> -> vector<1x4xf32>
    %1011 = arith.addf %1003, %1010 : vector<1x4xf32>
    %cst_442 = arith.constant 0.000000e+00 : f32
    %1012 = vector.broadcast %cst_442 : f32 to vector<1x4xf32>
    %1013 = arith.subf %1012, %1007 : vector<1x4xf32>
    %1014 = math.exp %1013 : vector<1x4xf32>
    %cst_443 = arith.constant 1.000000e+00 : f32
    %1015 = vector.broadcast %cst_443 : f32 to vector<1x4xf32>
    %1016 = arith.addf %1015, %1014 : vector<1x4xf32>
    %1017 = tpu.reciprocal %1016 {approx = true} : vector<1x4xf32> -> vector<1x4xf32>
    %1018 = arith.mulf %1017, %999 : vector<1x4xf32>
    %cst_444 = arith.constant 0.000000e+00 : f32
    %1019 = vector.broadcast %cst_444 : f32 to vector<1x4xf32>
    %1020 = arith.subf %1019, %1005 : vector<1x4xf32>
    %1021 = math.exp %1020 : vector<1x4xf32>
    %cst_445 = arith.constant 1.000000e+00 : f32
    %1022 = vector.broadcast %cst_445 : f32 to vector<1x4xf32>
    %1023 = arith.addf %1022, %1021 : vector<1x4xf32>
    %1024 = tpu.reciprocal %1023 {approx = true} : vector<1x4xf32> -> vector<1x4xf32>
    %1025 = math.tanh %1009 : vector<1x4xf32>
    %1026 = arith.mulf %1024, %1025 : vector<1x4xf32>
    %1027 = arith.addf %1018, %1026 : vector<1x4xf32>
    %cst_446 = arith.constant 0.000000e+00 : f32
    %1028 = vector.broadcast %cst_446 : f32 to vector<1x4xf32>
    %1029 = arith.subf %1028, %1011 : vector<1x4xf32>
    %1030 = math.exp %1029 : vector<1x4xf32>
    %cst_447 = arith.constant 1.000000e+00 : f32
    %1031 = vector.broadcast %cst_447 : f32 to vector<1x4xf32>
    %1032 = arith.addf %1031, %1030 : vector<1x4xf32>
    %1033 = tpu.reciprocal %1032 {approx = true} : vector<1x4xf32> -> vector<1x4xf32>
    %1034 = math.tanh %1027 : vector<1x4xf32>
    %1035 = arith.mulf %1033, %1034 : vector<1x4xf32>
    %c0_448 = arith.constant 0 : index
    %c0_449 = arith.constant 0 : index
    %1036 = vector.load %arg23[%c0_448, %c0_449] : memref<8x4xf32, #tpu.memory_space<vmem>>, vector<1x4xf32>
    tpu.vector_store %arg23[%c0_448, %c0_449], %1035 {strides = array<i32>} : memref<8x4xf32, #tpu.memory_space<vmem>>, vector<1x4xf32>,
    %1037 = vector.extract_strided_slice %968 {offsets = [1, 0], sizes = [1, 4], strides = [1, 1]} : vector<8x4xf32> to vector<1x4xf32>
    %1038 = vector.extract_strided_slice %975 {offsets = [1, 0], sizes = [1, 4], strides = [1, 1]} : vector<8x4xf32> to vector<1x4xf32>
    %1039 = vector.extract_strided_slice %982 {offsets = [1, 0], sizes = [1, 4], strides = [1, 1]} : vector<8x4xf32> to vector<1x4xf32>
    %1040 = vector.extract_strided_slice %989 {offsets = [1, 0], sizes = [1, 4], strides = [1, 1]} : vector<8x4xf32> to vector<1x4xf32>
    %cst_450 = arith.constant dense<0.000000e+00> : vector<1x4xf32>
    %1041 = tpu.matmul %1035, %991, %cst_450 {dimension_numbers = #tpu.dot_dimension_numbers<[1], [0], [0], [1], [0, 0, 1, 1], [], []>} : vector<1x4xf32>, vector<4x4xf32>, vector<1x4xf32> -> vector<1x4xf32>
    %1042 = arith.addf %1037, %1041 : vector<1x4xf32>
    %cst_451 = arith.constant dense<0.000000e+00> : vector<1x4xf32>
    %1043 = tpu.matmul %1035, %993, %cst_451 {dimension_numbers = #tpu.dot_dimension_numbers<[1], [0], [0], [1], [0, 0, 1, 1], [], []>} : vector<1x4xf32>, vector<4x4xf32>, vector<1x4xf32> -> vector<1x4xf32>
    %1044 = arith.addf %1038, %1043 : vector<1x4xf32>
    %cst_452 = arith.constant dense<0.000000e+00> : vector<1x4xf32>
    %1045 = tpu.matmul %1035, %995, %cst_452 {dimension_numbers = #tpu.dot_dimension_numbers<[1], [0], [0], [1], [0, 0, 1, 1], [], []>} : vector<1x4xf32>, vector<4x4xf32>, vector<1x4xf32> -> vector<1x4xf32>
    %1046 = arith.addf %1039, %1045 : vector<1x4xf32>
    %cst_453 = arith.constant dense<0.000000e+00> : vector<1x4xf32>
    %1047 = tpu.matmul %1035, %997, %cst_453 {dimension_numbers = #tpu.dot_dimension_numbers<[1], [0], [0], [1], [0, 0, 1, 1], [], []>} : vector<1x4xf32>, vector<4x4xf32>, vector<1x4xf32> -> vector<1x4xf32>
    %1048 = arith.addf %1040, %1047 : vector<1x4xf32>
    %cst_454 = arith.constant 0.000000e+00 : f32
    %1049 = vector.broadcast %cst_454 : f32 to vector<1x4xf32>
    %1050 = arith.subf %1049, %1044 : vector<1x4xf32>
    %1051 = math.exp %1050 : vector<1x4xf32>
    %cst_455 = arith.constant 1.000000e+00 : f32
    %1052 = vector.broadcast %cst_455 : f32 to vector<1x4xf32>
    %1053 = arith.addf %1052, %1051 : vector<1x4xf32>
    %1054 = tpu.reciprocal %1053 {approx = true} : vector<1x4xf32> -> vector<1x4xf32>
    %1055 = arith.mulf %1054, %1027 : vector<1x4xf32>
    %cst_456 = arith.constant 0.000000e+00 : f32
    %1056 = vector.broadcast %cst_456 : f32 to vector<1x4xf32>
    %1057 = arith.subf %1056, %1042 : vector<1x4xf32>
    %1058 = math.exp %1057 : vector<1x4xf32>
    %cst_457 = arith.constant 1.000000e+00 : f32
    %1059 = vector.broadcast %cst_457 : f32 to vector<1x4xf32>
    %1060 = arith.addf %1059, %1058 : vector<1x4xf32>
    %1061 = tpu.reciprocal %1060 {approx = true} : vector<1x4xf32> -> vector<1x4xf32>
    %1062 = math.tanh %1046 : vector<1x4xf32>
    %1063 = arith.mulf %1061, %1062 : vector<1x4xf32>
    %1064 = arith.addf %1055, %1063 : vector<1x4xf32>
    %cst_458 = arith.constant 0.000000e+00 : f32
    %1065 = vector.broadcast %cst_458 : f32 to vector<1x4xf32>
    %1066 = arith.subf %1065, %1048 : vector<1x4xf32>
    %1067 = math.exp %1066 : vector<1x4xf32>
    %cst_459 = arith.constant 1.000000e+00 : f32
    %1068 = vector.broadcast %cst_459 : f32 to vector<1x4xf32>
    %1069 = arith.addf %1068, %1067 : vector<1x4xf32>
    %1070 = tpu.reciprocal %1069 {approx = true} : vector<1x4xf32> -> vector<1x4xf32>
    %1071 = math.tanh %1064 : vector<1x4xf32>
    %1072 = arith.mulf %1070, %1071 : vector<1x4xf32>
    %c1_460 = arith.constant 1 : index
    %c0_461 = arith.constant 0 : index
    %1073 = vector.load %arg23[%c1_460, %c0_461] : memref<8x4xf32, #tpu.memory_space<vmem>>, vector<1x4xf32>
    tpu.vector_store %arg23[%c1_460, %c0_461], %1072 {strides = array<i32>} : memref<8x4xf32, #tpu.memory_space<vmem>>, vector<1x4xf32>,
    %1074 = vector.extract_strided_slice %968 {offsets = [2, 0], sizes = [1, 4], strides = [1, 1]} : vector<8x4xf32> to vector<1x4xf32>
    %1075 = vector.extract_strided_slice %975 {offsets = [2, 0], sizes = [1, 4], strides = [1, 1]} : vector<8x4xf32> to vector<1x4xf32>
    %1076 = vector.extract_strided_slice %982 {offsets = [2, 0], sizes = [1, 4], strides = [1, 1]} : vector<8x4xf32> to vector<1x4xf32>
    %1077 = vector.extract_strided_slice %989 {offsets = [2, 0], sizes = [1, 4], strides = [1, 1]} : vector<8x4xf32> to vector<1x4xf32>
    %cst_462 = arith.constant dense<0.000000e+00> : vector<1x4xf32>
    %1078 = tpu.matmul %1072, %991, %cst_462 {dimension_numbers = #tpu.dot_dimension_numbers<[1], [0], [0], [1], [0, 0, 1, 1], [], []>} : vector<1x4xf32>, vector<4x4xf32>, vector<1x4xf32> -> vector<1x4xf32>
    %1079 = arith.addf %1074, %1078 : vector<1x4xf32>
    %cst_463 = arith.constant dense<0.000000e+00> : vector<1x4xf32>
    %1080 = tpu.matmul %1072, %993, %cst_463 {dimension_numbers = #tpu.dot_dimension_numbers<[1], [0], [0], [1], [0, 0, 1, 1], [], []>} : vector<1x4xf32>, vector<4x4xf32>, vector<1x4xf32> -> vector<1x4xf32>
    %1081 = arith.addf %1075, %1080 : vector<1x4xf32>
    %cst_464 = arith.constant dense<0.000000e+00> : vector<1x4xf32>
    %1082 = tpu.matmul %1072, %995, %cst_464 {dimension_numbers = #tpu.dot_dimension_numbers<[1], [0], [0], [1], [0, 0, 1, 1], [], []>} : vector<1x4xf32>, vector<4x4xf32>, vector<1x4xf32> -> vector<1x4xf32>
    %1083 = arith.addf %1076, %1082 : vector<1x4xf32>
    %cst_465 = arith.constant dense<0.000000e+00> : vector<1x4xf32>
    %1084 = tpu.matmul %1072, %997, %cst_465 {dimension_numbers = #tpu.dot_dimension_numbers<[1], [0], [0], [1], [0, 0, 1, 1], [], []>} : vector<1x4xf32>, vector<4x4xf32>, vector<1x4xf32> -> vector<1x4xf32>
    %1085 = arith.addf %1077, %1084 : vector<1x4xf32>
    %cst_466 = arith.constant 0.000000e+00 : f32
    %1086 = vector.broadcast %cst_466 : f32 to vector<1x4xf32>
    %1087 = arith.subf %1086, %1081 : vector<1x4xf32>
    %1088 = math.exp %1087 : vector<1x4xf32>
    %cst_467 = arith.constant 1.000000e+00 : f32
    %1089 = vector.broadcast %cst_467 : f32 to vector<1x4xf32>
    %1090 = arith.addf %1089, %1088 : vector<1x4xf32>
    %1091 = tpu.reciprocal %1090 {approx = true} : vector<1x4xf32> -> vector<1x4xf32>
    %1092 = arith.mulf %1091, %1064 : vector<1x4xf32>
    %cst_468 = arith.constant 0.000000e+00 : f32
    %1093 = vector.broadcast %cst_468 : f32 to vector<1x4xf32>
    %1094 = arith.subf %1093, %1079 : vector<1x4xf32>
    %1095 = math.exp %1094 : vector<1x4xf32>
    %cst_469 = arith.constant 1.000000e+00 : f32
    %1096 = vector.broadcast %cst_469 : f32 to vector<1x4xf32>
    %1097 = arith.addf %1096, %1095 : vector<1x4xf32>
    %1098 = tpu.reciprocal %1097 {approx = true} : vector<1x4xf32> -> vector<1x4xf32>
    %1099 = math.tanh %1083 : vector<1x4xf32>
    %1100 = arith.mulf %1098, %1099 : vector<1x4xf32>
    %1101 = arith.addf %1092, %1100 : vector<1x4xf32>
    %cst_470 = arith.constant 0.000000e+00 : f32
    %1102 = vector.broadcast %cst_470 : f32 to vector<1x4xf32>
    %1103 = arith.subf %1102, %1085 : vector<1x4xf32>
    %1104 = math.exp %1103 : vector<1x4xf32>
    %cst_471 = arith.constant 1.000000e+00 : f32
    %1105 = vector.broadcast %cst_471 : f32 to vector<1x4xf32>
    %1106 = arith.addf %1105, %1104 : vector<1x4xf32>
    %1107 = tpu.reciprocal %1106 {approx = true} : vector<1x4xf32> -> vector<1x4xf32>
    %1108 = math.tanh %1101 : vector<1x4xf32>
    %1109 = arith.mulf %1107, %1108 : vector<1x4xf32>
    %c2_472 = arith.constant 2 : index
    %c0_473 = arith.constant 0 : index
    %1110 = vector.load %arg23[%c2_472, %c0_473] : memref<8x4xf32, #tpu.memory_space<vmem>>, vector<1x4xf32>
    tpu.vector_store %arg23[%c2_472, %c0_473], %1109 {strides = array<i32>} : memref<8x4xf32, #tpu.memory_space<vmem>>, vector<1x4xf32>,
    %1111 = vector.extract_strided_slice %968 {offsets = [3, 0], sizes = [1, 4], strides = [1, 1]} : vector<8x4xf32> to vector<1x4xf32>
    %1112 = vector.extract_strided_slice %975 {offsets = [3, 0], sizes = [1, 4], strides = [1, 1]} : vector<8x4xf32> to vector<1x4xf32>
    %1113 = vector.extract_strided_slice %982 {offsets = [3, 0], sizes = [1, 4], strides = [1, 1]} : vector<8x4xf32> to vector<1x4xf32>
    %1114 = vector.extract_strided_slice %989 {offsets = [3, 0], sizes = [1, 4], strides = [1, 1]} : vector<8x4xf32> to vector<1x4xf32>
    %cst_474 = arith.constant dense<0.000000e+00> : vector<1x4xf32>
    %1115 = tpu.matmul %1109, %991, %cst_474 {dimension_numbers = #tpu.dot_dimension_numbers<[1], [0], [0], [1], [0, 0, 1, 1], [], []>} : vector<1x4xf32>, vector<4x4xf32>, vector<1x4xf32> -> vector<1x4xf32>
    %1116 = arith.addf %1111, %1115 : vector<1x4xf32>
    %cst_475 = arith.constant dense<0.000000e+00> : vector<1x4xf32>
    %1117 = tpu.matmul %1109, %993, %cst_475 {dimension_numbers = #tpu.dot_dimension_numbers<[1], [0], [0], [1], [0, 0, 1, 1], [], []>} : vector<1x4xf32>, vector<4x4xf32>, vector<1x4xf32> -> vector<1x4xf32>
    %1118 = arith.addf %1112, %1117 : vector<1x4xf32>
    %cst_476 = arith.constant dense<0.000000e+00> : vector<1x4xf32>
    %1119 = tpu.matmul %1109, %995, %cst_476 {dimension_numbers = #tpu.dot_dimension_numbers<[1], [0], [0], [1], [0, 0, 1, 1], [], []>} : vector<1x4xf32>, vector<4x4xf32>, vector<1x4xf32> -> vector<1x4xf32>
    %1120 = arith.addf %1113, %1119 : vector<1x4xf32>
    %cst_477 = arith.constant dense<0.000000e+00> : vector<1x4xf32>
    %1121 = tpu.matmul %1109, %997, %cst_477 {dimension_numbers = #tpu.dot_dimension_numbers<[1], [0], [0], [1], [0, 0, 1, 1], [], []>} : vector<1x4xf32>, vector<4x4xf32>, vector<1x4xf32> -> vector<1x4xf32>
    %1122 = arith.addf %1114, %1121 : vector<1x4xf32>
    %cst_478 = arith.constant 0.000000e+00 : f32
    %1123 = vector.broadcast %cst_478 : f32 to vector<1x4xf32>
    %1124 = arith.subf %1123, %1118 : vector<1x4xf32>
    %1125 = math.exp %1124 : vector<1x4xf32>
    %cst_479 = arith.constant 1.000000e+00 : f32
    %1126 = vector.broadcast %cst_479 : f32 to vector<1x4xf32>
    %1127 = arith.addf %1126, %1125 : vector<1x4xf32>
    %1128 = tpu.reciprocal %1127 {approx = true} : vector<1x4xf32> -> vector<1x4xf32>
    %1129 = arith.mulf %1128, %1101 : vector<1x4xf32>
    %cst_480 = arith.constant 0.000000e+00 : f32
    %1130 = vector.broadcast %cst_480 : f32 to vector<1x4xf32>
    %1131 = arith.subf %1130, %1116 : vector<1x4xf32>
    %1132 = math.exp %1131 : vector<1x4xf32>
    %cst_481 = arith.constant 1.000000e+00 : f32
    %1133 = vector.broadcast %cst_481 : f32 to vector<1x4xf32>
    %1134 = arith.addf %1133, %1132 : vector<1x4xf32>
    %1135 = tpu.reciprocal %1134 {approx = true} : vector<1x4xf32> -> vector<1x4xf32>
    %1136 = math.tanh %1120 : vector<1x4xf32>
    %1137 = arith.mulf %1135, %1136 : vector<1x4xf32>
    %1138 = arith.addf %1129, %1137 : vector<1x4xf32>
    %cst_482 = arith.constant 0.000000e+00 : f32
    %1139 = vector.broadcast %cst_482 : f32 to vector<1x4xf32>
    %1140 = arith.subf %1139, %1122 : vector<1x4xf32>
    %1141 = math.exp %1140 : vector<1x4xf32>
    %cst_483 = arith.constant 1.000000e+00 : f32
    %1142 = vector.broadcast %cst_483 : f32 to vector<1x4xf32>
    %1143 = arith.addf %1142, %1141 : vector<1x4xf32>
    %1144 = tpu.reciprocal %1143 {approx = true} : vector<1x4xf32> -> vector<1x4xf32>
    %1145 = math.tanh %1138 : vector<1x4xf32>
    %1146 = arith.mulf %1144, %1145 : vector<1x4xf32>
    %c3_484 = arith.constant 3 : index
    %c0_485 = arith.constant 0 : index
    %1147 = vector.load %arg23[%c3_484, %c0_485] : memref<8x4xf32, #tpu.memory_space<vmem>>, vector<1x4xf32>
    tpu.vector_store %arg23[%c3_484, %c0_485], %1146 {strides = array<i32>} : memref<8x4xf32, #tpu.memory_space<vmem>>, vector<1x4xf32>,
    %1148 = vector.extract_strided_slice %968 {offsets = [4, 0], sizes = [1, 4], strides = [1, 1]} : vector<8x4xf32> to vector<1x4xf32>
    %1149 = vector.extract_strided_slice %975 {offsets = [4, 0], sizes = [1, 4], strides = [1, 1]} : vector<8x4xf32> to vector<1x4xf32>
    %1150 = vector.extract_strided_slice %982 {offsets = [4, 0], sizes = [1, 4], strides = [1, 1]} : vector<8x4xf32> to vector<1x4xf32>
    %1151 = vector.extract_strided_slice %989 {offsets = [4, 0], sizes = [1, 4], strides = [1, 1]} : vector<8x4xf32> to vector<1x4xf32>
    %cst_486 = arith.constant dense<0.000000e+00> : vector<1x4xf32>
    %1152 = tpu.matmul %1146, %991, %cst_486 {dimension_numbers = #tpu.dot_dimension_numbers<[1], [0], [0], [1], [0, 0, 1, 1], [], []>} : vector<1x4xf32>, vector<4x4xf32>, vector<1x4xf32> -> vector<1x4xf32>
    %1153 = arith.addf %1148, %1152 : vector<1x4xf32>
    %cst_487 = arith.constant dense<0.000000e+00> : vector<1x4xf32>
    %1154 = tpu.matmul %1146, %993, %cst_487 {dimension_numbers = #tpu.dot_dimension_numbers<[1], [0], [0], [1], [0, 0, 1, 1], [], []>} : vector<1x4xf32>, vector<4x4xf32>, vector<1x4xf32> -> vector<1x4xf32>
    %1155 = arith.addf %1149, %1154 : vector<1x4xf32>
    %cst_488 = arith.constant dense<0.000000e+00> : vector<1x4xf32>
    %1156 = tpu.matmul %1146, %995, %cst_488 {dimension_numbers = #tpu.dot_dimension_numbers<[1], [0], [0], [1], [0, 0, 1, 1], [], []>} : vector<1x4xf32>, vector<4x4xf32>, vector<1x4xf32> -> vector<1x4xf32>
    %1157 = arith.addf %1150, %1156 : vector<1x4xf32>
    %cst_489 = arith.constant dense<0.000000e+00> : vector<1x4xf32>
    %1158 = tpu.matmul %1146, %997, %cst_489 {dimension_numbers = #tpu.dot_dimension_numbers<[1], [0], [0], [1], [0, 0, 1, 1], [], []>} : vector<1x4xf32>, vector<4x4xf32>, vector<1x4xf32> -> vector<1x4xf32>
    %1159 = arith.addf %1151, %1158 : vector<1x4xf32>
    %cst_490 = arith.constant 0.000000e+00 : f32
    %1160 = vector.broadcast %cst_490 : f32 to vector<1x4xf32>
    %1161 = arith.subf %1160, %1155 : vector<1x4xf32>
    %1162 = math.exp %1161 : vector<1x4xf32>
    %cst_491 = arith.constant 1.000000e+00 : f32
    %1163 = vector.broadcast %cst_491 : f32 to vector<1x4xf32>
    %1164 = arith.addf %1163, %1162 : vector<1x4xf32>
    %1165 = tpu.reciprocal %1164 {approx = true} : vector<1x4xf32> -> vector<1x4xf32>
    %1166 = arith.mulf %1165, %1138 : vector<1x4xf32>
    %cst_492 = arith.constant 0.000000e+00 : f32
    %1167 = vector.broadcast %cst_492 : f32 to vector<1x4xf32>
    %1168 = arith.subf %1167, %1153 : vector<1x4xf32>
    %1169 = math.exp %1168 : vector<1x4xf32>
    %cst_493 = arith.constant 1.000000e+00 : f32
    %1170 = vector.broadcast %cst_493 : f32 to vector<1x4xf32>
    %1171 = arith.addf %1170, %1169 : vector<1x4xf32>
    %1172 = tpu.reciprocal %1171 {approx = true} : vector<1x4xf32> -> vector<1x4xf32>
    %1173 = math.tanh %1157 : vector<1x4xf32>
    %1174 = arith.mulf %1172, %1173 : vector<1x4xf32>
    %1175 = arith.addf %1166, %1174 : vector<1x4xf32>
    %cst_494 = arith.constant 0.000000e+00 : f32
    %1176 = vector.broadcast %cst_494 : f32 to vector<1x4xf32>
    %1177 = arith.subf %1176, %1159 : vector<1x4xf32>
    %1178 = math.exp %1177 : vector<1x4xf32>
    %cst_495 = arith.constant 1.000000e+00 : f32
    %1179 = vector.broadcast %cst_495 : f32 to vector<1x4xf32>
    %1180 = arith.addf %1179, %1178 : vector<1x4xf32>
    %1181 = tpu.reciprocal %1180 {approx = true} : vector<1x4xf32> -> vector<1x4xf32>
    %1182 = math.tanh %1175 : vector<1x4xf32>
    %1183 = arith.mulf %1181, %1182 : vector<1x4xf32>
    %c4_496 = arith.constant 4 : index
    %c0_497 = arith.constant 0 : index
    %1184 = vector.load %arg23[%c4_496, %c0_497] : memref<8x4xf32, #tpu.memory_space<vmem>>, vector<1x4xf32>
    tpu.vector_store %arg23[%c4_496, %c0_497], %1183 {strides = array<i32>} : memref<8x4xf32, #tpu.memory_space<vmem>>, vector<1x4xf32>,
    %1185 = vector.extract_strided_slice %968 {offsets = [5, 0], sizes = [1, 4], strides = [1, 1]} : vector<8x4xf32> to vector<1x4xf32>
    %1186 = vector.extract_strided_slice %975 {offsets = [5, 0], sizes = [1, 4], strides = [1, 1]} : vector<8x4xf32> to vector<1x4xf32>
    %1187 = vector.extract_strided_slice %982 {offsets = [5, 0], sizes = [1, 4], strides = [1, 1]} : vector<8x4xf32> to vector<1x4xf32>
    %1188 = vector.extract_strided_slice %989 {offsets = [5, 0], sizes = [1, 4], strides = [1, 1]} : vector<8x4xf32> to vector<1x4xf32>
    %cst_498 = arith.constant dense<0.000000e+00> : vector<1x4xf32>
    %1189 = tpu.matmul %1183, %991, %cst_498 {dimension_numbers = #tpu.dot_dimension_numbers<[1], [0], [0], [1], [0, 0, 1, 1], [], []>} : vector<1x4xf32>, vector<4x4xf32>, vector<1x4xf32> -> vector<1x4xf32>
    %1190 = arith.addf %1185, %1189 : vector<1x4xf32>
    %cst_499 = arith.constant dense<0.000000e+00> : vector<1x4xf32>
    %1191 = tpu.matmul %1183, %993, %cst_499 {dimension_numbers = #tpu.dot_dimension_numbers<[1], [0], [0], [1], [0, 0, 1, 1], [], []>} : vector<1x4xf32>, vector<4x4xf32>, vector<1x4xf32> -> vector<1x4xf32>
    %1192 = arith.addf %1186, %1191 : vector<1x4xf32>
    %cst_500 = arith.constant dense<0.000000e+00> : vector<1x4xf32>
    %1193 = tpu.matmul %1183, %995, %cst_500 {dimension_numbers = #tpu.dot_dimension_numbers<[1], [0], [0], [1], [0, 0, 1, 1], [], []>} : vector<1x4xf32>, vector<4x4xf32>, vector<1x4xf32> -> vector<1x4xf32>
    %1194 = arith.addf %1187, %1193 : vector<1x4xf32>
    %cst_501 = arith.constant dense<0.000000e+00> : vector<1x4xf32>
    %1195 = tpu.matmul %1183, %997, %cst_501 {dimension_numbers = #tpu.dot_dimension_numbers<[1], [0], [0], [1], [0, 0, 1, 1], [], []>} : vector<1x4xf32>, vector<4x4xf32>, vector<1x4xf32> -> vector<1x4xf32>
    %1196 = arith.addf %1188, %1195 : vector<1x4xf32>
    %cst_502 = arith.constant 0.000000e+00 : f32
    %1197 = vector.broadcast %cst_502 : f32 to vector<1x4xf32>
    %1198 = arith.subf %1197, %1192 : vector<1x4xf32>
    %1199 = math.exp %1198 : vector<1x4xf32>
    %cst_503 = arith.constant 1.000000e+00 : f32
    %1200 = vector.broadcast %cst_503 : f32 to vector<1x4xf32>
    %1201 = arith.addf %1200, %1199 : vector<1x4xf32>
    %1202 = tpu.reciprocal %1201 {approx = true} : vector<1x4xf32> -> vector<1x4xf32>
    %1203 = arith.mulf %1202, %1175 : vector<1x4xf32>
    %cst_504 = arith.constant 0.000000e+00 : f32
    %1204 = vector.broadcast %cst_504 : f32 to vector<1x4xf32>
    %1205 = arith.subf %1204, %1190 : vector<1x4xf32>
    %1206 = math.exp %1205 : vector<1x4xf32>
    %cst_505 = arith.constant 1.000000e+00 : f32
    %1207 = vector.broadcast %cst_505 : f32 to vector<1x4xf32>
    %1208 = arith.addf %1207, %1206 : vector<1x4xf32>
    %1209 = tpu.reciprocal %1208 {approx = true} : vector<1x4xf32> -> vector<1x4xf32>
    %1210 = math.tanh %1194 : vector<1x4xf32>
    %1211 = arith.mulf %1209, %1210 : vector<1x4xf32>
    %1212 = arith.addf %1203, %1211 : vector<1x4xf32>
    %cst_506 = arith.constant 0.000000e+00 : f32
    %1213 = vector.broadcast %cst_506 : f32 to vector<1x4xf32>
    %1214 = arith.subf %1213, %1196 : vector<1x4xf32>
    %1215 = math.exp %1214 : vector<1x4xf32>
    %cst_507 = arith.constant 1.000000e+00 : f32
    %1216 = vector.broadcast %cst_507 : f32 to vector<1x4xf32>
    %1217 = arith.addf %1216, %1215 : vector<1x4xf32>
    %1218 = tpu.reciprocal %1217 {approx = true} : vector<1x4xf32> -> vector<1x4xf32>
    %1219 = math.tanh %1212 : vector<1x4xf32>
    %1220 = arith.mulf %1218, %1219 : vector<1x4xf32>
    %c5_508 = arith.constant 5 : index
    %c0_509 = arith.constant 0 : index
    %1221 = vector.load %arg23[%c5_508, %c0_509] : memref<8x4xf32, #tpu.memory_space<vmem>>, vector<1x4xf32>
    tpu.vector_store %arg23[%c5_508, %c0_509], %1220 {strides = array<i32>} : memref<8x4xf32, #tpu.memory_space<vmem>>, vector<1x4xf32>,
    %1222 = vector.extract_strided_slice %968 {offsets = [6, 0], sizes = [1, 4], strides = [1, 1]} : vector<8x4xf32> to vector<1x4xf32>
    %1223 = vector.extract_strided_slice %975 {offsets = [6, 0], sizes = [1, 4], strides = [1, 1]} : vector<8x4xf32> to vector<1x4xf32>
    %1224 = vector.extract_strided_slice %982 {offsets = [6, 0], sizes = [1, 4], strides = [1, 1]} : vector<8x4xf32> to vector<1x4xf32>
    %1225 = vector.extract_strided_slice %989 {offsets = [6, 0], sizes = [1, 4], strides = [1, 1]} : vector<8x4xf32> to vector<1x4xf32>
    %cst_510 = arith.constant dense<0.000000e+00> : vector<1x4xf32>
    %1226 = tpu.matmul %1220, %991, %cst_510 {dimension_numbers = #tpu.dot_dimension_numbers<[1], [0], [0], [1], [0, 0, 1, 1], [], []>} : vector<1x4xf32>, vector<4x4xf32>, vector<1x4xf32> -> vector<1x4xf32>
    %1227 = arith.addf %1222, %1226 : vector<1x4xf32>
    %cst_511 = arith.constant dense<0.000000e+00> : vector<1x4xf32>
    %1228 = tpu.matmul %1220, %993, %cst_511 {dimension_numbers = #tpu.dot_dimension_numbers<[1], [0], [0], [1], [0, 0, 1, 1], [], []>} : vector<1x4xf32>, vector<4x4xf32>, vector<1x4xf32> -> vector<1x4xf32>
    %1229 = arith.addf %1223, %1228 : vector<1x4xf32>
    %cst_512 = arith.constant dense<0.000000e+00> : vector<1x4xf32>
    %1230 = tpu.matmul %1220, %995, %cst_512 {dimension_numbers = #tpu.dot_dimension_numbers<[1], [0], [0], [1], [0, 0, 1, 1], [], []>} : vector<1x4xf32>, vector<4x4xf32>, vector<1x4xf32> -> vector<1x4xf32>
    %1231 = arith.addf %1224, %1230 : vector<1x4xf32>
    %cst_513 = arith.constant dense<0.000000e+00> : vector<1x4xf32>
    %1232 = tpu.matmul %1220, %997, %cst_513 {dimension_numbers = #tpu.dot_dimension_numbers<[1], [0], [0], [1], [0, 0, 1, 1], [], []>} : vector<1x4xf32>, vector<4x4xf32>, vector<1x4xf32> -> vector<1x4xf32>
    %1233 = arith.addf %1225, %1232 : vector<1x4xf32>
    %cst_514 = arith.constant 0.000000e+00 : f32
    %1234 = vector.broadcast %cst_514 : f32 to vector<1x4xf32>
    %1235 = arith.subf %1234, %1229 : vector<1x4xf32>
    %1236 = math.exp %1235 : vector<1x4xf32>
    %cst_515 = arith.constant 1.000000e+00 : f32
    %1237 = vector.broadcast %cst_515 : f32 to vector<1x4xf32>
    %1238 = arith.addf %1237, %1236 : vector<1x4xf32>
    %1239 = tpu.reciprocal %1238 {approx = true} : vector<1x4xf32> -> vector<1x4xf32>
    %1240 = arith.mulf %1239, %1212 : vector<1x4xf32>
    %cst_516 = arith.constant 0.000000e+00 : f32
    %1241 = vector.broadcast %cst_516 : f32 to vector<1x4xf32>
    %1242 = arith.subf %1241, %1227 : vector<1x4xf32>
    %1243 = math.exp %1242 : vector<1x4xf32>
    %cst_517 = arith.constant 1.000000e+00 : f32
    %1244 = vector.broadcast %cst_517 : f32 to vector<1x4xf32>
    %1245 = arith.addf %1244, %1243 : vector<1x4xf32>
    %1246 = tpu.reciprocal %1245 {approx = true} : vector<1x4xf32> -> vector<1x4xf32>
    %1247 = math.tanh %1231 : vector<1x4xf32>
    %1248 = arith.mulf %1246, %1247 : vector<1x4xf32>
    %1249 = arith.addf %1240, %1248 : vector<1x4xf32>
    %cst_518 = arith.constant 0.000000e+00 : f32
    %1250 = vector.broadcast %cst_518 : f32 to vector<1x4xf32>
    %1251 = arith.subf %1250, %1233 : vector<1x4xf32>
    %1252 = math.exp %1251 : vector<1x4xf32>
    %cst_519 = arith.constant 1.000000e+00 : f32
    %1253 = vector.broadcast %cst_519 : f32 to vector<1x4xf32>
    %1254 = arith.addf %1253, %1252 : vector<1x4xf32>
    %1255 = tpu.reciprocal %1254 {approx = true} : vector<1x4xf32> -> vector<1x4xf32>
    %1256 = math.tanh %1249 : vector<1x4xf32>
    %1257 = arith.mulf %1255, %1256 : vector<1x4xf32>
    %c6_520 = arith.constant 6 : index
    %c0_521 = arith.constant 0 : index
    %1258 = vector.load %arg23[%c6_520, %c0_521] : memref<8x4xf32, #tpu.memory_space<vmem>>, vector<1x4xf32>
    tpu.vector_store %arg23[%c6_520, %c0_521], %1257 {strides = array<i32>} : memref<8x4xf32, #tpu.memory_space<vmem>>, vector<1x4xf32>,
    %1259 = vector.extract_strided_slice %968 {offsets = [7, 0], sizes = [1, 4], strides = [1, 1]} : vector<8x4xf32> to vector<1x4xf32>
    %1260 = vector.extract_strided_slice %975 {offsets = [7, 0], sizes = [1, 4], strides = [1, 1]} : vector<8x4xf32> to vector<1x4xf32>
    %1261 = vector.extract_strided_slice %982 {offsets = [7, 0], sizes = [1, 4], strides = [1, 1]} : vector<8x4xf32> to vector<1x4xf32>
    %1262 = vector.extract_strided_slice %989 {offsets = [7, 0], sizes = [1, 4], strides = [1, 1]} : vector<8x4xf32> to vector<1x4xf32>
    %cst_522 = arith.constant dense<0.000000e+00> : vector<1x4xf32>
    %1263 = tpu.matmul %1257, %991, %cst_522 {dimension_numbers = #tpu.dot_dimension_numbers<[1], [0], [0], [1], [0, 0, 1, 1], [], []>} : vector<1x4xf32>, vector<4x4xf32>, vector<1x4xf32> -> vector<1x4xf32>
    %1264 = arith.addf %1259, %1263 : vector<1x4xf32>
    %cst_523 = arith.constant dense<0.000000e+00> : vector<1x4xf32>
    %1265 = tpu.matmul %1257, %993, %cst_523 {dimension_numbers = #tpu.dot_dimension_numbers<[1], [0], [0], [1], [0, 0, 1, 1], [], []>} : vector<1x4xf32>, vector<4x4xf32>, vector<1x4xf32> -> vector<1x4xf32>
    %1266 = arith.addf %1260, %1265 : vector<1x4xf32>
    %cst_524 = arith.constant dense<0.000000e+00> : vector<1x4xf32>
    %1267 = tpu.matmul %1257, %995, %cst_524 {dimension_numbers = #tpu.dot_dimension_numbers<[1], [0], [0], [1], [0, 0, 1, 1], [], []>} : vector<1x4xf32>, vector<4x4xf32>, vector<1x4xf32> -> vector<1x4xf32>
    %1268 = arith.addf %1261, %1267 : vector<1x4xf32>
    %cst_525 = arith.constant dense<0.000000e+00> : vector<1x4xf32>
    %1269 = tpu.matmul %1257, %997, %cst_525 {dimension_numbers = #tpu.dot_dimension_numbers<[1], [0], [0], [1], [0, 0, 1, 1], [], []>} : vector<1x4xf32>, vector<4x4xf32>, vector<1x4xf32> -> vector<1x4xf32>
    %1270 = arith.addf %1262, %1269 : vector<1x4xf32>
    %cst_526 = arith.constant 0.000000e+00 : f32
    %1271 = vector.broadcast %cst_526 : f32 to vector<1x4xf32>
    %1272 = arith.subf %1271, %1266 : vector<1x4xf32>
    %1273 = math.exp %1272 : vector<1x4xf32>
    %cst_527 = arith.constant 1.000000e+00 : f32
    %1274 = vector.broadcast %cst_527 : f32 to vector<1x4xf32>
    %1275 = arith.addf %1274, %1273 : vector<1x4xf32>
    %1276 = tpu.reciprocal %1275 {approx = true} : vector<1x4xf32> -> vector<1x4xf32>
    %1277 = arith.mulf %1276, %1249 : vector<1x4xf32>
    %cst_528 = arith.constant 0.000000e+00 : f32
    %1278 = vector.broadcast %cst_528 : f32 to vector<1x4xf32>
    %1279 = arith.subf %1278, %1264 : vector<1x4xf32>
    %1280 = math.exp %1279 : vector<1x4xf32>
    %cst_529 = arith.constant 1.000000e+00 : f32
    %1281 = vector.broadcast %cst_529 : f32 to vector<1x4xf32>
    %1282 = arith.addf %1281, %1280 : vector<1x4xf32>
    %1283 = tpu.reciprocal %1282 {approx = true} : vector<1x4xf32> -> vector<1x4xf32>
    %1284 = math.tanh %1268 : vector<1x4xf32>
    %1285 = arith.mulf %1283, %1284 : vector<1x4xf32>
    %1286 = arith.addf %1277, %1285 : vector<1x4xf32>
    %cst_530 = arith.constant 0.000000e+00 : f32
    %1287 = vector.broadcast %cst_530 : f32 to vector<1x4xf32>
    %1288 = arith.subf %1287, %1270 : vector<1x4xf32>
    %1289 = math.exp %1288 : vector<1x4xf32>
    %cst_531 = arith.constant 1.000000e+00 : f32
    %1290 = vector.broadcast %cst_531 : f32 to vector<1x4xf32>
    %1291 = arith.addf %1290, %1289 : vector<1x4xf32>
    %1292 = tpu.reciprocal %1291 {approx = true} : vector<1x4xf32> -> vector<1x4xf32>
    %1293 = math.tanh %1286 : vector<1x4xf32>
    %1294 = arith.mulf %1292, %1293 : vector<1x4xf32>
    %c7_532 = arith.constant 7 : index
    %c0_533 = arith.constant 0 : index
    %1295 = vector.load %arg23[%c7_532, %c0_533] : memref<8x4xf32, #tpu.memory_space<vmem>>, vector<1x4xf32>
    tpu.vector_store %arg23[%c7_532, %c0_533], %1294 {strides = array<i32>} : memref<8x4xf32, #tpu.memory_space<vmem>>, vector<1x4xf32>,
    %c0_534 = arith.constant 0 : index
    %c0_535 = arith.constant 0 : index
    %1296 = vector.load %arg23[%c0_534, %c0_535] : memref<8x4xf32, #tpu.memory_space<vmem>>, vector<8x4xf32>
    %c0_536 = arith.constant 0 : index
    %c0_537 = arith.constant 0 : index
    %1297 = vector.load %arg13[%c0_536, %c0_537] : memref<4x4xf32, #tpu.memory_space<vmem>>, vector<4x4xf32>
    %cst_538 = arith.constant dense<0.000000e+00> : vector<8x4xf32>
    %1298 = tpu.matmul %1296, %1297, %cst_538 {dimension_numbers = #tpu.dot_dimension_numbers<[1], [0], [0], [1], [0, 0, 1, 1], [], []>} : vector<8x4xf32>, vector<4x4xf32>, vector<8x4xf32> -> vector<8x4xf32>
    %c0_539 = arith.constant 0 : index
    %c0_540 = arith.constant 0 : index
    %1299 = vector.load %arg14[%c0_539, %c0_540] : memref<1x4xf32, #tpu.memory_space<vmem>>, vector<1x4xf32>
    %1300 = vector.broadcast %1299 : vector<1x4xf32> to vector<8x4xf32>
    %1301 = arith.addf %1298, %1300 : vector<8x4xf32>
    %1302 = vector.shape_cast %1301 : vector<8x4xf32> to vector<8x1x4xf32>
    %c0_541 = arith.constant 0 : index
    %c0_542 = arith.constant 0 : index
    %c0_543 = arith.constant 0 : index
    %1303 = vector.load %arg19[%c0_541, %c0_542, %c0_543] : memref<8x1x4xf32, #tpu.memory_space<vmem>>, vector<8x1x4xf32>
    tpu.vector_store %arg19[%c0_541, %c0_542, %c0_543], %1302 {strides = array<i32>} : memref<8x1x4xf32, #tpu.memory_space<vmem>>, vector<8x1x4xf32>,
    %c0_544 = arith.constant 0 : index
    %c0_545 = arith.constant 0 : index
    %1304 = vector.load %arg15[%c0_544, %c0_545] : memref<16x96xf32, #tpu.memory_space<vmem>>, vector<16x96xf32>
    %cst_546 = arith.constant dense<0.000000e+00> : vector<1x96xf32>
    %1305 = tpu.matmul %662, %1304, %cst_546 {dimension_numbers = #tpu.dot_dimension_numbers<[1], [0], [0], [1], [0, 0, 1, 1], [], []>} : vector<1x16xf32>, vector<16x96xf32>, vector<1x96xf32> -> vector<1x96xf32>
    %c0_547 = arith.constant 0 : index
    %c0_548 = arith.constant 0 : index
    %1306 = vector.load %arg16[%c0_547, %c0_548] : memref<1x96xf32, #tpu.memory_space<vmem>>, vector<1x96xf32>
    %1307 = arith.addf %1305, %1306 : vector<1x96xf32>
    %c0_549 = arith.constant 0 : index
    %c0_550 = arith.constant 0 : index
    %1308 = vector.load %arg17[%c0_549, %c0_550] : memref<96x3xf32, #tpu.memory_space<vmem>>, vector<96x3xf32>
    %cst_551 = arith.constant dense<0.000000e+00> : vector<1x3xf32>
    %1309 = tpu.matmul %1307, %1308, %cst_551 {dimension_numbers = #tpu.dot_dimension_numbers<[1], [0], [0], [1], [0, 0, 1, 1], [], []>} : vector<1x96xf32>, vector<96x3xf32>, vector<1x3xf32> -> vector<1x3xf32>
    %c0_552 = arith.constant 0 : index
    %c0_553 = arith.constant 0 : index
    %1310 = vector.load %arg18[%c0_552, %c0_553] : memref<1x3xf32, #tpu.memory_space<vmem>>, vector<1x3xf32>
    %1311 = arith.addf %1309, %1310 : vector<1x3xf32>
    %cst_554 = arith.constant dense<0xFF800000> : vector<1xf32>
    %1312 = vector.multi_reduction <maximumf>, %1311, %cst_554 [1] : vector<1x3xf32> to vector<1xf32>
    %1313 = vector.shape_cast %1312 : vector<1xf32> to vector<1x1xf32>
    %1314 = vector.broadcast %1313 : vector<1x1xf32> to vector<1x3xf32>
    %1315 = arith.subf %1311, %1314 : vector<1x3xf32>
    %1316 = math.exp %1315 : vector<1x3xf32>
    %cst_555 = arith.constant dense<0.000000e+00> : vector<1xf32>
    %1317 = vector.multi_reduction <add>, %1316, %cst_555 [1] : vector<1x3xf32> to vector<1xf32>
    %1318 = vector.shape_cast %1317 : vector<1xf32> to vector<1x1xf32>
    %1319 = vector.broadcast %1318 : vector<1x1xf32> to vector<1x3xf32>
    %1320 = arith.divf %1316, %1319 : vector<1x3xf32>
    %c0_556 = arith.constant 0 : index
    %c0_557 = arith.constant 0 : index
    %1321 = vector.load %arg20[%c0_556, %c0_557] : memref<1x3xf32, #tpu.memory_space<vmem>>, vector<1x3xf32>
    tpu.vector_store %arg20[%c0_556, %c0_557], %1320 {strides = array<i32>} : memref<1x3xf32, #tpu.memory_space<vmem>>, vector<1x3xf32>,
    return
  }
}

</mosaic_0001>

<llo_original>
// kernel: dl_classifier_forward.1
$region0: #{dl_classifier_forward.1}
  #allocation0 [shape = 'u32[]', space=smem, size = 0x4, offset = 0x4, fixed_abs, tag = 'smem constant byte address 0x4 - core index']
  #allocation1 [shape = 'u32[72,128]{1,0:T(1,128)}', space=vmem, size = 0x9000, scoped, tag = 'internal scratch']
  #allocation2 [shape = 'f32[8,32]{1,0:T(8,128)}', space=vmem, size = 0x1000, scoped, tag = 'scratch operand']
  #allocation3 [shape = 'f32[8,32]{1,0:T(8,128)}', space=vmem, size = 0x1000, scoped, tag = 'scratch operand']
  #allocation4 [shape = 'f32[8,4]{1,0:T(8,128)}', space=vmem, size = 0x1000, scoped, tag = 'scratch operand']
  %s0 = inlined_call_operand.vmem [shape: f32[8,1,4], index: 0, kind: input, shape index: {}]
  %s1 = inlined_call_operand.vmem [shape: f32[4,4,32], index: 1, kind: input, shape index: {}]
  %s2 = inlined_call_operand.vmem [shape: f32[4,32,32], index: 2, kind: input, shape index: {}]
  %s3 = inlined_call_operand.vmem [shape: f32[4,1,32], index: 3, kind: input, shape index: {}]
  %s4 = inlined_call_operand.vmem [shape: f32[4,32,16], index: 4, kind: input, shape index: {}]
  %s5 = inlined_call_operand.vmem [shape: f32[4,16,16], index: 5, kind: input, shape index: {}]
  %s6 = inlined_call_operand.vmem [shape: f32[4,1,16], index: 6, kind: input, shape index: {}]
  %s7 = inlined_call_operand.vmem [shape: f32[4,16,32], index: 7, kind: input, shape index: {}]
  %s8 = inlined_call_operand.vmem [shape: f32[4,32,32], index: 8, kind: input, shape index: {}]
  %s9 = inlined_call_operand.vmem [shape: f32[4,1,32], index: 9, kind: input, shape index: {}]
  %s10 = inlined_call_operand.vmem [shape: f32[4,32,4], index: 10, kind: input, shape index: {}]
  %s11 = inlined_call_operand.vmem [shape: f32[4,4,4], index: 11, kind: input, shape index: {}]
  %s12 = inlined_call_operand.vmem [shape: f32[4,1,4], index: 12, kind: input, shape index: {}]
  %s13 = inlined_call_operand.vmem [shape: f32[4,4], index: 13, kind: input, shape index: {}]
  %s14 = inlined_call_operand.vmem [shape: f32[1,4], index: 14, kind: input, shape index: {}]
  %s15 = inlined_call_operand.vmem [shape: f32[16,96], index: 15, kind: input, shape index: {}]
  %s16 = inlined_call_operand.vmem [shape: f32[1,96], index: 16, kind: input, shape index: {}]
  %s17 = inlined_call_operand.vmem [shape: f32[96,3], index: 17, kind: input, shape index: {}]
  %s18 = inlined_call_operand.vmem [shape: f32[1,3], index: 18, kind: input, shape index: {}]
  %s19 = inlined_call_operand.vmem [shape: f32[8,1,4], index: 19, kind: output, shape index: {0}]
  %s20 = inlined_call_operand.hbm [shape: f32[1,3], index: 20, kind: output, shape index: {1}]
  %21 = xla_tuple %s19, %s20
  %s22 = sld [smem:[#allocation0]]
  $region94: #{dl_classifier_forward.1} parent=0
    _
  %s24 = ssub.s32 1, %s22
  %s25 = scalar_select 0, %s24, %s22
  $region1: #{dl_classifier_forward.1} parent=0
    #allocation5 [shape = 'u8[512]{0}', space=vmem, size = 0x400, scoped, tag = 'output window, operand 1, single buffered']
    #allocation6 [shape = 's32[1]{0}', space=sflag, size = 0x4, scoped, tag = 'scoped memory for dl_classifier_forward.1']
    %26 = vsyncpa [#allocation6], 0
    // Predicated region
    $region2: #{dl_classifier_forward.1} parent=1 // pred_check
      _
    $region3: #{dl_classifier_forward.1} parent=1 // pred_check_branch
      %28 = sbr.rel (0) target = $region5
    $region4: #{dl_classifier_forward.1} parent=1 // pred_region
      _
    $region5: #{dl_classifier_forward.1} parent=1 // pred_fallthru
      _
    // Predicated region
    $region6: #{dl_classifier_forward.1} parent=1 // pred_check
      _
    $region7: #{dl_classifier_forward.1} parent=1 // pred_check_branch
      %30 = sbr.rel (0) target = $region9
    $region8: #{dl_classifier_forward.1} parent=1 // pred_region
      _
    $region9: #{dl_classifier_forward.1} parent=1 // pred_fallthru
      _
    // Predicated region
    $region10: #{dl_classifier_forward.1} parent=1 // pred_check
      _
    $region11: #{dl_classifier_forward.1} parent=1 // pred_check_branch
      %32 = sbr.rel (0) target = $region13
    $region12: #{dl_classifier_forward.1} parent=1 // pred_region
      _
    $region13: #{dl_classifier_forward.1} parent=1 // pred_fallthru
      _
    // Predicated region
    $region14: #{dl_classifier_forward.1} parent=1 // pred_check
      _
    $region15: #{dl_classifier_forward.1} parent=1 // pred_check_branch
      %34 = sbr.rel (0) target = $region17
    $region16: #{dl_classifier_forward.1} parent=1 // pred_region
      _
    $region17: #{dl_classifier_forward.1} parent=1 // pred_fallthru
      _
    // Predicated region
    $region18: #{dl_classifier_forward.1} parent=1 // pred_check
      _
    $region19: #{dl_classifier_forward.1} parent=1 // pred_check_branch
      %36 = sbr.rel (0) target = $region21
    $region20: #{dl_classifier_forward.1} parent=1 // pred_region
      _
    $region21: #{dl_classifier_forward.1} parent=1 // pred_fallthru
      _
    // Predicated region
    $region22: #{dl_classifier_forward.1} parent=1 // pred_check
      _
    $region23: #{dl_classifier_forward.1} parent=1 // pred_check_branch
      %38 = sbr.rel (0) target = $region25
    $region24: #{dl_classifier_forward.1} parent=1 // pred_region
      _
    $region25: #{dl_classifier_forward.1} parent=1 // pred_fallthru
      _
    // Predicated region
    $region26: #{dl_classifier_forward.1} parent=1 // pred_check
      _
    $region27: #{dl_classifier_forward.1} parent=1 // pred_check_branch
      %40 = sbr.rel (0) target = $region29
    $region28: #{dl_classifier_forward.1} parent=1 // pred_region
      _
    $region29: #{dl_classifier_forward.1} parent=1 // pred_fallthru
      _
    // Predicated region
    $region30: #{dl_classifier_forward.1} parent=1 // pred_check
      _
    $region31: #{dl_classifier_forward.1} parent=1 // pred_check_branch
      %42 = sbr.rel (0) target = $region33
    $region32: #{dl_classifier_forward.1} parent=1 // pred_region
      _
    $region33: #{dl_classifier_forward.1} parent=1 // pred_fallthru
      _
    // Predicated region
    $region34: #{dl_classifier_forward.1} parent=1 // pred_check
      _
    $region35: #{dl_classifier_forward.1} parent=1 // pred_check_branch
      %44 = sbr.rel (0) target = $region37
    $region36: #{dl_classifier_forward.1} parent=1 // pred_region
      _
    $region37: #{dl_classifier_forward.1} parent=1 // pred_fallthru
      _
    // Predicated region
    $region38: #{dl_classifier_forward.1} parent=1 // pred_check
      _
    $region39: #{dl_classifier_forward.1} parent=1 // pred_check_branch
      %46 = sbr.rel (0) target = $region41
    $region40: #{dl_classifier_forward.1} parent=1 // pred_region
      _
    $region41: #{dl_classifier_forward.1} parent=1 // pred_fallthru
      _
    // Predicated region
    $region42: #{dl_classifier_forward.1} parent=1 // pred_check
      _
    $region43: #{dl_classifier_forward.1} parent=1 // pred_check_branch
      %48 = sbr.rel (0) target = $region45
    $region44: #{dl_classifier_forward.1} parent=1 // pred_region
      _
    $region45: #{dl_classifier_forward.1} parent=1 // pred_fallthru
      _
    // Predicated region
    $region46: #{dl_classifier_forward.1} parent=1 // pred_check
      _
    $region47: #{dl_classifier_forward.1} parent=1 // pred_check_branch
      %50 = sbr.rel (0) target = $region49
    $region48: #{dl_classifier_forward.1} parent=1 // pred_region
      _
    $region49: #{dl_classifier_forward.1} parent=1 // pred_fallthru
      _
    // Predicated region
    $region50: #{dl_classifier_forward.1} parent=1 // pred_check
      _
    $region51: #{dl_classifier_forward.1} parent=1 // pred_check_branch
      %52 = sbr.rel (0) target = $region53
    $region52: #{dl_classifier_forward.1} parent=1 // pred_region
      _
    $region53: #{dl_classifier_forward.1} parent=1 // pred_fallthru
      _
    // Predicated region
    $region54: #{dl_classifier_forward.1} parent=1 // pred_check
      _
    $region55: #{dl_classifier_forward.1} parent=1 // pred_check_branch
      %54 = sbr.rel (0) target = $region57
    $region56: #{dl_classifier_forward.1} parent=1 // pred_region
      _
    $region57: #{dl_classifier_forward.1} parent=1 // pred_fallthru
      _
    // Predicated region
    $region58: #{dl_classifier_forward.1} parent=1 // pred_check
      _
    $region59: #{dl_classifier_forward.1} parent=1 // pred_check_branch
      %56 = sbr.rel (0) target = $region61
    $region60: #{dl_classifier_forward.1} parent=1 // pred_region
      _
    $region61: #{dl_classifier_forward.1} parent=1 // pred_fallthru
      _
    // Predicated region
    $region62: #{dl_classifier_forward.1} parent=1 // pred_check
      _
    $region63: #{dl_classifier_forward.1} parent=1 // pred_check_branch
      %58 = sbr.rel (0) target = $region65
    $region64: #{dl_classifier_forward.1} parent=1 // pred_region
      _
    $region65: #{dl_classifier_forward.1} parent=1 // pred_fallthru
      _
    // Predicated region
    $region66: #{dl_classifier_forward.1} parent=1 // pred_check
      _
    $region67: #{dl_classifier_forward.1} parent=1 // pred_check_branch
      %60 = sbr.rel (0) target = $region69
    $region68: #{dl_classifier_forward.1} parent=1 // pred_region
      _
    $region69: #{dl_classifier_forward.1} parent=1 // pred_fallthru
      _
    // Predicated region
    $region70: #{dl_classifier_forward.1} parent=1 // pred_check
      _
    $region71: #{dl_classifier_forward.1} parent=1 // pred_check_branch
      %62 = sbr.rel (0) target = $region73
    $region72: #{dl_classifier_forward.1} parent=1 // pred_region
      _
    $region73: #{dl_classifier_forward.1} parent=1 // pred_fallthru
      _
    // Predicated region
    $region74: #{dl_classifier_forward.1} parent=1 // pred_check
      _
    $region75: #{dl_classifier_forward.1} parent=1 // pred_check_branch
      %64 = sbr.rel (0) target = $region77
    $region76: #{dl_classifier_forward.1} parent=1 // pred_region
      _
    $region77: #{dl_classifier_forward.1} parent=1 // pred_fallthru
      _
    %v65 = vld [vmem:[%s0] sm:$0x1]
    %v66 = vld [vmem:[%s0 + $0x1] sm:$0x1]
    %v67 = vld [vmem:[%s0 + $0x2] sm:$0x1]
    %v68 = vld [vmem:[%s0 + $0x3] sm:$0x1]
    %v69 = vld [vmem:[%s0 + $0x4] sm:$0x1]
    %v70 = vld [vmem:[%s0 + $0x5] sm:$0x1]
    %v71 = vld [vmem:[%s0 + $0x6] sm:$0x1]
    %v72 = vld [vmem:[%s0 + $0x7] sm:$0x1]
    %v73 = vld [vmem:[%s1] sm:$0xf]
    %v74 = vld [vmem:[%s3] sm:$0x1]
    %v76 = vperm.slane %v74, 0
    %86 = vst [vmem:[#allocation1] ss:$9 sm:$0xff] %v65
    %s87 = scalar_lea.vmem [#allocation1], 1
    %88 = vst [vmem:[%s87] ss:$9 sm:$0xff] %v66
    %s89 = scalar_lea.vmem [#allocation1], 2
    %90 = vst [vmem:[%s89] ss:$9 sm:$0xff] %v67
    %s91 = scalar_lea.vmem [#allocation1], 3
    %92 = vst [vmem:[%s91] ss:$9 sm:$0xff] %v68
    %s93 = scalar_lea.vmem [#allocation1], 4
    %94 = vst [vmem:[%s93] ss:$9 sm:$0xff] %v69
    %s95 = scalar_lea.vmem [#allocation1], 5
    %96 = vst [vmem:[%s95] ss:$9 sm:$0xff] %v70
    %s97 = scalar_lea.vmem [#allocation1], 6
    %98 = vst [vmem:[%s97] ss:$9 sm:$0xff] %v71
    %s99 = scalar_lea.vmem [#allocation1], 7
    %100 = vst [vmem:[%s99] ss:$9 sm:$0xff] %v72
    %v101 = vld [vmem:[#allocation1] sm:$0xff]
    %vm102 = vcmask 31744
    %v103 = vsel %vm102, %v101, 0
    %vm105 = vcmask 1043456
    %v107 = vsel %vm105, %v73, 0
    %109 = vmatpush.msra.mxu0 0.0
    %110 = vmatpush.msra.mxu0 0.0
    %111 = vmatpush.msra.mxu0 0.0
    %112 = vmatpush.msra.mxu0 0.0
    %113 = vmatpush.msra.mxu0 0.0
    %114 = vmatpush.msra.mxu0 0.0
    %115 = vmatpush.msra.mxu0 0.0
    %116 = vmatpush.msra.mxu0 0.0
    %117 = vmatpush.msra.mxu0 0.0
    %118 = vmatpush.msra.mxu0 0.0
    %119 = vmatpush.msra.mxu0 0.0
    %120 = vmatpush.msra.mxu0 0.0
    %121 = vmatpush.msra.mxu0 0.0
    %122 = vmatpush.msra.mxu0 0.0
    %123 = vmatpush.msra.mxu0 0.0
    %124 = vmatpush.msra.mxu0 %v107
    %125 = vmatmul.f32.gmra.mxu0 %v103
    %v126 = vpop.f32.mrf.mxu0
    %v127 = vadd.f32 %v76, %v126
    %128 = vdwg.mxu0
    %s129 = scalar_lea.vmem %s1, 4
    %v130 = vld [vmem:[%s129] sm:$0xf]
    %s131 = scalar_lea.vmem %s3, 1
    %v132 = vld [vmem:[%s131] sm:$0x1]
    %v134 = vperm.slane %v132, 0
    %136 = vst [vmem:[#allocation1] ss:$9 sm:$0xff] %v65
    %s137 = scalar_lea.vmem [#allocation1], 1
    %138 = vst [vmem:[%s137] ss:$9 sm:$0xff] %v66
    %s139 = scalar_lea.vmem [#allocation1], 2
    %140 = vst [vmem:[%s139] ss:$9 sm:$0xff] %v67
    %s141 = scalar_lea.vmem [#allocation1], 3
    %142 = vst [vmem:[%s141] ss:$9 sm:$0xff] %v68
    %s143 = scalar_lea.vmem [#allocation1], 4
    %144 = vst [vmem:[%s143] ss:$9 sm:$0xff] %v69
    %s145 = scalar_lea.vmem [#allocation1], 5
    %146 = vst [vmem:[%s145] ss:$9 sm:$0xff] %v70
    %s147 = scalar_lea.vmem [#allocation1], 6
    %148 = vst [vmem:[%s147] ss:$9 sm:$0xff] %v71
    %s149 = scalar_lea.vmem [#allocation1], 7
    %150 = vst [vmem:[%s149] ss:$9 sm:$0xff] %v72
    %v151 = vld [vmem:[#allocation1] sm:$0xff]
    %v152 = vsel %vm102, %v151, 0
    %v155 = vsel %vm105, %v130, 0
    %157 = vmatpush.msra.mxu0 0.0
    %158 = vmatpush.msra.mxu0 0.0
    %159 = vmatpush.msra.mxu0 0.0
    %160 = vmatpush.msra.mxu0 0.0
    %161 = vmatpush.msra.mxu0 0.0
    %162 = vmatpush.msra.mxu0 0.0
    %163 = vmatpush.msra.mxu0 0.0
    %164 = vmatpush.msra.mxu0 0.0
    %165 = vmatpush.msra.mxu0 0.0
    %166 = vmatpush.msra.mxu0 0.0
    %167 = vmatpush.msra.mxu0 0.0
    %168 = vmatpush.msra.mxu0 0.0
    %169 = vmatpush.msra.mxu0 0.0
    %170 = vmatpush.msra.mxu0 0.0
    %171 = vmatpush.msra.mxu0 0.0
    %172 = vmatpush.msra.mxu0 %v155
    %173 = vmatmul.f32.gmra.mxu0 %v152
    %v174 = vpop.f32.mrf.mxu0
    %v175 = vadd.f32 %v134, %v174
    %176 = vdwg.mxu0
    %s177 = scalar_lea.vmem %s1, 8
    %v178 = vld [vmem:[%s177] sm:$0xf]
    %s179 = scalar_lea.vmem %s3, 2
    %v180 = vld [vmem:[%s179] sm:$0x1]
    %v182 = vperm.slane %v180, 0
    %184 = vst [vmem:[#allocation1] ss:$9 sm:$0xff] %v65
    %s185 = scalar_lea.vmem [#allocation1], 1
    %186 = vst [vmem:[%s185] ss:$9 sm:$0xff] %v66
    %s187 = scalar_lea.vmem [#allocation1], 2
    %188 = vst [vmem:[%s187] ss:$9 sm:$0xff] %v67
    %s189 = scalar_lea.vmem [#allocation1], 3
    %190 = vst [vmem:[%s189] ss:$9 sm:$0xff] %v68
    %s191 = scalar_lea.vmem [#allocation1], 4
    %192 = vst [vmem:[%s191] ss:$9 sm:$0xff] %v69
    %s193 = scalar_lea.vmem [#allocation1], 5
    %194 = vst [vmem:[%s193] ss:$9 sm:$0xff] %v70
    %s195 = scalar_lea.vmem [#allocation1], 6
    %196 = vst [vmem:[%s195] ss:$9 sm:$0xff] %v71
    %s197 = scalar_lea.vmem [#allocation1], 7
    %198 = vst [vmem:[%s197] ss:$9 sm:$0xff] %v72
    %v199 = vld [vmem:[#allocation1] sm:$0xff]
    %v200 = vsel %vm102, %v199, 0
    %v203 = vsel %vm105, %v178, 0
    %205 = vmatpush.msra.mxu0 0.0
    %206 = vmatpush.msra.mxu0 0.0
    %207 = vmatpush.msra.mxu0 0.0
    %208 = vmatpush.msra.mxu0 0.0
    %209 = vmatpush.msra.mxu0 0.0
    %210 = vmatpush.msra.mxu0 0.0
    %211 = vmatpush.msra.mxu0 0.0
    %212 = vmatpush.msra.mxu0 0.0
    %213 = vmatpush.msra.mxu0 0.0
    %214 = vmatpush.msra.mxu0 0.0
    %215 = vmatpush.msra.mxu0 0.0
    %216 = vmatpush.msra.mxu0 0.0
    %217 = vmatpush.msra.mxu0 0.0
    %218 = vmatpush.msra.mxu0 0.0
    %219 = vmatpush.msra.mxu0 0.0
    %220 = vmatpush.msra.mxu0 %v203
    %221 = vmatmul.f32.gmra.mxu0 %v200
    %v222 = vpop.f32.mrf.mxu0
    %v223 = vadd.f32 %v182, %v222
    %224 = vdwg.mxu0
    %s225 = scalar_lea.vmem %s1, 12
    %v226 = vld [vmem:[%s225] sm:$0xf]
    %s227 = scalar_lea.vmem %s3, 3
    %v228 = vld [vmem:[%s227] sm:$0x1]
    %v230 = vperm.slane %v228, 0
    %232 = vst [vmem:[#allocation1] ss:$9 sm:$0xff] %v65
    %s233 = scalar_lea.vmem [#allocation1], 1
    %234 = vst [vmem:[%s233] ss:$9 sm:$0xff] %v66
    %s235 = scalar_lea.vmem [#allocation1], 2
    %236 = vst [vmem:[%s235] ss:$9 sm:$0xff] %v67
    %s237 = scalar_lea.vmem [#allocation1], 3
    %238 = vst [vmem:[%s237] ss:$9 sm:$0xff] %v68
    %s239 = scalar_lea.vmem [#allocation1], 4
    %240 = vst [vmem:[%s239] ss:$9 sm:$0xff] %v69
    %s241 = scalar_lea.vmem [#allocation1], 5
    %242 = vst [vmem:[%s241] ss:$9 sm:$0xff] %v70
    %s243 = scalar_lea.vmem [#allocation1], 6
    %244 = vst [vmem:[%s243] ss:$9 sm:$0xff] %v71
    %s245 = scalar_lea.vmem [#allocation1], 7
    %246 = vst [vmem:[%s245] ss:$9 sm:$0xff] %v72
    %v247 = vld [vmem:[#allocation1] sm:$0xff]
    %v248 = vsel %vm102, %v247, 0
    %v251 = vsel %vm105, %v226, 0
    %253 = vmatpush.msra.mxu0 0.0
    %254 = vmatpush.msra.mxu0 0.0
    %255 = vmatpush.msra.mxu0 0.0
    %256 = vmatpush.msra.mxu0 0.0
    %257 = vmatpush.msra.mxu0 0.0
    %258 = vmatpush.msra.mxu0 0.0
    %259 = vmatpush.msra.mxu0 0.0
    %260 = vmatpush.msra.mxu0 0.0
    %261 = vmatpush.msra.mxu0 0.0
    %262 = vmatpush.msra.mxu0 0.0
    %263 = vmatpush.msra.mxu0 0.0
    %264 = vmatpush.msra.mxu0 0.0
    %265 = vmatpush.msra.mxu0 0.0
    %266 = vmatpush.msra.mxu0 0.0
    %267 = vmatpush.msra.mxu0 0.0
    %268 = vmatpush.msra.mxu0 %v251
    %269 = vmatmul.f32.gmra.mxu0 %v248
    %v270 = vpop.f32.mrf.mxu0
    %v271 = vadd.f32 %v230, %v270
    %272 = vdwg.mxu0
    %v273 = vld [vmem:[%s2] sm:$0xff]
    %v274 = vld [vmem:[%s2 + $0x8] sm:$0xff]
    %v275 = vld [vmem:[%s2 + $0x10] sm:$0xff]
    %v276 = vld [vmem:[%s2 + $0x18] sm:$0xff]
    %s277 = scalar_lea.vmem %s2, 32
    %v278 = vld [vmem:[%s277] sm:$0xff]
    %v279 = vld [vmem:[%s277 + $0x8] sm:$0xff]
    %v280 = vld [vmem:[%s277 + $0x10] sm:$0xff]
    %v281 = vld [vmem:[%s277 + $0x18] sm:$0xff]
    %s282 = scalar_lea.vmem %s2, 64
    %v283 = vld [vmem:[%s282] sm:$0xff]
    %v284 = vld [vmem:[%s282 + $0x8] sm:$0xff]
    %v285 = vld [vmem:[%s282 + $0x10] sm:$0xff]
    %v286 = vld [vmem:[%s282 + $0x18] sm:$0xff]
    %s287 = scalar_lea.vmem %s2, 96
    %v288 = vld [vmem:[%s287] sm:$0xff]
    %v289 = vld [vmem:[%s287 + $0x8] sm:$0xff]
    %v290 = vld [vmem:[%s287 + $0x10] sm:$0xff]
    %v291 = vld [vmem:[%s287 + $0x18] sm:$0xff]
    %vm292 = vcmask 261120
    %v294 = vsel %vm292, 0.0, 0
    %296 = vmatpush.msra.mxu0 0.0
    %297 = vmatpush.msra.mxu0 0.0
    %298 = vmatpush.msra.mxu0 0.0
    %299 = vmatpush.msra.mxu0 0.0
    %300 = vmatpush.msra.mxu0 0.0
    %301 = vmatpush.msra.mxu0 0.0
    %302 = vmatpush.msra.mxu0 0.0
    %303 = vmatpush.msra.mxu0 0.0
    %304 = vmatpush.msra.mxu0 0.0
    %305 = vmatpush.msra.mxu0 0.0
    %306 = vmatpush.msra.mxu0 0.0
    %307 = vmatpush.msra.mxu0 0.0
    %308 = vmatpush.msra.mxu0 %v276
    %309 = vmatpush.msra.mxu0 %v275
    %310 = vmatpush.msra.mxu0 %v274
    %311 = vmatpush.msra.mxu0 %v273
    %312 = vmatmul.f32.gmra.mxu0 %v294
    %v313 = vpop.f32.mrf.mxu0
    %v314 = vadd.f32 0.0, %v313
    %315 = vdwg.mxu0
    %v316 = vadd.f32 %v127, %v314
    %317 = vmatpush.msra.mxu0 0.0
    %318 = vmatpush.msra.mxu0 0.0
    %319 = vmatpush.msra.mxu0 0.0
    %320 = vmatpush.msra.mxu0 0.0
    %321 = vmatpush.msra.mxu0 0.0
    %322 = vmatpush.msra.mxu0 0.0
    %323 = vmatpush.msra.mxu0 0.0
    %324 = vmatpush.msra.mxu0 0.0
    %325 = vmatpush.msra.mxu0 0.0
    %326 = vmatpush.msra.mxu0 0.0
    %327 = vmatpush.msra.mxu0 0.0
    %328 = vmatpush.msra.mxu0 0.0
    %329 = vmatpush.msra.mxu0 %v281
    %330 = vmatpush.msra.mxu0 %v280
    %331 = vmatpush.msra.mxu0 %v279
    %332 = vmatpush.msra.mxu0 %v278
    %333 = vmatmul.f32.gmra.mxu0 %v294
    %v334 = vpop.f32.mrf.mxu0
    %v335 = vadd.f32 0.0, %v334
    %336 = vdwg.mxu0
    %v337 = vadd.f32 %v175, %v335
    %338 = vmatpush.msra.mxu0 0.0
    %339 = vmatpush.msra.mxu0 0.0
    %340 = vmatpush.msra.mxu0 0.0
    %341 = vmatpush.msra.mxu0 0.0
    %342 = vmatpush.msra.mxu0 0.0
    %343 = vmatpush.msra.mxu0 0.0
    %344 = vmatpush.msra.mxu0 0.0
    %345 = vmatpush.msra.mxu0 0.0
    %346 = vmatpush.msra.mxu0 0.0
    %347 = vmatpush.msra.mxu0 0.0
    %348 = vmatpush.msra.mxu0 0.0
    %349 = vmatpush.msra.mxu0 0.0
    %350 = vmatpush.msra.mxu0 %v286
    %351 = vmatpush.msra.mxu0 %v285
    %352 = vmatpush.msra.mxu0 %v284
    %353 = vmatpush.msra.mxu0 %v283
    %354 = vmatmul.f32.gmra.mxu0 %v294
    %v355 = vpop.f32.mrf.mxu0
    %v356 = vadd.f32 0.0, %v355
    %357 = vdwg.mxu0
    %v358 = vadd.f32 %v223, %v356
    %359 = vmatpush.msra.mxu0 0.0
    %360 = vmatpush.msra.mxu0 0.0
    %361 = vmatpush.msra.mxu0 0.0
    %362 = vmatpush.msra.mxu0 0.0
    %363 = vmatpush.msra.mxu0 0.0
    %364 = vmatpush.msra.mxu0 0.0
    %365 = vmatpush.msra.mxu0 0.0
    %366 = vmatpush.msra.mxu0 0.0
    %367 = vmatpush.msra.mxu0 0.0
    %368 = vmatpush.msra.mxu0 0.0
    %369 = vmatpush.msra.mxu0 0.0
    %370 = vmatpush.msra.mxu0 0.0
    %371 = vmatpush.msra.mxu0 %v291
    %372 = vmatpush.msra.mxu0 %v290
    %373 = vmatpush.msra.mxu0 %v289
    %374 = vmatpush.msra.mxu0 %v288
    %375 = vmatmul.f32.gmra.mxu0 %v294
    %v376 = vpop.f32.mrf.mxu0
    %v377 = vadd.f32 0.0, %v376
    %378 = vdwg.mxu0
    %v379 = vadd.f32 %v271, %v377
    %v380 = vsub.f32 0.0, %v337
    %v381 = vmul.f32 %v380, 1.442695
    %v382 = vpow.pop %v381
    %v383 = vadd.f32 %v382, 1.0
    %v384 = vrcp.pop %v383
    %v385 = vmul.f32 %v384, 0.0
    %v386 = vsub.f32 0.0, %v316
    %v387 = vmul.f32 %v386, 1.442695
    %v388 = vpow.pop %v387
    %v389 = vadd.f32 %v388, 1.0
    %v390 = vrcp.pop %v389
    %v391 = vtanh.pop %v358
    %v392 = vmul.f32 %v390, %v391
    %v393 = vadd.f32 %v385, %v392
    %v394 = vsub.f32 0.0, %v379
    %v395 = vmul.f32 %v394, 1.442695
    %v396 = vpow.pop %v395
    %v397 = vadd.f32 %v396, 1.0
    %v398 = vrcp.pop %v397
    %v399 = vtanh.pop %v393
    %v400 = vmul.f32 %v398, %v399
    %vm401 = vcmask 253952
    %402 = vst.msk [vmem:[#allocation2] sm:$0x1] %vm401, %v400
    %v404 = vsel %vm292, %v400, 0
    %406 = vmatpush.msra.mxu0 0.0
    %407 = vmatpush.msra.mxu0 0.0
    %408 = vmatpush.msra.mxu0 0.0
    %409 = vmatpush.msra.mxu0 0.0
    %410 = vmatpush.msra.mxu0 0.0
    %411 = vmatpush.msra.mxu0 0.0
    %412 = vmatpush.msra.mxu0 0.0
    %413 = vmatpush.msra.mxu0 0.0
    %414 = vmatpush.msra.mxu0 0.0
    %415 = vmatpush.msra.mxu0 0.0
    %416 = vmatpush.msra.mxu0 0.0
    %417 = vmatpush.msra.mxu0 0.0
    %418 = vmatpush.msra.mxu0 %v276
    %419 = vmatpush.msra.mxu0 %v275
    %420 = vmatpush.msra.mxu0 %v274
    %421 = vmatpush.msra.mxu0 %v273
    %422 = vmatmul.f32.gmra.mxu0 %v404
    %v423 = vpop.f32.mrf.mxu0
    %v424 = vadd.f32 0.0, %v423
    %425 = vdwg.mxu0
    %v427 = vrot.slane %v424, 7
    %v429 = vadd.f32 %v127, %v427
    %430 = vmatpush.msra.mxu0 0.0
    %431 = vmatpush.msra.mxu0 0.0
    %432 = vmatpush.msra.mxu0 0.0
    %433 = vmatpush.msra.mxu0 0.0
    %434 = vmatpush.msra.mxu0 0.0
    %435 = vmatpush.msra.mxu0 0.0
    %436 = vmatpush.msra.mxu0 0.0
    %437 = vmatpush.msra.mxu0 0.0
    %438 = vmatpush.msra.mxu0 0.0
    %439 = vmatpush.msra.mxu0 0.0
    %440 = vmatpush.msra.mxu0 0.0
    %441 = vmatpush.msra.mxu0 0.0
    %442 = vmatpush.msra.mxu0 %v281
    %443 = vmatpush.msra.mxu0 %v280
    %444 = vmatpush.msra.mxu0 %v279
    %445 = vmatpush.msra.mxu0 %v278
    %446 = vmatmul.f32.gmra.mxu0 %v404
    %v447 = vpop.f32.mrf.mxu0
    %v448 = vadd.f32 0.0, %v447
    %449 = vdwg.mxu0
    %v451 = vrot.slane %v448, 7
    %v453 = vadd.f32 %v175, %v451
    %454 = vmatpush.msra.mxu0 0.0
    %455 = vmatpush.msra.mxu0 0.0
    %456 = vmatpush.msra.mxu0 0.0
    %457 = vmatpush.msra.mxu0 0.0
    %458 = vmatpush.msra.mxu0 0.0
    %459 = vmatpush.msra.mxu0 0.0
    %460 = vmatpush.msra.mxu0 0.0
    %461 = vmatpush.msra.mxu0 0.0
    %462 = vmatpush.msra.mxu0 0.0
    %463 = vmatpush.msra.mxu0 0.0
    %464 = vmatpush.msra.mxu0 0.0
    %465 = vmatpush.msra.mxu0 0.0
    %466 = vmatpush.msra.mxu0 %v286
    %467 = vmatpush.msra.mxu0 %v285
    %468 = vmatpush.msra.mxu0 %v284
    %469 = vmatpush.msra.mxu0 %v283
    %470 = vmatmul.f32.gmra.mxu0 %v404
    %v471 = vpop.f32.mrf.mxu0
    %v472 = vadd.f32 0.0, %v471
    %473 = vdwg.mxu0
    %v475 = vrot.slane %v472, 7
    %v477 = vadd.f32 %v223, %v475
    %478 = vmatpush.msra.mxu0 0.0
    %479 = vmatpush.msra.mxu0 0.0
    %480 = vmatpush.msra.mxu0 0.0
    %481 = vmatpush.msra.mxu0 0.0
    %482 = vmatpush.msra.mxu0 0.0
    %483 = vmatpush.msra.mxu0 0.0
    %484 = vmatpush.msra.mxu0 0.0
    %485 = vmatpush.msra.mxu0 0.0
    %486 = vmatpush.msra.mxu0 0.0
    %487 = vmatpush.msra.mxu0 0.0
    %488 = vmatpush.msra.mxu0 0.0
    %489 = vmatpush.msra.mxu0 0.0
    %490 = vmatpush.msra.mxu0 %v291
    %491 = vmatpush.msra.mxu0 %v290
    %492 = vmatpush.msra.mxu0 %v289
    %493 = vmatpush.msra.mxu0 %v288
    %494 = vmatmul.f32.gmra.mxu0 %v404
    %v495 = vpop.f32.mrf.mxu0
    %v496 = vadd.f32 0.0, %v495
    %497 = vdwg.mxu0
    %v499 = vrot.slane %v496, 7
    %v501 = vadd.f32 %v271, %v499
    %v502 = vsub.f32 0.0, %v453
    %v503 = vmul.f32 %v502, 1.442695
    %v504 = vpow.pop %v503
    %v505 = vadd.f32 %v504, 1.0
    %v506 = vrcp.pop %v505
    %v508 = vrot.slane %v393, 7
    %v510 = vmul.f32 %v506, %v508
    %v511 = vsub.f32 0.0, %v429
    %v512 = vmul.f32 %v511, 1.442695
    %v513 = vpow.pop %v512
    %v514 = vadd.f32 %v513, 1.0
    %v515 = vrcp.pop %v514
    %v516 = vtanh.pop %v477
    %v517 = vmul.f32 %v515, %v516
    %v518 = vadd.f32 %v510, %v517
    %v519 = vsub.f32 0.0, %v501
    %v520 = vmul.f32 %v519, 1.442695
    %v521 = vpow.pop %v520
    %v522 = vadd.f32 %v521, 1.0
    %v523 = vrcp.pop %v522
    %v524 = vtanh.pop %v518
    %v525 = vmul.f32 %v523, %v524
    %vm526 = vcmask 254977
    %527 = vst.msk [vmem:[#allocation2] sm:$0x2] %vm526, %v525
    %v529 = vrot.slane %v525, 1
    %v530 = vsel %vm292, %v529, 0
    %532 = vmatpush.msra.mxu0 0.0
    %533 = vmatpush.msra.mxu0 0.0
    %534 = vmatpush.msra.mxu0 0.0
    %535 = vmatpush.msra.mxu0 0.0
    %536 = vmatpush.msra.mxu0 0.0
    %537 = vmatpush.msra.mxu0 0.0
    %538 = vmatpush.msra.mxu0 0.0
    %539 = vmatpush.msra.mxu0 0.0
    %540 = vmatpush.msra.mxu0 0.0
    %541 = vmatpush.msra.mxu0 0.0
    %542 = vmatpush.msra.mxu0 0.0
    %543 = vmatpush.msra.mxu0 0.0
    %544 = vmatpush.msra.mxu0 %v276
    %545 = vmatpush.msra.mxu0 %v275
    %546 = vmatpush.msra.mxu0 %v274
    %547 = vmatpush.msra.mxu0 %v273
    %548 = vmatmul.f32.gmra.mxu0 %v530
    %v549 = vpop.f32.mrf.mxu0
    %v550 = vadd.f32 0.0, %v549
    %551 = vdwg.mxu0
    %v553 = vrot.slane %v550, 6
    %v555 = vadd.f32 %v127, %v553
    %556 = vmatpush.msra.mxu0 0.0
    %557 = vmatpush.msra.mxu0 0.0
    %558 = vmatpush.msra.mxu0 0.0
    %559 = vmatpush.msra.mxu0 0.0
    %560 = vmatpush.msra.mxu0 0.0
    %561 = vmatpush.msra.mxu0 0.0
    %562 = vmatpush.msra.mxu0 0.0
    %563 = vmatpush.msra.mxu0 0.0
    %564 = vmatpush.msra.mxu0 0.0
    %565 = vmatpush.msra.mxu0 0.0
    %566 = vmatpush.msra.mxu0 0.0
    %567 = vmatpush.msra.mxu0 0.0
    %568 = vmatpush.msra.mxu0 %v281
    %569 = vmatpush.msra.mxu0 %v280
    %570 = vmatpush.msra.mxu0 %v279
    %571 = vmatpush.msra.mxu0 %v278
    %572 = vmatmul.f32.gmra.mxu0 %v530
    %v573 = vpop.f32.mrf.mxu0
    %v574 = vadd.f32 0.0, %v573
    %575 = vdwg.mxu0
    %v577 = vrot.slane %v574, 6
    %v579 = vadd.f32 %v175, %v577
    %580 = vmatpush.msra.mxu0 0.0
    %581 = vmatpush.msra.mxu0 0.0
    %582 = vmatpush.msra.mxu0 0.0
    %583 = vmatpush.msra.mxu0 0.0
    %584 = vmatpush.msra.mxu0 0.0
    %585 = vmatpush.msra.mxu0 0.0
    %586 = vmatpush.msra.mxu0 0.0
    %587 = vmatpush.msra.mxu0 0.0
    %588 = vmatpush.msra.mxu0 0.0
    %589 = vmatpush.msra.mxu0 0.0
    %590 = vmatpush.msra.mxu0 0.0
    %591 = vmatpush.msra.mxu0 0.0
    %592 = vmatpush.msra.mxu0 %v286
    %593 = vmatpush.msra.mxu0 %v285
    %594 = vmatpush.msra.mxu0 %v284
    %595 = vmatpush.msra.mxu0 %v283
    %596 = vmatmul.f32.gmra.mxu0 %v530
    %v597 = vpop.f32.mrf.mxu0
    %v598 = vadd.f32 0.0, %v597
    %599 = vdwg.mxu0
    %v601 = vrot.slane %v598, 6
    %v603 = vadd.f32 %v223, %v601
    %604 = vmatpush.msra.mxu0 0.0
    %605 = vmatpush.msra.mxu0 0.0
    %606 = vmatpush.msra.mxu0 0.0
    %607 = vmatpush.msra.mxu0 0.0
    %608 = vmatpush.msra.mxu0 0.0
    %609 = vmatpush.msra.mxu0 0.0
    %610 = vmatpush.msra.mxu0 0.0
    %611 = vmatpush.msra.mxu0 0.0
    %612 = vmatpush.msra.mxu0 0.0
    %613 = vmatpush.msra.mxu0 0.0
    %614 = vmatpush.msra.mxu0 0.0
    %615 = vmatpush.msra.mxu0 0.0
    %616 = vmatpush.msra.mxu0 %v291
    %617 = vmatpush.msra.mxu0 %v290
    %618 = vmatpush.msra.mxu0 %v289
    %619 = vmatpush.msra.mxu0 %v288
    %620 = vmatmul.f32.gmra.mxu0 %v530
    %v621 = vpop.f32.mrf.mxu0
    %v622 = vadd.f32 0.0, %v621
    %623 = vdwg.mxu0
    %v625 = vrot.slane %v622, 6
    %v627 = vadd.f32 %v271, %v625
    %v628 = vsub.f32 0.0, %v579
    %v629 = vmul.f32 %v628, 1.442695
    %v630 = vpow.pop %v629
    %v631 = vadd.f32 %v630, 1.0
    %v632 = vrcp.pop %v631
    %v634 = vrot.slane %v518, 7
    %v636 = vmul.f32 %v632, %v634
    %v637 = vsub.f32 0.0, %v555
    %v638 = vmul.f32 %v637, 1.442695
    %v639 = vpow.pop %v638
    %v640 = vadd.f32 %v639, 1.0
    %v641 = vrcp.pop %v640
    %v642 = vtanh.pop %v603
    %v643 = vmul.f32 %v641, %v642
    %v644 = vadd.f32 %v636, %v643
    %v645 = vsub.f32 0.0, %v627
    %v646 = vmul.f32 %v645, 1.442695
    %v647 = vpow.pop %v646
    %v648 = vadd.f32 %v647, 1.0
    %v649 = vrcp.pop %v648
    %v650 = vtanh.pop %v644
    %v651 = vmul.f32 %v649, %v650
    %vm652 = vcmask 256002
    %653 = vst.msk [vmem:[#allocation2] sm:$0x4] %vm652, %v651
    %v655 = vrot.slane %v651, 2
    %v656 = vsel %vm292, %v655, 0
    %658 = vmatpush.msra.mxu0 0.0
    %659 = vmatpush.msra.mxu0 0.0
    %660 = vmatpush.msra.mxu0 0.0
    %661 = vmatpush.msra.mxu0 0.0
    %662 = vmatpush.msra.mxu0 0.0
    %663 = vmatpush.msra.mxu0 0.0
    %664 = vmatpush.msra.mxu0 0.0
    %665 = vmatpush.msra.mxu0 0.0
    %666 = vmatpush.msra.mxu0 0.0
    %667 = vmatpush.msra.mxu0 0.0
    %668 = vmatpush.msra.mxu0 0.0
    %669 = vmatpush.msra.mxu0 0.0
    %670 = vmatpush.msra.mxu0 %v276
    %671 = vmatpush.msra.mxu0 %v275
    %672 = vmatpush.msra.mxu0 %v274
    %673 = vmatpush.msra.mxu0 %v273
    %674 = vmatmul.f32.gmra.mxu0 %v656
    %v675 = vpop.f32.mrf.mxu0
    %v676 = vadd.f32 0.0, %v675
    %677 = vdwg.mxu0
    %v679 = vrot.slane %v676, 5
    %v681 = vadd.f32 %v127, %v679
    %682 = vmatpush.msra.mxu0 0.0
    %683 = vmatpush.msra.mxu0 0.0
    %684 = vmatpush.msra.mxu0 0.0
    %685 = vmatpush.msra.mxu0 0.0
    %686 = vmatpush.msra.mxu0 0.0
    %687 = vmatpush.msra.mxu0 0.0
    %688 = vmatpush.msra.mxu0 0.0
    %689 = vmatpush.msra.mxu0 0.0
    %690 = vmatpush.msra.mxu0 0.0
    %691 = vmatpush.msra.mxu0 0.0
    %692 = vmatpush.msra.mxu0 0.0
    %693 = vmatpush.msra.mxu0 0.0
    %694 = vmatpush.msra.mxu0 %v281
    %695 = vmatpush.msra.mxu0 %v280
    %696 = vmatpush.msra.mxu0 %v279
    %697 = vmatpush.msra.mxu0 %v278
    %698 = vmatmul.f32.gmra.mxu0 %v656
    %v699 = vpop.f32.mrf.mxu0
    %v700 = vadd.f32 0.0, %v699
    %701 = vdwg.mxu0
    %v703 = vrot.slane %v700, 5
    %v705 = vadd.f32 %v175, %v703
    %706 = vmatpush.msra.mxu0 0.0
    %707 = vmatpush.msra.mxu0 0.0
    %708 = vmatpush.msra.mxu0 0.0
    %709 = vmatpush.msra.mxu0 0.0
    %710 = vmatpush.msra.mxu0 0.0
    %711 = vmatpush.msra.mxu0 0.0
    %712 = vmatpush.msra.mxu0 0.0
    %713 = vmatpush.msra.mxu0 0.0
    %714 = vmatpush.msra.mxu0 0.0
    %715 = vmatpush.msra.mxu0 0.0
    %716 = vmatpush.msra.mxu0 0.0
    %717 = vmatpush.msra.mxu0 0.0
    %718 = vmatpush.msra.mxu0 %v286
    %719 = vmatpush.msra.mxu0 %v285
    %720 = vmatpush.msra.mxu0 %v284
    %721 = vmatpush.msra.mxu0 %v283
    %722 = vmatmul.f32.gmra.mxu0 %v656
    %v723 = vpop.f32.mrf.mxu0
    %v724 = vadd.f32 0.0, %v723
    %725 = vdwg.mxu0
    %v727 = vrot.slane %v724, 5
    %v729 = vadd.f32 %v223, %v727
    %730 = vmatpush.msra.mxu0 0.0
    %731 = vmatpush.msra.mxu0 0.0
    %732 = vmatpush.msra.mxu0 0.0
    %733 = vmatpush.msra.mxu0 0.0
    %734 = vmatpush.msra.mxu0 0.0
    %735 = vmatpush.msra.mxu0 0.0
    %736 = vmatpush.msra.mxu0 0.0
    %737 = vmatpush.msra.mxu0 0.0
    %738 = vmatpush.msra.mxu0 0.0
    %739 = vmatpush.msra.mxu0 0.0
    %740 = vmatpush.msra.mxu0 0.0
    %741 = vmatpush.msra.mxu0 0.0
    %742 = vmatpush.msra.mxu0 %v291
    %743 = vmatpush.msra.mxu0 %v290
    %744 = vmatpush.msra.mxu0 %v289
    %745 = vmatpush.msra.mxu0 %v288
    %746 = vmatmul.f32.gmra.mxu0 %v656
    %v747 = vpop.f32.mrf.mxu0
    %v748 = vadd.f32 0.0, %v747
    %749 = vdwg.mxu0
    %v751 = vrot.slane %v748, 5
    %v753 = vadd.f32 %v271, %v751
    %v754 = vsub.f32 0.0, %v705
    %v755 = vmul.f32 %v754, 1.442695
    %v756 = vpow.pop %v755
    %v757 = vadd.f32 %v756, 1.0
    %v758 = vrcp.pop %v757
    %v760 = vrot.slane %v644, 7
    %v762 = vmul.f32 %v758, %v760
    %v763 = vsub.f32 0.0, %v681
    %v764 = vmul.f32 %v763, 1.442695
    %v765 = vpow.pop %v764
    %v766 = vadd.f32 %v765, 1.0
    %v767 = vrcp.pop %v766
    %v768 = vtanh.pop %v729
    %v769 = vmul.f32 %v767, %v768
    %v770 = vadd.f32 %v762, %v769
    %v771 = vsub.f32 0.0, %v753
    %v772 = vmul.f32 %v771, 1.442695
    %v773 = vpow.pop %v772
    %v774 = vadd.f32 %v773, 1.0
    %v775 = vrcp.pop %v774
    %v776 = vtanh.pop %v770
    %v777 = vmul.f32 %v775, %v776
    %vm778 = vcmask 257027
    %779 = vst.msk [vmem:[#allocation2] sm:$0x8] %vm778, %v777
    %v781 = vrot.slane %v777, 3
    %v782 = vsel %vm292, %v781, 0
    %784 = vmatpush.msra.mxu0 0.0
    %785 = vmatpush.msra.mxu0 0.0
    %786 = vmatpush.msra.mxu0 0.0
    %787 = vmatpush.msra.mxu0 0.0
    %788 = vmatpush.msra.mxu0 0.0
    %789 = vmatpush.msra.mxu0 0.0
    %790 = vmatpush.msra.mxu0 0.0
    %791 = vmatpush.msra.mxu0 0.0
    %792 = vmatpush.msra.mxu0 0.0
    %793 = vmatpush.msra.mxu0 0.0
    %794 = vmatpush.msra.mxu0 0.0
    %795 = vmatpush.msra.mxu0 0.0
    %796 = vmatpush.msra.mxu0 %v276
    %797 = vmatpush.msra.mxu0 %v275
    %798 = vmatpush.msra.mxu0 %v274
    %799 = vmatpush.msra.mxu0 %v273
    %800 = vmatmul.f32.gmra.mxu0 %v782
    %v801 = vpop.f32.mrf.mxu0
    %v802 = vadd.f32 0.0, %v801
    %803 = vdwg.mxu0
    %v805 = vrot.slane %v802, 4
    %v807 = vadd.f32 %v127, %v805
    %808 = vmatpush.msra.mxu0 0.0
    %809 = vmatpush.msra.mxu0 0.0
    %810 = vmatpush.msra.mxu0 0.0
    %811 = vmatpush.msra.mxu0 0.0
    %812 = vmatpush.msra.mxu0 0.0
    %813 = vmatpush.msra.mxu0 0.0
    %814 = vmatpush.msra.mxu0 0.0
    %815 = vmatpush.msra.mxu0 0.0
    %816 = vmatpush.msra.mxu0 0.0
    %817 = vmatpush.msra.mxu0 0.0
    %818 = vmatpush.msra.mxu0 0.0
    %819 = vmatpush.msra.mxu0 0.0
    %820 = vmatpush.msra.mxu0 %v281
    %821 = vmatpush.msra.mxu0 %v280
    %822 = vmatpush.msra.mxu0 %v279
    %823 = vmatpush.msra.mxu0 %v278
    %824 = vmatmul.f32.gmra.mxu0 %v782
    %v825 = vpop.f32.mrf.mxu0
    %v826 = vadd.f32 0.0, %v825
    %827 = vdwg.mxu0
    %v829 = vrot.slane %v826, 4
    %v831 = vadd.f32 %v175, %v829
    %832 = vmatpush.msra.mxu0 0.0
    %833 = vmatpush.msra.mxu0 0.0
    %834 = vmatpush.msra.mxu0 0.0
    %835 = vmatpush.msra.mxu0 0.0
    %836 = vmatpush.msra.mxu0 0.0
    %837 = vmatpush.msra.mxu0 0.0
    %838 = vmatpush.msra.mxu0 0.0
    %839 = vmatpush.msra.mxu0 0.0
    %840 = vmatpush.msra.mxu0 0.0
    %841 = vmatpush.msra.mxu0 0.0
    %842 = vmatpush.msra.mxu0 0.0
    %843 = vmatpush.msra.mxu0 0.0
    %844 = vmatpush.msra.mxu0 %v286
    %845 = vmatpush.msra.mxu0 %v285
    %846 = vmatpush.msra.mxu0 %v284
    %847 = vmatpush.msra.mxu0 %v283
    %848 = vmatmul.f32.gmra.mxu0 %v782
    %v849 = vpop.f32.mrf.mxu0
    %v850 = vadd.f32 0.0, %v849
    %851 = vdwg.mxu0
    %v853 = vrot.slane %v850, 4
    %v855 = vadd.f32 %v223, %v853
    %856 = vmatpush.msra.mxu0 0.0
    %857 = vmatpush.msra.mxu0 0.0
    %858 = vmatpush.msra.mxu0 0.0
    %859 = vmatpush.msra.mxu0 0.0
    %860 = vmatpush.msra.mxu0 0.0
    %861 = vmatpush.msra.mxu0 0.0
    %862 = vmatpush.msra.mxu0 0.0
    %863 = vmatpush.msra.mxu0 0.0
    %864 = vmatpush.msra.mxu0 0.0
    %865 = vmatpush.msra.mxu0 0.0
    %866 = vmatpush.msra.mxu0 0.0
    %867 = vmatpush.msra.mxu0 0.0
    %868 = vmatpush.msra.mxu0 %v291
    %869 = vmatpush.msra.mxu0 %v290
    %870 = vmatpush.msra.mxu0 %v289
    %871 = vmatpush.msra.mxu0 %v288
    %872 = vmatmul.f32.gmra.mxu0 %v782
    %v873 = vpop.f32.mrf.mxu0
    %v874 = vadd.f32 0.0, %v873
    %875 = vdwg.mxu0
    %v877 = vrot.slane %v874, 4
    %v879 = vadd.f32 %v271, %v877
    %v880 = vsub.f32 0.0, %v831
    %v881 = vmul.f32 %v880, 1.442695
    %v882 = vpow.pop %v881
    %v883 = vadd.f32 %v882, 1.0
    %v884 = vrcp.pop %v883
    %v886 = vrot.slane %v770, 7
    %v888 = vmul.f32 %v884, %v886
    %v889 = vsub.f32 0.0, %v807
    %v890 = vmul.f32 %v889, 1.442695
    %v891 = vpow.pop %v890
    %v892 = vadd.f32 %v891, 1.0
    %v893 = vrcp.pop %v892
    %v894 = vtanh.pop %v855
    %v895 = vmul.f32 %v893, %v894
    %v896 = vadd.f32 %v888, %v895
    %v897 = vsub.f32 0.0, %v879
    %v898 = vmul.f32 %v897, 1.442695
    %v899 = vpow.pop %v898
    %v900 = vadd.f32 %v899, 1.0
    %v901 = vrcp.pop %v900
    %v902 = vtanh.pop %v896
    %v903 = vmul.f32 %v901, %v902
    %vm904 = vcmask 258052
    %905 = vst.msk [vmem:[#allocation2] sm:$0x10] %vm904, %v903
    %v907 = vrot.slane %v903, 4
    %v908 = vsel %vm292, %v907, 0
    %910 = vmatpush.msra.mxu0 0.0
    %911 = vmatpush.msra.mxu0 0.0
    %912 = vmatpush.msra.mxu0 0.0
    %913 = vmatpush.msra.mxu0 0.0
    %914 = vmatpush.msra.mxu0 0.0
    %915 = vmatpush.msra.mxu0 0.0
    %916 = vmatpush.msra.mxu0 0.0
    %917 = vmatpush.msra.mxu0 0.0
    %918 = vmatpush.msra.mxu0 0.0
    %919 = vmatpush.msra.mxu0 0.0
    %920 = vmatpush.msra.mxu0 0.0
    %921 = vmatpush.msra.mxu0 0.0
    %922 = vmatpush.msra.mxu0 %v276
    %923 = vmatpush.msra.mxu0 %v275
    %924 = vmatpush.msra.mxu0 %v274
    %925 = vmatpush.msra.mxu0 %v273
    %926 = vmatmul.f32.gmra.mxu0 %v908
    %v927 = vpop.f32.mrf.mxu0
    %v928 = vadd.f32 0.0, %v927
    %929 = vdwg.mxu0
    %v931 = vrot.slane %v928, 3
    %v933 = vadd.f32 %v127, %v931
    %934 = vmatpush.msra.mxu0 0.0
    %935 = vmatpush.msra.mxu0 0.0
    %936 = vmatpush.msra.mxu0 0.0
    %937 = vmatpush.msra.mxu0 0.0
    %938 = vmatpush.msra.mxu0 0.0
    %939 = vmatpush.msra.mxu0 0.0
    %940 = vmatpush.msra.mxu0 0.0
    %941 = vmatpush.msra.mxu0 0.0
    %942 = vmatpush.msra.mxu0 0.0
    %943 = vmatpush.msra.mxu0 0.0
    %944 = vmatpush.msra.mxu0 0.0
    %945 = vmatpush.msra.mxu0 0.0
    %946 = vmatpush.msra.mxu0 %v281
    %947 = vmatpush.msra.mxu0 %v280
    %948 = vmatpush.msra.mxu0 %v279
    %949 = vmatpush.msra.mxu0 %v278
    %950 = vmatmul.f32.gmra.mxu0 %v908
    %v951 = vpop.f32.mrf.mxu0
    %v952 = vadd.f32 0.0, %v951
    %953 = vdwg.mxu0
    %v955 = vrot.slane %v952, 3
    %v957 = vadd.f32 %v175, %v955
    %958 = vmatpush.msra.mxu0 0.0
    %959 = vmatpush.msra.mxu0 0.0
    %960 = vmatpush.msra.mxu0 0.0
    %961 = vmatpush.msra.mxu0 0.0
    %962 = vmatpush.msra.mxu0 0.0
    %963 = vmatpush.msra.mxu0 0.0
    %964 = vmatpush.msra.mxu0 0.0
    %965 = vmatpush.msra.mxu0 0.0
    %966 = vmatpush.msra.mxu0 0.0
    %967 = vmatpush.msra.mxu0 0.0
    %968 = vmatpush.msra.mxu0 0.0
    %969 = vmatpush.msra.mxu0 0.0
    %970 = vmatpush.msra.mxu0 %v286
    %971 = vmatpush.msra.mxu0 %v285
    %972 = vmatpush.msra.mxu0 %v284
    %973 = vmatpush.msra.mxu0 %v283
    %974 = vmatmul.f32.gmra.mxu0 %v908
    %v975 = vpop.f32.mrf.mxu0
    %v976 = vadd.f32 0.0, %v975
    %977 = vdwg.mxu0
    %v979 = vrot.slane %v976, 3
    %v981 = vadd.f32 %v223, %v979
    %982 = vmatpush.msra.mxu0 0.0
    %983 = vmatpush.msra.mxu0 0.0
    %984 = vmatpush.msra.mxu0 0.0
    %985 = vmatpush.msra.mxu0 0.0
    %986 = vmatpush.msra.mxu0 0.0
    %987 = vmatpush.msra.mxu0 0.0
    %988 = vmatpush.msra.mxu0 0.0
    %989 = vmatpush.msra.mxu0 0.0
    %990 = vmatpush.msra.mxu0 0.0
    %991 = vmatpush.msra.mxu0 0.0
    %992 = vmatpush.msra.mxu0 0.0
    %993 = vmatpush.msra.mxu0 0.0
    %994 = vmatpush.msra.mxu0 %v291
    %995 = vmatpush.msra.mxu0 %v290
    %996 = vmatpush.msra.mxu0 %v289
    %997 = vmatpush.msra.mxu0 %v288
    %998 = vmatmul.f32.gmra.mxu0 %v908
    %v999 = vpop.f32.mrf.mxu0
    %v1000 = vadd.f32 0.0, %v999
    %1001 = vdwg.mxu0
    %v1003 = vrot.slane %v1000, 3
    %v1005 = vadd.f32 %v271, %v1003
    %v1006 = vsub.f32 0.0, %v957
    %v1007 = vmul.f32 %v1006, 1.442695
    %v1008 = vpow.pop %v1007
    %v1009 = vadd.f32 %v1008, 1.0
    %v1010 = vrcp.pop %v1009
    %v1012 = vrot.slane %v896, 7
    %v1014 = vmul.f32 %v1010, %v1012
    %v1015 = vsub.f32 0.0, %v933
    %v1016 = vmul.f32 %v1015, 1.442695
    %v1017 = vpow.pop %v1016
    %v1018 = vadd.f32 %v1017, 1.0
    %v1019 = vrcp.pop %v1018
    %v1020 = vtanh.pop %v981
    %v1021 = vmul.f32 %v1019, %v1020
    %v1022 = vadd.f32 %v1014, %v1021
    %v1023 = vsub.f32 0.0, %v1005
    %v1024 = vmul.f32 %v1023, 1.442695
    %v1025 = vpow.pop %v1024
    %v1026 = vadd.f32 %v1025, 1.0
    %v1027 = vrcp.pop %v1026
    %v1028 = vtanh.pop %v1022
    %v1029 = vmul.f32 %v1027, %v1028
    %vm1030 = vcmask 259077
    %1031 = vst.msk [vmem:[#allocation2] sm:$0x20] %vm1030, %v1029
    %v1033 = vrot.slane %v1029, 5
    %v1034 = vsel %vm292, %v1033, 0
    %1036 = vmatpush.msra.mxu0 0.0
    %1037 = vmatpush.msra.mxu0 0.0
    %1038 = vmatpush.msra.mxu0 0.0
    %1039 = vmatpush.msra.mxu0 0.0
    %1040 = vmatpush.msra.mxu0 0.0
    %1041 = vmatpush.msra.mxu0 0.0
    %1042 = vmatpush.msra.mxu0 0.0
    %1043 = vmatpush.msra.mxu0 0.0
    %1044 = vmatpush.msra.mxu0 0.0
    %1045 = vmatpush.msra.mxu0 0.0
    %1046 = vmatpush.msra.mxu0 0.0
    %1047 = vmatpush.msra.mxu0 0.0
    %1048 = vmatpush.msra.mxu0 %v276
    %1049 = vmatpush.msra.mxu0 %v275
    %1050 = vmatpush.msra.mxu0 %v274
    %1051 = vmatpush.msra.mxu0 %v273
    %1052 = vmatmul.f32.gmra.mxu0 %v1034
    %v1053 = vpop.f32.mrf.mxu0
    %v1054 = vadd.f32 0.0, %v1053
    %1055 = vdwg.mxu0
    %v1057 = vrot.slane %v1054, 2
    %v1059 = vadd.f32 %v127, %v1057
    %1060 = vmatpush.msra.mxu0 0.0
    %1061 = vmatpush.msra.mxu0 0.0
    %1062 = vmatpush.msra.mxu0 0.0
    %1063 = vmatpush.msra.mxu0 0.0
    %1064 = vmatpush.msra.mxu0 0.0
    %1065 = vmatpush.msra.mxu0 0.0
    %1066 = vmatpush.msra.mxu0 0.0
    %1067 = vmatpush.msra.mxu0 0.0
    %1068 = vmatpush.msra.mxu0 0.0
    %1069 = vmatpush.msra.mxu0 0.0
    %1070 = vmatpush.msra.mxu0 0.0
    %1071 = vmatpush.msra.mxu0 0.0
    %1072 = vmatpush.msra.mxu0 %v281
    %1073 = vmatpush.msra.mxu0 %v280
    %1074 = vmatpush.msra.mxu0 %v279
    %1075 = vmatpush.msra.mxu0 %v278
    %1076 = vmatmul.f32.gmra.mxu0 %v1034
    %v1077 = vpop.f32.mrf.mxu0
    %v1078 = vadd.f32 0.0, %v1077
    %1079 = vdwg.mxu0
    %v1081 = vrot.slane %v1078, 2
    %v1083 = vadd.f32 %v175, %v1081
    %1084 = vmatpush.msra.mxu0 0.0
    %1085 = vmatpush.msra.mxu0 0.0
    %1086 = vmatpush.msra.mxu0 0.0
    %1087 = vmatpush.msra.mxu0 0.0
    %1088 = vmatpush.msra.mxu0 0.0
    %1089 = vmatpush.msra.mxu0 0.0
    %1090 = vmatpush.msra.mxu0 0.0
    %1091 = vmatpush.msra.mxu0 0.0
    %1092 = vmatpush.msra.mxu0 0.0
    %1093 = vmatpush.msra.mxu0 0.0
    %1094 = vmatpush.msra.mxu0 0.0
    %1095 = vmatpush.msra.mxu0 0.0
    %1096 = vmatpush.msra.mxu0 %v286
    %1097 = vmatpush.msra.mxu0 %v285
    %1098 = vmatpush.msra.mxu0 %v284
    %1099 = vmatpush.msra.mxu0 %v283
    %1100 = vmatmul.f32.gmra.mxu0 %v1034
    %v1101 = vpop.f32.mrf.mxu0
    %v1102 = vadd.f32 0.0, %v1101
    %1103 = vdwg.mxu0
    %v1105 = vrot.slane %v1102, 2
    %v1107 = vadd.f32 %v223, %v1105
    %1108 = vmatpush.msra.mxu0 0.0
    %1109 = vmatpush.msra.mxu0 0.0
    %1110 = vmatpush.msra.mxu0 0.0
    %1111 = vmatpush.msra.mxu0 0.0
    %1112 = vmatpush.msra.mxu0 0.0
    %1113 = vmatpush.msra.mxu0 0.0
    %1114 = vmatpush.msra.mxu0 0.0
    %1115 = vmatpush.msra.mxu0 0.0
    %1116 = vmatpush.msra.mxu0 0.0
    %1117 = vmatpush.msra.mxu0 0.0
    %1118 = vmatpush.msra.mxu0 0.0
    %1119 = vmatpush.msra.mxu0 0.0
    %1120 = vmatpush.msra.mxu0 %v291
    %1121 = vmatpush.msra.mxu0 %v290
    %1122 = vmatpush.msra.mxu0 %v289
    %1123 = vmatpush.msra.mxu0 %v288
    %1124 = vmatmul.f32.gmra.mxu0 %v1034
    %v1125 = vpop.f32.mrf.mxu0
    %v1126 = vadd.f32 0.0, %v1125
    %1127 = vdwg.mxu0
    %v1129 = vrot.slane %v1126, 2
    %v1131 = vadd.f32 %v271, %v1129
    %v1132 = vsub.f32 0.0, %v1083
    %v1133 = vmul.f32 %v1132, 1.442695
    %v1134 = vpow.pop %v1133
    %v1135 = vadd.f32 %v1134, 1.0
    %v1136 = vrcp.pop %v1135
    %v1138 = vrot.slane %v1022, 7
    %v1140 = vmul.f32 %v1136, %v1138
    %v1141 = vsub.f32 0.0, %v1059
    %v1142 = vmul.f32 %v1141, 1.442695
    %v1143 = vpow.pop %v1142
    %v1144 = vadd.f32 %v1143, 1.0
    %v1145 = vrcp.pop %v1144
    %v1146 = vtanh.pop %v1107
    %v1147 = vmul.f32 %v1145, %v1146
    %v1148 = vadd.f32 %v1140, %v1147
    %v1149 = vsub.f32 0.0, %v1131
    %v1150 = vmul.f32 %v1149, 1.442695
    %v1151 = vpow.pop %v1150
    %v1152 = vadd.f32 %v1151, 1.0
    %v1153 = vrcp.pop %v1152
    %v1154 = vtanh.pop %v1148
    %v1155 = vmul.f32 %v1153, %v1154
    %vm1156 = vcmask 260102
    %1157 = vst.msk [vmem:[#allocation2] sm:$0x40] %vm1156, %v1155
    %v1159 = vrot.slane %v1155, 6
    %v1160 = vsel %vm292, %v1159, 0
    %1162 = vmatpush.msra.mxu0 0.0
    %1163 = vmatpush.msra.mxu0 0.0
    %1164 = vmatpush.msra.mxu0 0.0
    %1165 = vmatpush.msra.mxu0 0.0
    %1166 = vmatpush.msra.mxu0 0.0
    %1167 = vmatpush.msra.mxu0 0.0
    %1168 = vmatpush.msra.mxu0 0.0
    %1169 = vmatpush.msra.mxu0 0.0
    %1170 = vmatpush.msra.mxu0 0.0
    %1171 = vmatpush.msra.mxu0 0.0
    %1172 = vmatpush.msra.mxu0 0.0
    %1173 = vmatpush.msra.mxu0 0.0
    %1174 = vmatpush.msra.mxu0 %v276
    %1175 = vmatpush.msra.mxu0 %v275
    %1176 = vmatpush.msra.mxu0 %v274
    %1177 = vmatpush.msra.mxu0 %v273
    %1178 = vmatmul.f32.gmra.mxu0 %v1160
    %v1179 = vpop.f32.mrf.mxu0
    %v1180 = vadd.f32 0.0, %v1179
    %1181 = vdwg.mxu0
    %v1183 = vrot.slane %v1180, 1
    %v1185 = vadd.f32 %v127, %v1183
    %1186 = vmatpush.msra.mxu0 0.0
    %1187 = vmatpush.msra.mxu0 0.0
    %1188 = vmatpush.msra.mxu0 0.0
    %1189 = vmatpush.msra.mxu0 0.0
    %1190 = vmatpush.msra.mxu0 0.0
    %1191 = vmatpush.msra.mxu0 0.0
    %1192 = vmatpush.msra.mxu0 0.0
    %1193 = vmatpush.msra.mxu0 0.0
    %1194 = vmatpush.msra.mxu0 0.0
    %1195 = vmatpush.msra.mxu0 0.0
    %1196 = vmatpush.msra.mxu0 0.0
    %1197 = vmatpush.msra.mxu0 0.0
    %1198 = vmatpush.msra.mxu0 %v281
    %1199 = vmatpush.msra.mxu0 %v280
    %1200 = vmatpush.msra.mxu0 %v279
    %1201 = vmatpush.msra.mxu0 %v278
    %1202 = vmatmul.f32.gmra.mxu0 %v1160
    %v1203 = vpop.f32.mrf.mxu0
    %v1204 = vadd.f32 0.0, %v1203
    %1205 = vdwg.mxu0
    %v1207 = vrot.slane %v1204, 1
    %v1209 = vadd.f32 %v175, %v1207
    %1210 = vmatpush.msra.mxu0 0.0
    %1211 = vmatpush.msra.mxu0 0.0
    %1212 = vmatpush.msra.mxu0 0.0
    %1213 = vmatpush.msra.mxu0 0.0
    %1214 = vmatpush.msra.mxu0 0.0
    %1215 = vmatpush.msra.mxu0 0.0
    %1216 = vmatpush.msra.mxu0 0.0
    %1217 = vmatpush.msra.mxu0 0.0
    %1218 = vmatpush.msra.mxu0 0.0
    %1219 = vmatpush.msra.mxu0 0.0
    %1220 = vmatpush.msra.mxu0 0.0
    %1221 = vmatpush.msra.mxu0 0.0
    %1222 = vmatpush.msra.mxu0 %v286
    %1223 = vmatpush.msra.mxu0 %v285
    %1224 = vmatpush.msra.mxu0 %v284
    %1225 = vmatpush.msra.mxu0 %v283
    %1226 = vmatmul.f32.gmra.mxu0 %v1160
    %v1227 = vpop.f32.mrf.mxu0
    %v1228 = vadd.f32 0.0, %v1227
    %1229 = vdwg.mxu0
    %v1231 = vrot.slane %v1228, 1
    %v1233 = vadd.f32 %v223, %v1231
    %1234 = vmatpush.msra.mxu0 0.0
    %1235 = vmatpush.msra.mxu0 0.0
    %1236 = vmatpush.msra.mxu0 0.0
    %1237 = vmatpush.msra.mxu0 0.0
    %1238 = vmatpush.msra.mxu0 0.0
    %1239 = vmatpush.msra.mxu0 0.0
    %1240 = vmatpush.msra.mxu0 0.0
    %1241 = vmatpush.msra.mxu0 0.0
    %1242 = vmatpush.msra.mxu0 0.0
    %1243 = vmatpush.msra.mxu0 0.0
    %1244 = vmatpush.msra.mxu0 0.0
    %1245 = vmatpush.msra.mxu0 0.0
    %1246 = vmatpush.msra.mxu0 %v291
    %1247 = vmatpush.msra.mxu0 %v290
    %1248 = vmatpush.msra.mxu0 %v289
    %1249 = vmatpush.msra.mxu0 %v288
    %1250 = vmatmul.f32.gmra.mxu0 %v1160
    %v1251 = vpop.f32.mrf.mxu0
    %v1252 = vadd.f32 0.0, %v1251
    %1253 = vdwg.mxu0
    %v1255 = vrot.slane %v1252, 1
    %v1257 = vadd.f32 %v271, %v1255
    %v1258 = vsub.f32 0.0, %v1209
    %v1259 = vmul.f32 %v1258, 1.442695
    %v1260 = vpow.pop %v1259
    %v1261 = vadd.f32 %v1260, 1.0
    %v1262 = vrcp.pop %v1261
    %v1264 = vrot.slane %v1148, 7
    %v1266 = vmul.f32 %v1262, %v1264
    %v1267 = vsub.f32 0.0, %v1185
    %v1268 = vmul.f32 %v1267, 1.442695
    %v1269 = vpow.pop %v1268
    %v1270 = vadd.f32 %v1269, 1.0
    %v1271 = vrcp.pop %v1270
    %v1272 = vtanh.pop %v1233
    %v1273 = vmul.f32 %v1271, %v1272
    %v1274 = vadd.f32 %v1266, %v1273
    %v1275 = vsub.f32 0.0, %v1257
    %v1276 = vmul.f32 %v1275, 1.442695
    %v1277 = vpow.pop %v1276
    %v1278 = vadd.f32 %v1277, 1.0
    %v1279 = vrcp.pop %v1278
    %v1280 = vtanh.pop %v1274
    %v1281 = vmul.f32 %v1279, %v1280
    %vm1282 = vcmask 261127
    %1283 = vst.msk [vmem:[#allocation2] sm:$0x80] %vm1282, %v1281
    %v1284 = vld [vmem:[#allocation2] sm:$0xff]
    %v1285 = vld [vmem:[%s4] sm:$0xff]
    %v1286 = vld [vmem:[%s4 + $0x8] sm:$0xff]
    %v1287 = vld [vmem:[%s4 + $0x10] sm:$0xff]
    %v1288 = vld [vmem:[%s4 + $0x18] sm:$0xff]
    %v1289 = vld [vmem:[%s6] sm:$0x1]
    %v1291 = vperm.slane %v1289, 0
    %v1294 = vsel %vm292, %v1284, 0
    %1296 = vmatpush.msra.mxu0 0.0
    %1297 = vmatpush.msra.mxu0 0.0
    %1298 = vmatpush.msra.mxu0 0.0
    %1299 = vmatpush.msra.mxu0 0.0
    %1300 = vmatpush.msra.mxu0 0.0
    %1301 = vmatpush.msra.mxu0 0.0
    %1302 = vmatpush.msra.mxu0 0.0
    %1303 = vmatpush.msra.mxu0 0.0
    %1304 = vmatpush.msra.mxu0 0.0
    %1305 = vmatpush.msra.mxu0 0.0
    %1306 = vmatpush.msra.mxu0 0.0
    %1307 = vmatpush.msra.mxu0 0.0
    %1308 = vmatpush.msra.mxu0 %v1288
    %1309 = vmatpush.msra.mxu0 %v1287
    %1310 = vmatpush.msra.mxu0 %v1286
    %1311 = vmatpush.msra.mxu0 %v1285
    %1312 = vmatmul.f32.gmra.mxu0 %v1294
    %v1313 = vpop.f32.mrf.mxu0
    %v1314 = vadd.f32 %v1291, %v1313
    %1315 = vdwg.mxu0
    %s1316 = scalar_lea.vmem %s4, 32
    %v1317 = vld [vmem:[%s1316] sm:$0xff]
    %v1318 = vld [vmem:[%s1316 + $0x8] sm:$0xff]
    %v1319 = vld [vmem:[%s1316 + $0x10] sm:$0xff]
    %v1320 = vld [vmem:[%s1316 + $0x18] sm:$0xff]
    %s1321 = scalar_lea.vmem %s6, 1
    %v1322 = vld [vmem:[%s1321] sm:$0x1]
    %v1324 = vperm.slane %v1322, 0
    %1326 = vmatpush.msra.mxu0 0.0
    %1327 = vmatpush.msra.mxu0 0.0
    %1328 = vmatpush.msra.mxu0 0.0
    %1329 = vmatpush.msra.mxu0 0.0
    %1330 = vmatpush.msra.mxu0 0.0
    %1331 = vmatpush.msra.mxu0 0.0
    %1332 = vmatpush.msra.mxu0 0.0
    %1333 = vmatpush.msra.mxu0 0.0
    %1334 = vmatpush.msra.mxu0 0.0
    %1335 = vmatpush.msra.mxu0 0.0
    %1336 = vmatpush.msra.mxu0 0.0
    %1337 = vmatpush.msra.mxu0 0.0
    %1338 = vmatpush.msra.mxu0 %v1320
    %1339 = vmatpush.msra.mxu0 %v1319
    %1340 = vmatpush.msra.mxu0 %v1318
    %1341 = vmatpush.msra.mxu0 %v1317
    %1342 = vmatmul.f32.gmra.mxu0 %v1294
    %v1343 = vpop.f32.mrf.mxu0
    %v1344 = vadd.f32 %v1324, %v1343
    %1345 = vdwg.mxu0
    %s1346 = scalar_lea.vmem %s4, 64
    %v1347 = vld [vmem:[%s1346] sm:$0xff]
    %v1348 = vld [vmem:[%s1346 + $0x8] sm:$0xff]
    %v1349 = vld [vmem:[%s1346 + $0x10] sm:$0xff]
    %v1350 = vld [vmem:[%s1346 + $0x18] sm:$0xff]
    %s1351 = scalar_lea.vmem %s6, 2
    %v1352 = vld [vmem:[%s1351] sm:$0x1]
    %v1354 = vperm.slane %v1352, 0
    %1356 = vmatpush.msra.mxu0 0.0
    %1357 = vmatpush.msra.mxu0 0.0
    %1358 = vmatpush.msra.mxu0 0.0
    %1359 = vmatpush.msra.mxu0 0.0
    %1360 = vmatpush.msra.mxu0 0.0
    %1361 = vmatpush.msra.mxu0 0.0
    %1362 = vmatpush.msra.mxu0 0.0
    %1363 = vmatpush.msra.mxu0 0.0
    %1364 = vmatpush.msra.mxu0 0.0
    %1365 = vmatpush.msra.mxu0 0.0
    %1366 = vmatpush.msra.mxu0 0.0
    %1367 = vmatpush.msra.mxu0 0.0
    %1368 = vmatpush.msra.mxu0 %v1350
    %1369 = vmatpush.msra.mxu0 %v1349
    %1370 = vmatpush.msra.mxu0 %v1348
    %1371 = vmatpush.msra.mxu0 %v1347
    %1372 = vmatmul.f32.gmra.mxu0 %v1294
    %v1373 = vpop.f32.mrf.mxu0
    %v1374 = vadd.f32 %v1354, %v1373
    %1375 = vdwg.mxu0
    %s1376 = scalar_lea.vmem %s4, 96
    %v1377 = vld [vmem:[%s1376] sm:$0xff]
    %v1378 = vld [vmem:[%s1376 + $0x8] sm:$0xff]
    %v1379 = vld [vmem:[%s1376 + $0x10] sm:$0xff]
    %v1380 = vld [vmem:[%s1376 + $0x18] sm:$0xff]
    %s1381 = scalar_lea.vmem %s6, 3
    %v1382 = vld [vmem:[%s1381] sm:$0x1]
    %v1384 = vperm.slane %v1382, 0
    %1386 = vmatpush.msra.mxu0 0.0
    %1387 = vmatpush.msra.mxu0 0.0
    %1388 = vmatpush.msra.mxu0 0.0
    %1389 = vmatpush.msra.mxu0 0.0
    %1390 = vmatpush.msra.mxu0 0.0
    %1391 = vmatpush.msra.mxu0 0.0
    %1392 = vmatpush.msra.mxu0 0.0
    %1393 = vmatpush.msra.mxu0 0.0
    %1394 = vmatpush.msra.mxu0 0.0
    %1395 = vmatpush.msra.mxu0 0.0
    %1396 = vmatpush.msra.mxu0 0.0
    %1397 = vmatpush.msra.mxu0 0.0
    %1398 = vmatpush.msra.mxu0 %v1380
    %1399 = vmatpush.msra.mxu0 %v1379
    %1400 = vmatpush.msra.mxu0 %v1378
    %1401 = vmatpush.msra.mxu0 %v1377
    %1402 = vmatmul.f32.gmra.mxu0 %v1294
    %v1403 = vpop.f32.mrf.mxu0
    %v1404 = vadd.f32 %v1384, %v1403
    %1405 = vdwg.mxu0
    %v1406 = vld [vmem:[%s5] sm:$0xff]
    %v1407 = vld [vmem:[%s5 + $0x8] sm:$0xff]
    %s1408 = scalar_lea.vmem %s5, 16
    %v1409 = vld [vmem:[%s1408] sm:$0xff]
    %v1410 = vld [vmem:[%s1408 + $0x8] sm:$0xff]
    %s1411 = scalar_lea.vmem %s5, 32
    %v1412 = vld [vmem:[%s1411] sm:$0xff]
    %v1413 = vld [vmem:[%s1411 + $0x8] sm:$0xff]
    %s1414 = scalar_lea.vmem %s5, 48
    %v1415 = vld [vmem:[%s1414] sm:$0xff]
    %v1416 = vld [vmem:[%s1414 + $0x8] sm:$0xff]
    %vm1417 = vcmask 130048
    %v1418 = vsel %vm1417, 0.0, 0
    %1420 = vmatpush.msra.mxu0 0.0
    %1421 = vmatpush.msra.mxu0 0.0
    %1422 = vmatpush.msra.mxu0 0.0
    %1423 = vmatpush.msra.mxu0 0.0
    %1424 = vmatpush.msra.mxu0 0.0
    %1425 = vmatpush.msra.mxu0 0.0
    %1426 = vmatpush.msra.mxu0 0.0
    %1427 = vmatpush.msra.mxu0 0.0
    %1428 = vmatpush.msra.mxu0 0.0
    %1429 = vmatpush.msra.mxu0 0.0
    %1430 = vmatpush.msra.mxu0 0.0
    %1431 = vmatpush.msra.mxu0 0.0
    %1432 = vmatpush.msra.mxu0 0.0
    %1433 = vmatpush.msra.mxu0 0.0
    %1434 = vmatpush.msra.mxu0 %v1407
    %1435 = vmatpush.msra.mxu0 %v1406
    %1436 = vmatmul.f32.gmra.mxu0 %v1418
    %v1437 = vpop.f32.mrf.mxu0
    %v1438 = vadd.f32 0.0, %v1437
    %1439 = vdwg.mxu0
    %v1440 = vadd.f32 %v1314, %v1438
    %1441 = vmatpush.msra.mxu0 0.0
    %1442 = vmatpush.msra.mxu0 0.0
    %1443 = vmatpush.msra.mxu0 0.0
    %1444 = vmatpush.msra.mxu0 0.0
    %1445 = vmatpush.msra.mxu0 0.0
    %1446 = vmatpush.msra.mxu0 0.0
    %1447 = vmatpush.msra.mxu0 0.0
    %1448 = vmatpush.msra.mxu0 0.0
    %1449 = vmatpush.msra.mxu0 0.0
    %1450 = vmatpush.msra.mxu0 0.0
    %1451 = vmatpush.msra.mxu0 0.0
    %1452 = vmatpush.msra.mxu0 0.0
    %1453 = vmatpush.msra.mxu0 0.0
    %1454 = vmatpush.msra.mxu0 0.0
    %1455 = vmatpush.msra.mxu0 %v1410
    %1456 = vmatpush.msra.mxu0 %v1409
    %1457 = vmatmul.f32.gmra.mxu0 %v1418
    %v1458 = vpop.f32.mrf.mxu0
    %v1459 = vadd.f32 0.0, %v1458
    %1460 = vdwg.mxu0
    %v1461 = vadd.f32 %v1344, %v1459
    %1462 = vmatpush.msra.mxu0 0.0
    %1463 = vmatpush.msra.mxu0 0.0
    %1464 = vmatpush.msra.mxu0 0.0
    %1465 = vmatpush.msra.mxu0 0.0
    %1466 = vmatpush.msra.mxu0 0.0
    %1467 = vmatpush.msra.mxu0 0.0
    %1468 = vmatpush.msra.mxu0 0.0
    %1469 = vmatpush.msra.mxu0 0.0
    %1470 = vmatpush.msra.mxu0 0.0
    %1471 = vmatpush.msra.mxu0 0.0
    %1472 = vmatpush.msra.mxu0 0.0
    %1473 = vmatpush.msra.mxu0 0.0
    %1474 = vmatpush.msra.mxu0 0.0
    %1475 = vmatpush.msra.mxu0 0.0
    %1476 = vmatpush.msra.mxu0 %v1413
    %1477 = vmatpush.msra.mxu0 %v1412
    %1478 = vmatmul.f32.gmra.mxu0 %v1418
    %v1479 = vpop.f32.mrf.mxu0
    %v1480 = vadd.f32 0.0, %v1479
    %1481 = vdwg.mxu0
    %v1482 = vadd.f32 %v1374, %v1480
    %1483 = vmatpush.msra.mxu0 0.0
    %1484 = vmatpush.msra.mxu0 0.0
    %1485 = vmatpush.msra.mxu0 0.0
    %1486 = vmatpush.msra.mxu0 0.0
    %1487 = vmatpush.msra.mxu0 0.0
    %1488 = vmatpush.msra.mxu0 0.0
    %1489 = vmatpush.msra.mxu0 0.0
    %1490 = vmatpush.msra.mxu0 0.0
    %1491 = vmatpush.msra.mxu0 0.0
    %1492 = vmatpush.msra.mxu0 0.0
    %1493 = vmatpush.msra.mxu0 0.0
    %1494 = vmatpush.msra.mxu0 0.0
    %1495 = vmatpush.msra.mxu0 0.0
    %1496 = vmatpush.msra.mxu0 0.0
    %1497 = vmatpush.msra.mxu0 %v1416
    %1498 = vmatpush.msra.mxu0 %v1415
    %1499 = vmatmul.f32.gmra.mxu0 %v1418
    %v1500 = vpop.f32.mrf.mxu0
    %v1501 = vadd.f32 0.0, %v1500
    %1502 = vdwg.mxu0
    %v1503 = vadd.f32 %v1404, %v1501
    %v1504 = vsub.f32 0.0, %v1461
    %v1505 = vmul.f32 %v1504, 1.442695
    %v1506 = vpow.pop %v1505
    %v1507 = vadd.f32 %v1506, 1.0
    %v1508 = vrcp.pop %v1507
    %v1509 = vmul.f32 %v1508, 0.0
    %v1510 = vsub.f32 0.0, %v1440
    %v1511 = vmul.f32 %v1510, 1.442695
    %v1512 = vpow.pop %v1511
    %v1513 = vadd.f32 %v1512, 1.0
    %v1514 = vrcp.pop %v1513
    %v1515 = vtanh.pop %v1482
    %v1516 = vmul.f32 %v1514, %v1515
    %v1517 = vadd.f32 %v1509, %v1516
    %v1518 = vsub.f32 0.0, %v1503
    %v1519 = vmul.f32 %v1518, 1.442695
    %v1520 = vpow.pop %v1519
    %v1521 = vadd.f32 %v1520, 1.0
    %v1522 = vrcp.pop %v1521
    %v1523 = vtanh.pop %v1517
    %v1524 = vmul.f32 %v1522, %v1523
    %v1526 = vsel %vm1417, %v1524, 0
    %1528 = vmatpush.msra.mxu0 0.0
    %1529 = vmatpush.msra.mxu0 0.0
    %1530 = vmatpush.msra.mxu0 0.0
    %1531 = vmatpush.msra.mxu0 0.0
    %1532 = vmatpush.msra.mxu0 0.0
    %1533 = vmatpush.msra.mxu0 0.0
    %1534 = vmatpush.msra.mxu0 0.0
    %1535 = vmatpush.msra.mxu0 0.0
    %1536 = vmatpush.msra.mxu0 0.0
    %1537 = vmatpush.msra.mxu0 0.0
    %1538 = vmatpush.msra.mxu0 0.0
    %1539 = vmatpush.msra.mxu0 0.0
    %1540 = vmatpush.msra.mxu0 0.0
    %1541 = vmatpush.msra.mxu0 0.0
    %1542 = vmatpush.msra.mxu0 %v1407
    %1543 = vmatpush.msra.mxu0 %v1406
    %1544 = vmatmul.f32.gmra.mxu0 %v1526
    %v1545 = vpop.f32.mrf.mxu0
    %v1546 = vadd.f32 0.0, %v1545
    %1547 = vdwg.mxu0
    %v1549 = vrot.slane %v1546, 7
    %v1551 = vadd.f32 %v1314, %v1549
    %1552 = vmatpush.msra.mxu0 0.0
    %1553 = vmatpush.msra.mxu0 0.0
    %1554 = vmatpush.msra.mxu0 0.0
    %1555 = vmatpush.msra.mxu0 0.0
    %1556 = vmatpush.msra.mxu0 0.0
    %1557 = vmatpush.msra.mxu0 0.0
    %1558 = vmatpush.msra.mxu0 0.0
    %1559 = vmatpush.msra.mxu0 0.0
    %1560 = vmatpush.msra.mxu0 0.0
    %1561 = vmatpush.msra.mxu0 0.0
    %1562 = vmatpush.msra.mxu0 0.0
    %1563 = vmatpush.msra.mxu0 0.0
    %1564 = vmatpush.msra.mxu0 0.0
    %1565 = vmatpush.msra.mxu0 0.0
    %1566 = vmatpush.msra.mxu0 %v1410
    %1567 = vmatpush.msra.mxu0 %v1409
    %1568 = vmatmul.f32.gmra.mxu0 %v1526
    %v1569 = vpop.f32.mrf.mxu0
    %v1570 = vadd.f32 0.0, %v1569
    %1571 = vdwg.mxu0
    %v1573 = vrot.slane %v1570, 7
    %v1575 = vadd.f32 %v1344, %v1573
    %1576 = vmatpush.msra.mxu0 0.0
    %1577 = vmatpush.msra.mxu0 0.0
    %1578 = vmatpush.msra.mxu0 0.0
    %1579 = vmatpush.msra.mxu0 0.0
    %1580 = vmatpush.msra.mxu0 0.0
    %1581 = vmatpush.msra.mxu0 0.0
    %1582 = vmatpush.msra.mxu0 0.0
    %1583 = vmatpush.msra.mxu0 0.0
    %1584 = vmatpush.msra.mxu0 0.0
    %1585 = vmatpush.msra.mxu0 0.0
    %1586 = vmatpush.msra.mxu0 0.0
    %1587 = vmatpush.msra.mxu0 0.0
    %1588 = vmatpush.msra.mxu0 0.0
    %1589 = vmatpush.msra.mxu0 0.0
    %1590 = vmatpush.msra.mxu0 %v1413
    %1591 = vmatpush.msra.mxu0 %v1412
    %1592 = vmatmul.f32.gmra.mxu0 %v1526
    %v1593 = vpop.f32.mrf.mxu0
    %v1594 = vadd.f32 0.0, %v1593
    %1595 = vdwg.mxu0
    %v1597 = vrot.slane %v1594, 7
    %v1599 = vadd.f32 %v1374, %v1597
    %1600 = vmatpush.msra.mxu0 0.0
    %1601 = vmatpush.msra.mxu0 0.0
    %1602 = vmatpush.msra.mxu0 0.0
    %1603 = vmatpush.msra.mxu0 0.0
    %1604 = vmatpush.msra.mxu0 0.0
    %1605 = vmatpush.msra.mxu0 0.0
    %1606 = vmatpush.msra.mxu0 0.0
    %1607 = vmatpush.msra.mxu0 0.0
    %1608 = vmatpush.msra.mxu0 0.0
    %1609 = vmatpush.msra.mxu0 0.0
    %1610 = vmatpush.msra.mxu0 0.0
    %1611 = vmatpush.msra.mxu0 0.0
    %1612 = vmatpush.msra.mxu0 0.0
    %1613 = vmatpush.msra.mxu0 0.0
    %1614 = vmatpush.msra.mxu0 %v1416
    %1615 = vmatpush.msra.mxu0 %v1415
    %1616 = vmatmul.f32.gmra.mxu0 %v1526
    %v1617 = vpop.f32.mrf.mxu0
    %v1618 = vadd.f32 0.0, %v1617
    %1619 = vdwg.mxu0
    %v1621 = vrot.slane %v1618, 7
    %v1623 = vadd.f32 %v1404, %v1621
    %v1624 = vsub.f32 0.0, %v1575
    %v1625 = vmul.f32 %v1624, 1.442695
    %v1626 = vpow.pop %v1625
    %v1627 = vadd.f32 %v1626, 1.0
    %v1628 = vrcp.pop %v1627
    %v1630 = vrot.slane %v1517, 7
    %v1632 = vmul.f32 %v1628, %v1630
    %v1633 = vsub.f32 0.0, %v1551
    %v1634 = vmul.f32 %v1633, 1.442695
    %v1635 = vpow.pop %v1634
    %v1636 = vadd.f32 %v1635, 1.0
    %v1637 = vrcp.pop %v1636
    %v1638 = vtanh.pop %v1599
    %v1639 = vmul.f32 %v1637, %v1638
    %v1640 = vadd.f32 %v1632, %v1639
    %v1641 = vsub.f32 0.0, %v1623
    %v1642 = vmul.f32 %v1641, 1.442695
    %v1643 = vpow.pop %v1642
    %v1644 = vadd.f32 %v1643, 1.0
    %v1645 = vrcp.pop %v1644
    %v1646 = vtanh.pop %v1640
    %v1647 = vmul.f32 %v1645, %v1646
    %v1649 = vrot.slane %v1647, 1
    %v1650 = vsel %vm1417, %v1649, 0
    %1652 = vmatpush.msra.mxu0 0.0
    %1653 = vmatpush.msra.mxu0 0.0
    %1654 = vmatpush.msra.mxu0 0.0
    %1655 = vmatpush.msra.mxu0 0.0
    %1656 = vmatpush.msra.mxu0 0.0
    %1657 = vmatpush.msra.mxu0 0.0
    %1658 = vmatpush.msra.mxu0 0.0
    %1659 = vmatpush.msra.mxu0 0.0
    %1660 = vmatpush.msra.mxu0 0.0
    %1661 = vmatpush.msra.mxu0 0.0
    %1662 = vmatpush.msra.mxu0 0.0
    %1663 = vmatpush.msra.mxu0 0.0
    %1664 = vmatpush.msra.mxu0 0.0
    %1665 = vmatpush.msra.mxu0 0.0
    %1666 = vmatpush.msra.mxu0 %v1407
    %1667 = vmatpush.msra.mxu0 %v1406
    %1668 = vmatmul.f32.gmra.mxu0 %v1650
    %v1669 = vpop.f32.mrf.mxu0
    %v1670 = vadd.f32 0.0, %v1669
    %1671 = vdwg.mxu0
    %v1673 = vrot.slane %v1670, 6
    %v1675 = vadd.f32 %v1314, %v1673
    %1676 = vmatpush.msra.mxu0 0.0
    %1677 = vmatpush.msra.mxu0 0.0
    %1678 = vmatpush.msra.mxu0 0.0
    %1679 = vmatpush.msra.mxu0 0.0
    %1680 = vmatpush.msra.mxu0 0.0
    %1681 = vmatpush.msra.mxu0 0.0
    %1682 = vmatpush.msra.mxu0 0.0
    %1683 = vmatpush.msra.mxu0 0.0
    %1684 = vmatpush.msra.mxu0 0.0
    %1685 = vmatpush.msra.mxu0 0.0
    %1686 = vmatpush.msra.mxu0 0.0
    %1687 = vmatpush.msra.mxu0 0.0
    %1688 = vmatpush.msra.mxu0 0.0
    %1689 = vmatpush.msra.mxu0 0.0
    %1690 = vmatpush.msra.mxu0 %v1410
    %1691 = vmatpush.msra.mxu0 %v1409
    %1692 = vmatmul.f32.gmra.mxu0 %v1650
    %v1693 = vpop.f32.mrf.mxu0
    %v1694 = vadd.f32 0.0, %v1693
    %1695 = vdwg.mxu0
    %v1697 = vrot.slane %v1694, 6
    %v1699 = vadd.f32 %v1344, %v1697
    %1700 = vmatpush.msra.mxu0 0.0
    %1701 = vmatpush.msra.mxu0 0.0
    %1702 = vmatpush.msra.mxu0 0.0
    %1703 = vmatpush.msra.mxu0 0.0
    %1704 = vmatpush.msra.mxu0 0.0
    %1705 = vmatpush.msra.mxu0 0.0
    %1706 = vmatpush.msra.mxu0 0.0
    %1707 = vmatpush.msra.mxu0 0.0
    %1708 = vmatpush.msra.mxu0 0.0
    %1709 = vmatpush.msra.mxu0 0.0
    %1710 = vmatpush.msra.mxu0 0.0
    %1711 = vmatpush.msra.mxu0 0.0
    %1712 = vmatpush.msra.mxu0 0.0
    %1713 = vmatpush.msra.mxu0 0.0
    %1714 = vmatpush.msra.mxu0 %v1413
    %1715 = vmatpush.msra.mxu0 %v1412
    %1716 = vmatmul.f32.gmra.mxu0 %v1650
    %v1717 = vpop.f32.mrf.mxu0
    %v1718 = vadd.f32 0.0, %v1717
    %1719 = vdwg.mxu0
    %v1721 = vrot.slane %v1718, 6
    %v1723 = vadd.f32 %v1374, %v1721
    %1724 = vmatpush.msra.mxu0 0.0
    %1725 = vmatpush.msra.mxu0 0.0
    %1726 = vmatpush.msra.mxu0 0.0
    %1727 = vmatpush.msra.mxu0 0.0
    %1728 = vmatpush.msra.mxu0 0.0
    %1729 = vmatpush.msra.mxu0 0.0
    %1730 = vmatpush.msra.mxu0 0.0
    %1731 = vmatpush.msra.mxu0 0.0
    %1732 = vmatpush.msra.mxu0 0.0
    %1733 = vmatpush.msra.mxu0 0.0
    %1734 = vmatpush.msra.mxu0 0.0
    %1735 = vmatpush.msra.mxu0 0.0
    %1736 = vmatpush.msra.mxu0 0.0
    %1737 = vmatpush.msra.mxu0 0.0
    %1738 = vmatpush.msra.mxu0 %v1416
    %1739 = vmatpush.msra.mxu0 %v1415
    %1740 = vmatmul.f32.gmra.mxu0 %v1650
    %v1741 = vpop.f32.mrf.mxu0
    %v1742 = vadd.f32 0.0, %v1741
    %1743 = vdwg.mxu0
    %v1745 = vrot.slane %v1742, 6
    %v1747 = vadd.f32 %v1404, %v1745
    %v1748 = vsub.f32 0.0, %v1699
    %v1749 = vmul.f32 %v1748, 1.442695
    %v1750 = vpow.pop %v1749
    %v1751 = vadd.f32 %v1750, 1.0
    %v1752 = vrcp.pop %v1751
    %v1754 = vrot.slane %v1640, 7
    %v1756 = vmul.f32 %v1752, %v1754
    %v1757 = vsub.f32 0.0, %v1675
    %v1758 = vmul.f32 %v1757, 1.442695
    %v1759 = vpow.pop %v1758
    %v1760 = vadd.f32 %v1759, 1.0
    %v1761 = vrcp.pop %v1760
    %v1762 = vtanh.pop %v1723
    %v1763 = vmul.f32 %v1761, %v1762
    %v1764 = vadd.f32 %v1756, %v1763
    %v1765 = vsub.f32 0.0, %v1747
    %v1766 = vmul.f32 %v1765, 1.442695
    %v1767 = vpow.pop %v1766
    %v1768 = vadd.f32 %v1767, 1.0
    %v1769 = vrcp.pop %v1768
    %v1770 = vtanh.pop %v1764
    %v1771 = vmul.f32 %v1769, %v1770
    %v1773 = vrot.slane %v1771, 2
    %v1774 = vsel %vm1417, %v1773, 0
    %1776 = vmatpush.msra.mxu0 0.0
    %1777 = vmatpush.msra.mxu0 0.0
    %1778 = vmatpush.msra.mxu0 0.0
    %1779 = vmatpush.msra.mxu0 0.0
    %1780 = vmatpush.msra.mxu0 0.0
    %1781 = vmatpush.msra.mxu0 0.0
    %1782 = vmatpush.msra.mxu0 0.0
    %1783 = vmatpush.msra.mxu0 0.0
    %1784 = vmatpush.msra.mxu0 0.0
    %1785 = vmatpush.msra.mxu0 0.0
    %1786 = vmatpush.msra.mxu0 0.0
    %1787 = vmatpush.msra.mxu0 0.0
    %1788 = vmatpush.msra.mxu0 0.0
    %1789 = vmatpush.msra.mxu0 0.0
    %1790 = vmatpush.msra.mxu0 %v1407
    %1791 = vmatpush.msra.mxu0 %v1406
    %1792 = vmatmul.f32.gmra.mxu0 %v1774
    %v1793 = vpop.f32.mrf.mxu0
    %v1794 = vadd.f32 0.0, %v1793
    %1795 = vdwg.mxu0
    %v1797 = vrot.slane %v1794, 5
    %v1799 = vadd.f32 %v1314, %v1797
    %1800 = vmatpush.msra.mxu0 0.0
    %1801 = vmatpush.msra.mxu0 0.0
    %1802 = vmatpush.msra.mxu0 0.0
    %1803 = vmatpush.msra.mxu0 0.0
    %1804 = vmatpush.msra.mxu0 0.0
    %1805 = vmatpush.msra.mxu0 0.0
    %1806 = vmatpush.msra.mxu0 0.0
    %1807 = vmatpush.msra.mxu0 0.0
    %1808 = vmatpush.msra.mxu0 0.0
    %1809 = vmatpush.msra.mxu0 0.0
    %1810 = vmatpush.msra.mxu0 0.0
    %1811 = vmatpush.msra.mxu0 0.0
    %1812 = vmatpush.msra.mxu0 0.0
    %1813 = vmatpush.msra.mxu0 0.0
    %1814 = vmatpush.msra.mxu0 %v1410
    %1815 = vmatpush.msra.mxu0 %v1409
    %1816 = vmatmul.f32.gmra.mxu0 %v1774
    %v1817 = vpop.f32.mrf.mxu0
    %v1818 = vadd.f32 0.0, %v1817
    %1819 = vdwg.mxu0
    %v1821 = vrot.slane %v1818, 5
    %v1823 = vadd.f32 %v1344, %v1821
    %1824 = vmatpush.msra.mxu0 0.0
    %1825 = vmatpush.msra.mxu0 0.0
    %1826 = vmatpush.msra.mxu0 0.0
    %1827 = vmatpush.msra.mxu0 0.0
    %1828 = vmatpush.msra.mxu0 0.0
    %1829 = vmatpush.msra.mxu0 0.0
    %1830 = vmatpush.msra.mxu0 0.0
    %1831 = vmatpush.msra.mxu0 0.0
    %1832 = vmatpush.msra.mxu0 0.0
    %1833 = vmatpush.msra.mxu0 0.0
    %1834 = vmatpush.msra.mxu0 0.0
    %1835 = vmatpush.msra.mxu0 0.0
    %1836 = vmatpush.msra.mxu0 0.0
    %1837 = vmatpush.msra.mxu0 0.0
    %1838 = vmatpush.msra.mxu0 %v1413
    %1839 = vmatpush.msra.mxu0 %v1412
    %1840 = vmatmul.f32.gmra.mxu0 %v1774
    %v1841 = vpop.f32.mrf.mxu0
    %v1842 = vadd.f32 0.0, %v1841
    %1843 = vdwg.mxu0
    %v1845 = vrot.slane %v1842, 5
    %v1847 = vadd.f32 %v1374, %v1845
    %1848 = vmatpush.msra.mxu0 0.0
    %1849 = vmatpush.msra.mxu0 0.0
    %1850 = vmatpush.msra.mxu0 0.0
    %1851 = vmatpush.msra.mxu0 0.0
    %1852 = vmatpush.msra.mxu0 0.0
    %1853 = vmatpush.msra.mxu0 0.0
    %1854 = vmatpush.msra.mxu0 0.0
    %1855 = vmatpush.msra.mxu0 0.0
    %1856 = vmatpush.msra.mxu0 0.0
    %1857 = vmatpush.msra.mxu0 0.0
    %1858 = vmatpush.msra.mxu0 0.0
    %1859 = vmatpush.msra.mxu0 0.0
    %1860 = vmatpush.msra.mxu0 0.0
    %1861 = vmatpush.msra.mxu0 0.0
    %1862 = vmatpush.msra.mxu0 %v1416
    %1863 = vmatpush.msra.mxu0 %v1415
    %1864 = vmatmul.f32.gmra.mxu0 %v1774
    %v1865 = vpop.f32.mrf.mxu0
    %v1866 = vadd.f32 0.0, %v1865
    %1867 = vdwg.mxu0
    %v1869 = vrot.slane %v1866, 5
    %v1871 = vadd.f32 %v1404, %v1869
    %v1872 = vsub.f32 0.0, %v1823
    %v1873 = vmul.f32 %v1872, 1.442695
    %v1874 = vpow.pop %v1873
    %v1875 = vadd.f32 %v1874, 1.0
    %v1876 = vrcp.pop %v1875
    %v1878 = vrot.slane %v1764, 7
    %v1880 = vmul.f32 %v1876, %v1878
    %v1881 = vsub.f32 0.0, %v1799
    %v1882 = vmul.f32 %v1881, 1.442695
    %v1883 = vpow.pop %v1882
    %v1884 = vadd.f32 %v1883, 1.0
    %v1885 = vrcp.pop %v1884
    %v1886 = vtanh.pop %v1847
    %v1887 = vmul.f32 %v1885, %v1886
    %v1888 = vadd.f32 %v1880, %v1887
    %v1889 = vsub.f32 0.0, %v1871
    %v1890 = vmul.f32 %v1889, 1.442695
    %v1891 = vpow.pop %v1890
    %v1892 = vadd.f32 %v1891, 1.0
    %v1893 = vrcp.pop %v1892
    %v1894 = vtanh.pop %v1888
    %v1895 = vmul.f32 %v1893, %v1894
    %v1897 = vrot.slane %v1895, 3
    %v1898 = vsel %vm1417, %v1897, 0
    %1900 = vmatpush.msra.mxu0 0.0
    %1901 = vmatpush.msra.mxu0 0.0
    %1902 = vmatpush.msra.mxu0 0.0
    %1903 = vmatpush.msra.mxu0 0.0
    %1904 = vmatpush.msra.mxu0 0.0
    %1905 = vmatpush.msra.mxu0 0.0
    %1906 = vmatpush.msra.mxu0 0.0
    %1907 = vmatpush.msra.mxu0 0.0
    %1908 = vmatpush.msra.mxu0 0.0
    %1909 = vmatpush.msra.mxu0 0.0
    %1910 = vmatpush.msra.mxu0 0.0
    %1911 = vmatpush.msra.mxu0 0.0
    %1912 = vmatpush.msra.mxu0 0.0
    %1913 = vmatpush.msra.mxu0 0.0
    %1914 = vmatpush.msra.mxu0 %v1407
    %1915 = vmatpush.msra.mxu0 %v1406
    %1916 = vmatmul.f32.gmra.mxu0 %v1898
    %v1917 = vpop.f32.mrf.mxu0
    %v1918 = vadd.f32 0.0, %v1917
    %1919 = vdwg.mxu0
    %v1921 = vrot.slane %v1918, 4
    %v1923 = vadd.f32 %v1314, %v1921
    %1924 = vmatpush.msra.mxu0 0.0
    %1925 = vmatpush.msra.mxu0 0.0
    %1926 = vmatpush.msra.mxu0 0.0
    %1927 = vmatpush.msra.mxu0 0.0
    %1928 = vmatpush.msra.mxu0 0.0
    %1929 = vmatpush.msra.mxu0 0.0
    %1930 = vmatpush.msra.mxu0 0.0
    %1931 = vmatpush.msra.mxu0 0.0
    %1932 = vmatpush.msra.mxu0 0.0
    %1933 = vmatpush.msra.mxu0 0.0
    %1934 = vmatpush.msra.mxu0 0.0
    %1935 = vmatpush.msra.mxu0 0.0
    %1936 = vmatpush.msra.mxu0 0.0
    %1937 = vmatpush.msra.mxu0 0.0
    %1938 = vmatpush.msra.mxu0 %v1410
    %1939 = vmatpush.msra.mxu0 %v1409
    %1940 = vmatmul.f32.gmra.mxu0 %v1898
    %v1941 = vpop.f32.mrf.mxu0
    %v1942 = vadd.f32 0.0, %v1941
    %1943 = vdwg.mxu0
    %v1945 = vrot.slane %v1942, 4
    %v1947 = vadd.f32 %v1344, %v1945
    %1948 = vmatpush.msra.mxu0 0.0
    %1949 = vmatpush.msra.mxu0 0.0
    %1950 = vmatpush.msra.mxu0 0.0
    %1951 = vmatpush.msra.mxu0 0.0
    %1952 = vmatpush.msra.mxu0 0.0
    %1953 = vmatpush.msra.mxu0 0.0
    %1954 = vmatpush.msra.mxu0 0.0
    %1955 = vmatpush.msra.mxu0 0.0
    %1956 = vmatpush.msra.mxu0 0.0
    %1957 = vmatpush.msra.mxu0 0.0
    %1958 = vmatpush.msra.mxu0 0.0
    %1959 = vmatpush.msra.mxu0 0.0
    %1960 = vmatpush.msra.mxu0 0.0
    %1961 = vmatpush.msra.mxu0 0.0
    %1962 = vmatpush.msra.mxu0 %v1413
    %1963 = vmatpush.msra.mxu0 %v1412
    %1964 = vmatmul.f32.gmra.mxu0 %v1898
    %v1965 = vpop.f32.mrf.mxu0
    %v1966 = vadd.f32 0.0, %v1965
    %1967 = vdwg.mxu0
    %v1969 = vrot.slane %v1966, 4
    %v1971 = vadd.f32 %v1374, %v1969
    %1972 = vmatpush.msra.mxu0 0.0
    %1973 = vmatpush.msra.mxu0 0.0
    %1974 = vmatpush.msra.mxu0 0.0
    %1975 = vmatpush.msra.mxu0 0.0
    %1976 = vmatpush.msra.mxu0 0.0
    %1977 = vmatpush.msra.mxu0 0.0
    %1978 = vmatpush.msra.mxu0 0.0
    %1979 = vmatpush.msra.mxu0 0.0
    %1980 = vmatpush.msra.mxu0 0.0
    %1981 = vmatpush.msra.mxu0 0.0
    %1982 = vmatpush.msra.mxu0 0.0
    %1983 = vmatpush.msra.mxu0 0.0
    %1984 = vmatpush.msra.mxu0 0.0
    %1985 = vmatpush.msra.mxu0 0.0
    %1986 = vmatpush.msra.mxu0 %v1416
    %1987 = vmatpush.msra.mxu0 %v1415
    %1988 = vmatmul.f32.gmra.mxu0 %v1898
    %v1989 = vpop.f32.mrf.mxu0
    %v1990 = vadd.f32 0.0, %v1989
    %1991 = vdwg.mxu0
    %v1993 = vrot.slane %v1990, 4
    %v1995 = vadd.f32 %v1404, %v1993
    %v1996 = vsub.f32 0.0, %v1947
    %v1997 = vmul.f32 %v1996, 1.442695
    %v1998 = vpow.pop %v1997
    %v1999 = vadd.f32 %v1998, 1.0
    %v2000 = vrcp.pop %v1999
    %v2002 = vrot.slane %v1888, 7
    %v2004 = vmul.f32 %v2000, %v2002
    %v2005 = vsub.f32 0.0, %v1923
    %v2006 = vmul.f32 %v2005, 1.442695
    %v2007 = vpow.pop %v2006
    %v2008 = vadd.f32 %v2007, 1.0
    %v2009 = vrcp.pop %v2008
    %v2010 = vtanh.pop %v1971
    %v2011 = vmul.f32 %v2009, %v2010
    %v2012 = vadd.f32 %v2004, %v2011
    %v2013 = vsub.f32 0.0, %v1995
    %v2014 = vmul.f32 %v2013, 1.442695
    %v2015 = vpow.pop %v2014
    %v2016 = vadd.f32 %v2015, 1.0
    %v2017 = vrcp.pop %v2016
    %v2018 = vtanh.pop %v2012
    %v2019 = vmul.f32 %v2017, %v2018
    %v2021 = vrot.slane %v2019, 4
    %v2022 = vsel %vm1417, %v2021, 0
    %2024 = vmatpush.msra.mxu0 0.0
    %2025 = vmatpush.msra.mxu0 0.0
    %2026 = vmatpush.msra.mxu0 0.0
    %2027 = vmatpush.msra.mxu0 0.0
    %2028 = vmatpush.msra.mxu0 0.0
    %2029 = vmatpush.msra.mxu0 0.0
    %2030 = vmatpush.msra.mxu0 0.0
    %2031 = vmatpush.msra.mxu0 0.0
    %2032 = vmatpush.msra.mxu0 0.0
    %2033 = vmatpush.msra.mxu0 0.0
    %2034 = vmatpush.msra.mxu0 0.0
    %2035 = vmatpush.msra.mxu0 0.0
    %2036 = vmatpush.msra.mxu0 0.0
    %2037 = vmatpush.msra.mxu0 0.0
    %2038 = vmatpush.msra.mxu0 %v1407
    %2039 = vmatpush.msra.mxu0 %v1406
    %2040 = vmatmul.f32.gmra.mxu0 %v2022
    %v2041 = vpop.f32.mrf.mxu0
    %v2042 = vadd.f32 0.0, %v2041
    %2043 = vdwg.mxu0
    %v2045 = vrot.slane %v2042, 3
    %v2047 = vadd.f32 %v1314, %v2045
    %2048 = vmatpush.msra.mxu0 0.0
    %2049 = vmatpush.msra.mxu0 0.0
    %2050 = vmatpush.msra.mxu0 0.0
    %2051 = vmatpush.msra.mxu0 0.0
    %2052 = vmatpush.msra.mxu0 0.0
    %2053 = vmatpush.msra.mxu0 0.0
    %2054 = vmatpush.msra.mxu0 0.0
    %2055 = vmatpush.msra.mxu0 0.0
    %2056 = vmatpush.msra.mxu0 0.0
    %2057 = vmatpush.msra.mxu0 0.0
    %2058 = vmatpush.msra.mxu0 0.0
    %2059 = vmatpush.msra.mxu0 0.0
    %2060 = vmatpush.msra.mxu0 0.0
    %2061 = vmatpush.msra.mxu0 0.0
    %2062 = vmatpush.msra.mxu0 %v1410
    %2063 = vmatpush.msra.mxu0 %v1409
    %2064 = vmatmul.f32.gmra.mxu0 %v2022
    %v2065 = vpop.f32.mrf.mxu0
    %v2066 = vadd.f32 0.0, %v2065
    %2067 = vdwg.mxu0
    %v2069 = vrot.slane %v2066, 3
    %v2071 = vadd.f32 %v1344, %v2069
    %2072 = vmatpush.msra.mxu0 0.0
    %2073 = vmatpush.msra.mxu0 0.0
    %2074 = vmatpush.msra.mxu0 0.0
    %2075 = vmatpush.msra.mxu0 0.0
    %2076 = vmatpush.msra.mxu0 0.0
    %2077 = vmatpush.msra.mxu0 0.0
    %2078 = vmatpush.msra.mxu0 0.0
    %2079 = vmatpush.msra.mxu0 0.0
    %2080 = vmatpush.msra.mxu0 0.0
    %2081 = vmatpush.msra.mxu0 0.0
    %2082 = vmatpush.msra.mxu0 0.0
    %2083 = vmatpush.msra.mxu0 0.0
    %2084 = vmatpush.msra.mxu0 0.0
    %2085 = vmatpush.msra.mxu0 0.0
    %2086 = vmatpush.msra.mxu0 %v1413
    %2087 = vmatpush.msra.mxu0 %v1412
    %2088 = vmatmul.f32.gmra.mxu0 %v2022
    %v2089 = vpop.f32.mrf.mxu0
    %v2090 = vadd.f32 0.0, %v2089
    %2091 = vdwg.mxu0
    %v2093 = vrot.slane %v2090, 3
    %v2095 = vadd.f32 %v1374, %v2093
    %2096 = vmatpush.msra.mxu0 0.0
    %2097 = vmatpush.msra.mxu0 0.0
    %2098 = vmatpush.msra.mxu0 0.0
    %2099 = vmatpush.msra.mxu0 0.0
    %2100 = vmatpush.msra.mxu0 0.0
    %2101 = vmatpush.msra.mxu0 0.0
    %2102 = vmatpush.msra.mxu0 0.0
    %2103 = vmatpush.msra.mxu0 0.0
    %2104 = vmatpush.msra.mxu0 0.0
    %2105 = vmatpush.msra.mxu0 0.0
    %2106 = vmatpush.msra.mxu0 0.0
    %2107 = vmatpush.msra.mxu0 0.0
    %2108 = vmatpush.msra.mxu0 0.0
    %2109 = vmatpush.msra.mxu0 0.0
    %2110 = vmatpush.msra.mxu0 %v1416
    %2111 = vmatpush.msra.mxu0 %v1415
    %2112 = vmatmul.f32.gmra.mxu0 %v2022
    %v2113 = vpop.f32.mrf.mxu0
    %v2114 = vadd.f32 0.0, %v2113
    %2115 = vdwg.mxu0
    %v2117 = vrot.slane %v2114, 3
    %v2119 = vadd.f32 %v1404, %v2117
    %v2120 = vsub.f32 0.0, %v2071
    %v2121 = vmul.f32 %v2120, 1.442695
    %v2122 = vpow.pop %v2121
    %v2123 = vadd.f32 %v2122, 1.0
    %v2124 = vrcp.pop %v2123
    %v2126 = vrot.slane %v2012, 7
    %v2128 = vmul.f32 %v2124, %v2126
    %v2129 = vsub.f32 0.0, %v2047
    %v2130 = vmul.f32 %v2129, 1.442695
    %v2131 = vpow.pop %v2130
    %v2132 = vadd.f32 %v2131, 1.0
    %v2133 = vrcp.pop %v2132
    %v2134 = vtanh.pop %v2095
    %v2135 = vmul.f32 %v2133, %v2134
    %v2136 = vadd.f32 %v2128, %v2135
    %v2137 = vsub.f32 0.0, %v2119
    %v2138 = vmul.f32 %v2137, 1.442695
    %v2139 = vpow.pop %v2138
    %v2140 = vadd.f32 %v2139, 1.0
    %v2141 = vrcp.pop %v2140
    %v2142 = vtanh.pop %v2136
    %v2143 = vmul.f32 %v2141, %v2142
    %v2145 = vrot.slane %v2143, 5
    %v2146 = vsel %vm1417, %v2145, 0
    %2148 = vmatpush.msra.mxu0 0.0
    %2149 = vmatpush.msra.mxu0 0.0
    %2150 = vmatpush.msra.mxu0 0.0
    %2151 = vmatpush.msra.mxu0 0.0
    %2152 = vmatpush.msra.mxu0 0.0
    %2153 = vmatpush.msra.mxu0 0.0
    %2154 = vmatpush.msra.mxu0 0.0
    %2155 = vmatpush.msra.mxu0 0.0
    %2156 = vmatpush.msra.mxu0 0.0
    %2157 = vmatpush.msra.mxu0 0.0
    %2158 = vmatpush.msra.mxu0 0.0
    %2159 = vmatpush.msra.mxu0 0.0
    %2160 = vmatpush.msra.mxu0 0.0
    %2161 = vmatpush.msra.mxu0 0.0
    %2162 = vmatpush.msra.mxu0 %v1407
    %2163 = vmatpush.msra.mxu0 %v1406
    %2164 = vmatmul.f32.gmra.mxu0 %v2146
    %v2165 = vpop.f32.mrf.mxu0
    %v2166 = vadd.f32 0.0, %v2165
    %2167 = vdwg.mxu0
    %v2169 = vrot.slane %v2166, 2
    %v2171 = vadd.f32 %v1314, %v2169
    %2172 = vmatpush.msra.mxu0 0.0
    %2173 = vmatpush.msra.mxu0 0.0
    %2174 = vmatpush.msra.mxu0 0.0
    %2175 = vmatpush.msra.mxu0 0.0
    %2176 = vmatpush.msra.mxu0 0.0
    %2177 = vmatpush.msra.mxu0 0.0
    %2178 = vmatpush.msra.mxu0 0.0
    %2179 = vmatpush.msra.mxu0 0.0
    %2180 = vmatpush.msra.mxu0 0.0
    %2181 = vmatpush.msra.mxu0 0.0
    %2182 = vmatpush.msra.mxu0 0.0
    %2183 = vmatpush.msra.mxu0 0.0
    %2184 = vmatpush.msra.mxu0 0.0
    %2185 = vmatpush.msra.mxu0 0.0
    %2186 = vmatpush.msra.mxu0 %v1410
    %2187 = vmatpush.msra.mxu0 %v1409
    %2188 = vmatmul.f32.gmra.mxu0 %v2146
    %v2189 = vpop.f32.mrf.mxu0
    %v2190 = vadd.f32 0.0, %v2189
    %2191 = vdwg.mxu0
    %v2193 = vrot.slane %v2190, 2
    %v2195 = vadd.f32 %v1344, %v2193
    %2196 = vmatpush.msra.mxu0 0.0
    %2197 = vmatpush.msra.mxu0 0.0
    %2198 = vmatpush.msra.mxu0 0.0
    %2199 = vmatpush.msra.mxu0 0.0
    %2200 = vmatpush.msra.mxu0 0.0
    %2201 = vmatpush.msra.mxu0 0.0
    %2202 = vmatpush.msra.mxu0 0.0
    %2203 = vmatpush.msra.mxu0 0.0
    %2204 = vmatpush.msra.mxu0 0.0
    %2205 = vmatpush.msra.mxu0 0.0
    %2206 = vmatpush.msra.mxu0 0.0
    %2207 = vmatpush.msra.mxu0 0.0
    %2208 = vmatpush.msra.mxu0 0.0
    %2209 = vmatpush.msra.mxu0 0.0
    %2210 = vmatpush.msra.mxu0 %v1413
    %2211 = vmatpush.msra.mxu0 %v1412
    %2212 = vmatmul.f32.gmra.mxu0 %v2146
    %v2213 = vpop.f32.mrf.mxu0
    %v2214 = vadd.f32 0.0, %v2213
    %2215 = vdwg.mxu0
    %v2217 = vrot.slane %v2214, 2
    %v2219 = vadd.f32 %v1374, %v2217
    %2220 = vmatpush.msra.mxu0 0.0
    %2221 = vmatpush.msra.mxu0 0.0
    %2222 = vmatpush.msra.mxu0 0.0
    %2223 = vmatpush.msra.mxu0 0.0
    %2224 = vmatpush.msra.mxu0 0.0
    %2225 = vmatpush.msra.mxu0 0.0
    %2226 = vmatpush.msra.mxu0 0.0
    %2227 = vmatpush.msra.mxu0 0.0
    %2228 = vmatpush.msra.mxu0 0.0
    %2229 = vmatpush.msra.mxu0 0.0
    %2230 = vmatpush.msra.mxu0 0.0
    %2231 = vmatpush.msra.mxu0 0.0
    %2232 = vmatpush.msra.mxu0 0.0
    %2233 = vmatpush.msra.mxu0 0.0
    %2234 = vmatpush.msra.mxu0 %v1416
    %2235 = vmatpush.msra.mxu0 %v1415
    %2236 = vmatmul.f32.gmra.mxu0 %v2146
    %v2237 = vpop.f32.mrf.mxu0
    %v2238 = vadd.f32 0.0, %v2237
    %2239 = vdwg.mxu0
    %v2241 = vrot.slane %v2238, 2
    %v2243 = vadd.f32 %v1404, %v2241
    %v2244 = vsub.f32 0.0, %v2195
    %v2245 = vmul.f32 %v2244, 1.442695
    %v2246 = vpow.pop %v2245
    %v2247 = vadd.f32 %v2246, 1.0
    %v2248 = vrcp.pop %v2247
    %v2250 = vrot.slane %v2136, 7
    %v2252 = vmul.f32 %v2248, %v2250
    %v2253 = vsub.f32 0.0, %v2171
    %v2254 = vmul.f32 %v2253, 1.442695
    %v2255 = vpow.pop %v2254
    %v2256 = vadd.f32 %v2255, 1.0
    %v2257 = vrcp.pop %v2256
    %v2258 = vtanh.pop %v2219
    %v2259 = vmul.f32 %v2257, %v2258
    %v2260 = vadd.f32 %v2252, %v2259
    %v2261 = vsub.f32 0.0, %v2243
    %v2262 = vmul.f32 %v2261, 1.442695
    %v2263 = vpow.pop %v2262
    %v2264 = vadd.f32 %v2263, 1.0
    %v2265 = vrcp.pop %v2264
    %v2266 = vtanh.pop %v2260
    %v2267 = vmul.f32 %v2265, %v2266
    %v2269 = vrot.slane %v2267, 6
    %v2270 = vsel %vm1417, %v2269, 0
    %2272 = vmatpush.msra.mxu0 0.0
    %2273 = vmatpush.msra.mxu0 0.0
    %2274 = vmatpush.msra.mxu0 0.0
    %2275 = vmatpush.msra.mxu0 0.0
    %2276 = vmatpush.msra.mxu0 0.0
    %2277 = vmatpush.msra.mxu0 0.0
    %2278 = vmatpush.msra.mxu0 0.0
    %2279 = vmatpush.msra.mxu0 0.0
    %2280 = vmatpush.msra.mxu0 0.0
    %2281 = vmatpush.msra.mxu0 0.0
    %2282 = vmatpush.msra.mxu0 0.0
    %2283 = vmatpush.msra.mxu0 0.0
    %2284 = vmatpush.msra.mxu0 0.0
    %2285 = vmatpush.msra.mxu0 0.0
    %2286 = vmatpush.msra.mxu0 %v1407
    %2287 = vmatpush.msra.mxu0 %v1406
    %2288 = vmatmul.f32.gmra.mxu0 %v2270
    %v2289 = vpop.f32.mrf.mxu0
    %v2290 = vadd.f32 0.0, %v2289
    %2291 = vdwg.mxu0
    %v2293 = vrot.slane %v2290, 1
    %v2295 = vadd.f32 %v1314, %v2293
    %2296 = vmatpush.msra.mxu0 0.0
    %2297 = vmatpush.msra.mxu0 0.0
    %2298 = vmatpush.msra.mxu0 0.0
    %2299 = vmatpush.msra.mxu0 0.0
    %2300 = vmatpush.msra.mxu0 0.0
    %2301 = vmatpush.msra.mxu0 0.0
    %2302 = vmatpush.msra.mxu0 0.0
    %2303 = vmatpush.msra.mxu0 0.0
    %2304 = vmatpush.msra.mxu0 0.0
    %2305 = vmatpush.msra.mxu0 0.0
    %2306 = vmatpush.msra.mxu0 0.0
    %2307 = vmatpush.msra.mxu0 0.0
    %2308 = vmatpush.msra.mxu0 0.0
    %2309 = vmatpush.msra.mxu0 0.0
    %2310 = vmatpush.msra.mxu0 %v1410
    %2311 = vmatpush.msra.mxu0 %v1409
    %2312 = vmatmul.f32.gmra.mxu0 %v2270
    %v2313 = vpop.f32.mrf.mxu0
    %v2314 = vadd.f32 0.0, %v2313
    %2315 = vdwg.mxu0
    %v2317 = vrot.slane %v2314, 1
    %v2319 = vadd.f32 %v1344, %v2317
    %2320 = vmatpush.msra.mxu0 0.0
    %2321 = vmatpush.msra.mxu0 0.0
    %2322 = vmatpush.msra.mxu0 0.0
    %2323 = vmatpush.msra.mxu0 0.0
    %2324 = vmatpush.msra.mxu0 0.0
    %2325 = vmatpush.msra.mxu0 0.0
    %2326 = vmatpush.msra.mxu0 0.0
    %2327 = vmatpush.msra.mxu0 0.0
    %2328 = vmatpush.msra.mxu0 0.0
    %2329 = vmatpush.msra.mxu0 0.0
    %2330 = vmatpush.msra.mxu0 0.0
    %2331 = vmatpush.msra.mxu0 0.0
    %2332 = vmatpush.msra.mxu0 0.0
    %2333 = vmatpush.msra.mxu0 0.0
    %2334 = vmatpush.msra.mxu0 %v1413
    %2335 = vmatpush.msra.mxu0 %v1412
    %2336 = vmatmul.f32.gmra.mxu0 %v2270
    %v2337 = vpop.f32.mrf.mxu0
    %v2338 = vadd.f32 0.0, %v2337
    %2339 = vdwg.mxu0
    %v2341 = vrot.slane %v2338, 1
    %v2343 = vadd.f32 %v1374, %v2341
    %2344 = vmatpush.msra.mxu0 0.0
    %2345 = vmatpush.msra.mxu0 0.0
    %2346 = vmatpush.msra.mxu0 0.0
    %2347 = vmatpush.msra.mxu0 0.0
    %2348 = vmatpush.msra.mxu0 0.0
    %2349 = vmatpush.msra.mxu0 0.0
    %2350 = vmatpush.msra.mxu0 0.0
    %2351 = vmatpush.msra.mxu0 0.0
    %2352 = vmatpush.msra.mxu0 0.0
    %2353 = vmatpush.msra.mxu0 0.0
    %2354 = vmatpush.msra.mxu0 0.0
    %2355 = vmatpush.msra.mxu0 0.0
    %2356 = vmatpush.msra.mxu0 0.0
    %2357 = vmatpush.msra.mxu0 0.0
    %2358 = vmatpush.msra.mxu0 %v1416
    %2359 = vmatpush.msra.mxu0 %v1415
    %2360 = vmatmul.f32.gmra.mxu0 %v2270
    %v2361 = vpop.f32.mrf.mxu0
    %v2362 = vadd.f32 0.0, %v2361
    %2363 = vdwg.mxu0
    %v2365 = vrot.slane %v2362, 1
    %v2367 = vadd.f32 %v1404, %v2365
    %v2368 = vsub.f32 0.0, %v2319
    %v2369 = vmul.f32 %v2368, 1.442695
    %v2370 = vpow.pop %v2369
    %v2371 = vadd.f32 %v2370, 1.0
    %v2372 = vrcp.pop %v2371
    %v2374 = vrot.slane %v2260, 7
    %v2376 = vmul.f32 %v2372, %v2374
    %v2377 = vsub.f32 0.0, %v2295
    %v2378 = vmul.f32 %v2377, 1.442695
    %v2379 = vpow.pop %v2378
    %v2380 = vadd.f32 %v2379, 1.0
    %v2381 = vrcp.pop %v2380
    %v2382 = vtanh.pop %v2343
    %v2383 = vmul.f32 %v2381, %v2382
    %v2384 = vadd.f32 %v2376, %v2383
    %v2385 = vsub.f32 0.0, %v2367
    %v2386 = vmul.f32 %v2385, 1.442695
    %v2387 = vpow.pop %v2386
    %v2388 = vadd.f32 %v2387, 1.0
    %v2389 = vrcp.pop %v2388
    %v2390 = vtanh.pop %v2384
    %v2391 = vmul.f32 %v2389, %v2390
    %v2392 = vld [vmem:[%s7] sm:$0xff]
    %v2393 = vld [vmem:[%s7 + $0x8] sm:$0xff]
    %v2394 = vld [vmem:[%s9] sm:$0x1]
    %v2396 = vrot.slane %v2391, 7
    %v2397 = vsel %vm1417, %v2396, 0
    %2399 = vmatpush.msra.mxu0 0.0
    %2400 = vmatpush.msra.mxu0 0.0
    %2401 = vmatpush.msra.mxu0 0.0
    %2402 = vmatpush.msra.mxu0 0.0
    %2403 = vmatpush.msra.mxu0 0.0
    %2404 = vmatpush.msra.mxu0 0.0
    %2405 = vmatpush.msra.mxu0 0.0
    %2406 = vmatpush.msra.mxu0 0.0
    %2407 = vmatpush.msra.mxu0 0.0
    %2408 = vmatpush.msra.mxu0 0.0
    %2409 = vmatpush.msra.mxu0 0.0
    %2410 = vmatpush.msra.mxu0 0.0
    %2411 = vmatpush.msra.mxu0 0.0
    %2412 = vmatpush.msra.mxu0 0.0
    %2413 = vmatpush.msra.mxu0 %v2393
    %2414 = vmatpush.msra.mxu0 %v2392
    %2415 = vmatmul.f32.gmra.mxu0 %v2397
    %v2416 = vpop.f32.mrf.mxu0
    %v2417 = vadd.f32 %v2394, %v2416
    %2418 = vdwg.mxu0
    %s2419 = scalar_lea.vmem %s7, 16
    %v2420 = vld [vmem:[%s2419] sm:$0xff]
    %v2421 = vld [vmem:[%s2419 + $0x8] sm:$0xff]
    %s2422 = scalar_lea.vmem %s9, 1
    %v2423 = vld [vmem:[%s2422] sm:$0x1]
    %2424 = vmatpush.msra.mxu0 0.0
    %2425 = vmatpush.msra.mxu0 0.0
    %2426 = vmatpush.msra.mxu0 0.0
    %2427 = vmatpush.msra.mxu0 0.0
    %2428 = vmatpush.msra.mxu0 0.0
    %2429 = vmatpush.msra.mxu0 0.0
    %2430 = vmatpush.msra.mxu0 0.0
    %2431 = vmatpush.msra.mxu0 0.0
    %2432 = vmatpush.msra.mxu0 0.0
    %2433 = vmatpush.msra.mxu0 0.0
    %2434 = vmatpush.msra.mxu0 0.0
    %2435 = vmatpush.msra.mxu0 0.0
    %2436 = vmatpush.msra.mxu0 0.0
    %2437 = vmatpush.msra.mxu0 0.0
    %2438 = vmatpush.msra.mxu0 %v2421
    %2439 = vmatpush.msra.mxu0 %v2420
    %2440 = vmatmul.f32.gmra.mxu0 %v2397
    %v2441 = vpop.f32.mrf.mxu0
    %v2442 = vadd.f32 %v2423, %v2441
    %2443 = vdwg.mxu0
    %s2444 = scalar_lea.vmem %s7, 32
    %v2445 = vld [vmem:[%s2444] sm:$0xff]
    %v2446 = vld [vmem:[%s2444 + $0x8] sm:$0xff]
    %s2447 = scalar_lea.vmem %s9, 2
    %v2448 = vld [vmem:[%s2447] sm:$0x1]
    %2449 = vmatpush.msra.mxu0 0.0
    %2450 = vmatpush.msra.mxu0 0.0
    %2451 = vmatpush.msra.mxu0 0.0
    %2452 = vmatpush.msra.mxu0 0.0
    %2453 = vmatpush.msra.mxu0 0.0
    %2454 = vmatpush.msra.mxu0 0.0
    %2455 = vmatpush.msra.mxu0 0.0
    %2456 = vmatpush.msra.mxu0 0.0
    %2457 = vmatpush.msra.mxu0 0.0
    %2458 = vmatpush.msra.mxu0 0.0
    %2459 = vmatpush.msra.mxu0 0.0
    %2460 = vmatpush.msra.mxu0 0.0
    %2461 = vmatpush.msra.mxu0 0.0
    %2462 = vmatpush.msra.mxu0 0.0
    %2463 = vmatpush.msra.mxu0 %v2446
    %2464 = vmatpush.msra.mxu0 %v2445
    %2465 = vmatmul.f32.gmra.mxu0 %v2397
    %v2466 = vpop.f32.mrf.mxu0
    %v2467 = vadd.f32 %v2448, %v2466
    %2468 = vdwg.mxu0
    %s2469 = scalar_lea.vmem %s7, 48
    %v2470 = vld [vmem:[%s2469] sm:$0xff]
    %v2471 = vld [vmem:[%s2469 + $0x8] sm:$0xff]
    %s2472 = scalar_lea.vmem %s9, 3
    %v2473 = vld [vmem:[%s2472] sm:$0x1]
    %2474 = vmatpush.msra.mxu0 0.0
    %2475 = vmatpush.msra.mxu0 0.0
    %2476 = vmatpush.msra.mxu0 0.0
    %2477 = vmatpush.msra.mxu0 0.0
    %2478 = vmatpush.msra.mxu0 0.0
    %2479 = vmatpush.msra.mxu0 0.0
    %2480 = vmatpush.msra.mxu0 0.0
    %2481 = vmatpush.msra.mxu0 0.0
    %2482 = vmatpush.msra.mxu0 0.0
    %2483 = vmatpush.msra.mxu0 0.0
    %2484 = vmatpush.msra.mxu0 0.0
    %2485 = vmatpush.msra.mxu0 0.0
    %2486 = vmatpush.msra.mxu0 0.0
    %2487 = vmatpush.msra.mxu0 0.0
    %2488 = vmatpush.msra.mxu0 %v2471
    %2489 = vmatpush.msra.mxu0 %v2470
    %2490 = vmatmul.f32.gmra.mxu0 %v2397
    %v2491 = vpop.f32.mrf.mxu0
    %v2492 = vadd.f32 %v2473, %v2491
    %2493 = vdwg.mxu0
    %v2494 = vld [vmem:[%s8] sm:$0xff]
    %v2495 = vld [vmem:[%s8 + $0x8] sm:$0xff]
    %v2496 = vld [vmem:[%s8 + $0x10] sm:$0xff]
    %v2497 = vld [vmem:[%s8 + $0x18] sm:$0xff]
    %s2498 = scalar_lea.vmem %s8, 32
    %v2499 = vld [vmem:[%s2498] sm:$0xff]
    %v2500 = vld [vmem:[%s2498 + $0x8] sm:$0xff]
    %v2501 = vld [vmem:[%s2498 + $0x10] sm:$0xff]
    %v2502 = vld [vmem:[%s2498 + $0x18] sm:$0xff]
    %s2503 = scalar_lea.vmem %s8, 64
    %v2504 = vld [vmem:[%s2503] sm:$0xff]
    %v2505 = vld [vmem:[%s2503 + $0x8] sm:$0xff]
    %v2506 = vld [vmem:[%s2503 + $0x10] sm:$0xff]
    %v2507 = vld [vmem:[%s2503 + $0x18] sm:$0xff]
    %s2508 = scalar_lea.vmem %s8, 96
    %v2509 = vld [vmem:[%s2508] sm:$0xff]
    %v2510 = vld [vmem:[%s2508 + $0x8] sm:$0xff]
    %v2511 = vld [vmem:[%s2508 + $0x10] sm:$0xff]
    %v2512 = vld [vmem:[%s2508 + $0x18] sm:$0xff]
    %2513 = vmatpush.msra.mxu0 0.0
    %2514 = vmatpush.msra.mxu0 0.0
    %2515 = vmatpush.msra.mxu0 0.0
    %2516 = vmatpush.msra.mxu0 0.0
    %2517 = vmatpush.msra.mxu0 0.0
    %2518 = vmatpush.msra.mxu0 0.0
    %2519 = vmatpush.msra.mxu0 0.0
    %2520 = vmatpush.msra.mxu0 0.0
    %2521 = vmatpush.msra.mxu0 0.0
    %2522 = vmatpush.msra.mxu0 0.0
    %2523 = vmatpush.msra.mxu0 0.0
    %2524 = vmatpush.msra.mxu0 0.0
    %2525 = vmatpush.msra.mxu0 %v2497
    %2526 = vmatpush.msra.mxu0 %v2496
    %2527 = vmatpush.msra.mxu0 %v2495
    %2528 = vmatpush.msra.mxu0 %v2494
    %2529 = vmatmul.f32.gmra.mxu0 %v294
    %v2530 = vpop.f32.mrf.mxu0
    %v2531 = vadd.f32 0.0, %v2530
    %2532 = vdwg.mxu0
    %v2533 = vadd.f32 %v2417, %v2531
    %2534 = vmatpush.msra.mxu0 0.0
    %2535 = vmatpush.msra.mxu0 0.0
    %2536 = vmatpush.msra.mxu0 0.0
    %2537 = vmatpush.msra.mxu0 0.0
    %2538 = vmatpush.msra.mxu0 0.0
    %2539 = vmatpush.msra.mxu0 0.0
    %2540 = vmatpush.msra.mxu0 0.0
    %2541 = vmatpush.msra.mxu0 0.0
    %2542 = vmatpush.msra.mxu0 0.0
    %2543 = vmatpush.msra.mxu0 0.0
    %2544 = vmatpush.msra.mxu0 0.0
    %2545 = vmatpush.msra.mxu0 0.0
    %2546 = vmatpush.msra.mxu0 %v2502
    %2547 = vmatpush.msra.mxu0 %v2501
    %2548 = vmatpush.msra.mxu0 %v2500
    %2549 = vmatpush.msra.mxu0 %v2499
    %2550 = vmatmul.f32.gmra.mxu0 %v294
    %v2551 = vpop.f32.mrf.mxu0
    %v2552 = vadd.f32 0.0, %v2551
    %2553 = vdwg.mxu0
    %v2554 = vadd.f32 %v2442, %v2552
    %2555 = vmatpush.msra.mxu0 0.0
    %2556 = vmatpush.msra.mxu0 0.0
    %2557 = vmatpush.msra.mxu0 0.0
    %2558 = vmatpush.msra.mxu0 0.0
    %2559 = vmatpush.msra.mxu0 0.0
    %2560 = vmatpush.msra.mxu0 0.0
    %2561 = vmatpush.msra.mxu0 0.0
    %2562 = vmatpush.msra.mxu0 0.0
    %2563 = vmatpush.msra.mxu0 0.0
    %2564 = vmatpush.msra.mxu0 0.0
    %2565 = vmatpush.msra.mxu0 0.0
    %2566 = vmatpush.msra.mxu0 0.0
    %2567 = vmatpush.msra.mxu0 %v2507
    %2568 = vmatpush.msra.mxu0 %v2506
    %2569 = vmatpush.msra.mxu0 %v2505
    %2570 = vmatpush.msra.mxu0 %v2504
    %2571 = vmatmul.f32.gmra.mxu0 %v294
    %v2572 = vpop.f32.mrf.mxu0
    %v2573 = vadd.f32 0.0, %v2572
    %2574 = vdwg.mxu0
    %v2575 = vadd.f32 %v2467, %v2573
    %2576 = vmatpush.msra.mxu0 0.0
    %2577 = vmatpush.msra.mxu0 0.0
    %2578 = vmatpush.msra.mxu0 0.0
    %2579 = vmatpush.msra.mxu0 0.0
    %2580 = vmatpush.msra.mxu0 0.0
    %2581 = vmatpush.msra.mxu0 0.0
    %2582 = vmatpush.msra.mxu0 0.0
    %2583 = vmatpush.msra.mxu0 0.0
    %2584 = vmatpush.msra.mxu0 0.0
    %2585 = vmatpush.msra.mxu0 0.0
    %2586 = vmatpush.msra.mxu0 0.0
    %2587 = vmatpush.msra.mxu0 0.0
    %2588 = vmatpush.msra.mxu0 %v2512
    %2589 = vmatpush.msra.mxu0 %v2511
    %2590 = vmatpush.msra.mxu0 %v2510
    %2591 = vmatpush.msra.mxu0 %v2509
    %2592 = vmatmul.f32.gmra.mxu0 %v294
    %v2593 = vpop.f32.mrf.mxu0
    %v2594 = vadd.f32 0.0, %v2593
    %2595 = vdwg.mxu0
    %v2596 = vadd.f32 %v2492, %v2594
    %v2597 = vsub.f32 0.0, %v2554
    %v2598 = vmul.f32 %v2597, 1.442695
    %v2599 = vpow.pop %v2598
    %v2600 = vadd.f32 %v2599, 1.0
    %v2601 = vrcp.pop %v2600
    %v2602 = vmul.f32 %v2601, 0.0
    %v2603 = vsub.f32 0.0, %v2533
    %v2604 = vmul.f32 %v2603, 1.442695
    %v2605 = vpow.pop %v2604
    %v2606 = vadd.f32 %v2605, 1.0
    %v2607 = vrcp.pop %v2606
    %v2608 = vtanh.pop %v2575
    %v2609 = vmul.f32 %v2607, %v2608
    %v2610 = vadd.f32 %v2602, %v2609
    %v2611 = vsub.f32 0.0, %v2596
    %v2612 = vmul.f32 %v2611, 1.442695
    %v2613 = vpow.pop %v2612
    %v2614 = vadd.f32 %v2613, 1.0
    %v2615 = vrcp.pop %v2614
    %v2616 = vtanh.pop %v2610
    %v2617 = vmul.f32 %v2615, %v2616
    %2618 = vst.msk [vmem:[#allocation3] sm:$0x1] %vm401, %v2617
    %v2620 = vsel %vm292, %v2617, 0
    %2622 = vmatpush.msra.mxu0 0.0
    %2623 = vmatpush.msra.mxu0 0.0
    %2624 = vmatpush.msra.mxu0 0.0
    %2625 = vmatpush.msra.mxu0 0.0
    %2626 = vmatpush.msra.mxu0 0.0
    %2627 = vmatpush.msra.mxu0 0.0
    %2628 = vmatpush.msra.mxu0 0.0
    %2629 = vmatpush.msra.mxu0 0.0
    %2630 = vmatpush.msra.mxu0 0.0
    %2631 = vmatpush.msra.mxu0 0.0
    %2632 = vmatpush.msra.mxu0 0.0
    %2633 = vmatpush.msra.mxu0 0.0
    %2634 = vmatpush.msra.mxu0 %v2497
    %2635 = vmatpush.msra.mxu0 %v2496
    %2636 = vmatpush.msra.mxu0 %v2495
    %2637 = vmatpush.msra.mxu0 %v2494
    %2638 = vmatmul.f32.gmra.mxu0 %v2620
    %v2639 = vpop.f32.mrf.mxu0
    %v2640 = vadd.f32 0.0, %v2639
    %2641 = vdwg.mxu0
    %v2642 = vadd.f32 %v2417, %v2640
    %2643 = vmatpush.msra.mxu0 0.0
    %2644 = vmatpush.msra.mxu0 0.0
    %2645 = vmatpush.msra.mxu0 0.0
    %2646 = vmatpush.msra.mxu0 0.0
    %2647 = vmatpush.msra.mxu0 0.0
    %2648 = vmatpush.msra.mxu0 0.0
    %2649 = vmatpush.msra.mxu0 0.0
    %2650 = vmatpush.msra.mxu0 0.0
    %2651 = vmatpush.msra.mxu0 0.0
    %2652 = vmatpush.msra.mxu0 0.0
    %2653 = vmatpush.msra.mxu0 0.0
    %2654 = vmatpush.msra.mxu0 0.0
    %2655 = vmatpush.msra.mxu0 %v2502
    %2656 = vmatpush.msra.mxu0 %v2501
    %2657 = vmatpush.msra.mxu0 %v2500
    %2658 = vmatpush.msra.mxu0 %v2499
    %2659 = vmatmul.f32.gmra.mxu0 %v2620
    %v2660 = vpop.f32.mrf.mxu0
    %v2661 = vadd.f32 0.0, %v2660
    %2662 = vdwg.mxu0
    %v2663 = vadd.f32 %v2442, %v2661
    %2664 = vmatpush.msra.mxu0 0.0
    %2665 = vmatpush.msra.mxu0 0.0
    %2666 = vmatpush.msra.mxu0 0.0
    %2667 = vmatpush.msra.mxu0 0.0
    %2668 = vmatpush.msra.mxu0 0.0
    %2669 = vmatpush.msra.mxu0 0.0
    %2670 = vmatpush.msra.mxu0 0.0
    %2671 = vmatpush.msra.mxu0 0.0
    %2672 = vmatpush.msra.mxu0 0.0
    %2673 = vmatpush.msra.mxu0 0.0
    %2674 = vmatpush.msra.mxu0 0.0
    %2675 = vmatpush.msra.mxu0 0.0
    %2676 = vmatpush.msra.mxu0 %v2507
    %2677 = vmatpush.msra.mxu0 %v2506
    %2678 = vmatpush.msra.mxu0 %v2505
    %2679 = vmatpush.msra.mxu0 %v2504
    %2680 = vmatmul.f32.gmra.mxu0 %v2620
    %v2681 = vpop.f32.mrf.mxu0
    %v2682 = vadd.f32 0.0, %v2681
    %2683 = vdwg.mxu0
    %v2684 = vadd.f32 %v2467, %v2682
    %2685 = vmatpush.msra.mxu0 0.0
    %2686 = vmatpush.msra.mxu0 0.0
    %2687 = vmatpush.msra.mxu0 0.0
    %2688 = vmatpush.msra.mxu0 0.0
    %2689 = vmatpush.msra.mxu0 0.0
    %2690 = vmatpush.msra.mxu0 0.0
    %2691 = vmatpush.msra.mxu0 0.0
    %2692 = vmatpush.msra.mxu0 0.0
    %2693 = vmatpush.msra.mxu0 0.0
    %2694 = vmatpush.msra.mxu0 0.0
    %2695 = vmatpush.msra.mxu0 0.0
    %2696 = vmatpush.msra.mxu0 0.0
    %2697 = vmatpush.msra.mxu0 %v2512
    %2698 = vmatpush.msra.mxu0 %v2511
    %2699 = vmatpush.msra.mxu0 %v2510
    %2700 = vmatpush.msra.mxu0 %v2509
    %2701 = vmatmul.f32.gmra.mxu0 %v2620
    %v2702 = vpop.f32.mrf.mxu0
    %v2703 = vadd.f32 0.0, %v2702
    %2704 = vdwg.mxu0
    %v2705 = vadd.f32 %v2492, %v2703
    %v2706 = vsub.f32 0.0, %v2663
    %v2707 = vmul.f32 %v2706, 1.442695
    %v2708 = vpow.pop %v2707
    %v2709 = vadd.f32 %v2708, 1.0
    %v2710 = vrcp.pop %v2709
    %v2711 = vmul.f32 %v2710, %v2610
    %v2712 = vsub.f32 0.0, %v2642
    %v2713 = vmul.f32 %v2712, 1.442695
    %v2714 = vpow.pop %v2713
    %v2715 = vadd.f32 %v2714, 1.0
    %v2716 = vrcp.pop %v2715
    %v2717 = vtanh.pop %v2684
    %v2718 = vmul.f32 %v2716, %v2717
    %v2719 = vadd.f32 %v2711, %v2718
    %v2720 = vsub.f32 0.0, %v2705
    %v2721 = vmul.f32 %v2720, 1.442695
    %v2722 = vpow.pop %v2721
    %v2723 = vadd.f32 %v2722, 1.0
    %v2724 = vrcp.pop %v2723
    %v2725 = vtanh.pop %v2719
    %v2726 = vmul.f32 %v2724, %v2725
    %2727 = vst.msk [vmem:[#allocation3 + $0x1] sm:$0x1] %vm401, %v2726
    %v2729 = vsel %vm292, %v2726, 0
    %2731 = vmatpush.msra.mxu0 0.0
    %2732 = vmatpush.msra.mxu0 0.0
    %2733 = vmatpush.msra.mxu0 0.0
    %2734 = vmatpush.msra.mxu0 0.0
    %2735 = vmatpush.msra.mxu0 0.0
    %2736 = vmatpush.msra.mxu0 0.0
    %2737 = vmatpush.msra.mxu0 0.0
    %2738 = vmatpush.msra.mxu0 0.0
    %2739 = vmatpush.msra.mxu0 0.0
    %2740 = vmatpush.msra.mxu0 0.0
    %2741 = vmatpush.msra.mxu0 0.0
    %2742 = vmatpush.msra.mxu0 0.0
    %2743 = vmatpush.msra.mxu0 %v2497
    %2744 = vmatpush.msra.mxu0 %v2496
    %2745 = vmatpush.msra.mxu0 %v2495
    %2746 = vmatpush.msra.mxu0 %v2494
    %2747 = vmatmul.f32.gmra.mxu0 %v2729
    %v2748 = vpop.f32.mrf.mxu0
    %v2749 = vadd.f32 0.0, %v2748
    %2750 = vdwg.mxu0
    %v2751 = vadd.f32 %v2417, %v2749
    %2752 = vmatpush.msra.mxu0 0.0
    %2753 = vmatpush.msra.mxu0 0.0
    %2754 = vmatpush.msra.mxu0 0.0
    %2755 = vmatpush.msra.mxu0 0.0
    %2756 = vmatpush.msra.mxu0 0.0
    %2757 = vmatpush.msra.mxu0 0.0
    %2758 = vmatpush.msra.mxu0 0.0
    %2759 = vmatpush.msra.mxu0 0.0
    %2760 = vmatpush.msra.mxu0 0.0
    %2761 = vmatpush.msra.mxu0 0.0
    %2762 = vmatpush.msra.mxu0 0.0
    %2763 = vmatpush.msra.mxu0 0.0
    %2764 = vmatpush.msra.mxu0 %v2502
    %2765 = vmatpush.msra.mxu0 %v2501
    %2766 = vmatpush.msra.mxu0 %v2500
    %2767 = vmatpush.msra.mxu0 %v2499
    %2768 = vmatmul.f32.gmra.mxu0 %v2729
    %v2769 = vpop.f32.mrf.mxu0
    %v2770 = vadd.f32 0.0, %v2769
    %2771 = vdwg.mxu0
    %v2772 = vadd.f32 %v2442, %v2770
    %2773 = vmatpush.msra.mxu0 0.0
    %2774 = vmatpush.msra.mxu0 0.0
    %2775 = vmatpush.msra.mxu0 0.0
    %2776 = vmatpush.msra.mxu0 0.0
    %2777 = vmatpush.msra.mxu0 0.0
    %2778 = vmatpush.msra.mxu0 0.0
    %2779 = vmatpush.msra.mxu0 0.0
    %2780 = vmatpush.msra.mxu0 0.0
    %2781 = vmatpush.msra.mxu0 0.0
    %2782 = vmatpush.msra.mxu0 0.0
    %2783 = vmatpush.msra.mxu0 0.0
    %2784 = vmatpush.msra.mxu0 0.0
    %2785 = vmatpush.msra.mxu0 %v2507
    %2786 = vmatpush.msra.mxu0 %v2506
    %2787 = vmatpush.msra.mxu0 %v2505
    %2788 = vmatpush.msra.mxu0 %v2504
    %2789 = vmatmul.f32.gmra.mxu0 %v2729
    %v2790 = vpop.f32.mrf.mxu0
    %v2791 = vadd.f32 0.0, %v2790
    %2792 = vdwg.mxu0
    %v2793 = vadd.f32 %v2467, %v2791
    %2794 = vmatpush.msra.mxu0 0.0
    %2795 = vmatpush.msra.mxu0 0.0
    %2796 = vmatpush.msra.mxu0 0.0
    %2797 = vmatpush.msra.mxu0 0.0
    %2798 = vmatpush.msra.mxu0 0.0
    %2799 = vmatpush.msra.mxu0 0.0
    %2800 = vmatpush.msra.mxu0 0.0
    %2801 = vmatpush.msra.mxu0 0.0
    %2802 = vmatpush.msra.mxu0 0.0
    %2803 = vmatpush.msra.mxu0 0.0
    %2804 = vmatpush.msra.mxu0 0.0
    %2805 = vmatpush.msra.mxu0 0.0
    %2806 = vmatpush.msra.mxu0 %v2512
    %2807 = vmatpush.msra.mxu0 %v2511
    %2808 = vmatpush.msra.mxu0 %v2510
    %2809 = vmatpush.msra.mxu0 %v2509
    %2810 = vmatmul.f32.gmra.mxu0 %v2729
    %v2811 = vpop.f32.mrf.mxu0
    %v2812 = vadd.f32 0.0, %v2811
    %2813 = vdwg.mxu0
    %v2814 = vadd.f32 %v2492, %v2812
    %v2815 = vsub.f32 0.0, %v2772
    %v2816 = vmul.f32 %v2815, 1.442695
    %v2817 = vpow.pop %v2816
    %v2818 = vadd.f32 %v2817, 1.0
    %v2819 = vrcp.pop %v2818
    %v2820 = vmul.f32 %v2819, %v2719
    %v2821 = vsub.f32 0.0, %v2751
    %v2822 = vmul.f32 %v2821, 1.442695
    %v2823 = vpow.pop %v2822
    %v2824 = vadd.f32 %v2823, 1.0
    %v2825 = vrcp.pop %v2824
    %v2826 = vtanh.pop %v2793
    %v2827 = vmul.f32 %v2825, %v2826
    %v2828 = vadd.f32 %v2820, %v2827
    %v2829 = vsub.f32 0.0, %v2814
    %v2830 = vmul.f32 %v2829, 1.442695
    %v2831 = vpow.pop %v2830
    %v2832 = vadd.f32 %v2831, 1.0
    %v2833 = vrcp.pop %v2832
    %v2834 = vtanh.pop %v2828
    %v2835 = vmul.f32 %v2833, %v2834
    %2836 = vst.msk [vmem:[#allocation3 + $0x2] sm:$0x1] %vm401, %v2835
    %v2838 = vsel %vm292, %v2835, 0
    %2840 = vmatpush.msra.mxu0 0.0
    %2841 = vmatpush.msra.mxu0 0.0
    %2842 = vmatpush.msra.mxu0 0.0
    %2843 = vmatpush.msra.mxu0 0.0
    %2844 = vmatpush.msra.mxu0 0.0
    %2845 = vmatpush.msra.mxu0 0.0
    %2846 = vmatpush.msra.mxu0 0.0
    %2847 = vmatpush.msra.mxu0 0.0
    %2848 = vmatpush.msra.mxu0 0.0
    %2849 = vmatpush.msra.mxu0 0.0
    %2850 = vmatpush.msra.mxu0 0.0
    %2851 = vmatpush.msra.mxu0 0.0
    %2852 = vmatpush.msra.mxu0 %v2497
    %2853 = vmatpush.msra.mxu0 %v2496
    %2854 = vmatpush.msra.mxu0 %v2495
    %2855 = vmatpush.msra.mxu0 %v2494
    %2856 = vmatmul.f32.gmra.mxu0 %v2838
    %v2857 = vpop.f32.mrf.mxu0
    %v2858 = vadd.f32 0.0, %v2857
    %2859 = vdwg.mxu0
    %v2860 = vadd.f32 %v2417, %v2858
    %2861 = vmatpush.msra.mxu0 0.0
    %2862 = vmatpush.msra.mxu0 0.0
    %2863 = vmatpush.msra.mxu0 0.0
    %2864 = vmatpush.msra.mxu0 0.0
    %2865 = vmatpush.msra.mxu0 0.0
    %2866 = vmatpush.msra.mxu0 0.0
    %2867 = vmatpush.msra.mxu0 0.0
    %2868 = vmatpush.msra.mxu0 0.0
    %2869 = vmatpush.msra.mxu0 0.0
    %2870 = vmatpush.msra.mxu0 0.0
    %2871 = vmatpush.msra.mxu0 0.0
    %2872 = vmatpush.msra.mxu0 0.0
    %2873 = vmatpush.msra.mxu0 %v2502
    %2874 = vmatpush.msra.mxu0 %v2501
    %2875 = vmatpush.msra.mxu0 %v2500
    %2876 = vmatpush.msra.mxu0 %v2499
    %2877 = vmatmul.f32.gmra.mxu0 %v2838
    %v2878 = vpop.f32.mrf.mxu0
    %v2879 = vadd.f32 0.0, %v2878
    %2880 = vdwg.mxu0
    %v2881 = vadd.f32 %v2442, %v2879
    %2882 = vmatpush.msra.mxu0 0.0
    %2883 = vmatpush.msra.mxu0 0.0
    %2884 = vmatpush.msra.mxu0 0.0
    %2885 = vmatpush.msra.mxu0 0.0
    %2886 = vmatpush.msra.mxu0 0.0
    %2887 = vmatpush.msra.mxu0 0.0
    %2888 = vmatpush.msra.mxu0 0.0
    %2889 = vmatpush.msra.mxu0 0.0
    %2890 = vmatpush.msra.mxu0 0.0
    %2891 = vmatpush.msra.mxu0 0.0
    %2892 = vmatpush.msra.mxu0 0.0
    %2893 = vmatpush.msra.mxu0 0.0
    %2894 = vmatpush.msra.mxu0 %v2507
    %2895 = vmatpush.msra.mxu0 %v2506
    %2896 = vmatpush.msra.mxu0 %v2505
    %2897 = vmatpush.msra.mxu0 %v2504
    %2898 = vmatmul.f32.gmra.mxu0 %v2838
    %v2899 = vpop.f32.mrf.mxu0
    %v2900 = vadd.f32 0.0, %v2899
    %2901 = vdwg.mxu0
    %v2902 = vadd.f32 %v2467, %v2900
    %2903 = vmatpush.msra.mxu0 0.0
    %2904 = vmatpush.msra.mxu0 0.0
    %2905 = vmatpush.msra.mxu0 0.0
    %2906 = vmatpush.msra.mxu0 0.0
    %2907 = vmatpush.msra.mxu0 0.0
    %2908 = vmatpush.msra.mxu0 0.0
    %2909 = vmatpush.msra.mxu0 0.0
    %2910 = vmatpush.msra.mxu0 0.0
    %2911 = vmatpush.msra.mxu0 0.0
    %2912 = vmatpush.msra.mxu0 0.0
    %2913 = vmatpush.msra.mxu0 0.0
    %2914 = vmatpush.msra.mxu0 0.0
    %2915 = vmatpush.msra.mxu0 %v2512
    %2916 = vmatpush.msra.mxu0 %v2511
    %2917 = vmatpush.msra.mxu0 %v2510
    %2918 = vmatpush.msra.mxu0 %v2509
    %2919 = vmatmul.f32.gmra.mxu0 %v2838
    %v2920 = vpop.f32.mrf.mxu0
    %v2921 = vadd.f32 0.0, %v2920
    %2922 = vdwg.mxu0
    %v2923 = vadd.f32 %v2492, %v2921
    %v2924 = vsub.f32 0.0, %v2881
    %v2925 = vmul.f32 %v2924, 1.442695
    %v2926 = vpow.pop %v2925
    %v2927 = vadd.f32 %v2926, 1.0
    %v2928 = vrcp.pop %v2927
    %v2929 = vmul.f32 %v2928, %v2828
    %v2930 = vsub.f32 0.0, %v2860
    %v2931 = vmul.f32 %v2930, 1.442695
    %v2932 = vpow.pop %v2931
    %v2933 = vadd.f32 %v2932, 1.0
    %v2934 = vrcp.pop %v2933
    %v2935 = vtanh.pop %v2902
    %v2936 = vmul.f32 %v2934, %v2935
    %v2937 = vadd.f32 %v2929, %v2936
    %v2938 = vsub.f32 0.0, %v2923
    %v2939 = vmul.f32 %v2938, 1.442695
    %v2940 = vpow.pop %v2939
    %v2941 = vadd.f32 %v2940, 1.0
    %v2942 = vrcp.pop %v2941
    %v2943 = vtanh.pop %v2937
    %v2944 = vmul.f32 %v2942, %v2943
    %2945 = vst.msk [vmem:[#allocation3 + $0x3] sm:$0x1] %vm401, %v2944
    %v2947 = vsel %vm292, %v2944, 0
    %2949 = vmatpush.msra.mxu0 0.0
    %2950 = vmatpush.msra.mxu0 0.0
    %2951 = vmatpush.msra.mxu0 0.0
    %2952 = vmatpush.msra.mxu0 0.0
    %2953 = vmatpush.msra.mxu0 0.0
    %2954 = vmatpush.msra.mxu0 0.0
    %2955 = vmatpush.msra.mxu0 0.0
    %2956 = vmatpush.msra.mxu0 0.0
    %2957 = vmatpush.msra.mxu0 0.0
    %2958 = vmatpush.msra.mxu0 0.0
    %2959 = vmatpush.msra.mxu0 0.0
    %2960 = vmatpush.msra.mxu0 0.0
    %2961 = vmatpush.msra.mxu0 %v2497
    %2962 = vmatpush.msra.mxu0 %v2496
    %2963 = vmatpush.msra.mxu0 %v2495
    %2964 = vmatpush.msra.mxu0 %v2494
    %2965 = vmatmul.f32.gmra.mxu0 %v2947
    %v2966 = vpop.f32.mrf.mxu0
    %v2967 = vadd.f32 0.0, %v2966
    %2968 = vdwg.mxu0
    %v2969 = vadd.f32 %v2417, %v2967
    %2970 = vmatpush.msra.mxu0 0.0
    %2971 = vmatpush.msra.mxu0 0.0
    %2972 = vmatpush.msra.mxu0 0.0
    %2973 = vmatpush.msra.mxu0 0.0
    %2974 = vmatpush.msra.mxu0 0.0
    %2975 = vmatpush.msra.mxu0 0.0
    %2976 = vmatpush.msra.mxu0 0.0
    %2977 = vmatpush.msra.mxu0 0.0
    %2978 = vmatpush.msra.mxu0 0.0
    %2979 = vmatpush.msra.mxu0 0.0
    %2980 = vmatpush.msra.mxu0 0.0
    %2981 = vmatpush.msra.mxu0 0.0
    %2982 = vmatpush.msra.mxu0 %v2502
    %2983 = vmatpush.msra.mxu0 %v2501
    %2984 = vmatpush.msra.mxu0 %v2500
    %2985 = vmatpush.msra.mxu0 %v2499
    %2986 = vmatmul.f32.gmra.mxu0 %v2947
    %v2987 = vpop.f32.mrf.mxu0
    %v2988 = vadd.f32 0.0, %v2987
    %2989 = vdwg.mxu0
    %v2990 = vadd.f32 %v2442, %v2988
    %2991 = vmatpush.msra.mxu0 0.0
    %2992 = vmatpush.msra.mxu0 0.0
    %2993 = vmatpush.msra.mxu0 0.0
    %2994 = vmatpush.msra.mxu0 0.0
    %2995 = vmatpush.msra.mxu0 0.0
    %2996 = vmatpush.msra.mxu0 0.0
    %2997 = vmatpush.msra.mxu0 0.0
    %2998 = vmatpush.msra.mxu0 0.0
    %2999 = vmatpush.msra.mxu0 0.0
    %3000 = vmatpush.msra.mxu0 0.0
    %3001 = vmatpush.msra.mxu0 0.0
    %3002 = vmatpush.msra.mxu0 0.0
    %3003 = vmatpush.msra.mxu0 %v2507
    %3004 = vmatpush.msra.mxu0 %v2506
    %3005 = vmatpush.msra.mxu0 %v2505
    %3006 = vmatpush.msra.mxu0 %v2504
    %3007 = vmatmul.f32.gmra.mxu0 %v2947
    %v3008 = vpop.f32.mrf.mxu0
    %v3009 = vadd.f32 0.0, %v3008
    %3010 = vdwg.mxu0
    %v3011 = vadd.f32 %v2467, %v3009
    %3012 = vmatpush.msra.mxu0 0.0
    %3013 = vmatpush.msra.mxu0 0.0
    %3014 = vmatpush.msra.mxu0 0.0
    %3015 = vmatpush.msra.mxu0 0.0
    %3016 = vmatpush.msra.mxu0 0.0
    %3017 = vmatpush.msra.mxu0 0.0
    %3018 = vmatpush.msra.mxu0 0.0
    %3019 = vmatpush.msra.mxu0 0.0
    %3020 = vmatpush.msra.mxu0 0.0
    %3021 = vmatpush.msra.mxu0 0.0
    %3022 = vmatpush.msra.mxu0 0.0
    %3023 = vmatpush.msra.mxu0 0.0
    %3024 = vmatpush.msra.mxu0 %v2512
    %3025 = vmatpush.msra.mxu0 %v2511
    %3026 = vmatpush.msra.mxu0 %v2510
    %3027 = vmatpush.msra.mxu0 %v2509
    %3028 = vmatmul.f32.gmra.mxu0 %v2947
    %v3029 = vpop.f32.mrf.mxu0
    %v3030 = vadd.f32 0.0, %v3029
    %3031 = vdwg.mxu0
    %v3032 = vadd.f32 %v2492, %v3030
    %v3033 = vsub.f32 0.0, %v2990
    %v3034 = vmul.f32 %v3033, 1.442695
    %v3035 = vpow.pop %v3034
    %v3036 = vadd.f32 %v3035, 1.0
    %v3037 = vrcp.pop %v3036
    %v3038 = vmul.f32 %v3037, %v2937
    %v3039 = vsub.f32 0.0, %v2969
    %v3040 = vmul.f32 %v3039, 1.442695
    %v3041 = vpow.pop %v3040
    %v3042 = vadd.f32 %v3041, 1.0
    %v3043 = vrcp.pop %v3042
    %v3044 = vtanh.pop %v3011
    %v3045 = vmul.f32 %v3043, %v3044
    %v3046 = vadd.f32 %v3038, %v3045
    %v3047 = vsub.f32 0.0, %v3032
    %v3048 = vmul.f32 %v3047, 1.442695
    %v3049 = vpow.pop %v3048
    %v3050 = vadd.f32 %v3049, 1.0
    %v3051 = vrcp.pop %v3050
    %v3052 = vtanh.pop %v3046
    %v3053 = vmul.f32 %v3051, %v3052
    %3054 = vst.msk [vmem:[#allocation3 + $0x4] sm:$0x1] %vm401, %v3053
    %v3056 = vsel %vm292, %v3053, 0
    %3058 = vmatpush.msra.mxu0 0.0
    %3059 = vmatpush.msra.mxu0 0.0
    %3060 = vmatpush.msra.mxu0 0.0
    %3061 = vmatpush.msra.mxu0 0.0
    %3062 = vmatpush.msra.mxu0 0.0
    %3063 = vmatpush.msra.mxu0 0.0
    %3064 = vmatpush.msra.mxu0 0.0
    %3065 = vmatpush.msra.mxu0 0.0
    %3066 = vmatpush.msra.mxu0 0.0
    %3067 = vmatpush.msra.mxu0 0.0
    %3068 = vmatpush.msra.mxu0 0.0
    %3069 = vmatpush.msra.mxu0 0.0
    %3070 = vmatpush.msra.mxu0 %v2497
    %3071 = vmatpush.msra.mxu0 %v2496
    %3072 = vmatpush.msra.mxu0 %v2495
    %3073 = vmatpush.msra.mxu0 %v2494
    %3074 = vmatmul.f32.gmra.mxu0 %v3056
    %v3075 = vpop.f32.mrf.mxu0
    %v3076 = vadd.f32 0.0, %v3075
    %3077 = vdwg.mxu0
    %v3078 = vadd.f32 %v2417, %v3076
    %3079 = vmatpush.msra.mxu0 0.0
    %3080 = vmatpush.msra.mxu0 0.0
    %3081 = vmatpush.msra.mxu0 0.0
    %3082 = vmatpush.msra.mxu0 0.0
    %3083 = vmatpush.msra.mxu0 0.0
    %3084 = vmatpush.msra.mxu0 0.0
    %3085 = vmatpush.msra.mxu0 0.0
    %3086 = vmatpush.msra.mxu0 0.0
    %3087 = vmatpush.msra.mxu0 0.0
    %3088 = vmatpush.msra.mxu0 0.0
    %3089 = vmatpush.msra.mxu0 0.0
    %3090 = vmatpush.msra.mxu0 0.0
    %3091 = vmatpush.msra.mxu0 %v2502
    %3092 = vmatpush.msra.mxu0 %v2501
    %3093 = vmatpush.msra.mxu0 %v2500
    %3094 = vmatpush.msra.mxu0 %v2499
    %3095 = vmatmul.f32.gmra.mxu0 %v3056
    %v3096 = vpop.f32.mrf.mxu0
    %v3097 = vadd.f32 0.0, %v3096
    %3098 = vdwg.mxu0
    %v3099 = vadd.f32 %v2442, %v3097
    %3100 = vmatpush.msra.mxu0 0.0
    %3101 = vmatpush.msra.mxu0 0.0
    %3102 = vmatpush.msra.mxu0 0.0
    %3103 = vmatpush.msra.mxu0 0.0
    %3104 = vmatpush.msra.mxu0 0.0
    %3105 = vmatpush.msra.mxu0 0.0
    %3106 = vmatpush.msra.mxu0 0.0
    %3107 = vmatpush.msra.mxu0 0.0
    %3108 = vmatpush.msra.mxu0 0.0
    %3109 = vmatpush.msra.mxu0 0.0
    %3110 = vmatpush.msra.mxu0 0.0
    %3111 = vmatpush.msra.mxu0 0.0
    %3112 = vmatpush.msra.mxu0 %v2507
    %3113 = vmatpush.msra.mxu0 %v2506
    %3114 = vmatpush.msra.mxu0 %v2505
    %3115 = vmatpush.msra.mxu0 %v2504
    %3116 = vmatmul.f32.gmra.mxu0 %v3056
    %v3117 = vpop.f32.mrf.mxu0
    %v3118 = vadd.f32 0.0, %v3117
    %3119 = vdwg.mxu0
    %v3120 = vadd.f32 %v2467, %v3118
    %3121 = vmatpush.msra.mxu0 0.0
    %3122 = vmatpush.msra.mxu0 0.0
    %3123 = vmatpush.msra.mxu0 0.0
    %3124 = vmatpush.msra.mxu0 0.0
    %3125 = vmatpush.msra.mxu0 0.0
    %3126 = vmatpush.msra.mxu0 0.0
    %3127 = vmatpush.msra.mxu0 0.0
    %3128 = vmatpush.msra.mxu0 0.0
    %3129 = vmatpush.msra.mxu0 0.0
    %3130 = vmatpush.msra.mxu0 0.0
    %3131 = vmatpush.msra.mxu0 0.0
    %3132 = vmatpush.msra.mxu0 0.0
    %3133 = vmatpush.msra.mxu0 %v2512
    %3134 = vmatpush.msra.mxu0 %v2511
    %3135 = vmatpush.msra.mxu0 %v2510
    %3136 = vmatpush.msra.mxu0 %v2509
    %3137 = vmatmul.f32.gmra.mxu0 %v3056
    %v3138 = vpop.f32.mrf.mxu0
    %v3139 = vadd.f32 0.0, %v3138
    %3140 = vdwg.mxu0
    %v3141 = vadd.f32 %v2492, %v3139
    %v3142 = vsub.f32 0.0, %v3099
    %v3143 = vmul.f32 %v3142, 1.442695
    %v3144 = vpow.pop %v3143
    %v3145 = vadd.f32 %v3144, 1.0
    %v3146 = vrcp.pop %v3145
    %v3147 = vmul.f32 %v3146, %v3046
    %v3148 = vsub.f32 0.0, %v3078
    %v3149 = vmul.f32 %v3148, 1.442695
    %v3150 = vpow.pop %v3149
    %v3151 = vadd.f32 %v3150, 1.0
    %v3152 = vrcp.pop %v3151
    %v3153 = vtanh.pop %v3120
    %v3154 = vmul.f32 %v3152, %v3153
    %v3155 = vadd.f32 %v3147, %v3154
    %v3156 = vsub.f32 0.0, %v3141
    %v3157 = vmul.f32 %v3156, 1.442695
    %v3158 = vpow.pop %v3157
    %v3159 = vadd.f32 %v3158, 1.0
    %v3160 = vrcp.pop %v3159
    %v3161 = vtanh.pop %v3155
    %v3162 = vmul.f32 %v3160, %v3161
    %3163 = vst.msk [vmem:[#allocation3 + $0x5] sm:$0x1] %vm401, %v3162
    %v3165 = vsel %vm292, %v3162, 0
    %3167 = vmatpush.msra.mxu0 0.0
    %3168 = vmatpush.msra.mxu0 0.0
    %3169 = vmatpush.msra.mxu0 0.0
    %3170 = vmatpush.msra.mxu0 0.0
    %3171 = vmatpush.msra.mxu0 0.0
    %3172 = vmatpush.msra.mxu0 0.0
    %3173 = vmatpush.msra.mxu0 0.0
    %3174 = vmatpush.msra.mxu0 0.0
    %3175 = vmatpush.msra.mxu0 0.0
    %3176 = vmatpush.msra.mxu0 0.0
    %3177 = vmatpush.msra.mxu0 0.0
    %3178 = vmatpush.msra.mxu0 0.0
    %3179 = vmatpush.msra.mxu0 %v2497
    %3180 = vmatpush.msra.mxu0 %v2496
    %3181 = vmatpush.msra.mxu0 %v2495
    %3182 = vmatpush.msra.mxu0 %v2494
    %3183 = vmatmul.f32.gmra.mxu0 %v3165
    %v3184 = vpop.f32.mrf.mxu0
    %v3185 = vadd.f32 0.0, %v3184
    %3186 = vdwg.mxu0
    %v3187 = vadd.f32 %v2417, %v3185
    %3188 = vmatpush.msra.mxu0 0.0
    %3189 = vmatpush.msra.mxu0 0.0
    %3190 = vmatpush.msra.mxu0 0.0
    %3191 = vmatpush.msra.mxu0 0.0
    %3192 = vmatpush.msra.mxu0 0.0
    %3193 = vmatpush.msra.mxu0 0.0
    %3194 = vmatpush.msra.mxu0 0.0
    %3195 = vmatpush.msra.mxu0 0.0
    %3196 = vmatpush.msra.mxu0 0.0
    %3197 = vmatpush.msra.mxu0 0.0
    %3198 = vmatpush.msra.mxu0 0.0
    %3199 = vmatpush.msra.mxu0 0.0
    %3200 = vmatpush.msra.mxu0 %v2502
    %3201 = vmatpush.msra.mxu0 %v2501
    %3202 = vmatpush.msra.mxu0 %v2500
    %3203 = vmatpush.msra.mxu0 %v2499
    %3204 = vmatmul.f32.gmra.mxu0 %v3165
    %v3205 = vpop.f32.mrf.mxu0
    %v3206 = vadd.f32 0.0, %v3205
    %3207 = vdwg.mxu0
    %v3208 = vadd.f32 %v2442, %v3206
    %3209 = vmatpush.msra.mxu0 0.0
    %3210 = vmatpush.msra.mxu0 0.0
    %3211 = vmatpush.msra.mxu0 0.0
    %3212 = vmatpush.msra.mxu0 0.0
    %3213 = vmatpush.msra.mxu0 0.0
    %3214 = vmatpush.msra.mxu0 0.0
    %3215 = vmatpush.msra.mxu0 0.0
    %3216 = vmatpush.msra.mxu0 0.0
    %3217 = vmatpush.msra.mxu0 0.0
    %3218 = vmatpush.msra.mxu0 0.0
    %3219 = vmatpush.msra.mxu0 0.0
    %3220 = vmatpush.msra.mxu0 0.0
    %3221 = vmatpush.msra.mxu0 %v2507
    %3222 = vmatpush.msra.mxu0 %v2506
    %3223 = vmatpush.msra.mxu0 %v2505
    %3224 = vmatpush.msra.mxu0 %v2504
    %3225 = vmatmul.f32.gmra.mxu0 %v3165
    %v3226 = vpop.f32.mrf.mxu0
    %v3227 = vadd.f32 0.0, %v3226
    %3228 = vdwg.mxu0
    %v3229 = vadd.f32 %v2467, %v3227
    %3230 = vmatpush.msra.mxu0 0.0
    %3231 = vmatpush.msra.mxu0 0.0
    %3232 = vmatpush.msra.mxu0 0.0
    %3233 = vmatpush.msra.mxu0 0.0
    %3234 = vmatpush.msra.mxu0 0.0
    %3235 = vmatpush.msra.mxu0 0.0
    %3236 = vmatpush.msra.mxu0 0.0
    %3237 = vmatpush.msra.mxu0 0.0
    %3238 = vmatpush.msra.mxu0 0.0
    %3239 = vmatpush.msra.mxu0 0.0
    %3240 = vmatpush.msra.mxu0 0.0
    %3241 = vmatpush.msra.mxu0 0.0
    %3242 = vmatpush.msra.mxu0 %v2512
    %3243 = vmatpush.msra.mxu0 %v2511
    %3244 = vmatpush.msra.mxu0 %v2510
    %3245 = vmatpush.msra.mxu0 %v2509
    %3246 = vmatmul.f32.gmra.mxu0 %v3165
    %v3247 = vpop.f32.mrf.mxu0
    %v3248 = vadd.f32 0.0, %v3247
    %3249 = vdwg.mxu0
    %v3250 = vadd.f32 %v2492, %v3248
    %v3251 = vsub.f32 0.0, %v3208
    %v3252 = vmul.f32 %v3251, 1.442695
    %v3253 = vpow.pop %v3252
    %v3254 = vadd.f32 %v3253, 1.0
    %v3255 = vrcp.pop %v3254
    %v3256 = vmul.f32 %v3255, %v3155
    %v3257 = vsub.f32 0.0, %v3187
    %v3258 = vmul.f32 %v3257, 1.442695
    %v3259 = vpow.pop %v3258
    %v3260 = vadd.f32 %v3259, 1.0
    %v3261 = vrcp.pop %v3260
    %v3262 = vtanh.pop %v3229
    %v3263 = vmul.f32 %v3261, %v3262
    %v3264 = vadd.f32 %v3256, %v3263
    %v3265 = vsub.f32 0.0, %v3250
    %v3266 = vmul.f32 %v3265, 1.442695
    %v3267 = vpow.pop %v3266
    %v3268 = vadd.f32 %v3267, 1.0
    %v3269 = vrcp.pop %v3268
    %v3270 = vtanh.pop %v3264
    %v3271 = vmul.f32 %v3269, %v3270
    %3272 = vst.msk [vmem:[#allocation3 + $0x6] sm:$0x1] %vm401, %v3271
    %v3274 = vsel %vm292, %v3271, 0
    %3276 = vmatpush.msra.mxu0 0.0
    %3277 = vmatpush.msra.mxu0 0.0
    %3278 = vmatpush.msra.mxu0 0.0
    %3279 = vmatpush.msra.mxu0 0.0
    %3280 = vmatpush.msra.mxu0 0.0
    %3281 = vmatpush.msra.mxu0 0.0
    %3282 = vmatpush.msra.mxu0 0.0
    %3283 = vmatpush.msra.mxu0 0.0
    %3284 = vmatpush.msra.mxu0 0.0
    %3285 = vmatpush.msra.mxu0 0.0
    %3286 = vmatpush.msra.mxu0 0.0
    %3287 = vmatpush.msra.mxu0 0.0
    %3288 = vmatpush.msra.mxu0 %v2497
    %3289 = vmatpush.msra.mxu0 %v2496
    %3290 = vmatpush.msra.mxu0 %v2495
    %3291 = vmatpush.msra.mxu0 %v2494
    %3292 = vmatmul.f32.gmra.mxu0 %v3274
    %v3293 = vpop.f32.mrf.mxu0
    %v3294 = vadd.f32 0.0, %v3293
    %3295 = vdwg.mxu0
    %v3296 = vadd.f32 %v2417, %v3294
    %3297 = vmatpush.msra.mxu0 0.0
    %3298 = vmatpush.msra.mxu0 0.0
    %3299 = vmatpush.msra.mxu0 0.0
    %3300 = vmatpush.msra.mxu0 0.0
    %3301 = vmatpush.msra.mxu0 0.0
    %3302 = vmatpush.msra.mxu0 0.0
    %3303 = vmatpush.msra.mxu0 0.0
    %3304 = vmatpush.msra.mxu0 0.0
    %3305 = vmatpush.msra.mxu0 0.0
    %3306 = vmatpush.msra.mxu0 0.0
    %3307 = vmatpush.msra.mxu0 0.0
    %3308 = vmatpush.msra.mxu0 0.0
    %3309 = vmatpush.msra.mxu0 %v2502
    %3310 = vmatpush.msra.mxu0 %v2501
    %3311 = vmatpush.msra.mxu0 %v2500
    %3312 = vmatpush.msra.mxu0 %v2499
    %3313 = vmatmul.f32.gmra.mxu0 %v3274
    %v3314 = vpop.f32.mrf.mxu0
    %v3315 = vadd.f32 0.0, %v3314
    %3316 = vdwg.mxu0
    %v3317 = vadd.f32 %v2442, %v3315
    %3318 = vmatpush.msra.mxu0 0.0
    %3319 = vmatpush.msra.mxu0 0.0
    %3320 = vmatpush.msra.mxu0 0.0
    %3321 = vmatpush.msra.mxu0 0.0
    %3322 = vmatpush.msra.mxu0 0.0
    %3323 = vmatpush.msra.mxu0 0.0
    %3324 = vmatpush.msra.mxu0 0.0
    %3325 = vmatpush.msra.mxu0 0.0
    %3326 = vmatpush.msra.mxu0 0.0
    %3327 = vmatpush.msra.mxu0 0.0
    %3328 = vmatpush.msra.mxu0 0.0
    %3329 = vmatpush.msra.mxu0 0.0
    %3330 = vmatpush.msra.mxu0 %v2507
    %3331 = vmatpush.msra.mxu0 %v2506
    %3332 = vmatpush.msra.mxu0 %v2505
    %3333 = vmatpush.msra.mxu0 %v2504
    %3334 = vmatmul.f32.gmra.mxu0 %v3274
    %v3335 = vpop.f32.mrf.mxu0
    %v3336 = vadd.f32 0.0, %v3335
    %3337 = vdwg.mxu0
    %v3338 = vadd.f32 %v2467, %v3336
    %3339 = vmatpush.msra.mxu0 0.0
    %3340 = vmatpush.msra.mxu0 0.0
    %3341 = vmatpush.msra.mxu0 0.0
    %3342 = vmatpush.msra.mxu0 0.0
    %3343 = vmatpush.msra.mxu0 0.0
    %3344 = vmatpush.msra.mxu0 0.0
    %3345 = vmatpush.msra.mxu0 0.0
    %3346 = vmatpush.msra.mxu0 0.0
    %3347 = vmatpush.msra.mxu0 0.0
    %3348 = vmatpush.msra.mxu0 0.0
    %3349 = vmatpush.msra.mxu0 0.0
    %3350 = vmatpush.msra.mxu0 0.0
    %3351 = vmatpush.msra.mxu0 %v2512
    %3352 = vmatpush.msra.mxu0 %v2511
    %3353 = vmatpush.msra.mxu0 %v2510
    %3354 = vmatpush.msra.mxu0 %v2509
    %3355 = vmatmul.f32.gmra.mxu0 %v3274
    %v3356 = vpop.f32.mrf.mxu0
    %v3357 = vadd.f32 0.0, %v3356
    %3358 = vdwg.mxu0
    %v3359 = vadd.f32 %v2492, %v3357
    %v3360 = vsub.f32 0.0, %v3317
    %v3361 = vmul.f32 %v3360, 1.442695
    %v3362 = vpow.pop %v3361
    %v3363 = vadd.f32 %v3362, 1.0
    %v3364 = vrcp.pop %v3363
    %v3365 = vmul.f32 %v3364, %v3264
    %v3366 = vsub.f32 0.0, %v3296
    %v3367 = vmul.f32 %v3366, 1.442695
    %v3368 = vpow.pop %v3367
    %v3369 = vadd.f32 %v3368, 1.0
    %v3370 = vrcp.pop %v3369
    %v3371 = vtanh.pop %v3338
    %v3372 = vmul.f32 %v3370, %v3371
    %v3373 = vadd.f32 %v3365, %v3372
    %v3374 = vsub.f32 0.0, %v3359
    %v3375 = vmul.f32 %v3374, 1.442695
    %v3376 = vpow.pop %v3375
    %v3377 = vadd.f32 %v3376, 1.0
    %v3378 = vrcp.pop %v3377
    %v3379 = vtanh.pop %v3373
    %v3380 = vmul.f32 %v3378, %v3379
    %3381 = vst.msk [vmem:[#allocation3 + $0x7] sm:$0x1] %vm401, %v3380
    %v3382 = vld [vmem:[#allocation3] sm:$0xff]
    %v3383 = vld [vmem:[%s10] sm:$0xff]
    %v3384 = vld [vmem:[%s10 + $0x8] sm:$0xff]
    %v3385 = vld [vmem:[%s10 + $0x10] sm:$0xff]
    %v3386 = vld [vmem:[%s10 + $0x18] sm:$0xff]
    %v3387 = vld [vmem:[%s12] sm:$0x1]
    %v3389 = vperm.slane %v3387, 0
    %v3392 = vsel %vm292, %v3382, 0
    %3394 = vmatpush.msra.mxu0 0.0
    %3395 = vmatpush.msra.mxu0 0.0
    %3396 = vmatpush.msra.mxu0 0.0
    %3397 = vmatpush.msra.mxu0 0.0
    %3398 = vmatpush.msra.mxu0 0.0
    %3399 = vmatpush.msra.mxu0 0.0
    %3400 = vmatpush.msra.mxu0 0.0
    %3401 = vmatpush.msra.mxu0 0.0
    %3402 = vmatpush.msra.mxu0 0.0
    %3403 = vmatpush.msra.mxu0 0.0
    %3404 = vmatpush.msra.mxu0 0.0
    %3405 = vmatpush.msra.mxu0 0.0
    %3406 = vmatpush.msra.mxu0 %v3386
    %3407 = vmatpush.msra.mxu0 %v3385
    %3408 = vmatpush.msra.mxu0 %v3384
    %3409 = vmatpush.msra.mxu0 %v3383
    %3410 = vmatmul.f32.gmra.mxu0 %v3392
    %v3411 = vpop.f32.mrf.mxu0
    %v3412 = vadd.f32 %v3389, %v3411
    %3413 = vdwg.mxu0
    %s3414 = scalar_lea.vmem %s10, 32
    %v3415 = vld [vmem:[%s3414] sm:$0xff]
    %v3416 = vld [vmem:[%s3414 + $0x8] sm:$0xff]
    %v3417 = vld [vmem:[%s3414 + $0x10] sm:$0xff]
    %v3418 = vld [vmem:[%s3414 + $0x18] sm:$0xff]
    %s3419 = scalar_lea.vmem %s12, 1
    %v3420 = vld [vmem:[%s3419] sm:$0x1]
    %v3422 = vperm.slane %v3420, 0
    %3424 = vmatpush.msra.mxu0 0.0
    %3425 = vmatpush.msra.mxu0 0.0
    %3426 = vmatpush.msra.mxu0 0.0
    %3427 = vmatpush.msra.mxu0 0.0
    %3428 = vmatpush.msra.mxu0 0.0
    %3429 = vmatpush.msra.mxu0 0.0
    %3430 = vmatpush.msra.mxu0 0.0
    %3431 = vmatpush.msra.mxu0 0.0
    %3432 = vmatpush.msra.mxu0 0.0
    %3433 = vmatpush.msra.mxu0 0.0
    %3434 = vmatpush.msra.mxu0 0.0
    %3435 = vmatpush.msra.mxu0 0.0
    %3436 = vmatpush.msra.mxu0 %v3418
    %3437 = vmatpush.msra.mxu0 %v3417
    %3438 = vmatpush.msra.mxu0 %v3416
    %3439 = vmatpush.msra.mxu0 %v3415
    %3440 = vmatmul.f32.gmra.mxu0 %v3392
    %v3441 = vpop.f32.mrf.mxu0
    %v3442 = vadd.f32 %v3422, %v3441
    %3443 = vdwg.mxu0
    %s3444 = scalar_lea.vmem %s10, 64
    %v3445 = vld [vmem:[%s3444] sm:$0xff]
    %v3446 = vld [vmem:[%s3444 + $0x8] sm:$0xff]
    %v3447 = vld [vmem:[%s3444 + $0x10] sm:$0xff]
    %v3448 = vld [vmem:[%s3444 + $0x18] sm:$0xff]
    %s3449 = scalar_lea.vmem %s12, 2
    %v3450 = vld [vmem:[%s3449] sm:$0x1]
    %v3452 = vperm.slane %v3450, 0
    %3454 = vmatpush.msra.mxu0 0.0
    %3455 = vmatpush.msra.mxu0 0.0
    %3456 = vmatpush.msra.mxu0 0.0
    %3457 = vmatpush.msra.mxu0 0.0
    %3458 = vmatpush.msra.mxu0 0.0
    %3459 = vmatpush.msra.mxu0 0.0
    %3460 = vmatpush.msra.mxu0 0.0
    %3461 = vmatpush.msra.mxu0 0.0
    %3462 = vmatpush.msra.mxu0 0.0
    %3463 = vmatpush.msra.mxu0 0.0
    %3464 = vmatpush.msra.mxu0 0.0
    %3465 = vmatpush.msra.mxu0 0.0
    %3466 = vmatpush.msra.mxu0 %v3448
    %3467 = vmatpush.msra.mxu0 %v3447
    %3468 = vmatpush.msra.mxu0 %v3446
    %3469 = vmatpush.msra.mxu0 %v3445
    %3470 = vmatmul.f32.gmra.mxu0 %v3392
    %v3471 = vpop.f32.mrf.mxu0
    %v3472 = vadd.f32 %v3452, %v3471
    %3473 = vdwg.mxu0
    %s3474 = scalar_lea.vmem %s10, 96
    %v3475 = vld [vmem:[%s3474] sm:$0xff]
    %v3476 = vld [vmem:[%s3474 + $0x8] sm:$0xff]
    %v3477 = vld [vmem:[%s3474 + $0x10] sm:$0xff]
    %v3478 = vld [vmem:[%s3474 + $0x18] sm:$0xff]
    %s3479 = scalar_lea.vmem %s12, 3
    %v3480 = vld [vmem:[%s3479] sm:$0x1]
    %v3482 = vperm.slane %v3480, 0
    %3484 = vmatpush.msra.mxu0 0.0
    %3485 = vmatpush.msra.mxu0 0.0
    %3486 = vmatpush.msra.mxu0 0.0
    %3487 = vmatpush.msra.mxu0 0.0
    %3488 = vmatpush.msra.mxu0 0.0
    %3489 = vmatpush.msra.mxu0 0.0
    %3490 = vmatpush.msra.mxu0 0.0
    %3491 = vmatpush.msra.mxu0 0.0
    %3492 = vmatpush.msra.mxu0 0.0
    %3493 = vmatpush.msra.mxu0 0.0
    %3494 = vmatpush.msra.mxu0 0.0
    %3495 = vmatpush.msra.mxu0 0.0
    %3496 = vmatpush.msra.mxu0 %v3478
    %3497 = vmatpush.msra.mxu0 %v3477
    %3498 = vmatpush.msra.mxu0 %v3476
    %3499 = vmatpush.msra.mxu0 %v3475
    %3500 = vmatmul.f32.gmra.mxu0 %v3392
    %v3501 = vpop.f32.mrf.mxu0
    %v3502 = vadd.f32 %v3482, %v3501
    %3503 = vdwg.mxu0
    %v3504 = vld [vmem:[%s11] sm:$0xf]
    %s3505 = scalar_lea.vmem %s11, 4
    %v3506 = vld [vmem:[%s3505] sm:$0xf]
    %s3507 = scalar_lea.vmem %s11, 8
    %v3508 = vld [vmem:[%s3507] sm:$0xf]
    %s3509 = scalar_lea.vmem %s11, 12
    %v3510 = vld [vmem:[%s3509] sm:$0xf]
    %v3511 = vsel %vm102, 0.0, 0
    %v3514 = vsel %vm105, %v3504, 0
    %3516 = vmatpush.msra.mxu0 0.0
    %3517 = vmatpush.msra.mxu0 0.0
    %3518 = vmatpush.msra.mxu0 0.0
    %3519 = vmatpush.msra.mxu0 0.0
    %3520 = vmatpush.msra.mxu0 0.0
    %3521 = vmatpush.msra.mxu0 0.0
    %3522 = vmatpush.msra.mxu0 0.0
    %3523 = vmatpush.msra.mxu0 0.0
    %3524 = vmatpush.msra.mxu0 0.0
    %3525 = vmatpush.msra.mxu0 0.0
    %3526 = vmatpush.msra.mxu0 0.0
    %3527 = vmatpush.msra.mxu0 0.0
    %3528 = vmatpush.msra.mxu0 0.0
    %3529 = vmatpush.msra.mxu0 0.0
    %3530 = vmatpush.msra.mxu0 0.0
    %3531 = vmatpush.msra.mxu0 %v3514
    %3532 = vmatmul.f32.gmra.mxu0 %v3511
    %v3533 = vpop.f32.mrf.mxu0
    %v3534 = vadd.f32 0.0, %v3533
    %3535 = vdwg.mxu0
    %v3536 = vadd.f32 %v3412, %v3534
    %v3538 = vsel %vm105, %v3506, 0
    %3540 = vmatpush.msra.mxu0 0.0
    %3541 = vmatpush.msra.mxu0 0.0
    %3542 = vmatpush.msra.mxu0 0.0
    %3543 = vmatpush.msra.mxu0 0.0
    %3544 = vmatpush.msra.mxu0 0.0
    %3545 = vmatpush.msra.mxu0 0.0
    %3546 = vmatpush.msra.mxu0 0.0
    %3547 = vmatpush.msra.mxu0 0.0
    %3548 = vmatpush.msra.mxu0 0.0
    %3549 = vmatpush.msra.mxu0 0.0
    %3550 = vmatpush.msra.mxu0 0.0
    %3551 = vmatpush.msra.mxu0 0.0
    %3552 = vmatpush.msra.mxu0 0.0
    %3553 = vmatpush.msra.mxu0 0.0
    %3554 = vmatpush.msra.mxu0 0.0
    %3555 = vmatpush.msra.mxu0 %v3538
    %3556 = vmatmul.f32.gmra.mxu0 %v3511
    %v3557 = vpop.f32.mrf.mxu0
    %v3558 = vadd.f32 0.0, %v3557
    %3559 = vdwg.mxu0
    %v3560 = vadd.f32 %v3442, %v3558
    %v3562 = vsel %vm105, %v3508, 0
    %3564 = vmatpush.msra.mxu0 0.0
    %3565 = vmatpush.msra.mxu0 0.0
    %3566 = vmatpush.msra.mxu0 0.0
    %3567 = vmatpush.msra.mxu0 0.0
    %3568 = vmatpush.msra.mxu0 0.0
    %3569 = vmatpush.msra.mxu0 0.0
    %3570 = vmatpush.msra.mxu0 0.0
    %3571 = vmatpush.msra.mxu0 0.0
    %3572 = vmatpush.msra.mxu0 0.0
    %3573 = vmatpush.msra.mxu0 0.0
    %3574 = vmatpush.msra.mxu0 0.0
    %3575 = vmatpush.msra.mxu0 0.0
    %3576 = vmatpush.msra.mxu0 0.0
    %3577 = vmatpush.msra.mxu0 0.0
    %3578 = vmatpush.msra.mxu0 0.0
    %3579 = vmatpush.msra.mxu0 %v3562
    %3580 = vmatmul.f32.gmra.mxu0 %v3511
    %v3581 = vpop.f32.mrf.mxu0
    %v3582 = vadd.f32 0.0, %v3581
    %3583 = vdwg.mxu0
    %v3584 = vadd.f32 %v3472, %v3582
    %v3586 = vsel %vm105, %v3510, 0
    %3588 = vmatpush.msra.mxu0 0.0
    %3589 = vmatpush.msra.mxu0 0.0
    %3590 = vmatpush.msra.mxu0 0.0
    %3591 = vmatpush.msra.mxu0 0.0
    %3592 = vmatpush.msra.mxu0 0.0
    %3593 = vmatpush.msra.mxu0 0.0
    %3594 = vmatpush.msra.mxu0 0.0
    %3595 = vmatpush.msra.mxu0 0.0
    %3596 = vmatpush.msra.mxu0 0.0
    %3597 = vmatpush.msra.mxu0 0.0
    %3598 = vmatpush.msra.mxu0 0.0
    %3599 = vmatpush.msra.mxu0 0.0
    %3600 = vmatpush.msra.mxu0 0.0
    %3601 = vmatpush.msra.mxu0 0.0
    %3602 = vmatpush.msra.mxu0 0.0
    %3603 = vmatpush.msra.mxu0 %v3586
    %3604 = vmatmul.f32.gmra.mxu0 %v3511
    %v3605 = vpop.f32.mrf.mxu0
    %v3606 = vadd.f32 0.0, %v3605
    %3607 = vdwg.mxu0
    %v3608 = vadd.f32 %v3502, %v3606
    %v3609 = vsub.f32 0.0, %v3560
    %v3610 = vmul.f32 %v3609, 1.442695
    %v3611 = vpow.pop %v3610
    %v3612 = vadd.f32 %v3611, 1.0
    %v3613 = vrcp.pop %v3612
    %v3614 = vmul.f32 %v3613, 0.0
    %v3615 = vsub.f32 0.0, %v3536
    %v3616 = vmul.f32 %v3615, 1.442695
    %v3617 = vpow.pop %v3616
    %v3618 = vadd.f32 %v3617, 1.0
    %v3619 = vrcp.pop %v3618
    %v3620 = vtanh.pop %v3584
    %v3621 = vmul.f32 %v3619, %v3620
    %v3622 = vadd.f32 %v3614, %v3621
    %v3623 = vsub.f32 0.0, %v3608
    %v3624 = vmul.f32 %v3623, 1.442695
    %v3625 = vpow.pop %v3624
    %v3626 = vadd.f32 %v3625, 1.0
    %v3627 = vrcp.pop %v3626
    %v3628 = vtanh.pop %v3622
    %v3629 = vmul.f32 %v3627, %v3628
    %vm3630 = vcmask 24576
    %3631 = vst.msk [vmem:[#allocation4] sm:$0x1] %vm3630, %v3629
    %v3633 = vsel %vm102, %v3629, 0
    %3635 = vmatpush.msra.mxu0 0.0
    %3636 = vmatpush.msra.mxu0 0.0
    %3637 = vmatpush.msra.mxu0 0.0
    %3638 = vmatpush.msra.mxu0 0.0
    %3639 = vmatpush.msra.mxu0 0.0
    %3640 = vmatpush.msra.mxu0 0.0
    %3641 = vmatpush.msra.mxu0 0.0
    %3642 = vmatpush.msra.mxu0 0.0
    %3643 = vmatpush.msra.mxu0 0.0
    %3644 = vmatpush.msra.mxu0 0.0
    %3645 = vmatpush.msra.mxu0 0.0
    %3646 = vmatpush.msra.mxu0 0.0
    %3647 = vmatpush.msra.mxu0 0.0
    %3648 = vmatpush.msra.mxu0 0.0
    %3649 = vmatpush.msra.mxu0 0.0
    %3650 = vmatpush.msra.mxu0 %v3514
    %3651 = vmatmul.f32.gmra.mxu0 %v3633
    %v3652 = vpop.f32.mrf.mxu0
    %v3653 = vadd.f32 0.0, %v3652
    %3654 = vdwg.mxu0
    %v3656 = vrot.slane %v3653, 7
    %v3658 = vadd.f32 %v3412, %v3656
    %3659 = vmatpush.msra.mxu0 0.0
    %3660 = vmatpush.msra.mxu0 0.0
    %3661 = vmatpush.msra.mxu0 0.0
    %3662 = vmatpush.msra.mxu0 0.0
    %3663 = vmatpush.msra.mxu0 0.0
    %3664 = vmatpush.msra.mxu0 0.0
    %3665 = vmatpush.msra.mxu0 0.0
    %3666 = vmatpush.msra.mxu0 0.0
    %3667 = vmatpush.msra.mxu0 0.0
    %3668 = vmatpush.msra.mxu0 0.0
    %3669 = vmatpush.msra.mxu0 0.0
    %3670 = vmatpush.msra.mxu0 0.0
    %3671 = vmatpush.msra.mxu0 0.0
    %3672 = vmatpush.msra.mxu0 0.0
    %3673 = vmatpush.msra.mxu0 0.0
    %3674 = vmatpush.msra.mxu0 %v3538
    %3675 = vmatmul.f32.gmra.mxu0 %v3633
    %v3676 = vpop.f32.mrf.mxu0
    %v3677 = vadd.f32 0.0, %v3676
    %3678 = vdwg.mxu0
    %v3680 = vrot.slane %v3677, 7
    %v3682 = vadd.f32 %v3442, %v3680
    %3683 = vmatpush.msra.mxu0 0.0
    %3684 = vmatpush.msra.mxu0 0.0
    %3685 = vmatpush.msra.mxu0 0.0
    %3686 = vmatpush.msra.mxu0 0.0
    %3687 = vmatpush.msra.mxu0 0.0
    %3688 = vmatpush.msra.mxu0 0.0
    %3689 = vmatpush.msra.mxu0 0.0
    %3690 = vmatpush.msra.mxu0 0.0
    %3691 = vmatpush.msra.mxu0 0.0
    %3692 = vmatpush.msra.mxu0 0.0
    %3693 = vmatpush.msra.mxu0 0.0
    %3694 = vmatpush.msra.mxu0 0.0
    %3695 = vmatpush.msra.mxu0 0.0
    %3696 = vmatpush.msra.mxu0 0.0
    %3697 = vmatpush.msra.mxu0 0.0
    %3698 = vmatpush.msra.mxu0 %v3562
    %3699 = vmatmul.f32.gmra.mxu0 %v3633
    %v3700 = vpop.f32.mrf.mxu0
    %v3701 = vadd.f32 0.0, %v3700
    %3702 = vdwg.mxu0
    %v3704 = vrot.slane %v3701, 7
    %v3706 = vadd.f32 %v3472, %v3704
    %3707 = vmatpush.msra.mxu0 0.0
    %3708 = vmatpush.msra.mxu0 0.0
    %3709 = vmatpush.msra.mxu0 0.0
    %3710 = vmatpush.msra.mxu0 0.0
    %3711 = vmatpush.msra.mxu0 0.0
    %3712 = vmatpush.msra.mxu0 0.0
    %3713 = vmatpush.msra.mxu0 0.0
    %3714 = vmatpush.msra.mxu0 0.0
    %3715 = vmatpush.msra.mxu0 0.0
    %3716 = vmatpush.msra.mxu0 0.0
    %3717 = vmatpush.msra.mxu0 0.0
    %3718 = vmatpush.msra.mxu0 0.0
    %3719 = vmatpush.msra.mxu0 0.0
    %3720 = vmatpush.msra.mxu0 0.0
    %3721 = vmatpush.msra.mxu0 0.0
    %3722 = vmatpush.msra.mxu0 %v3586
    %3723 = vmatmul.f32.gmra.mxu0 %v3633
    %v3724 = vpop.f32.mrf.mxu0
    %v3725 = vadd.f32 0.0, %v3724
    %3726 = vdwg.mxu0
    %v3728 = vrot.slane %v3725, 7
    %v3730 = vadd.f32 %v3502, %v3728
    %v3731 = vsub.f32 0.0, %v3682
    %v3732 = vmul.f32 %v3731, 1.442695
    %v3733 = vpow.pop %v3732
    %v3734 = vadd.f32 %v3733, 1.0
    %v3735 = vrcp.pop %v3734
    %v3737 = vrot.slane %v3622, 7
    %v3739 = vmul.f32 %v3735, %v3737
    %v3740 = vsub.f32 0.0, %v3658
    %v3741 = vmul.f32 %v3740, 1.442695
    %v3742 = vpow.pop %v3741
    %v3743 = vadd.f32 %v3742, 1.0
    %v3744 = vrcp.pop %v3743
    %v3745 = vtanh.pop %v3706
    %v3746 = vmul.f32 %v3744, %v3745
    %v3747 = vadd.f32 %v3739, %v3746
    %v3748 = vsub.f32 0.0, %v3730
    %v3749 = vmul.f32 %v3748, 1.442695
    %v3750 = vpow.pop %v3749
    %v3751 = vadd.f32 %v3750, 1.0
    %v3752 = vrcp.pop %v3751
    %v3753 = vtanh.pop %v3747
    %v3754 = vmul.f32 %v3752, %v3753
    %vm3755 = vcmask 25601
    %3756 = vst.msk [vmem:[#allocation4] sm:$0x2] %vm3755, %v3754
    %v3758 = vrot.slane %v3754, 1
    %v3759 = vsel %vm102, %v3758, 0
    %3761 = vmatpush.msra.mxu0 0.0
    %3762 = vmatpush.msra.mxu0 0.0
    %3763 = vmatpush.msra.mxu0 0.0
    %3764 = vmatpush.msra.mxu0 0.0
    %3765 = vmatpush.msra.mxu0 0.0
    %3766 = vmatpush.msra.mxu0 0.0
    %3767 = vmatpush.msra.mxu0 0.0
    %3768 = vmatpush.msra.mxu0 0.0
    %3769 = vmatpush.msra.mxu0 0.0
    %3770 = vmatpush.msra.mxu0 0.0
    %3771 = vmatpush.msra.mxu0 0.0
    %3772 = vmatpush.msra.mxu0 0.0
    %3773 = vmatpush.msra.mxu0 0.0
    %3774 = vmatpush.msra.mxu0 0.0
    %3775 = vmatpush.msra.mxu0 0.0
    %3776 = vmatpush.msra.mxu0 %v3514
    %3777 = vmatmul.f32.gmra.mxu0 %v3759
    %v3778 = vpop.f32.mrf.mxu0
    %v3779 = vadd.f32 0.0, %v3778
    %3780 = vdwg.mxu0
    %v3782 = vrot.slane %v3779, 6
    %v3784 = vadd.f32 %v3412, %v3782
    %3785 = vmatpush.msra.mxu0 0.0
    %3786 = vmatpush.msra.mxu0 0.0
    %3787 = vmatpush.msra.mxu0 0.0
    %3788 = vmatpush.msra.mxu0 0.0
    %3789 = vmatpush.msra.mxu0 0.0
    %3790 = vmatpush.msra.mxu0 0.0
    %3791 = vmatpush.msra.mxu0 0.0
    %3792 = vmatpush.msra.mxu0 0.0
    %3793 = vmatpush.msra.mxu0 0.0
    %3794 = vmatpush.msra.mxu0 0.0
    %3795 = vmatpush.msra.mxu0 0.0
    %3796 = vmatpush.msra.mxu0 0.0
    %3797 = vmatpush.msra.mxu0 0.0
    %3798 = vmatpush.msra.mxu0 0.0
    %3799 = vmatpush.msra.mxu0 0.0
    %3800 = vmatpush.msra.mxu0 %v3538
    %3801 = vmatmul.f32.gmra.mxu0 %v3759
    %v3802 = vpop.f32.mrf.mxu0
    %v3803 = vadd.f32 0.0, %v3802
    %3804 = vdwg.mxu0
    %v3806 = vrot.slane %v3803, 6
    %v3808 = vadd.f32 %v3442, %v3806
    %3809 = vmatpush.msra.mxu0 0.0
    %3810 = vmatpush.msra.mxu0 0.0
    %3811 = vmatpush.msra.mxu0 0.0
    %3812 = vmatpush.msra.mxu0 0.0
    %3813 = vmatpush.msra.mxu0 0.0
    %3814 = vmatpush.msra.mxu0 0.0
    %3815 = vmatpush.msra.mxu0 0.0
    %3816 = vmatpush.msra.mxu0 0.0
    %3817 = vmatpush.msra.mxu0 0.0
    %3818 = vmatpush.msra.mxu0 0.0
    %3819 = vmatpush.msra.mxu0 0.0
    %3820 = vmatpush.msra.mxu0 0.0
    %3821 = vmatpush.msra.mxu0 0.0
    %3822 = vmatpush.msra.mxu0 0.0
    %3823 = vmatpush.msra.mxu0 0.0
    %3824 = vmatpush.msra.mxu0 %v3562
    %3825 = vmatmul.f32.gmra.mxu0 %v3759
    %v3826 = vpop.f32.mrf.mxu0
    %v3827 = vadd.f32 0.0, %v3826
    %3828 = vdwg.mxu0
    %v3830 = vrot.slane %v3827, 6
    %v3832 = vadd.f32 %v3472, %v3830
    %3833 = vmatpush.msra.mxu0 0.0
    %3834 = vmatpush.msra.mxu0 0.0
    %3835 = vmatpush.msra.mxu0 0.0
    %3836 = vmatpush.msra.mxu0 0.0
    %3837 = vmatpush.msra.mxu0 0.0
    %3838 = vmatpush.msra.mxu0 0.0
    %3839 = vmatpush.msra.mxu0 0.0
    %3840 = vmatpush.msra.mxu0 0.0
    %3841 = vmatpush.msra.mxu0 0.0
    %3842 = vmatpush.msra.mxu0 0.0
    %3843 = vmatpush.msra.mxu0 0.0
    %3844 = vmatpush.msra.mxu0 0.0
    %3845 = vmatpush.msra.mxu0 0.0
    %3846 = vmatpush.msra.mxu0 0.0
    %3847 = vmatpush.msra.mxu0 0.0
    %3848 = vmatpush.msra.mxu0 %v3586
    %3849 = vmatmul.f32.gmra.mxu0 %v3759
    %v3850 = vpop.f32.mrf.mxu0
    %v3851 = vadd.f32 0.0, %v3850
    %3852 = vdwg.mxu0
    %v3854 = vrot.slane %v3851, 6
    %v3856 = vadd.f32 %v3502, %v3854
    %v3857 = vsub.f32 0.0, %v3808
    %v3858 = vmul.f32 %v3857, 1.442695
    %v3859 = vpow.pop %v3858
    %v3860 = vadd.f32 %v3859, 1.0
    %v3861 = vrcp.pop %v3860
    %v3863 = vrot.slane %v3747, 7
    %v3865 = vmul.f32 %v3861, %v3863
    %v3866 = vsub.f32 0.0, %v3784
    %v3867 = vmul.f32 %v3866, 1.442695
    %v3868 = vpow.pop %v3867
    %v3869 = vadd.f32 %v3868, 1.0
    %v3870 = vrcp.pop %v3869
    %v3871 = vtanh.pop %v3832
    %v3872 = vmul.f32 %v3870, %v3871
    %v3873 = vadd.f32 %v3865, %v3872
    %v3874 = vsub.f32 0.0, %v3856
    %v3875 = vmul.f32 %v3874, 1.442695
    %v3876 = vpow.pop %v3875
    %v3877 = vadd.f32 %v3876, 1.0
    %v3878 = vrcp.pop %v3877
    %v3879 = vtanh.pop %v3873
    %v3880 = vmul.f32 %v3878, %v3879
    %vm3881 = vcmask 26626
    %3882 = vst.msk [vmem:[#allocation4] sm:$0x4] %vm3881, %v3880
    %v3884 = vrot.slane %v3880, 2
    %v3885 = vsel %vm102, %v3884, 0
    %3887 = vmatpush.msra.mxu0 0.0
    %3888 = vmatpush.msra.mxu0 0.0
    %3889 = vmatpush.msra.mxu0 0.0
    %3890 = vmatpush.msra.mxu0 0.0
    %3891 = vmatpush.msra.mxu0 0.0
    %3892 = vmatpush.msra.mxu0 0.0
    %3893 = vmatpush.msra.mxu0 0.0
    %3894 = vmatpush.msra.mxu0 0.0
    %3895 = vmatpush.msra.mxu0 0.0
    %3896 = vmatpush.msra.mxu0 0.0
    %3897 = vmatpush.msra.mxu0 0.0
    %3898 = vmatpush.msra.mxu0 0.0
    %3899 = vmatpush.msra.mxu0 0.0
    %3900 = vmatpush.msra.mxu0 0.0
    %3901 = vmatpush.msra.mxu0 0.0
    %3902 = vmatpush.msra.mxu0 %v3514
    %3903 = vmatmul.f32.gmra.mxu0 %v3885
    %v3904 = vpop.f32.mrf.mxu0
    %v3905 = vadd.f32 0.0, %v3904
    %3906 = vdwg.mxu0
    %v3908 = vrot.slane %v3905, 5
    %v3910 = vadd.f32 %v3412, %v3908
    %3911 = vmatpush.msra.mxu0 0.0
    %3912 = vmatpush.msra.mxu0 0.0
    %3913 = vmatpush.msra.mxu0 0.0
    %3914 = vmatpush.msra.mxu0 0.0
    %3915 = vmatpush.msra.mxu0 0.0
    %3916 = vmatpush.msra.mxu0 0.0
    %3917 = vmatpush.msra.mxu0 0.0
    %3918 = vmatpush.msra.mxu0 0.0
    %3919 = vmatpush.msra.mxu0 0.0
    %3920 = vmatpush.msra.mxu0 0.0
    %3921 = vmatpush.msra.mxu0 0.0
    %3922 = vmatpush.msra.mxu0 0.0
    %3923 = vmatpush.msra.mxu0 0.0
    %3924 = vmatpush.msra.mxu0 0.0
    %3925 = vmatpush.msra.mxu0 0.0
    %3926 = vmatpush.msra.mxu0 %v3538
    %3927 = vmatmul.f32.gmra.mxu0 %v3885
    %v3928 = vpop.f32.mrf.mxu0
    %v3929 = vadd.f32 0.0, %v3928
    %3930 = vdwg.mxu0
    %v3932 = vrot.slane %v3929, 5
    %v3934 = vadd.f32 %v3442, %v3932
    %3935 = vmatpush.msra.mxu0 0.0
    %3936 = vmatpush.msra.mxu0 0.0
    %3937 = vmatpush.msra.mxu0 0.0
    %3938 = vmatpush.msra.mxu0 0.0
    %3939 = vmatpush.msra.mxu0 0.0
    %3940 = vmatpush.msra.mxu0 0.0
    %3941 = vmatpush.msra.mxu0 0.0
    %3942 = vmatpush.msra.mxu0 0.0
    %3943 = vmatpush.msra.mxu0 0.0
    %3944 = vmatpush.msra.mxu0 0.0
    %3945 = vmatpush.msra.mxu0 0.0
    %3946 = vmatpush.msra.mxu0 0.0
    %3947 = vmatpush.msra.mxu0 0.0
    %3948 = vmatpush.msra.mxu0 0.0
    %3949 = vmatpush.msra.mxu0 0.0
    %3950 = vmatpush.msra.mxu0 %v3562
    %3951 = vmatmul.f32.gmra.mxu0 %v3885
    %v3952 = vpop.f32.mrf.mxu0
    %v3953 = vadd.f32 0.0, %v3952
    %3954 = vdwg.mxu0
    %v3956 = vrot.slane %v3953, 5
    %v3958 = vadd.f32 %v3472, %v3956
    %3959 = vmatpush.msra.mxu0 0.0
    %3960 = vmatpush.msra.mxu0 0.0
    %3961 = vmatpush.msra.mxu0 0.0
    %3962 = vmatpush.msra.mxu0 0.0
    %3963 = vmatpush.msra.mxu0 0.0
    %3964 = vmatpush.msra.mxu0 0.0
    %3965 = vmatpush.msra.mxu0 0.0
    %3966 = vmatpush.msra.mxu0 0.0
    %3967 = vmatpush.msra.mxu0 0.0
    %3968 = vmatpush.msra.mxu0 0.0
    %3969 = vmatpush.msra.mxu0 0.0
    %3970 = vmatpush.msra.mxu0 0.0
    %3971 = vmatpush.msra.mxu0 0.0
    %3972 = vmatpush.msra.mxu0 0.0
    %3973 = vmatpush.msra.mxu0 0.0
    %3974 = vmatpush.msra.mxu0 %v3586
    %3975 = vmatmul.f32.gmra.mxu0 %v3885
    %v3976 = vpop.f32.mrf.mxu0
    %v3977 = vadd.f32 0.0, %v3976
    %3978 = vdwg.mxu0
    %v3980 = vrot.slane %v3977, 5
    %v3982 = vadd.f32 %v3502, %v3980
    %v3983 = vsub.f32 0.0, %v3934
    %v3984 = vmul.f32 %v3983, 1.442695
    %v3985 = vpow.pop %v3984
    %v3986 = vadd.f32 %v3985, 1.0
    %v3987 = vrcp.pop %v3986
    %v3989 = vrot.slane %v3873, 7
    %v3991 = vmul.f32 %v3987, %v3989
    %v3992 = vsub.f32 0.0, %v3910
    %v3993 = vmul.f32 %v3992, 1.442695
    %v3994 = vpow.pop %v3993
    %v3995 = vadd.f32 %v3994, 1.0
    %v3996 = vrcp.pop %v3995
    %v3997 = vtanh.pop %v3958
    %v3998 = vmul.f32 %v3996, %v3997
    %v3999 = vadd.f32 %v3991, %v3998
    %v4000 = vsub.f32 0.0, %v3982
    %v4001 = vmul.f32 %v4000, 1.442695
    %v4002 = vpow.pop %v4001
    %v4003 = vadd.f32 %v4002, 1.0
    %v4004 = vrcp.pop %v4003
    %v4005 = vtanh.pop %v3999
    %v4006 = vmul.f32 %v4004, %v4005
    %vm4007 = vcmask 27651
    %4008 = vst.msk [vmem:[#allocation4] sm:$0x8] %vm4007, %v4006
    %v4010 = vrot.slane %v4006, 3
    %v4011 = vsel %vm102, %v4010, 0
    %4013 = vmatpush.msra.mxu0 0.0
    %4014 = vmatpush.msra.mxu0 0.0
    %4015 = vmatpush.msra.mxu0 0.0
    %4016 = vmatpush.msra.mxu0 0.0
    %4017 = vmatpush.msra.mxu0 0.0
    %4018 = vmatpush.msra.mxu0 0.0
    %4019 = vmatpush.msra.mxu0 0.0
    %4020 = vmatpush.msra.mxu0 0.0
    %4021 = vmatpush.msra.mxu0 0.0
    %4022 = vmatpush.msra.mxu0 0.0
    %4023 = vmatpush.msra.mxu0 0.0
    %4024 = vmatpush.msra.mxu0 0.0
    %4025 = vmatpush.msra.mxu0 0.0
    %4026 = vmatpush.msra.mxu0 0.0
    %4027 = vmatpush.msra.mxu0 0.0
    %4028 = vmatpush.msra.mxu0 %v3514
    %4029 = vmatmul.f32.gmra.mxu0 %v4011
    %v4030 = vpop.f32.mrf.mxu0
    %v4031 = vadd.f32 0.0, %v4030
    %4032 = vdwg.mxu0
    %v4034 = vrot.slane %v4031, 4
    %v4036 = vadd.f32 %v3412, %v4034
    %4037 = vmatpush.msra.mxu0 0.0
    %4038 = vmatpush.msra.mxu0 0.0
    %4039 = vmatpush.msra.mxu0 0.0
    %4040 = vmatpush.msra.mxu0 0.0
    %4041 = vmatpush.msra.mxu0 0.0
    %4042 = vmatpush.msra.mxu0 0.0
    %4043 = vmatpush.msra.mxu0 0.0
    %4044 = vmatpush.msra.mxu0 0.0
    %4045 = vmatpush.msra.mxu0 0.0
    %4046 = vmatpush.msra.mxu0 0.0
    %4047 = vmatpush.msra.mxu0 0.0
    %4048 = vmatpush.msra.mxu0 0.0
    %4049 = vmatpush.msra.mxu0 0.0
    %4050 = vmatpush.msra.mxu0 0.0
    %4051 = vmatpush.msra.mxu0 0.0
    %4052 = vmatpush.msra.mxu0 %v3538
    %4053 = vmatmul.f32.gmra.mxu0 %v4011
    %v4054 = vpop.f32.mrf.mxu0
    %v4055 = vadd.f32 0.0, %v4054
    %4056 = vdwg.mxu0
    %v4058 = vrot.slane %v4055, 4
    %v4060 = vadd.f32 %v3442, %v4058
    %4061 = vmatpush.msra.mxu0 0.0
    %4062 = vmatpush.msra.mxu0 0.0
    %4063 = vmatpush.msra.mxu0 0.0
    %4064 = vmatpush.msra.mxu0 0.0
    %4065 = vmatpush.msra.mxu0 0.0
    %4066 = vmatpush.msra.mxu0 0.0
    %4067 = vmatpush.msra.mxu0 0.0
    %4068 = vmatpush.msra.mxu0 0.0
    %4069 = vmatpush.msra.mxu0 0.0
    %4070 = vmatpush.msra.mxu0 0.0
    %4071 = vmatpush.msra.mxu0 0.0
    %4072 = vmatpush.msra.mxu0 0.0
    %4073 = vmatpush.msra.mxu0 0.0
    %4074 = vmatpush.msra.mxu0 0.0
    %4075 = vmatpush.msra.mxu0 0.0
    %4076 = vmatpush.msra.mxu0 %v3562
    %4077 = vmatmul.f32.gmra.mxu0 %v4011
    %v4078 = vpop.f32.mrf.mxu0
    %v4079 = vadd.f32 0.0, %v4078
    %4080 = vdwg.mxu0
    %v4082 = vrot.slane %v4079, 4
    %v4084 = vadd.f32 %v3472, %v4082
    %4085 = vmatpush.msra.mxu0 0.0
    %4086 = vmatpush.msra.mxu0 0.0
    %4087 = vmatpush.msra.mxu0 0.0
    %4088 = vmatpush.msra.mxu0 0.0
    %4089 = vmatpush.msra.mxu0 0.0
    %4090 = vmatpush.msra.mxu0 0.0
    %4091 = vmatpush.msra.mxu0 0.0
    %4092 = vmatpush.msra.mxu0 0.0
    %4093 = vmatpush.msra.mxu0 0.0
    %4094 = vmatpush.msra.mxu0 0.0
    %4095 = vmatpush.msra.mxu0 0.0
    %4096 = vmatpush.msra.mxu0 0.0
    %4097 = vmatpush.msra.mxu0 0.0
    %4098 = vmatpush.msra.mxu0 0.0
    %4099 = vmatpush.msra.mxu0 0.0
    %4100 = vmatpush.msra.mxu0 %v3586
    %4101 = vmatmul.f32.gmra.mxu0 %v4011
    %v4102 = vpop.f32.mrf.mxu0
    %v4103 = vadd.f32 0.0, %v4102
    %4104 = vdwg.mxu0
    %v4106 = vrot.slane %v4103, 4
    %v4108 = vadd.f32 %v3502, %v4106
    %v4109 = vsub.f32 0.0, %v4060
    %v4110 = vmul.f32 %v4109, 1.442695
    %v4111 = vpow.pop %v4110
    %v4112 = vadd.f32 %v4111, 1.0
    %v4113 = vrcp.pop %v4112
    %v4115 = vrot.slane %v3999, 7
    %v4117 = vmul.f32 %v4113, %v4115
    %v4118 = vsub.f32 0.0, %v4036
    %v4119 = vmul.f32 %v4118, 1.442695
    %v4120 = vpow.pop %v4119
    %v4121 = vadd.f32 %v4120, 1.0
    %v4122 = vrcp.pop %v4121
    %v4123 = vtanh.pop %v4084
    %v4124 = vmul.f32 %v4122, %v4123
    %v4125 = vadd.f32 %v4117, %v4124
    %v4126 = vsub.f32 0.0, %v4108
    %v4127 = vmul.f32 %v4126, 1.442695
    %v4128 = vpow.pop %v4127
    %v4129 = vadd.f32 %v4128, 1.0
    %v4130 = vrcp.pop %v4129
    %v4131 = vtanh.pop %v4125
    %v4132 = vmul.f32 %v4130, %v4131
    %vm4133 = vcmask 28676
    %4134 = vst.msk [vmem:[#allocation4] sm:$0x10] %vm4133, %v4132
    %v4136 = vrot.slane %v4132, 4
    %v4137 = vsel %vm102, %v4136, 0
    %4139 = vmatpush.msra.mxu0 0.0
    %4140 = vmatpush.msra.mxu0 0.0
    %4141 = vmatpush.msra.mxu0 0.0
    %4142 = vmatpush.msra.mxu0 0.0
    %4143 = vmatpush.msra.mxu0 0.0
    %4144 = vmatpush.msra.mxu0 0.0
    %4145 = vmatpush.msra.mxu0 0.0
    %4146 = vmatpush.msra.mxu0 0.0
    %4147 = vmatpush.msra.mxu0 0.0
    %4148 = vmatpush.msra.mxu0 0.0
    %4149 = vmatpush.msra.mxu0 0.0
    %4150 = vmatpush.msra.mxu0 0.0
    %4151 = vmatpush.msra.mxu0 0.0
    %4152 = vmatpush.msra.mxu0 0.0
    %4153 = vmatpush.msra.mxu0 0.0
    %4154 = vmatpush.msra.mxu0 %v3514
    %4155 = vmatmul.f32.gmra.mxu0 %v4137
    %v4156 = vpop.f32.mrf.mxu0
    %v4157 = vadd.f32 0.0, %v4156
    %4158 = vdwg.mxu0
    %v4160 = vrot.slane %v4157, 3
    %v4162 = vadd.f32 %v3412, %v4160
    %4163 = vmatpush.msra.mxu0 0.0
    %4164 = vmatpush.msra.mxu0 0.0
    %4165 = vmatpush.msra.mxu0 0.0
    %4166 = vmatpush.msra.mxu0 0.0
    %4167 = vmatpush.msra.mxu0 0.0
    %4168 = vmatpush.msra.mxu0 0.0
    %4169 = vmatpush.msra.mxu0 0.0
    %4170 = vmatpush.msra.mxu0 0.0
    %4171 = vmatpush.msra.mxu0 0.0
    %4172 = vmatpush.msra.mxu0 0.0
    %4173 = vmatpush.msra.mxu0 0.0
    %4174 = vmatpush.msra.mxu0 0.0
    %4175 = vmatpush.msra.mxu0 0.0
    %4176 = vmatpush.msra.mxu0 0.0
    %4177 = vmatpush.msra.mxu0 0.0
    %4178 = vmatpush.msra.mxu0 %v3538
    %4179 = vmatmul.f32.gmra.mxu0 %v4137
    %v4180 = vpop.f32.mrf.mxu0
    %v4181 = vadd.f32 0.0, %v4180
    %4182 = vdwg.mxu0
    %v4184 = vrot.slane %v4181, 3
    %v4186 = vadd.f32 %v3442, %v4184
    %4187 = vmatpush.msra.mxu0 0.0
    %4188 = vmatpush.msra.mxu0 0.0
    %4189 = vmatpush.msra.mxu0 0.0
    %4190 = vmatpush.msra.mxu0 0.0
    %4191 = vmatpush.msra.mxu0 0.0
    %4192 = vmatpush.msra.mxu0 0.0
    %4193 = vmatpush.msra.mxu0 0.0
    %4194 = vmatpush.msra.mxu0 0.0
    %4195 = vmatpush.msra.mxu0 0.0
    %4196 = vmatpush.msra.mxu0 0.0
    %4197 = vmatpush.msra.mxu0 0.0
    %4198 = vmatpush.msra.mxu0 0.0
    %4199 = vmatpush.msra.mxu0 0.0
    %4200 = vmatpush.msra.mxu0 0.0
    %4201 = vmatpush.msra.mxu0 0.0
    %4202 = vmatpush.msra.mxu0 %v3562
    %4203 = vmatmul.f32.gmra.mxu0 %v4137
    %v4204 = vpop.f32.mrf.mxu0
    %v4205 = vadd.f32 0.0, %v4204
    %4206 = vdwg.mxu0
    %v4208 = vrot.slane %v4205, 3
    %v4210 = vadd.f32 %v3472, %v4208
    %4211 = vmatpush.msra.mxu0 0.0
    %4212 = vmatpush.msra.mxu0 0.0
    %4213 = vmatpush.msra.mxu0 0.0
    %4214 = vmatpush.msra.mxu0 0.0
    %4215 = vmatpush.msra.mxu0 0.0
    %4216 = vmatpush.msra.mxu0 0.0
    %4217 = vmatpush.msra.mxu0 0.0
    %4218 = vmatpush.msra.mxu0 0.0
    %4219 = vmatpush.msra.mxu0 0.0
    %4220 = vmatpush.msra.mxu0 0.0
    %4221 = vmatpush.msra.mxu0 0.0
    %4222 = vmatpush.msra.mxu0 0.0
    %4223 = vmatpush.msra.mxu0 0.0
    %4224 = vmatpush.msra.mxu0 0.0
    %4225 = vmatpush.msra.mxu0 0.0
    %4226 = vmatpush.msra.mxu0 %v3586
    %4227 = vmatmul.f32.gmra.mxu0 %v4137
    %v4228 = vpop.f32.mrf.mxu0
    %v4229 = vadd.f32 0.0, %v4228
    %4230 = vdwg.mxu0
    %v4232 = vrot.slane %v4229, 3
    %v4234 = vadd.f32 %v3502, %v4232
    %v4235 = vsub.f32 0.0, %v4186
    %v4236 = vmul.f32 %v4235, 1.442695
    %v4237 = vpow.pop %v4236
    %v4238 = vadd.f32 %v4237, 1.0
    %v4239 = vrcp.pop %v4238
    %v4241 = vrot.slane %v4125, 7
    %v4243 = vmul.f32 %v4239, %v4241
    %v4244 = vsub.f32 0.0, %v4162
    %v4245 = vmul.f32 %v4244, 1.442695
    %v4246 = vpow.pop %v4245
    %v4247 = vadd.f32 %v4246, 1.0
    %v4248 = vrcp.pop %v4247
    %v4249 = vtanh.pop %v4210
    %v4250 = vmul.f32 %v4248, %v4249
    %v4251 = vadd.f32 %v4243, %v4250
    %v4252 = vsub.f32 0.0, %v4234
    %v4253 = vmul.f32 %v4252, 1.442695
    %v4254 = vpow.pop %v4253
    %v4255 = vadd.f32 %v4254, 1.0
    %v4256 = vrcp.pop %v4255
    %v4257 = vtanh.pop %v4251
    %v4258 = vmul.f32 %v4256, %v4257
    %vm4259 = vcmask 29701
    %4260 = vst.msk [vmem:[#allocation4] sm:$0x20] %vm4259, %v4258
    %v4262 = vrot.slane %v4258, 5
    %v4263 = vsel %vm102, %v4262, 0
    %4265 = vmatpush.msra.mxu0 0.0
    %4266 = vmatpush.msra.mxu0 0.0
    %4267 = vmatpush.msra.mxu0 0.0
    %4268 = vmatpush.msra.mxu0 0.0
    %4269 = vmatpush.msra.mxu0 0.0
    %4270 = vmatpush.msra.mxu0 0.0
    %4271 = vmatpush.msra.mxu0 0.0
    %4272 = vmatpush.msra.mxu0 0.0
    %4273 = vmatpush.msra.mxu0 0.0
    %4274 = vmatpush.msra.mxu0 0.0
    %4275 = vmatpush.msra.mxu0 0.0
    %4276 = vmatpush.msra.mxu0 0.0
    %4277 = vmatpush.msra.mxu0 0.0
    %4278 = vmatpush.msra.mxu0 0.0
    %4279 = vmatpush.msra.mxu0 0.0
    %4280 = vmatpush.msra.mxu0 %v3514
    %4281 = vmatmul.f32.gmra.mxu0 %v4263
    %v4282 = vpop.f32.mrf.mxu0
    %v4283 = vadd.f32 0.0, %v4282
    %4284 = vdwg.mxu0
    %v4286 = vrot.slane %v4283, 2
    %v4288 = vadd.f32 %v3412, %v4286
    %4289 = vmatpush.msra.mxu0 0.0
    %4290 = vmatpush.msra.mxu0 0.0
    %4291 = vmatpush.msra.mxu0 0.0
    %4292 = vmatpush.msra.mxu0 0.0
    %4293 = vmatpush.msra.mxu0 0.0
    %4294 = vmatpush.msra.mxu0 0.0
    %4295 = vmatpush.msra.mxu0 0.0
    %4296 = vmatpush.msra.mxu0 0.0
    %4297 = vmatpush.msra.mxu0 0.0
    %4298 = vmatpush.msra.mxu0 0.0
    %4299 = vmatpush.msra.mxu0 0.0
    %4300 = vmatpush.msra.mxu0 0.0
    %4301 = vmatpush.msra.mxu0 0.0
    %4302 = vmatpush.msra.mxu0 0.0
    %4303 = vmatpush.msra.mxu0 0.0
    %4304 = vmatpush.msra.mxu0 %v3538
    %4305 = vmatmul.f32.gmra.mxu0 %v4263
    %v4306 = vpop.f32.mrf.mxu0
    %v4307 = vadd.f32 0.0, %v4306
    %4308 = vdwg.mxu0
    %v4310 = vrot.slane %v4307, 2
    %v4312 = vadd.f32 %v3442, %v4310
    %4313 = vmatpush.msra.mxu0 0.0
    %4314 = vmatpush.msra.mxu0 0.0
    %4315 = vmatpush.msra.mxu0 0.0
    %4316 = vmatpush.msra.mxu0 0.0
    %4317 = vmatpush.msra.mxu0 0.0
    %4318 = vmatpush.msra.mxu0 0.0
    %4319 = vmatpush.msra.mxu0 0.0
    %4320 = vmatpush.msra.mxu0 0.0
    %4321 = vmatpush.msra.mxu0 0.0
    %4322 = vmatpush.msra.mxu0 0.0
    %4323 = vmatpush.msra.mxu0 0.0
    %4324 = vmatpush.msra.mxu0 0.0
    %4325 = vmatpush.msra.mxu0 0.0
    %4326 = vmatpush.msra.mxu0 0.0
    %4327 = vmatpush.msra.mxu0 0.0
    %4328 = vmatpush.msra.mxu0 %v3562
    %4329 = vmatmul.f32.gmra.mxu0 %v4263
    %v4330 = vpop.f32.mrf.mxu0
    %v4331 = vadd.f32 0.0, %v4330
    %4332 = vdwg.mxu0
    %v4334 = vrot.slane %v4331, 2
    %v4336 = vadd.f32 %v3472, %v4334
    %4337 = vmatpush.msra.mxu0 0.0
    %4338 = vmatpush.msra.mxu0 0.0
    %4339 = vmatpush.msra.mxu0 0.0
    %4340 = vmatpush.msra.mxu0 0.0
    %4341 = vmatpush.msra.mxu0 0.0
    %4342 = vmatpush.msra.mxu0 0.0
    %4343 = vmatpush.msra.mxu0 0.0
    %4344 = vmatpush.msra.mxu0 0.0
    %4345 = vmatpush.msra.mxu0 0.0
    %4346 = vmatpush.msra.mxu0 0.0
    %4347 = vmatpush.msra.mxu0 0.0
    %4348 = vmatpush.msra.mxu0 0.0
    %4349 = vmatpush.msra.mxu0 0.0
    %4350 = vmatpush.msra.mxu0 0.0
    %4351 = vmatpush.msra.mxu0 0.0
    %4352 = vmatpush.msra.mxu0 %v3586
    %4353 = vmatmul.f32.gmra.mxu0 %v4263
    %v4354 = vpop.f32.mrf.mxu0
    %v4355 = vadd.f32 0.0, %v4354
    %4356 = vdwg.mxu0
    %v4358 = vrot.slane %v4355, 2
    %v4360 = vadd.f32 %v3502, %v4358
    %v4361 = vsub.f32 0.0, %v4312
    %v4362 = vmul.f32 %v4361, 1.442695
    %v4363 = vpow.pop %v4362
    %v4364 = vadd.f32 %v4363, 1.0
    %v4365 = vrcp.pop %v4364
    %v4367 = vrot.slane %v4251, 7
    %v4369 = vmul.f32 %v4365, %v4367
    %v4370 = vsub.f32 0.0, %v4288
    %v4371 = vmul.f32 %v4370, 1.442695
    %v4372 = vpow.pop %v4371
    %v4373 = vadd.f32 %v4372, 1.0
    %v4374 = vrcp.pop %v4373
    %v4375 = vtanh.pop %v4336
    %v4376 = vmul.f32 %v4374, %v4375
    %v4377 = vadd.f32 %v4369, %v4376
    %v4378 = vsub.f32 0.0, %v4360
    %v4379 = vmul.f32 %v4378, 1.442695
    %v4380 = vpow.pop %v4379
    %v4381 = vadd.f32 %v4380, 1.0
    %v4382 = vrcp.pop %v4381
    %v4383 = vtanh.pop %v4377
    %v4384 = vmul.f32 %v4382, %v4383
    %vm4385 = vcmask 30726
    %4386 = vst.msk [vmem:[#allocation4] sm:$0x40] %vm4385, %v4384
    %v4388 = vrot.slane %v4384, 6
    %v4389 = vsel %vm102, %v4388, 0
    %4391 = vmatpush.msra.mxu0 0.0
    %4392 = vmatpush.msra.mxu0 0.0
    %4393 = vmatpush.msra.mxu0 0.0
    %4394 = vmatpush.msra.mxu0 0.0
    %4395 = vmatpush.msra.mxu0 0.0
    %4396 = vmatpush.msra.mxu0 0.0
    %4397 = vmatpush.msra.mxu0 0.0
    %4398 = vmatpush.msra.mxu0 0.0
    %4399 = vmatpush.msra.mxu0 0.0
    %4400 = vmatpush.msra.mxu0 0.0
    %4401 = vmatpush.msra.mxu0 0.0
    %4402 = vmatpush.msra.mxu0 0.0
    %4403 = vmatpush.msra.mxu0 0.0
    %4404 = vmatpush.msra.mxu0 0.0
    %4405 = vmatpush.msra.mxu0 0.0
    %4406 = vmatpush.msra.mxu0 %v3514
    %4407 = vmatmul.f32.gmra.mxu0 %v4389
    %v4408 = vpop.f32.mrf.mxu0
    %v4409 = vadd.f32 0.0, %v4408
    %4410 = vdwg.mxu0
    %v4412 = vrot.slane %v4409, 1
    %v4414 = vadd.f32 %v3412, %v4412
    %4415 = vmatpush.msra.mxu0 0.0
    %4416 = vmatpush.msra.mxu0 0.0
    %4417 = vmatpush.msra.mxu0 0.0
    %4418 = vmatpush.msra.mxu0 0.0
    %4419 = vmatpush.msra.mxu0 0.0
    %4420 = vmatpush.msra.mxu0 0.0
    %4421 = vmatpush.msra.mxu0 0.0
    %4422 = vmatpush.msra.mxu0 0.0
    %4423 = vmatpush.msra.mxu0 0.0
    %4424 = vmatpush.msra.mxu0 0.0
    %4425 = vmatpush.msra.mxu0 0.0
    %4426 = vmatpush.msra.mxu0 0.0
    %4427 = vmatpush.msra.mxu0 0.0
    %4428 = vmatpush.msra.mxu0 0.0
    %4429 = vmatpush.msra.mxu0 0.0
    %4430 = vmatpush.msra.mxu0 %v3538
    %4431 = vmatmul.f32.gmra.mxu0 %v4389
    %v4432 = vpop.f32.mrf.mxu0
    %v4433 = vadd.f32 0.0, %v4432
    %4434 = vdwg.mxu0
    %v4436 = vrot.slane %v4433, 1
    %v4438 = vadd.f32 %v3442, %v4436
    %4439 = vmatpush.msra.mxu0 0.0
    %4440 = vmatpush.msra.mxu0 0.0
    %4441 = vmatpush.msra.mxu0 0.0
    %4442 = vmatpush.msra.mxu0 0.0
    %4443 = vmatpush.msra.mxu0 0.0
    %4444 = vmatpush.msra.mxu0 0.0
    %4445 = vmatpush.msra.mxu0 0.0
    %4446 = vmatpush.msra.mxu0 0.0
    %4447 = vmatpush.msra.mxu0 0.0
    %4448 = vmatpush.msra.mxu0 0.0
    %4449 = vmatpush.msra.mxu0 0.0
    %4450 = vmatpush.msra.mxu0 0.0
    %4451 = vmatpush.msra.mxu0 0.0
    %4452 = vmatpush.msra.mxu0 0.0
    %4453 = vmatpush.msra.mxu0 0.0
    %4454 = vmatpush.msra.mxu0 %v3562
    %4455 = vmatmul.f32.gmra.mxu0 %v4389
    %v4456 = vpop.f32.mrf.mxu0
    %v4457 = vadd.f32 0.0, %v4456
    %4458 = vdwg.mxu0
    %v4460 = vrot.slane %v4457, 1
    %v4462 = vadd.f32 %v3472, %v4460
    %4463 = vmatpush.msra.mxu0 0.0
    %4464 = vmatpush.msra.mxu0 0.0
    %4465 = vmatpush.msra.mxu0 0.0
    %4466 = vmatpush.msra.mxu0 0.0
    %4467 = vmatpush.msra.mxu0 0.0
    %4468 = vmatpush.msra.mxu0 0.0
    %4469 = vmatpush.msra.mxu0 0.0
    %4470 = vmatpush.msra.mxu0 0.0
    %4471 = vmatpush.msra.mxu0 0.0
    %4472 = vmatpush.msra.mxu0 0.0
    %4473 = vmatpush.msra.mxu0 0.0
    %4474 = vmatpush.msra.mxu0 0.0
    %4475 = vmatpush.msra.mxu0 0.0
    %4476 = vmatpush.msra.mxu0 0.0
    %4477 = vmatpush.msra.mxu0 0.0
    %4478 = vmatpush.msra.mxu0 %v3586
    %4479 = vmatmul.f32.gmra.mxu0 %v4389
    %v4480 = vpop.f32.mrf.mxu0
    %v4481 = vadd.f32 0.0, %v4480
    %4482 = vdwg.mxu0
    %v4484 = vrot.slane %v4481, 1
    %v4486 = vadd.f32 %v3502, %v4484
    %v4487 = vsub.f32 0.0, %v4438
    %v4488 = vmul.f32 %v4487, 1.442695
    %v4489 = vpow.pop %v4488
    %v4490 = vadd.f32 %v4489, 1.0
    %v4491 = vrcp.pop %v4490
    %v4493 = vrot.slane %v4377, 7
    %v4495 = vmul.f32 %v4491, %v4493
    %v4496 = vsub.f32 0.0, %v4414
    %v4497 = vmul.f32 %v4496, 1.442695
    %v4498 = vpow.pop %v4497
    %v4499 = vadd.f32 %v4498, 1.0
    %v4500 = vrcp.pop %v4499
    %v4501 = vtanh.pop %v4462
    %v4502 = vmul.f32 %v4500, %v4501
    %v4503 = vadd.f32 %v4495, %v4502
    %v4504 = vsub.f32 0.0, %v4486
    %v4505 = vmul.f32 %v4504, 1.442695
    %v4506 = vpow.pop %v4505
    %v4507 = vadd.f32 %v4506, 1.0
    %v4508 = vrcp.pop %v4507
    %v4509 = vtanh.pop %v4503
    %v4510 = vmul.f32 %v4508, %v4509
    %vm4511 = vcmask 31751
    %4512 = vst.msk [vmem:[#allocation4] sm:$0x80] %vm4511, %v4510
    %v4513 = vld [vmem:[#allocation4] sm:$0xff]
    %v4514 = vld [vmem:[%s13] sm:$0xf]
    %v4515 = vld [vmem:[%s14] sm:$0x1]
    %v4517 = vperm.slane %v4515, 0
    %v4520 = vsel %vm102, %v4513, 0
    %v4523 = vsel %vm105, %v4514, 0
    %4525 = vmatpush.msra.mxu0 0.0
    %4526 = vmatpush.msra.mxu0 0.0
    %4527 = vmatpush.msra.mxu0 0.0
    %4528 = vmatpush.msra.mxu0 0.0
    %4529 = vmatpush.msra.mxu0 0.0
    %4530 = vmatpush.msra.mxu0 0.0
    %4531 = vmatpush.msra.mxu0 0.0
    %4532 = vmatpush.msra.mxu0 0.0
    %4533 = vmatpush.msra.mxu0 0.0
    %4534 = vmatpush.msra.mxu0 0.0
    %4535 = vmatpush.msra.mxu0 0.0
    %4536 = vmatpush.msra.mxu0 0.0
    %4537 = vmatpush.msra.mxu0 0.0
    %4538 = vmatpush.msra.mxu0 0.0
    %4539 = vmatpush.msra.mxu0 0.0
    %4540 = vmatpush.msra.mxu0 %v4523
    %4541 = vmatmul.f32.gmra.mxu0 %v4520
    %v4542 = vpop.f32.mrf.mxu0
    %v4543 = vadd.f32 %v4517, %v4542
    %4544 = vdwg.mxu0
    %v4546 = vrot.slane %v4543, 1
    %v4547 = vrot.slane %v4543, 2
    %v4548 = vrot.slane %v4543, 3
    %v4549 = vrot.slane %v4543, 4
    %v4550 = vrot.slane %v4543, 5
    %v4551 = vrot.slane %v4543, 6
    %v4552 = vrot.slane %v4543, 7
    %4560 = vst.msk [vmem:[%s19] sm:$0x1] %vm3630, %v4543
    %4561 = vst.msk [vmem:[%s19 + $0x1] sm:$0x1] %vm3630, %v4546
    %4562 = vst.msk [vmem:[%s19 + $0x2] sm:$0x1] %vm3630, %v4547
    %4563 = vst.msk [vmem:[%s19 + $0x3] sm:$0x1] %vm3630, %v4548
    %4564 = vst.msk [vmem:[%s19 + $0x4] sm:$0x1] %vm3630, %v4549
    %4565 = vst.msk [vmem:[%s19 + $0x5] sm:$0x1] %vm3630, %v4550
    %4566 = vst.msk [vmem:[%s19 + $0x6] sm:$0x1] %vm3630, %v4551
    %4567 = vst.msk [vmem:[%s19 + $0x7] sm:$0x1] %vm3630, %v4552
    %v4568 = vld [vmem:[%s15] sm:$0xff]
    %v4569 = vld [vmem:[%s15 + $0x8] sm:$0xff]
    %v4570 = vld [vmem:[%s16] sm:$0x1]
    %4571 = vmatpush.msra.mxu0 0.0
    %4572 = vmatpush.msra.mxu0 0.0
    %4573 = vmatpush.msra.mxu0 0.0
    %4574 = vmatpush.msra.mxu0 0.0
    %4575 = vmatpush.msra.mxu0 0.0
    %4576 = vmatpush.msra.mxu0 0.0
    %4577 = vmatpush.msra.mxu0 0.0
    %4578 = vmatpush.msra.mxu0 0.0
    %4579 = vmatpush.msra.mxu0 0.0
    %4580 = vmatpush.msra.mxu0 0.0
    %4581 = vmatpush.msra.mxu0 0.0
    %4582 = vmatpush.msra.mxu0 0.0
    %4583 = vmatpush.msra.mxu0 0.0
    %4584 = vmatpush.msra.mxu0 0.0
    %4585 = vmatpush.msra.mxu0 %v4569
    %4586 = vmatpush.msra.mxu0 %v4568
    %4587 = vmatmul.f32.gmra.mxu0 %v2397
    %v4588 = vpop.f32.mrf.mxu0
    %v4589 = vadd.f32 %v4570, %v4588
    %4590 = vdwg.mxu0
    %v4591 = vld [vmem:[%s17] sm:$0xff]
    %v4592 = vld [vmem:[%s17 + $0x8] sm:$0xff]
    %v4593 = vld [vmem:[%s17 + $0x10] sm:$0xff]
    %v4594 = vld [vmem:[%s17 + $0x18] sm:$0xff]
    %v4595 = vld [vmem:[%s17 + $0x20] sm:$0xff]
    %v4596 = vld [vmem:[%s17 + $0x28] sm:$0xff]
    %v4597 = vld [vmem:[%s17 + $0x30] sm:$0xff]
    %v4598 = vld [vmem:[%s17 + $0x38] sm:$0xff]
    %v4599 = vld [vmem:[%s17 + $0x40] sm:$0xff]
    %v4600 = vld [vmem:[%s17 + $0x48] sm:$0xff]
    %v4601 = vld [vmem:[%s17 + $0x50] sm:$0xff]
    %v4602 = vld [vmem:[%s17 + $0x58] sm:$0xff]
    %v4603 = vld [vmem:[%s18] sm:$0x1]
    %vm4604 = vcmask 785408
    %v4606 = vsel %vm4604, %v4589, 0
    %4608 = vmatpush.msra.mxu0 0.0
    %4609 = vmatpush.msra.mxu0 0.0
    %4610 = vmatpush.msra.mxu0 0.0
    %4611 = vmatpush.msra.mxu0 0.0
    %4612 = vmatpush.msra.mxu0 %v4602
    %4613 = vmatpush.msra.mxu0 %v4601
    %4614 = vmatpush.msra.mxu0 %v4600
    %4615 = vmatpush.msra.mxu0 %v4599
    %4616 = vmatpush.msra.mxu0 %v4598
    %4617 = vmatpush.msra.mxu0 %v4597
    %4618 = vmatpush.msra.mxu0 %v4596
    %4619 = vmatpush.msra.mxu0 %v4595
    %4620 = vmatpush.msra.mxu0 %v4594
    %4621 = vmatpush.msra.mxu0 %v4593
    %4622 = vmatpush.msra.mxu0 %v4592
    %4623 = vmatpush.msra.mxu0 %v4591
    %4624 = vmatmul.f32.gmra.mxu0 %v4606
    %v4625 = vpop.f32.mrf.mxu0
    %v4626 = vadd.f32 %v4603, %v4625
    %4627 = vdwg.mxu0
    %vm4628 = vcmask 16384
    %v4629 = vsel %vm4628, %v4626, -inf
    %4630 = vmax.xlane.f32.xlu0 %v4629
    %v4631 = vpop.xlane.xlu0 %4630
    %v4632 = vsub.f32 %v4626, %v4631
    %v4633 = vmul.f32 %v4632, 1.442695
    %v4634 = vpow.pop %v4633
    %v4635 = vsel %vm4628, %v4634, 0.0
    %4636 = vadd.xlane.f32.xlu0 %v4635
    %v4637 = vpop.xlane.xlu0 %4636
    %v4638 = vrcp.pop %v4637
    %v4639 = vmul.f32 %v4637, %v4638
    %v4640 = vsub.f32 1.0, %v4639
    %v4641 = vmul.f32 %v4638, %v4640
    %v4642 = vadd.f32 %v4638, %v4641
    %vm4643 = vweird.f32 %v4637
    %vm4644 = vweird.f32 %v4638
    %vm4645 = vmor %vm4643, %vm4644
    %v4646 = vsel %vm4645, %v4638, %v4642
    %v4647 = vand.u32 2147483647, %v4637
    %vm4648 = vcmp.eq.f32.partialorder %v4647, 8.507059e+37
    %v4649 = vand.u32 %v4637, 2147483648
    %v4650 = vor.u32 1.1754944e-38, %v4649
    %v4651 = vsel %vm4648, %v4650, %v4646
    %v4652 = vmul.f32 %v4634, %v4651
    %4653 = vst.msk [vmem:[#allocation5] sm:$0x1] %vm4628, %v4652
    // Predicated region
    $region78: #{dl_classifier_forward.1} parent=1 // pred_check
      _
    $region79: #{dl_classifier_forward.1} parent=1 // pred_check_branch
      %4655 = sbr.rel (0) target = $region81
    $region80: #{dl_classifier_forward.1} parent=1 // pred_region
      _
    $region81: #{dl_classifier_forward.1} parent=1 // pred_fallthru
      _
    // Predicated region
    $region82: #{dl_classifier_forward.1} parent=1 // pred_check
      _
    $region83: #{dl_classifier_forward.1} parent=1 // pred_check_branch
      %4657 = sbr.rel (0) target = $region85
    $region84: #{dl_classifier_forward.1} parent=1 // pred_region
      %4659 = vsyncadd [#allocation6], 0
      %s4661 = sshll.u32 [#allocation5], 4
      %s4662 = int_to_ptr.vmem [resolvable:$true] %s4661
      %s4663 = sshll.u32 %s20, 4
      %s4664 = int_to_ptr.hbm [resolvable:$true] %s4663
      %4666 = dma.vmem_to_hbm [thread:$0]  %s4662, 16, %s4664, [#allocation6]
    $region85: #{dl_classifier_forward.1} parent=1 // pred_fallthru
      _
    // Predicated region
    $region86: #{dl_classifier_forward.1} parent=1 // pred_check
      _
    $region87: #{dl_classifier_forward.1} parent=1 // pred_check_branch
      %4668 = sbr.rel (0) target = $region89
    $region88: #{dl_classifier_forward.1} parent=1 // pred_region
      _
    $region89: #{dl_classifier_forward.1} parent=1 // pred_fallthru
      _
    // Predicated region
    $region90: #{dl_classifier_forward.1} parent=1 // pred_check
      _
    $region91: #{dl_classifier_forward.1} parent=1 // pred_check_branch
      %4670 = sbr.rel (0) target = $region93
    $region92: #{dl_classifier_forward.1} parent=1 // pred_region
      %4672 = dma.done [#allocation6], 16
    $region93: #{dl_classifier_forward.1} parent=1 // pred_fallthru
      _
    %4673 = vsyncpa [#allocation6], 1

</llo_original>
